<compile_context>
chip_gen: v7x
topology: tpu7x:2x2x1
jax: 0.10.0
libtpu: 0.0.40
codegen_flags: <defaults>
</compile_context>

<pallas_src>
from functools import partial

import numpy as np
import jax
import jax.numpy as jnp
from jax.experimental import pallas as pl
from jax.experimental.pallas import tpu as pltpu

_LANE = 128
_VMEM_LIMIT = 32 * 1024 * 1024   # explicit budget: fits v5e/v6e (128 MiB) and v7x (64 MiB)


def _round_up(x, m):
    return (x + m - 1) // m * m


def _m_tiling(M):
    """Row padding for the matmul LHS (bf16 sublane pack = 16, use 32)."""
    if M > 128:
        return _round_up(M, 128)
    return _round_up(M, 32)


# ----------------------------------------------------------------------------
# Pallas kernels
# ----------------------------------------------------------------------------
def _mm_bias_relu_kernel(a_ref, w_ref, b_ref, o_ref, *, relu):
    """One (TM, TN) output tile with the full K resident in VMEM.

    f32 MXU result + f32 bias + ReLU, stored as bf16 (halves writeback traffic).
    """
    acc = jnp.dot(a_ref[...], w_ref[...], preferred_element_type=jnp.float32)
    out = acc + b_ref[...]
    if relu:
        out = jnp.maximum(out, 0.0)
    o_ref[...] = out.astype(o_ref.dtype)


def _maxpool9_kernel(x_ref, o_ref):
    """x_ref: (9, TR, 128) stacked 3x3 windows; tree-max over the window axis."""
    x = x_ref[...]
    m01 = jnp.maximum(x[0], x[1])
    m23 = jnp.maximum(x[2], x[3])
    m45 = jnp.maximum(x[4], x[5])
    m67 = jnp.maximum(x[6], x[7])
    o_ref[...] = jnp.maximum(
        jnp.maximum(jnp.maximum(m01, m23), jnp.maximum(m45, m67)), x[8])


# ----------------------------------------------------------------------------
# Pallas wrappers
# ----------------------------------------------------------------------------
def matmul_bias_relu(a_p, w_p, b_p, relu=True):
    """out = relu(a_p @ w_p + b_p), bf16 output.

    a_p: (Mp, Kp) bf16, w_p: (Kp, Np) bf16, b_p: (1, Np) f32.
    Single K step (whole K resident in VMEM; AlexNet K <= 3456).
    """
    Mp, Kp = a_p.shape
    Kp2, Np = w_p.shape
    assert Kp == Kp2 and Kp % _LANE == 0 and Np % _LANE == 0

    TM = 128 if (Mp >= 128 and Mp % 128 == 0) else Mp
    assert Mp % TM == 0 and TM % 16 == 0
    TN = Np if Np <= 512 else (256 if Np % 256 == 0 else 128)
    assert Np % TN == 0
    # VMEM sanity: double-buffered bf16 blocks must fit the explicit budget.
    assert 2 * 2 * (TM * Kp + Kp * TN + TM * TN) < _VMEM_LIMIT

    grid = (Mp // TM, Np // TN)
    return pl.pallas_call(
        partial(_mm_bias_relu_kernel, relu=relu),
        out_shape=jax.ShapeDtypeStruct((Mp, Np), jnp.bfloat16),
        grid=grid,
        in_specs=[
            pl.BlockSpec((TM, Kp), lambda i, j: (i, 0)),
            pl.BlockSpec((Kp, TN), lambda i, j: (0, j)),
            pl.BlockSpec((1, TN), lambda i, j: (0, j)),
        ],
        out_specs=pl.BlockSpec((TM, TN), lambda i, j: (i, j)),
        compiler_params=pltpu.CompilerParams(
            dimension_semantics=("parallel", "parallel"),
            vmem_limit_bytes=_VMEM_LIMIT),
    )(a_p, w_p, b_p)


def maxpool_3x3_s2(x_nhwc):
    """nn.MaxPool2d(kernel_size=3, stride=2), NHWC bf16 activations, lane-dense."""
    N, H, W, C = x_nhwc.shape
    Ho = (H - 3) // 2 + 1
    Wo = (W - 3) // 2 + 1
    # TODO(synk): the 9 shifted stride-2 window views are gathered by XLA glue;
    # BlockSpec cannot express intra-block strides, so the gather is not fused.
    wins = [x_nhwc[:, i:i + 2 * (Ho - 1) + 1:2, j:j + 2 * (Wo - 1) + 1:2, :]
            for i in range(3) for j in range(3)]
    L = N * Ho * Wo * C
    wins = jnp.stack(wins, axis=0).reshape(9, L)

    # Fold onto a dense 128-wide lane dim.  Single full-array block when small
    # (one grid step, no masked partial stores); otherwise 512-row tiles.
    R = pl.cdiv(L, _LANE)
    if R <= 1024:
        Rp = _round_up(R, 16)
        TR = Rp
    else:
        TR = 512
        Rp = _round_up(R, TR)
    wins = jnp.pad(wins, ((0, 0), (0, Rp * _LANE - L)))
    wins = wins.reshape(9, Rp, _LANE)

    out = pl.pallas_call(
        _maxpool9_kernel,
        out_shape=jax.ShapeDtypeStruct((Rp, _LANE), x_nhwc.dtype),
        grid=(Rp // TR,),
        in_specs=[pl.BlockSpec((9, TR, _LANE), lambda r: (0, r, 0))],
        out_specs=pl.BlockSpec((TR, _LANE), lambda r: (r, 0)),
        compiler_params=pltpu.CompilerParams(dimension_semantics=("parallel",)),
    )(wins)
    return out.reshape(Rp * _LANE)[:L].reshape(N, Ho, Wo, C)


def conv2d_relu(x_nhwc, w_p, b_p, Cout, kh, kw, stride, pad):
    """nn.Conv2d + ReLU: bf16 im2col + one single-K-step Pallas matmul."""
    N, H, W, Cin = x_nhwc.shape
    K = kh * kw * Cin
    Kp, Np = w_p.shape
    xp = jnp.pad(x_nhwc, ((0, 0), (pad, pad), (pad, pad), (0, 0)))
    Hp, Wp = H + 2 * pad, W + 2 * pad
    Ho = (Hp - kh) // stride + 1
    Wo = (Wp - kw) // stride + 1
    cols = []
    for i in range(kh):
        for j in range(kw):
            cols.append(xp[:, i:i + stride * (Ho - 1) + 1:stride,
                           j:j + stride * (Wo - 1) + 1:stride, :])
    # TODO(synk): the kh*kw im2col gather is XLA glue (HBM-amplified); fusing it
    # into the kernel needs strided manual DMA and is not done here.
    # (N, Ho, Wo, kh*kw, Cin) -> (M, K); K order = (kh, kw, Cin), matching w_p.
    patches = jnp.stack(cols, axis=3).reshape(N * Ho * Wo, K).astype(jnp.bfloat16)
    M = N * Ho * Wo
    Mp = _m_tiling(M)
    patches = jnp.pad(patches, ((0, Mp - M), (0, Kp - K)))
    out = matmul_bias_relu(patches, w_p, b_p, relu=True)     # (Mp, Np) bf16
    return out[:M, :Cout].reshape(N, Ho, Wo, Cout)


def _avg_matrix(out_size, in_size):
    # adaptive_avg_pool1d averaging matrix (F.interpolate mode='area').
    A = np.zeros((out_size, in_size), np.float32)
    for i in range(out_size):
        s = (i * in_size) // out_size
        e = -(-((i + 1) * in_size) // out_size)  # ceil
        A[i, s:e] = 1.0 / (e - s)
    return jnp.asarray(A)


def interpolate_area(x_nchw, out_h, out_w):
    """F.interpolate(x, (out_h, out_w), mode='area') == adaptive_avg_pool2d.

    Tiny op -> plain XLA (per perf review); default precision (no multi-pass
    f32 MXU emulation).
    """
    N, C, H, W = x_nchw.shape
    Ah = _avg_matrix(out_h, H)  # (out_h, H)
    Aw = _avg_matrix(out_w, W)  # (out_w, W)
    return jnp.einsum('nchw,oh,pw->ncop', x_nchw, Ah, Aw)


# ----------------------------------------------------------------------------
# AlexNet model
# ----------------------------------------------------------------------------
_CONV_SPECS = [
    # (Cout, Cin, kh, kw, stride, pad)
    (64, 3, 11, 11, 4, 2),
    (192, 64, 5, 5, 1, 2),
    (384, 192, 3, 3, 1, 1),
    (256, 384, 3, 3, 1, 1),
    (256, 256, 3, 3, 1, 1),
]
_POOL_AFTER = (0, 1, 4)   # MaxPool(3,2) after conv1, conv2, conv5


def init_params(key):
    """PyTorch-layout parameters: [(w (Cout,Cin,kh,kw), b (Cout,)), ...]."""
    params = []
    for idx, (co, ci, kh, kw, _, _) in enumerate(_CONV_SPECS):
        kw_key, kb_key = jax.random.split(jax.random.fold_in(key, idx))
        fan_in = ci * kh * kw
        w = jax.random.normal(kw_key, (co, ci, kh, kw), jnp.float32) * np.sqrt(
            2.0 / fan_in)
        b = jax.random.normal(kb_key, (co,), jnp.float32) * 0.01
        params.append((w, b))
    return params


def prepare_params(params):
    """Hoisted weight prep: transpose to (kh,kw,Cin,Cout), flatten, pad, bf16.

    K is padded only to a multiple of 128 (kept in lockstep with conv2d_relu's
    patch padding); Cout is padded to a multiple of 128.
    """
    prepared = []
    for (w_pt, b), (co, ci, kh, kw, _, _) in zip(params, _CONV_SPECS):
        K = kh * kw * ci
        Kp = _round_up(K, _LANE)
        Np = _round_up(co, _LANE)
        w_mat = jnp.transpose(w_pt, (2, 3, 1, 0)).reshape(K, co)
        w_p = jnp.zeros((Kp, Np), jnp.bfloat16).at[:K, :co].set(
            w_mat.astype(jnp.bfloat16))
        b_p = jnp.zeros((1, Np), jnp.float32).at[0, :co].set(
            b.astype(jnp.float32))
        prepared.append((w_p, b_p))
    return prepared


def conv2d_size_out(size, kernel_size, stride, padding):
    return (size - kernel_size + 2 * padding) // stride + 1


def alexnet_forward(x_nchw, pparams, input_h, input_w):
    x = interpolate_area(x_nchw, input_h, input_w)
    x = jnp.transpose(x, (0, 2, 3, 1)).astype(jnp.bfloat16)  # NHWC, bf16 internal
    for idx, ((w_p, b_p), (co, _, kh, kw, stride, pad)) in enumerate(
            zip(pparams, _CONV_SPECS)):
        x = conv2d_relu(x, w_p, b_p, co, kh, kw, stride, pad)
        if idx in _POOL_AFTER:
            x = maxpool_3x3_s2(x)
    f = jnp.transpose(x, (0, 3, 1, 2)).astype(jnp.float32)   # NCHW, like PyTorch
    flat = f.reshape(f.shape[0], -1)
    return f, flat


# ----------------------------------------------------------------------------
# Pure-JAX reference (f32, highest precision) for a sanity check
# ----------------------------------------------------------------------------
def reference_forward(x_nchw, params, input_h, input_w):
    x = interpolate_area(x_nchw, input_h, input_w)
    for idx, ((w, b), (_, _, _, _, stride, pad)) in enumerate(
            zip(params, _CONV_SPECS)):
        x = jax.lax.conv_general_dilated(
            x, w, window_strides=(stride, stride),
            padding=[(pad, pad), (pad, pad)],
            dimension_numbers=('NCHW', 'OIHW', 'NCHW'),
            precision=jax.lax.Precision.HIGHEST)
        x = jnp.maximum(x + b[None, :, None, None], 0.0)
        if idx in _POOL_AFTER:
            x = jax.lax.reduce_window(x, -jnp.inf, jax.lax.max,
                                      (1, 1, 3, 3), (1, 1, 2, 2), 'VALID')
    return x, x.reshape(x.shape[0], -1)


if __name__ == "__main__":
    # Small-but-valid config: input_h = input_w = 67 keeps every MaxPool valid.
    INPUT_H = INPUT_W = 67
    key = jax.random.PRNGKey(0)
    x = jax.random.normal(key, (2, 3, 16, 16), jnp.float32)  # NCHW, like PyTorch
    params = init_params(jax.random.PRNGKey(42))
    pparams = prepare_params(params)   # hoisted: padded bf16 weights, f32 bias

    # Expected feature map size per the module's own bookkeeping.
    fh = fw = INPUT_H
    for (k, s, p) in [(11, 4, 2), (3, 2, 0), (5, 1, 2), (3, 2, 0),
                      (3, 1, 1), (3, 1, 1), (3, 1, 1), (3, 2, 0)]:
        fh = conv2d_size_out(fh, k, s, p)
        fw = conv2d_size_out(fw, k, s, p)

    fwd = jax.jit(partial(alexnet_forward, input_h=INPUT_H, input_w=INPUT_W))
    f, flat = fwd(x, pparams)
    jax.block_until_ready((f, flat))

    assert f.shape == (2, 256, fh, fw), f.shape
    assert flat.shape == (2, 256 * fh * fw), flat.shape
    assert jnp.all(jnp.isfinite(f)) and jnp.all(jnp.isfinite(flat))

    # Numerical sanity check vs. f32 XLA reference (bf16 MXU inputs + bf16
    # inter-layer activations -> loose tolerance).
    f_ref, flat_ref = jax.jit(
        partial(reference_forward, input_h=INPUT_H, input_w=INPUT_W))(x, params)
    jax.block_until_ready((f_ref, flat_ref))
    rel = float(jnp.linalg.norm(flat - flat_ref) /
                (jnp.linalg.norm(flat_ref) + 1e-6))
    assert rel < 5e-2, f"relative error too large: {rel}"

    print("KERNEL_OK")
</pallas_src>

<mosaic_0001>
module attributes {stable_mosaic.version = 11 : i64} {
  func.func @_mm_bias_relu_kernel(%arg0: i32, %arg1: i32, %arg2: memref<128x384xbf16, #tpu.memory_space<vmem>>, %arg3: memref<384x128xbf16, #tpu.memory_space<vmem>>, %arg4: memref<1x128xf32, #tpu.memory_space<vmem>>, %arg5: memref<128x128xbf16, #tpu.memory_space<vmem>>) attributes {dimension_semantics = [#tpu.dimension_semantics<parallel>, #tpu.dimension_semantics<parallel>], iteration_bounds = array<i64: 4, 1>, scalar_prefetch = 0 : i64, scratch_operands = 0 : i64, tpu.core_type = #tpu.core_type<tc>, window_params = [{transform_indices = @transform_0, window_bounds = array<i64: 128, 384>}, {transform_indices = @transform_1, window_bounds = array<i64: 384, 128>}, {transform_indices = @transform_2, window_bounds = array<i64: 1, 128>}, {transform_indices = @transform_3, window_bounds = array<i64: 128, 128>}]} {
    %c0 = arith.constant 0 : index
    %c0_0 = arith.constant 0 : index
    %0 = vector.load %arg2[%c0, %c0_0] : memref<128x384xbf16, #tpu.memory_space<vmem>>, vector<128x384xbf16>
    %c0_1 = arith.constant 0 : index
    %c0_2 = arith.constant 0 : index
    %1 = vector.load %arg3[%c0_1, %c0_2] : memref<384x128xbf16, #tpu.memory_space<vmem>>, vector<384x128xbf16>
    %cst = arith.constant dense<0.000000e+00> : vector<128x128xf32>
    %2 = tpu.matmul %0, %1, %cst {dimension_numbers = #tpu.dot_dimension_numbers<[1], [0], [0], [1], [0, 0, 1, 1], [], []>} : vector<128x384xbf16>, vector<384x128xbf16>, vector<128x128xf32> -> vector<128x128xf32>
    %c0_3 = arith.constant 0 : index
    %c0_4 = arith.constant 0 : index
    %3 = vector.load %arg4[%c0_3, %c0_4] : memref<1x128xf32, #tpu.memory_space<vmem>>, vector<1x128xf32>
    %4 = vector.broadcast %3 : vector<1x128xf32> to vector<128x128xf32>
    %5 = arith.addf %2, %4 : vector<128x128xf32>
    %cst_5 = arith.constant 0.000000e+00 : f32
    %6 = vector.broadcast %cst_5 : f32 to vector<128x128xf32>
    %7 = arith.maximumf %5, %6 : vector<128x128xf32>
    %8 = arith.truncf %7 : vector<128x128xf32> to vector<128x128xbf16>
    %c0_6 = arith.constant 0 : index
    %c0_7 = arith.constant 0 : index
    %9 = vector.load %arg5[%c0_6, %c0_7] : memref<128x128xbf16, #tpu.memory_space<vmem>>, vector<128x128xbf16>
    tpu.vector_store %arg5[%c0_6, %c0_7], %8 {strides = array<i32>} : memref<128x128xbf16, #tpu.memory_space<vmem>>, vector<128x128xbf16>,
    return
  }
  func.func @transform_0(%arg0: i32, %arg1: i32) -> (i32, i32) {
    %c0_i32 = arith.constant 0 : i32
    %c0_i32_0 = arith.constant 0 : i32
    return %arg0, %c0_i32 : i32, i32
  }
  func.func @transform_1(%arg0: i32, %arg1: i32) -> (i32, i32) {
    %c0_i32 = arith.constant 0 : i32
    %c0_i32_0 = arith.constant 0 : i32
    return %c0_i32, %arg1 : i32, i32
  }
  func.func @transform_2(%arg0: i32, %arg1: i32) -> (i32, i32) {
    %c0_i32 = arith.constant 0 : i32
    %c0_i32_0 = arith.constant 0 : i32
    return %c0_i32, %arg1 : i32, i32
  }
  func.func @transform_3(%arg0: i32, %arg1: i32) -> (i32, i32) {
    %c0_i32 = arith.constant 0 : i32
    return %arg0, %arg1 : i32, i32
  }
}

module attributes {stable_mosaic.version = 11 : i64} {
  func.func @_maxpool9_kernel(%arg0: i32, %arg1: memref<9x64x128xbf16, #tpu.memory_space<vmem>>, %arg2: memref<64x128xbf16, #tpu.memory_space<vmem>>) attributes {dimension_semantics = [#tpu.dimension_semantics<parallel>], iteration_bounds = array<i64: 1>, scalar_prefetch = 0 : i64, scratch_operands = 0 : i64, tpu.core_type = #tpu.core_type<tc>, window_params = [{transform_indices = @transform_0, window_bounds = array<i64: 9, 64, 128>}, {transform_indices = @transform_1, window_bounds = array<i64: 64, 128>}]} {
    %c0 = arith.constant 0 : index
    %c0_0 = arith.constant 0 : index
    %c0_1 = arith.constant 0 : index
    %0 = vector.load %arg1[%c0, %c0_0, %c0_1] : memref<9x64x128xbf16, #tpu.memory_space<vmem>>, vector<9x64x128xbf16>
    %1 = vector.extract_strided_slice %0 {offsets = [0, 0, 0], sizes = [1, 64, 128], strides = [1, 1, 1]} : vector<9x64x128xbf16> to vector<1x64x128xbf16>
    %2 = vector.shape_cast %1 : vector<1x64x128xbf16> to vector<64x128xbf16>
    %3 = vector.extract_strided_slice %0 {offsets = [1, 0, 0], sizes = [1, 64, 128], strides = [1, 1, 1]} : vector<9x64x128xbf16> to vector<1x64x128xbf16>
    %4 = vector.shape_cast %3 : vector<1x64x128xbf16> to vector<64x128xbf16>
    %5 = arith.maximumf %2, %4 : vector<64x128xbf16>
    %6 = vector.extract_strided_slice %0 {offsets = [2, 0, 0], sizes = [1, 64, 128], strides = [1, 1, 1]} : vector<9x64x128xbf16> to vector<1x64x128xbf16>
    %7 = vector.shape_cast %6 : vector<1x64x128xbf16> to vector<64x128xbf16>
    %8 = vector.extract_strided_slice %0 {offsets = [3, 0, 0], sizes = [1, 64, 128], strides = [1, 1, 1]} : vector<9x64x128xbf16> to vector<1x64x128xbf16>
    %9 = vector.shape_cast %8 : vector<1x64x128xbf16> to vector<64x128xbf16>
    %10 = arith.maximumf %7, %9 : vector<64x128xbf16>
    %11 = vector.extract_strided_slice %0 {offsets = [4, 0, 0], sizes = [1, 64, 128], strides = [1, 1, 1]} : vector<9x64x128xbf16> to vector<1x64x128xbf16>
    %12 = vector.shape_cast %11 : vector<1x64x128xbf16> to vector<64x128xbf16>
    %13 = vector.extract_strided_slice %0 {offsets = [5, 0, 0], sizes = [1, 64, 128], strides = [1, 1, 1]} : vector<9x64x128xbf16> to vector<1x64x128xbf16>
    %14 = vector.shape_cast %13 : vector<1x64x128xbf16> to vector<64x128xbf16>
    %15 = arith.maximumf %12, %14 : vector<64x128xbf16>
    %16 = vector.extract_strided_slice %0 {offsets = [6, 0, 0], sizes = [1, 64, 128], strides = [1, 1, 1]} : vector<9x64x128xbf16> to vector<1x64x128xbf16>
    %17 = vector.shape_cast %16 : vector<1x64x128xbf16> to vector<64x128xbf16>
    %18 = vector.extract_strided_slice %0 {offsets = [7, 0, 0], sizes = [1, 64, 128], strides = [1, 1, 1]} : vector<9x64x128xbf16> to vector<1x64x128xbf16>
    %19 = vector.shape_cast %18 : vector<1x64x128xbf16> to vector<64x128xbf16>
    %20 = arith.maximumf %17, %19 : vector<64x128xbf16>
    %21 = arith.maximumf %5, %10 : vector<64x128xbf16>
    %22 = arith.maximumf %15, %20 : vector<64x128xbf16>
    %23 = arith.maximumf %21, %22 : vector<64x128xbf16>
    %24 = vector.extract_strided_slice %0 {offsets = [8, 0, 0], sizes = [1, 64, 128], strides = [1, 1, 1]} : vector<9x64x128xbf16> to vector<1x64x128xbf16>
    %25 = vector.shape_cast %24 : vector<1x64x128xbf16> to vector<64x128xbf16>
    %26 = arith.maximumf %23, %25 : vector<64x128xbf16>
    %c0_2 = arith.constant 0 : index
    %c0_3 = arith.constant 0 : index
    %27 = vector.load %arg2[%c0_2, %c0_3] : memref<64x128xbf16, #tpu.memory_space<vmem>>, vector<64x128xbf16>
    tpu.vector_store %arg2[%c0_2, %c0_3], %26 {strides = array<i32>} : memref<64x128xbf16, #tpu.memory_space<vmem>>, vector<64x128xbf16>,
    return
  }
  func.func @transform_0(%arg0: i32) -> (i32, i32, i32) {
    %c0_i32 = arith.constant 0 : i32
    %c0_i32_0 = arith.constant 0 : i32
    %c0_i32_1 = arith.constant 0 : i32
    return %c0_i32, %arg0, %c0_i32_0 : i32, i32, i32
  }
  func.func @transform_1(%arg0: i32) -> (i32, i32) {
    %c0_i32 = arith.constant 0 : i32
    %c0_i32_0 = arith.constant 0 : i32
    return %arg0, %c0_i32 : i32, i32
  }
}

module attributes {stable_mosaic.version = 11 : i64} {
  func.func @_mm_bias_relu_kernel(%arg0: i32, %arg1: i32, %arg2: memref<128x1664xbf16, #tpu.memory_space<vmem>>, %arg3: memref<1664x256xbf16, #tpu.memory_space<vmem>>, %arg4: memref<1x256xf32, #tpu.memory_space<vmem>>, %arg5: memref<128x256xbf16, #tpu.memory_space<vmem>>) attributes {dimension_semantics = [#tpu.dimension_semantics<parallel>, #tpu.dimension_semantics<parallel>], iteration_bounds = array<i64: 1, 1>, scalar_prefetch = 0 : i64, scratch_operands = 0 : i64, tpu.core_type = #tpu.core_type<tc>, window_params = [{transform_indices = @transform_0, window_bounds = array<i64: 128, 1664>}, {transform_indices = @transform_1, window_bounds = array<i64: 1664, 256>}, {transform_indices = @transform_2, window_bounds = array<i64: 1, 256>}, {transform_indices = @transform_3, window_bounds = array<i64: 128, 256>}]} {
    %c0 = arith.constant 0 : index
    %c0_0 = arith.constant 0 : index
    %0 = vector.load %arg2[%c0, %c0_0] : memref<128x1664xbf16, #tpu.memory_space<vmem>>, vector<128x1664xbf16>
    %c0_1 = arith.constant 0 : index
    %c0_2 = arith.constant 0 : index
    %1 = vector.load %arg3[%c0_1, %c0_2] : memref<1664x256xbf16, #tpu.memory_space<vmem>>, vector<1664x256xbf16>
    %cst = arith.constant dense<0.000000e+00> : vector<128x256xf32>
    %2 = tpu.matmul %0, %1, %cst {dimension_numbers = #tpu.dot_dimension_numbers<[1], [0], [0], [1], [0, 0, 1, 1], [], []>} : vector<128x1664xbf16>, vector<1664x256xbf16>, vector<128x256xf32> -> vector<128x256xf32>
    %c0_3 = arith.constant 0 : index
    %c0_4 = arith.constant 0 : index
    %3 = vector.load %arg4[%c0_3, %c0_4] : memref<1x256xf32, #tpu.memory_space<vmem>>, vector<1x256xf32>
    %4 = vector.broadcast %3 : vector<1x256xf32> to vector<128x256xf32>
    %5 = arith.addf %2, %4 : vector<128x256xf32>
    %cst_5 = arith.constant 0.000000e+00 : f32
    %6 = vector.broadcast %cst_5 : f32 to vector<128x256xf32>
    %7 = arith.maximumf %5, %6 : vector<128x256xf32>
    %8 = arith.truncf %7 : vector<128x256xf32> to vector<128x256xbf16>
    %c0_6 = arith.constant 0 : index
    %c0_7 = arith.constant 0 : index
    %9 = vector.load %arg5[%c0_6, %c0_7] : memref<128x256xbf16, #tpu.memory_space<vmem>>, vector<128x256xbf16>
    tpu.vector_store %arg5[%c0_6, %c0_7], %8 {strides = array<i32>} : memref<128x256xbf16, #tpu.memory_space<vmem>>, vector<128x256xbf16>,
    return
  }
  func.func @transform_0(%arg0: i32, %arg1: i32) -> (i32, i32) {
    %c0_i32 = arith.constant 0 : i32
    %c0_i32_0 = arith.constant 0 : i32
    return %arg0, %c0_i32 : i32, i32
  }
  func.func @transform_1(%arg0: i32, %arg1: i32) -> (i32, i32) {
    %c0_i32 = arith.constant 0 : i32
    %c0_i32_0 = arith.constant 0 : i32
    return %c0_i32, %arg1 : i32, i32
  }
  func.func @transform_2(%arg0: i32, %arg1: i32) -> (i32, i32) {
    %c0_i32 = arith.constant 0 : i32
    %c0_i32_0 = arith.constant 0 : i32
    return %c0_i32, %arg1 : i32, i32
  }
  func.func @transform_3(%arg0: i32, %arg1: i32) -> (i32, i32) {
    %c0_i32 = arith.constant 0 : i32
    return %arg0, %arg1 : i32, i32
  }
}

module attributes {stable_mosaic.version = 11 : i64} {
  func.func @_maxpool9_kernel(%arg0: i32, %arg1: memref<9x32x128xbf16, #tpu.memory_space<vmem>>, %arg2: memref<32x128xbf16, #tpu.memory_space<vmem>>) attributes {dimension_semantics = [#tpu.dimension_semantics<parallel>], iteration_bounds = array<i64: 1>, scalar_prefetch = 0 : i64, scratch_operands = 0 : i64, tpu.core_type = #tpu.core_type<tc>, window_params = [{transform_indices = @transform_0, window_bounds = array<i64: 9, 32, 128>}, {transform_indices = @transform_1, window_bounds = array<i64: 32, 128>}]} {
    %c0 = arith.constant 0 : index
    %c0_0 = arith.constant 0 : index
    %c0_1 = arith.constant 0 : index
    %0 = vector.load %arg1[%c0, %c0_0, %c0_1] : memref<9x32x128xbf16, #tpu.memory_space<vmem>>, vector<9x32x128xbf16>
    %1 = vector.extract_strided_slice %0 {offsets = [0, 0, 0], sizes = [1, 32, 128], strides = [1, 1, 1]} : vector<9x32x128xbf16> to vector<1x32x128xbf16>
    %2 = vector.shape_cast %1 : vector<1x32x128xbf16> to vector<32x128xbf16>
    %3 = vector.extract_strided_slice %0 {offsets = [1, 0, 0], sizes = [1, 32, 128], strides = [1, 1, 1]} : vector<9x32x128xbf16> to vector<1x32x128xbf16>
    %4 = vector.shape_cast %3 : vector<1x32x128xbf16> to vector<32x128xbf16>
    %5 = arith.maximumf %2, %4 : vector<32x128xbf16>
    %6 = vector.extract_strided_slice %0 {offsets = [2, 0, 0], sizes = [1, 32, 128], strides = [1, 1, 1]} : vector<9x32x128xbf16> to vector<1x32x128xbf16>
    %7 = vector.shape_cast %6 : vector<1x32x128xbf16> to vector<32x128xbf16>
    %8 = vector.extract_strided_slice %0 {offsets = [3, 0, 0], sizes = [1, 32, 128], strides = [1, 1, 1]} : vector<9x32x128xbf16> to vector<1x32x128xbf16>
    %9 = vector.shape_cast %8 : vector<1x32x128xbf16> to vector<32x128xbf16>
    %10 = arith.maximumf %7, %9 : vector<32x128xbf16>
    %11 = vector.extract_strided_slice %0 {offsets = [4, 0, 0], sizes = [1, 32, 128], strides = [1, 1, 1]} : vector<9x32x128xbf16> to vector<1x32x128xbf16>
    %12 = vector.shape_cast %11 : vector<1x32x128xbf16> to vector<32x128xbf16>
    %13 = vector.extract_strided_slice %0 {offsets = [5, 0, 0], sizes = [1, 32, 128], strides = [1, 1, 1]} : vector<9x32x128xbf16> to vector<1x32x128xbf16>
    %14 = vector.shape_cast %13 : vector<1x32x128xbf16> to vector<32x128xbf16>
    %15 = arith.maximumf %12, %14 : vector<32x128xbf16>
    %16 = vector.extract_strided_slice %0 {offsets = [6, 0, 0], sizes = [1, 32, 128], strides = [1, 1, 1]} : vector<9x32x128xbf16> to vector<1x32x128xbf16>
    %17 = vector.shape_cast %16 : vector<1x32x128xbf16> to vector<32x128xbf16>
    %18 = vector.extract_strided_slice %0 {offsets = [7, 0, 0], sizes = [1, 32, 128], strides = [1, 1, 1]} : vector<9x32x128xbf16> to vector<1x32x128xbf16>
    %19 = vector.shape_cast %18 : vector<1x32x128xbf16> to vector<32x128xbf16>
    %20 = arith.maximumf %17, %19 : vector<32x128xbf16>
    %21 = arith.maximumf %5, %10 : vector<32x128xbf16>
    %22 = arith.maximumf %15, %20 : vector<32x128xbf16>
    %23 = arith.maximumf %21, %22 : vector<32x128xbf16>
    %24 = vector.extract_strided_slice %0 {offsets = [8, 0, 0], sizes = [1, 32, 128], strides = [1, 1, 1]} : vector<9x32x128xbf16> to vector<1x32x128xbf16>
    %25 = vector.shape_cast %24 : vector<1x32x128xbf16> to vector<32x128xbf16>
    %26 = arith.maximumf %23, %25 : vector<32x128xbf16>
    %c0_2 = arith.constant 0 : index
    %c0_3 = arith.constant 0 : index
    %27 = vector.load %arg2[%c0_2, %c0_3] : memref<32x128xbf16, #tpu.memory_space<vmem>>, vector<32x128xbf16>
    tpu.vector_store %arg2[%c0_2, %c0_3], %26 {strides = array<i32>} : memref<32x128xbf16, #tpu.memory_space<vmem>>, vector<32x128xbf16>,
    return
  }
  func.func @transform_0(%arg0: i32) -> (i32, i32, i32) {
    %c0_i32 = arith.constant 0 : i32
    %c0_i32_0 = arith.constant 0 : i32
    %c0_i32_1 = arith.constant 0 : i32
    return %c0_i32, %arg0, %c0_i32_0 : i32, i32, i32
  }
  func.func @transform_1(%arg0: i32) -> (i32, i32) {
    %c0_i32 = arith.constant 0 : i32
    %c0_i32_0 = arith.constant 0 : i32
    return %arg0, %c0_i32 : i32, i32
  }
}

module attributes {stable_mosaic.version = 11 : i64} {
  func.func @_mm_bias_relu_kernel(%arg0: i32, %arg1: i32, %arg2: memref<32x1792xbf16, #tpu.memory_space<vmem>>, %arg3: memref<1792x384xbf16, #tpu.memory_space<vmem>>, %arg4: memref<1x384xf32, #tpu.memory_space<vmem>>, %arg5: memref<32x384xbf16, #tpu.memory_space<vmem>>) attributes {dimension_semantics = [#tpu.dimension_semantics<parallel>, #tpu.dimension_semantics<parallel>], iteration_bounds = array<i64: 1, 1>, scalar_prefetch = 0 : i64, scratch_operands = 0 : i64, tpu.core_type = #tpu.core_type<tc>, window_params = [{transform_indices = @transform_0, window_bounds = array<i64: 32, 1792>}, {transform_indices = @transform_1, window_bounds = array<i64: 1792, 384>}, {transform_indices = @transform_2, window_bounds = array<i64: 1, 384>}, {transform_indices = @transform_3, window_bounds = array<i64: 32, 384>}]} {
    %c0 = arith.constant 0 : index
    %c0_0 = arith.constant 0 : index
    %0 = vector.load %arg2[%c0, %c0_0] : memref<32x1792xbf16, #tpu.memory_space<vmem>>, vector<32x1792xbf16>
    %c0_1 = arith.constant 0 : index
    %c0_2 = arith.constant 0 : index
    %1 = vector.load %arg3[%c0_1, %c0_2] : memref<1792x384xbf16, #tpu.memory_space<vmem>>, vector<1792x384xbf16>
    %cst = arith.constant dense<0.000000e+00> : vector<32x384xf32>
    %2 = tpu.matmul %0, %1, %cst {dimension_numbers = #tpu.dot_dimension_numbers<[1], [0], [0], [1], [0, 0, 1, 1], [], []>} : vector<32x1792xbf16>, vector<1792x384xbf16>, vector<32x384xf32> -> vector<32x384xf32>
    %c0_3 = arith.constant 0 : index
    %c0_4 = arith.constant 0 : index
    %3 = vector.load %arg4[%c0_3, %c0_4] : memref<1x384xf32, #tpu.memory_space<vmem>>, vector<1x384xf32>
    %4 = vector.broadcast %3 : vector<1x384xf32> to vector<32x384xf32>
    %5 = arith.addf %2, %4 : vector<32x384xf32>
    %cst_5 = arith.constant 0.000000e+00 : f32
    %6 = vector.broadcast %cst_5 : f32 to vector<32x384xf32>
    %7 = arith.maximumf %5, %6 : vector<32x384xf32>
    %8 = arith.truncf %7 : vector<32x384xf32> to vector<32x384xbf16>
    %c0_6 = arith.constant 0 : index
    %c0_7 = arith.constant 0 : index
    %9 = vector.load %arg5[%c0_6, %c0_7] : memref<32x384xbf16, #tpu.memory_space<vmem>>, vector<32x384xbf16>
    tpu.vector_store %arg5[%c0_6, %c0_7], %8 {strides = array<i32>} : memref<32x384xbf16, #tpu.memory_space<vmem>>, vector<32x384xbf16>,
    return
  }
  func.func @transform_0(%arg0: i32, %arg1: i32) -> (i32, i32) {
    %c0_i32 = arith.constant 0 : i32
    %c0_i32_0 = arith.constant 0 : i32
    return %arg0, %c0_i32 : i32, i32
  }
  func.func @transform_1(%arg0: i32, %arg1: i32) -> (i32, i32) {
    %c0_i32 = arith.constant 0 : i32
    %c0_i32_0 = arith.constant 0 : i32
    return %c0_i32, %arg1 : i32, i32
  }
  func.func @transform_2(%arg0: i32, %arg1: i32) -> (i32, i32) {
    %c0_i32 = arith.constant 0 : i32
    %c0_i32_0 = arith.constant 0 : i32
    return %c0_i32, %arg1 : i32, i32
  }
  func.func @transform_3(%arg0: i32, %arg1: i32) -> (i32, i32) {
    %c0_i32 = arith.constant 0 : i32
    return %arg0, %arg1 : i32, i32
  }
}

module attributes {stable_mosaic.version = 11 : i64} {
  func.func @_mm_bias_relu_kernel(%arg0: i32, %arg1: i32, %arg2: memref<32x3456xbf16, #tpu.memory_space<vmem>>, %arg3: memref<3456x256xbf16, #tpu.memory_space<vmem>>, %arg4: memref<1x256xf32, #tpu.memory_space<vmem>>, %arg5: memref<32x256xbf16, #tpu.memory_space<vmem>>) attributes {dimension_semantics = [#tpu.dimension_semantics<parallel>, #tpu.dimension_semantics<parallel>], iteration_bounds = array<i64: 1, 1>, scalar_prefetch = 0 : i64, scratch_operands = 0 : i64, tpu.core_type = #tpu.core_type<tc>, window_params = [{transform_indices = @transform_0, window_bounds = array<i64: 32, 3456>}, {transform_indices = @transform_1, window_bounds = array<i64: 3456, 256>}, {transform_indices = @transform_2, window_bounds = array<i64: 1, 256>}, {transform_indices = @transform_3, window_bounds = array<i64: 32, 256>}]} {
    %c0 = arith.constant 0 : index
    %c0_0 = arith.constant 0 : index
    %0 = vector.load %arg2[%c0, %c0_0] : memref<32x3456xbf16, #tpu.memory_space<vmem>>, vector<32x3456xbf16>
    %c0_1 = arith.constant 0 : index
    %c0_2 = arith.constant 0 : index
    %1 = vector.load %arg3[%c0_1, %c0_2] : memref<3456x256xbf16, #tpu.memory_space<vmem>>, vector<3456x256xbf16>
    %cst = arith.constant dense<0.000000e+00> : vector<32x256xf32>
    %2 = tpu.matmul %0, %1, %cst {dimension_numbers = #tpu.dot_dimension_numbers<[1], [0], [0], [1], [0, 0, 1, 1], [], []>} : vector<32x3456xbf16>, vector<3456x256xbf16>, vector<32x256xf32> -> vector<32x256xf32>
    %c0_3 = arith.constant 0 : index
    %c0_4 = arith.constant 0 : index
    %3 = vector.load %arg4[%c0_3, %c0_4] : memref<1x256xf32, #tpu.memory_space<vmem>>, vector<1x256xf32>
    %4 = vector.broadcast %3 : vector<1x256xf32> to vector<32x256xf32>
    %5 = arith.addf %2, %4 : vector<32x256xf32>
    %cst_5 = arith.constant 0.000000e+00 : f32
    %6 = vector.broadcast %cst_5 : f32 to vector<32x256xf32>
    %7 = arith.maximumf %5, %6 : vector<32x256xf32>
    %8 = arith.truncf %7 : vector<32x256xf32> to vector<32x256xbf16>
    %c0_6 = arith.constant 0 : index
    %c0_7 = arith.constant 0 : index
    %9 = vector.load %arg5[%c0_6, %c0_7] : memref<32x256xbf16, #tpu.memory_space<vmem>>, vector<32x256xbf16>
    tpu.vector_store %arg5[%c0_6, %c0_7], %8 {strides = array<i32>} : memref<32x256xbf16, #tpu.memory_space<vmem>>, vector<32x256xbf16>,
    return
  }
  func.func @transform_0(%arg0: i32, %arg1: i32) -> (i32, i32) {
    %c0_i32 = arith.constant 0 : i32
    %c0_i32_0 = arith.constant 0 : i32
    return %arg0, %c0_i32 : i32, i32
  }
  func.func @transform_1(%arg0: i32, %arg1: i32) -> (i32, i32) {
    %c0_i32 = arith.constant 0 : i32
    %c0_i32_0 = arith.constant 0 : i32
    return %c0_i32, %arg1 : i32, i32
  }
  func.func @transform_2(%arg0: i32, %arg1: i32) -> (i32, i32) {
    %c0_i32 = arith.constant 0 : i32
    %c0_i32_0 = arith.constant 0 : i32
    return %c0_i32, %arg1 : i32, i32
  }
  func.func @transform_3(%arg0: i32, %arg1: i32) -> (i32, i32) {
    %c0_i32 = arith.constant 0 : i32
    return %arg0, %arg1 : i32, i32
  }
}

module attributes {stable_mosaic.version = 11 : i64} {
  func.func @_mm_bias_relu_kernel(%arg0: i32, %arg1: i32, %arg2: memref<32x2304xbf16, #tpu.memory_space<vmem>>, %arg3: memref<2304x256xbf16, #tpu.memory_space<vmem>>, %arg4: memref<1x256xf32, #tpu.memory_space<vmem>>, %arg5: memref<32x256xbf16, #tpu.memory_space<vmem>>) attributes {dimension_semantics = [#tpu.dimension_semantics<parallel>, #tpu.dimension_semantics<parallel>], iteration_bounds = array<i64: 1, 1>, scalar_prefetch = 0 : i64, scratch_operands = 0 : i64, tpu.core_type = #tpu.core_type<tc>, window_params = [{transform_indices = @transform_0, window_bounds = array<i64: 32, 2304>}, {transform_indices = @transform_1, window_bounds = array<i64: 2304, 256>}, {transform_indices = @transform_2, window_bounds = array<i64: 1, 256>}, {transform_indices = @transform_3, window_bounds = array<i64: 32, 256>}]} {
    %c0 = arith.constant 0 : index
    %c0_0 = arith.constant 0 : index
    %0 = vector.load %arg2[%c0, %c0_0] : memref<32x2304xbf16, #tpu.memory_space<vmem>>, vector<32x2304xbf16>
    %c0_1 = arith.constant 0 : index
    %c0_2 = arith.constant 0 : index
    %1 = vector.load %arg3[%c0_1, %c0_2] : memref<2304x256xbf16, #tpu.memory_space<vmem>>, vector<2304x256xbf16>
    %cst = arith.constant dense<0.000000e+00> : vector<32x256xf32>
    %2 = tpu.matmul %0, %1, %cst {dimension_numbers = #tpu.dot_dimension_numbers<[1], [0], [0], [1], [0, 0, 1, 1], [], []>} : vector<32x2304xbf16>, vector<2304x256xbf16>, vector<32x256xf32> -> vector<32x256xf32>
    %c0_3 = arith.constant 0 : index
    %c0_4 = arith.constant 0 : index
    %3 = vector.load %arg4[%c0_3, %c0_4] : memref<1x256xf32, #tpu.memory_space<vmem>>, vector<1x256xf32>
    %4 = vector.broadcast %3 : vector<1x256xf32> to vector<32x256xf32>
    %5 = arith.addf %2, %4 : vector<32x256xf32>
    %cst_5 = arith.constant 0.000000e+00 : f32
    %6 = vector.broadcast %cst_5 : f32 to vector<32x256xf32>
    %7 = arith.maximumf %5, %6 : vector<32x256xf32>
    %8 = arith.truncf %7 : vector<32x256xf32> to vector<32x256xbf16>
    %c0_6 = arith.constant 0 : index
    %c0_7 = arith.constant 0 : index
    %9 = vector.load %arg5[%c0_6, %c0_7] : memref<32x256xbf16, #tpu.memory_space<vmem>>, vector<32x256xbf16>
    tpu.vector_store %arg5[%c0_6, %c0_7], %8 {strides = array<i32>} : memref<32x256xbf16, #tpu.memory_space<vmem>>, vector<32x256xbf16>,
    return
  }
  func.func @transform_0(%arg0: i32, %arg1: i32) -> (i32, i32) {
    %c0_i32 = arith.constant 0 : i32
    %c0_i32_0 = arith.constant 0 : i32
    return %arg0, %c0_i32 : i32, i32
  }
  func.func @transform_1(%arg0: i32, %arg1: i32) -> (i32, i32) {
    %c0_i32 = arith.constant 0 : i32
    %c0_i32_0 = arith.constant 0 : i32
    return %c0_i32, %arg1 : i32, i32
  }
  func.func @transform_2(%arg0: i32, %arg1: i32) -> (i32, i32) {
    %c0_i32 = arith.constant 0 : i32
    %c0_i32_0 = arith.constant 0 : i32
    return %c0_i32, %arg1 : i32, i32
  }
  func.func @transform_3(%arg0: i32, %arg1: i32) -> (i32, i32) {
    %c0_i32 = arith.constant 0 : i32
    return %arg0, %arg1 : i32, i32
  }
}

module attributes {stable_mosaic.version = 11 : i64} {
  func.func @_maxpool9_kernel(%arg0: i32, %arg1: memref<9x16x128xbf16, #tpu.memory_space<vmem>>, %arg2: memref<16x128xbf16, #tpu.memory_space<vmem>>) attributes {dimension_semantics = [#tpu.dimension_semantics<parallel>], iteration_bounds = array<i64: 1>, scalar_prefetch = 0 : i64, scratch_operands = 0 : i64, tpu.core_type = #tpu.core_type<tc>, window_params = [{transform_indices = @transform_0, window_bounds = array<i64: 9, 16, 128>}, {transform_indices = @transform_1, window_bounds = array<i64: 16, 128>}]} {
    %c0 = arith.constant 0 : index
    %c0_0 = arith.constant 0 : index
    %c0_1 = arith.constant 0 : index
    %0 = vector.load %arg1[%c0, %c0_0, %c0_1] : memref<9x16x128xbf16, #tpu.memory_space<vmem>>, vector<9x16x128xbf16>
    %1 = vector.extract_strided_slice %0 {offsets = [0, 0, 0], sizes = [1, 16, 128], strides = [1, 1, 1]} : vector<9x16x128xbf16> to vector<1x16x128xbf16>
    %2 = vector.shape_cast %1 : vector<1x16x128xbf16> to vector<16x128xbf16>
    %3 = vector.extract_strided_slice %0 {offsets = [1, 0, 0], sizes = [1, 16, 128], strides = [1, 1, 1]} : vector<9x16x128xbf16> to vector<1x16x128xbf16>
    %4 = vector.shape_cast %3 : vector<1x16x128xbf16> to vector<16x128xbf16>
    %5 = arith.maximumf %2, %4 : vector<16x128xbf16>
    %6 = vector.extract_strided_slice %0 {offsets = [2, 0, 0], sizes = [1, 16, 128], strides = [1, 1, 1]} : vector<9x16x128xbf16> to vector<1x16x128xbf16>
    %7 = vector.shape_cast %6 : vector<1x16x128xbf16> to vector<16x128xbf16>
    %8 = vector.extract_strided_slice %0 {offsets = [3, 0, 0], sizes = [1, 16, 128], strides = [1, 1, 1]} : vector<9x16x128xbf16> to vector<1x16x128xbf16>
    %9 = vector.shape_cast %8 : vector<1x16x128xbf16> to vector<16x128xbf16>
    %10 = arith.maximumf %7, %9 : vector<16x128xbf16>
    %11 = vector.extract_strided_slice %0 {offsets = [4, 0, 0], sizes = [1, 16, 128], strides = [1, 1, 1]} : vector<9x16x128xbf16> to vector<1x16x128xbf16>
    %12 = vector.shape_cast %11 : vector<1x16x128xbf16> to vector<16x128xbf16>
    %13 = vector.extract_strided_slice %0 {offsets = [5, 0, 0], sizes = [1, 16, 128], strides = [1, 1, 1]} : vector<9x16x128xbf16> to vector<1x16x128xbf16>
    %14 = vector.shape_cast %13 : vector<1x16x128xbf16> to vector<16x128xbf16>
    %15 = arith.maximumf %12, %14 : vector<16x128xbf16>
    %16 = vector.extract_strided_slice %0 {offsets = [6, 0, 0], sizes = [1, 16, 128], strides = [1, 1, 1]} : vector<9x16x128xbf16> to vector<1x16x128xbf16>
    %17 = vector.shape_cast %16 : vector<1x16x128xbf16> to vector<16x128xbf16>
    %18 = vector.extract_strided_slice %0 {offsets = [7, 0, 0], sizes = [1, 16, 128], strides = [1, 1, 1]} : vector<9x16x128xbf16> to vector<1x16x128xbf16>
    %19 = vector.shape_cast %18 : vector<1x16x128xbf16> to vector<16x128xbf16>
    %20 = arith.maximumf %17, %19 : vector<16x128xbf16>
    %21 = arith.maximumf %5, %10 : vector<16x128xbf16>
    %22 = arith.maximumf %15, %20 : vector<16x128xbf16>
    %23 = arith.maximumf %21, %22 : vector<16x128xbf16>
    %24 = vector.extract_strided_slice %0 {offsets = [8, 0, 0], sizes = [1, 16, 128], strides = [1, 1, 1]} : vector<9x16x128xbf16> to vector<1x16x128xbf16>
    %25 = vector.shape_cast %24 : vector<1x16x128xbf16> to vector<16x128xbf16>
    %26 = arith.maximumf %23, %25 : vector<16x128xbf16>
    %c0_2 = arith.constant 0 : index
    %c0_3 = arith.constant 0 : index
    %27 = vector.load %arg2[%c0_2, %c0_3] : memref<16x128xbf16, #tpu.memory_space<vmem>>, vector<16x128xbf16>
    tpu.vector_store %arg2[%c0_2, %c0_3], %26 {strides = array<i32>} : memref<16x128xbf16, #tpu.memory_space<vmem>>, vector<16x128xbf16>,
    return
  }
  func.func @transform_0(%arg0: i32) -> (i32, i32, i32) {
    %c0_i32 = arith.constant 0 : i32
    %c0_i32_0 = arith.constant 0 : i32
    %c0_i32_1 = arith.constant 0 : i32
    return %c0_i32, %arg0, %c0_i32_0 : i32, i32, i32
  }
  func.func @transform_1(%arg0: i32) -> (i32, i32) {
    %c0_i32 = arith.constant 0 : i32
    %c0_i32_0 = arith.constant 0 : i32
    return %arg0, %c0_i32 : i32, i32
  }
}

</mosaic_0001>

<llo_original>
// kernel: alexnet_forward.8
$region0: #{alexnet_forward.8}
  #allocation0 [shape = 'u32[]', space=smem, size = 0x4, offset = 0x4, fixed_abs, tag = 'smem constant byte address 0x4 - core index']
  #allocation1 [shape = 'u32[144,128]{1,0:T(1,128)}', space=vmem, size = 0x12000, scoped, tag = 'internal scratch']
  %s0 = inlined_call_operand.vmem [shape: bf16[512,384], index: 0, kind: input, shape index: {}]
  %s1 = inlined_call_operand.vmem [shape: bf16[384,128], index: 1, kind: input, shape index: {}]
  %s2 = inlined_call_operand.vmem [shape: f32[1,128], index: 2, kind: input, shape index: {}]
  %s3 = inlined_call_operand.vmem [shape: bf16[512,128], index: 3, kind: output, shape index: {}]
  %s4 = sld [smem:[#allocation0]]
  $region45: #{alexnet_forward.8} parent=0
    _
  %s6 = ssub.s32 1, %s4
  %s7 = scalar_select 0, %s6, %s4
  loop: start=0, step=1, limit=6
  $region2: #{alexnet_forward.8} parent=0 // loop_pre_header
    _
  $region3: #{alexnet_forward.8} parent=0 // loop_header
    %s9 = sphi 0, %s13
    %p10 = scmp.ge.s32.totalorder %s9, 6
    %s16 = sphi 0, %s28
    %s17 = sphi 0, %s24
    %s18 = sphi 0, %s16
    %s19 = sphi 0, %s17
    %s20 = sphi 0, %s18
    %s21 = sphi 0, %s19
    %s31 = sphi 0, %s33
    %s34 = sphi 0, %s31
    %s35 = sphi 0, %s34
    %s51 = sphi 0, %s35
    %s57 = sphi 0, %s59
    %s60 = sphi 0, %s57
    %s61 = sphi 0, %s60
    %s77 = sphi 0, %s61
    %s83 = sphi 0, %s85
    %s86 = sphi 0, %s83
    %s87 = sphi 0, %s86
    %s103 = sphi 0, %s87
    %s111 = sphi 0, %s113
    %s114 = sphi 0, %s111
    %s115 = sphi 0, %s114
    %s131 = sphi 0, %s115
  $region4: #{alexnet_forward.8} parent=0 // loop_header_branch
    %12 = sbr.rel (%p10) target = $region8
  $region5: #{alexnet_forward.8} parent=0 // loop_body
    %s14 = ssub.s32 %s9, 1
    %s15 = ssub.s32 %s9, 2
    %s22 = sadd.s32 1, %s17
    %p23 = scmp.ge.s32.totalorder %s22, 1
    %s24 = scalar_select %p23, 0, %s22
    %s25 = sadd.s32 1, %s16
    %s26 = scalar_select %p23, %s25, %s16
    %p27 = scmp.ge.s32.totalorder %s26, 4
    %s28 = scalar_select %p27, 0, %s26
    %s29 = ssub.s32 %s16, %s28
    %p30 = scmp.eq.s32.totalorder %s29, 0
    %s32 = sadd.s32 %s31, 1
    %s33 = scalar_select %p30, %s31, %s32
    %p36 = pneg %p30
    %p37 = scmp.eq.s32.totalorder %s9, 3
    %p38 = por %p36, %p37
    %p39 = scmp.ne.s32.totalorder %s31, %s34
    %p40 = scmp.eq.s32.totalorder %s9, 0
    %p41 = por %p39, %p40
    %p42 = scmp.ne.s32.totalorder %s31, %s34
    %p43 = scmp.eq.s32.totalorder %s14, 3
    %p44 = por %p42, %p43
    %p45 = scmp.ne.s32.totalorder %s34, %s35
    %p46 = scmp.eq.s32.totalorder %s14, 0
    %p47 = por %p45, %p46
    %p48 = scmp.ne.s32.totalorder %s34, %s35
    %p49 = scmp.eq.s32.totalorder %s15, 3
    %p50 = por %p48, %p49
    %p52 = scmp.ne.s32.totalorder %s35, %s51
    %p53 = scmp.eq.s32.totalorder %s15, 0
    %p54 = por %p52, %p53
    %s55 = ssub.s32 %s17, %s24
    %p56 = scmp.eq.s32.totalorder %s55, 0
    %s58 = sadd.s32 %s57, 1
    %s59 = scalar_select %p56, %s57, %s58
    %p62 = pneg %p56
    %p63 = scmp.eq.s32.totalorder %s9, 3
    %p64 = por %p62, %p63
    %p65 = scmp.ne.s32.totalorder %s57, %s60
    %p66 = scmp.eq.s32.totalorder %s9, 0
    %p67 = por %p65, %p66
    %p68 = scmp.ne.s32.totalorder %s57, %s60
    %p69 = scmp.eq.s32.totalorder %s14, 3
    %p70 = por %p68, %p69
    %p71 = scmp.ne.s32.totalorder %s60, %s61
    %p72 = scmp.eq.s32.totalorder %s14, 0
    %p73 = por %p71, %p72
    %p74 = scmp.ne.s32.totalorder %s60, %s61
    %p75 = scmp.eq.s32.totalorder %s15, 3
    %p76 = por %p74, %p75
    %p78 = scmp.ne.s32.totalorder %s61, %s77
    %p79 = scmp.eq.s32.totalorder %s15, 0
    %p80 = por %p78, %p79
    %s81 = ssub.s32 %s17, %s24
    %p82 = scmp.eq.s32.totalorder %s81, 0
    %s84 = sadd.s32 %s83, 1
    %s85 = scalar_select %p82, %s83, %s84
    %p88 = pneg %p82
    %p89 = scmp.eq.s32.totalorder %s9, 3
    %p90 = por %p88, %p89
    %p91 = scmp.ne.s32.totalorder %s83, %s86
    %p92 = scmp.eq.s32.totalorder %s9, 0
    %p93 = por %p91, %p92
    %p94 = scmp.ne.s32.totalorder %s83, %s86
    %p95 = scmp.eq.s32.totalorder %s14, 3
    %p96 = por %p94, %p95
    %p97 = scmp.ne.s32.totalorder %s86, %s87
    %p98 = scmp.eq.s32.totalorder %s14, 0
    %p99 = por %p97, %p98
    %p100 = scmp.ne.s32.totalorder %s86, %s87
    %p101 = scmp.eq.s32.totalorder %s15, 3
    %p102 = por %p100, %p101
    %p104 = scmp.ne.s32.totalorder %s87, %s103
    %p105 = scmp.eq.s32.totalorder %s15, 0
    %p106 = por %p104, %p105
    %s107 = ssub.s32 %s16, %s28
    %s108 = ssub.s32 %s17, %s24
    %s109 = sor.u32 %s107, %s108
    %p110 = scmp.eq.s32.totalorder %s109, 0
    %s112 = sadd.s32 %s111, 1
    %s113 = scalar_select %p110, %s111, %s112
    %p116 = pneg %p110
    %p117 = scmp.eq.s32.totalorder %s9, 3
    %p118 = por %p116, %p117
    %p119 = scmp.ne.s32.totalorder %s111, %s114
    %p120 = scmp.eq.s32.totalorder %s9, 0
    %p121 = por %p119, %p120
    %p122 = scmp.ne.s32.totalorder %s111, %s114
    %p123 = scmp.eq.s32.totalorder %s14, 3
    %p124 = por %p122, %p123
    %p125 = scmp.ne.s32.totalorder %s114, %s115
    %p126 = scmp.eq.s32.totalorder %s14, 0
    %p127 = por %p125, %p126
    %p128 = scmp.ne.s32.totalorder %s114, %s115
    %p129 = scmp.eq.s32.totalorder %s15, 3
    %p130 = por %p128, %p129
    %p132 = scmp.ne.s32.totalorder %s115, %s131
    %p133 = scmp.eq.s32.totalorder %s15, 0
    %p134 = por %p132, %p133
    %p135 = scmp.le.s32.totalorder 1, %s9
    %p136 = scmp.lt.s32.totalorder %s9, 5
    %p137 = pnand %p135, %p136
    %p138 = pneg %p137
    // Predicated region
    $region9: #{alexnet_forward.8} parent=5 // pred_check
      _
    $region10: #{alexnet_forward.8} parent=5 // pred_check_branch
      %140 = sbr.rel (%p137) target = $region12
    $region11: #{alexnet_forward.8} parent=5 // pred_region
      %s141 = ssub.s32 %s9, 1
      // Predicated region
      $region13: #{alexnet_forward.8} parent=11 // pred_check
        %p142 = pneg %p73
      $region14: #{alexnet_forward.8} parent=11 // pred_check_branch
        %144 = sbr.rel (%p142) target = $region16
      $region15: #{alexnet_forward.8} parent=11 // pred_region
        %p145 = scmp.lt.s32.totalorder %s19, 0
        %s146 = scalar_select %p145, %s19, 0
        %s147 = smul.addr %s146, 4
        %s148 = scalar_lea.vmem %s1, %s147
      $region16: #{alexnet_forward.8} parent=11 // pred_fallthru
        _
      // Predicated region
      $region17: #{alexnet_forward.8} parent=11 // pred_check
        %p149 = pneg %p99
      $region18: #{alexnet_forward.8} parent=11 // pred_check_branch
        %151 = sbr.rel (%p149) target = $region20
      $region19: #{alexnet_forward.8} parent=11 // pred_region
        %p152 = scmp.lt.s32.totalorder %s19, 0
        %s153 = scalar_select %p152, %s19, 0
        %s154 = scalar_lea.vmem %s2, %s153
      $region20: #{alexnet_forward.8} parent=11 // pred_fallthru
        _
    $region12: #{alexnet_forward.8} parent=5 // pred_fallthru
      _
    %p155 = scmp.lt.s32.totalorder %s9, 4
    // Predicated region
    $region21: #{alexnet_forward.8} parent=5 // pred_check
      %p156 = pneg %p155
    $region22: #{alexnet_forward.8} parent=5 // pred_check_branch
      %158 = sbr.rel (%p156) target = $region24
    $region23: #{alexnet_forward.8} parent=5 // pred_region
      // Predicated region
      $region25: #{alexnet_forward.8} parent=23 // pred_check
        %p159 = pneg %p41
      $region26: #{alexnet_forward.8} parent=23 // pred_check_branch
        %161 = sbr.rel (%p159) target = $region28
      $region27: #{alexnet_forward.8} parent=23 // pred_region
        %s162 = smul.u32 16, %s16
        %p163 = scmp.lt.s32.totalorder %s162, 63
        %s164 = scalar_select %p163, %s162, 63
        %s165 = smul.addr %s164, 3
        %s166 = smul.addr %s165, 4
        %s167 = scalar_lea.vmem %s0, %s166
        %s168 = smul.u32 16, %s16
      $region28: #{alexnet_forward.8} parent=23 // pred_fallthru
        _
    $region24: #{alexnet_forward.8} parent=5 // pred_fallthru
      _
    %p169 = scmp.le.s32.totalorder 1, %s9
    %p170 = scmp.lt.s32.totalorder %s9, 5
    %p171 = pnand %p169, %p170
    %p172 = pneg %p171
    // Predicated region
    $region29: #{alexnet_forward.8} parent=5 // pred_check
      _
    $region30: #{alexnet_forward.8} parent=5 // pred_check_branch
      %174 = sbr.rel (%p171) target = $region32
    $region31: #{alexnet_forward.8} parent=5 // pred_region
      %s175 = ssub.s32 %s9, 1
      %s176 = smul.u32 16, %s18
      %p177 = scmp.lt.s32.totalorder %s176, 63
      %s178 = scalar_select %p177, %s176, 63
      %s179 = smul.addr %s178, 3
      %s180 = smul.addr %s179, 4
      %s181 = scalar_lea.vmem %s0, %s180
      %p182 = pneg %p47
      %p183 = pneg %p44
      %p184 = scmp.lt.s32.totalorder %s19, 0
      %s185 = scalar_select %p184, %s19, 0
      %s186 = smul.addr %s185, 4
      %s187 = scalar_lea.vmem %s1, %s186
      %p188 = pneg %p73
      %p189 = pneg %p70
      %p190 = scmp.lt.s32.totalorder %s19, 0
      %s191 = scalar_select %p190, %s19, 0
      %s192 = scalar_lea.vmem %s2, %s191
      %p193 = pneg %p99
      %p194 = pneg %p96
      %p195 = pneg %p127
      %p196 = pneg %p124
      %s197 = smul.u32 16, %s18
      %p198 = scmp.lt.s32.totalorder %s197, 63
      %s199 = scalar_select %p198, %s197, 63
      %p200 = scmp.lt.s32.totalorder %s19, 0
      %s201 = scalar_select %p200, %s19, 0
      %s202 = sadd.s32 %s201, %s199
      %s203 = smul.addr %s202, 4
      %s204 = scalar_lea.vmem %s3, %s203
      %s205 = smul.u32 16, %s18
      %p206 = scmp.lt.s32.totalorder %s205, 63
      %s207 = scalar_select %p206, %s205, 63
      %s208 = smul.addr %s207, 3
      %s209 = smul.addr %s208, 4
      %s210 = scalar_lea.vmem %s0, %s209
      %s211 = smul.u32 16, %s18
      %p212 = scmp.lt.s32.totalorder %s19, 0
      %s213 = scalar_select %p212, %s19, 0
      %s214 = smul.addr %s213, 4
      %s215 = scalar_lea.vmem %s1, %s214
      %p216 = scmp.lt.s32.totalorder %s19, 0
      %s217 = scalar_select %p216, %s19, 0
      %s218 = scalar_lea.vmem %s2, %s217
      %s219 = smul.u32 16, %s18
      %p220 = scmp.lt.s32.totalorder %s219, 63
      %s221 = scalar_select %p220, %s219, 63
      %p222 = scmp.lt.s32.totalorder %s19, 0
      %s223 = scalar_select %p222, %s19, 0
      %s224 = sadd.s32 %s223, %s221
      %s225 = smul.addr %s224, 4
      %s226 = scalar_lea.vmem %s3, %s225
      %s227 = smul.u32 16, %s18
      %v229 = vld [vmem:[%s210] sm:$0xff]
      %v230 = vld [vmem:[%s210 + $0x8] sm:$0xf]
      %v231 = vld [vmem:[%s210 + $0xc] sm:$0xff]
      %v232 = vld [vmem:[%s210 + $0x14] sm:$0xf]
      %v233 = vld [vmem:[%s210 + $0x18] sm:$0xff]
      %v234 = vld [vmem:[%s210 + $0x20] sm:$0xf]
      %v235 = vld [vmem:[%s210 + $0x24] sm:$0xff]
      %v236 = vld [vmem:[%s210 + $0x2c] sm:$0xf]
      %v237 = vld [vmem:[%s210 + $0x30] sm:$0xff]
      %v238 = vld [vmem:[%s210 + $0x38] sm:$0xf]
      %v239 = vld [vmem:[%s210 + $0x3c] sm:$0xff]
      %v240 = vld [vmem:[%s210 + $0x44] sm:$0xf]
      %v241 = vld [vmem:[%s210 + $0x48] sm:$0xff]
      %v242 = vld [vmem:[%s210 + $0x50] sm:$0xf]
      %v243 = vld [vmem:[%s210 + $0x54] sm:$0xff]
      %v244 = vld [vmem:[%s210 + $0x5c] sm:$0xf]
      %v245 = vld [vmem:[%s210 + $0x60] sm:$0xff]
      %v246 = vld [vmem:[%s210 + $0x68] sm:$0xf]
      %v247 = vld [vmem:[%s210 + $0x6c] sm:$0xff]
      %v248 = vld [vmem:[%s210 + $0x74] sm:$0xf]
      %v249 = vld [vmem:[%s210 + $0x78] sm:$0xff]
      %v250 = vld [vmem:[%s210 + $0x80] sm:$0xf]
      %v251 = vld [vmem:[%s210 + $0x84] sm:$0xff]
      %v252 = vld [vmem:[%s210 + $0x8c] sm:$0xf]
      %v253 = vld [vmem:[%s210 + $0x90] sm:$0xff]
      %v254 = vld [vmem:[%s210 + $0x98] sm:$0xf]
      %v255 = vld [vmem:[%s210 + $0x9c] sm:$0xff]
      %v256 = vld [vmem:[%s210 + $0xa4] sm:$0xf]
      %v257 = vld [vmem:[%s210 + $0xa8] sm:$0xff]
      %v258 = vld [vmem:[%s210 + $0xb0] sm:$0xf]
      %v259 = vld [vmem:[%s210 + $0xb4] sm:$0xff]
      %v260 = vld [vmem:[%s210 + $0xbc] sm:$0xf]
      %v261 = vld [vmem:[%s215] sm:$0xf]
      %v262 = vld [vmem:[%s215 + $0x4] sm:$0xf]
      %v263 = vld [vmem:[%s215 + $0x8] sm:$0xf]
      %v264 = vld [vmem:[%s215 + $0xc] sm:$0xf]
      %v265 = vld [vmem:[%s215 + $0x10] sm:$0xf]
      %v266 = vld [vmem:[%s215 + $0x14] sm:$0xf]
      %v267 = vld [vmem:[%s215 + $0x18] sm:$0xf]
      %v268 = vld [vmem:[%s215 + $0x1c] sm:$0xf]
      %v269 = vld [vmem:[%s215 + $0x20] sm:$0xf]
      %v270 = vld [vmem:[%s215 + $0x24] sm:$0xf]
      %v271 = vld [vmem:[%s215 + $0x28] sm:$0xf]
      %v272 = vld [vmem:[%s215 + $0x2c] sm:$0xf]
      %v273 = vld [vmem:[%s215 + $0x30] sm:$0xf]
      %v274 = vld [vmem:[%s215 + $0x34] sm:$0xf]
      %v275 = vld [vmem:[%s215 + $0x38] sm:$0xf]
      %v276 = vld [vmem:[%s215 + $0x3c] sm:$0xf]
      %v277 = vld [vmem:[%s215 + $0x40] sm:$0xf]
      %v278 = vld [vmem:[%s215 + $0x44] sm:$0xf]
      %v279 = vld [vmem:[%s215 + $0x48] sm:$0xf]
      %v280 = vld [vmem:[%s215 + $0x4c] sm:$0xf]
      %v281 = vld [vmem:[%s215 + $0x50] sm:$0xf]
      %v282 = vld [vmem:[%s215 + $0x54] sm:$0xf]
      %v283 = vld [vmem:[%s215 + $0x58] sm:$0xf]
      %v284 = vld [vmem:[%s215 + $0x5c] sm:$0xf]
      %v285 = vld [vmem:[%s215 + $0x60] sm:$0xf]
      %v286 = vld [vmem:[%s215 + $0x64] sm:$0xf]
      %v287 = vld [vmem:[%s215 + $0x68] sm:$0xf]
      %v288 = vld [vmem:[%s215 + $0x6c] sm:$0xf]
      %v289 = vld [vmem:[%s215 + $0x70] sm:$0xf]
      %v290 = vld [vmem:[%s215 + $0x74] sm:$0xf]
      %v291 = vld [vmem:[%s215 + $0x78] sm:$0xf]
      %v292 = vld [vmem:[%s215 + $0x7c] sm:$0xf]
      %v293 = vld [vmem:[%s215 + $0x80] sm:$0xf]
      %v294 = vld [vmem:[%s215 + $0x84] sm:$0xf]
      %v295 = vld [vmem:[%s215 + $0x88] sm:$0xf]
      %v296 = vld [vmem:[%s215 + $0x8c] sm:$0xf]
      %v297 = vld [vmem:[%s215 + $0x90] sm:$0xf]
      %v298 = vld [vmem:[%s215 + $0x94] sm:$0xf]
      %v299 = vld [vmem:[%s215 + $0x98] sm:$0xf]
      %v300 = vld [vmem:[%s215 + $0x9c] sm:$0xf]
      %v301 = vld [vmem:[%s215 + $0xa0] sm:$0xf]
      %v302 = vld [vmem:[%s215 + $0xa4] sm:$0xf]
      %v303 = vld [vmem:[%s215 + $0xa8] sm:$0xf]
      %v304 = vld [vmem:[%s215 + $0xac] sm:$0xf]
      %v305 = vld [vmem:[%s215 + $0xb0] sm:$0xf]
      %v306 = vld [vmem:[%s215 + $0xb4] sm:$0xf]
      %v307 = vld [vmem:[%s215 + $0xb8] sm:$0xf]
      %v308 = vld [vmem:[%s215 + $0xbc] sm:$0xf]
      %v309 = vld [vmem:[%s218] sm:$0x1]
      %v311 = vlaneseq
      %v312 = vshrl.u32 %v311, 7
      %v313 = vsub.s32 0, %v312
      %v314 = vrot.slane %v309, %v313
      %v348 = vunpack.c.l.b16 %v229
      %v349 = vunpack.c.h.b16 %v229
      %v350 = vunpack.c.l.b16 %v230
      %v351 = vunpack.c.l.b16 %v231
      %v352 = vunpack.c.h.b16 %v231
      %v353 = vunpack.c.l.b16 %v232
      %v354 = vunpack.c.l.b16 %v233
      %v355 = vunpack.c.h.b16 %v233
      %v356 = vunpack.c.l.b16 %v234
      %v357 = vunpack.c.l.b16 %v235
      %v358 = vunpack.c.h.b16 %v235
      %v359 = vunpack.c.l.b16 %v236
      %v360 = vunpack.c.l.b16 %v237
      %v361 = vunpack.c.h.b16 %v237
      %v362 = vunpack.c.l.b16 %v238
      %v363 = vunpack.c.l.b16 %v239
      %v364 = vunpack.c.h.b16 %v239
      %v365 = vunpack.c.l.b16 %v240
      %v366 = vunpack.c.l.b16 %v241
      %v367 = vunpack.c.h.b16 %v241
      %v368 = vunpack.c.l.b16 %v242
      %v369 = vunpack.c.l.b16 %v243
      %v370 = vunpack.c.h.b16 %v243
      %v371 = vunpack.c.l.b16 %v244
      %v372 = vunpack.c.l.b16 %v245
      %v373 = vunpack.c.h.b16 %v245
      %v374 = vunpack.c.l.b16 %v246
      %v375 = vunpack.c.l.b16 %v247
      %v376 = vunpack.c.h.b16 %v247
      %v377 = vunpack.c.l.b16 %v248
      %v378 = vunpack.c.l.b16 %v249
      %v379 = vunpack.c.h.b16 %v249
      %v380 = vunpack.c.l.b16 %v250
      %v381 = vunpack.c.l.b16 %v251
      %v382 = vunpack.c.h.b16 %v251
      %v383 = vunpack.c.l.b16 %v252
      %v384 = vunpack.c.l.b16 %v253
      %v385 = vunpack.c.h.b16 %v253
      %v386 = vunpack.c.l.b16 %v254
      %v387 = vunpack.c.l.b16 %v255
      %v388 = vunpack.c.h.b16 %v255
      %v389 = vunpack.c.l.b16 %v256
      %v390 = vunpack.c.l.b16 %v257
      %v391 = vunpack.c.h.b16 %v257
      %v392 = vunpack.c.l.b16 %v258
      %v393 = vunpack.c.l.b16 %v259
      %v394 = vunpack.c.h.b16 %v259
      %v395 = vunpack.c.l.b16 %v260
      %v396 = vpack.c.b16 %v351, %v348
      %v397 = vpack.c.b16 %v352, %v349
      %v398 = vpack.c.b16 %v353, %v350
      %v399 = vpack.c.b16 %v357, %v354
      %v400 = vpack.c.b16 %v358, %v355
      %v401 = vpack.c.b16 %v359, %v356
      %v402 = vpack.c.b16 %v363, %v360
      %v403 = vpack.c.b16 %v364, %v361
      %v404 = vpack.c.b16 %v365, %v362
      %v405 = vpack.c.b16 %v369, %v366
      %v406 = vpack.c.b16 %v370, %v367
      %v407 = vpack.c.b16 %v371, %v368
      %v408 = vpack.c.b16 %v375, %v372
      %v409 = vpack.c.b16 %v376, %v373
      %v410 = vpack.c.b16 %v377, %v374
      %v411 = vpack.c.b16 %v381, %v378
      %v412 = vpack.c.b16 %v382, %v379
      %v413 = vpack.c.b16 %v383, %v380
      %v414 = vpack.c.b16 %v387, %v384
      %v415 = vpack.c.b16 %v388, %v385
      %v416 = vpack.c.b16 %v389, %v386
      %v417 = vpack.c.b16 %v393, %v390
      %v418 = vpack.c.b16 %v394, %v391
      %v419 = vpack.c.b16 %v395, %v392
      %v492 = vunpack.c.l.b16 %v261
      %v493 = vunpack.c.l.b16 %v262
      %v494 = vunpack.c.l.b16 %v263
      %v495 = vunpack.c.l.b16 %v264
      %v496 = vunpack.c.l.b16 %v265
      %v497 = vunpack.c.l.b16 %v266
      %v498 = vunpack.c.l.b16 %v267
      %v499 = vunpack.c.l.b16 %v268
      %v500 = vunpack.c.l.b16 %v269
      %v501 = vunpack.c.l.b16 %v270
      %v502 = vunpack.c.l.b16 %v271
      %v503 = vunpack.c.l.b16 %v272
      %v504 = vunpack.c.l.b16 %v273
      %v505 = vunpack.c.l.b16 %v274
      %v506 = vunpack.c.l.b16 %v275
      %v507 = vunpack.c.l.b16 %v276
      %v508 = vunpack.c.l.b16 %v277
      %v509 = vunpack.c.l.b16 %v278
      %v510 = vunpack.c.l.b16 %v279
      %v511 = vunpack.c.l.b16 %v280
      %v512 = vunpack.c.l.b16 %v281
      %v513 = vunpack.c.l.b16 %v282
      %v514 = vunpack.c.l.b16 %v283
      %v515 = vunpack.c.l.b16 %v284
      %v516 = vunpack.c.l.b16 %v285
      %v517 = vunpack.c.l.b16 %v286
      %v518 = vunpack.c.l.b16 %v287
      %v519 = vunpack.c.l.b16 %v288
      %v520 = vunpack.c.l.b16 %v289
      %v521 = vunpack.c.l.b16 %v290
      %v522 = vunpack.c.l.b16 %v291
      %v523 = vunpack.c.l.b16 %v292
      %v524 = vunpack.c.l.b16 %v293
      %v525 = vunpack.c.l.b16 %v294
      %v526 = vunpack.c.l.b16 %v295
      %v527 = vunpack.c.l.b16 %v296
      %v528 = vunpack.c.l.b16 %v297
      %v529 = vunpack.c.l.b16 %v298
      %v530 = vunpack.c.l.b16 %v299
      %v531 = vunpack.c.l.b16 %v300
      %v532 = vunpack.c.l.b16 %v301
      %v533 = vunpack.c.l.b16 %v302
      %v534 = vunpack.c.l.b16 %v303
      %v535 = vunpack.c.l.b16 %v304
      %v536 = vunpack.c.l.b16 %v305
      %v537 = vunpack.c.l.b16 %v306
      %v538 = vunpack.c.l.b16 %v307
      %v539 = vunpack.c.l.b16 %v308
      %v540 = vpack.c.b16 %v493, %v492
      %v541 = vpack.c.b16 %v495, %v494
      %v542 = vpack.c.b16 %v497, %v496
      %v543 = vpack.c.b16 %v499, %v498
      %v544 = vpack.c.b16 %v501, %v500
      %v545 = vpack.c.b16 %v503, %v502
      %v546 = vpack.c.b16 %v505, %v504
      %v547 = vpack.c.b16 %v507, %v506
      %v548 = vpack.c.b16 %v509, %v508
      %v549 = vpack.c.b16 %v511, %v510
      %v550 = vpack.c.b16 %v513, %v512
      %v551 = vpack.c.b16 %v515, %v514
      %v552 = vpack.c.b16 %v517, %v516
      %v553 = vpack.c.b16 %v519, %v518
      %v554 = vpack.c.b16 %v521, %v520
      %v555 = vpack.c.b16 %v523, %v522
      %v556 = vpack.c.b16 %v525, %v524
      %v557 = vpack.c.b16 %v527, %v526
      %v558 = vpack.c.b16 %v529, %v528
      %v559 = vpack.c.b16 %v531, %v530
      %v560 = vpack.c.b16 %v533, %v532
      %v561 = vpack.c.b16 %v535, %v534
      %v562 = vpack.c.b16 %v537, %v536
      %v563 = vpack.c.b16 %v539, %v538
      %588 = vmatprep.subr.bf16.mxu0 0
      %589 = vmatpush1.bf16.msra.mxu0 %v540
      %590 = vmatprep.subr.bf16.mxu0 0
      %591 = vmatpush1.bf16.msra.mxu0 %v541
      %592 = vmatprep.subr.bf16.mxu0 0
      %593 = vmatpush1.bf16.msra.mxu0 %v542
      %594 = vmatprep.subr.bf16.mxu0 0
      %595 = vmatpush1.bf16.msra.mxu0 %v543
      %596 = vmatprep.subr.bf16.mxu0 0
      %597 = vmatpush1.bf16.msra.mxu0 %v544
      %598 = vmatprep.subr.bf16.mxu0 0
      %599 = vmatpush1.bf16.msra.mxu0 %v545
      %600 = vmatprep.subr.bf16.mxu0 0
      %601 = vmatpush1.bf16.msra.mxu0 %v546
      %602 = vmatprep.subr.bf16.mxu0 0
      %603 = vmatpush1.bf16.msra.mxu0 %v547
      %604 = vmatprep.subr.bf16.mxu0 0
      %605 = vmatpush1.bf16.msra.mxu0 %v548
      %606 = vmatprep.subr.bf16.mxu0 0
      %607 = vmatpush1.bf16.msra.mxu0 %v549
      %608 = vmatprep.subr.bf16.mxu0 0
      %609 = vmatpush1.bf16.msra.mxu0 %v550
      %610 = vmatprep.subr.bf16.mxu0 0
      %611 = vmatpush1.bf16.msra.mxu0 %v551
      %612 = vmatprep.subr.bf16.mxu0 0
      %613 = vmatpush1.bf16.msra.mxu0 %v552
      %614 = vmatprep.subr.bf16.mxu0 0
      %615 = vmatpush1.bf16.msra.mxu0 %v553
      %616 = vmatprep.subr.bf16.mxu0 0
      %617 = vmatpush1.bf16.msra.mxu0 %v554
      %618 = vmatprep.subr.bf16.mxu0 0
      %619 = vmatpush1.bf16.msra.mxu0 %v555
      %620 = vmatprep.mubr.bf16.mxu0 %v397
      %621 = vmatmul.mubr.bf16.gmra.mrb[0].mxu0 %v396
      %v622 = vpop.f32.mrb[0].mxu0
      %v623 = vadd.f32 %v314, %v622
      %v624 = vpop.f32.mrb[0].mxu0
      %v625 = vpop.f32.mrb[0].mxu0
      %v626 = vadd.f32 %v314, %v625
      %v627 = vpop.f32.mrb[0].mxu0
      %628 = vmatprep.mubr.bf16.mxu0 %v400
      %629 = vmatmul.mubr.bf16.gmra.mrb[0].mxu0 %v399
      %v630 = vpop.f32.mrb[0].mxu0
      %v631 = vadd.f32 %v314, %v630
      %v632 = vpop.f32.mrb[0].mxu0
      %v633 = vpop.f32.mrb[0].mxu0
      %v634 = vadd.f32 %v314, %v633
      %v635 = vpop.f32.mrb[0].mxu0
      %636 = vmatprep.mubr.bf16.mxu0 %v403
      %637 = vmatmul.mubr.bf16.gmra.mrb[0].mxu0 %v402
      %v638 = vpop.f32.mrb[0].mxu0
      %v639 = vadd.f32 %v314, %v638
      %v640 = vpop.f32.mrb[0].mxu0
      %v641 = vpop.f32.mrb[0].mxu0
      %v642 = vadd.f32 %v314, %v641
      %v643 = vpop.f32.mrb[0].mxu0
      %644 = vmatprep.mubr.bf16.mxu0 %v406
      %645 = vmatmul.mubr.bf16.gmra.mrb[0].mxu0 %v405
      %v646 = vpop.f32.mrb[0].mxu0
      %v647 = vadd.f32 %v314, %v646
      %v648 = vpop.f32.mrb[0].mxu0
      %v649 = vpop.f32.mrb[0].mxu0
      %v650 = vadd.f32 %v314, %v649
      %v651 = vpop.f32.mrb[0].mxu0
      %652 = vmatprep.mubr.bf16.mxu0 %v409
      %653 = vmatmul.mubr.bf16.gmra.mrb[0].mxu0 %v408
      %v654 = vpop.f32.mrb[0].mxu0
      %v655 = vadd.f32 %v314, %v654
      %v656 = vpop.f32.mrb[0].mxu0
      %v657 = vpop.f32.mrb[0].mxu0
      %v658 = vadd.f32 %v314, %v657
      %v659 = vpop.f32.mrb[0].mxu0
      %660 = vmatprep.mubr.bf16.mxu0 %v412
      %661 = vmatmul.mubr.bf16.gmra.mrb[0].mxu0 %v411
      %v662 = vpop.f32.mrb[0].mxu0
      %v663 = vadd.f32 %v314, %v662
      %v664 = vpop.f32.mrb[0].mxu0
      %v665 = vpop.f32.mrb[0].mxu0
      %v666 = vadd.f32 %v314, %v665
      %v667 = vpop.f32.mrb[0].mxu0
      %668 = vmatprep.mubr.bf16.mxu0 %v415
      %669 = vmatmul.mubr.bf16.gmra.mrb[0].mxu0 %v414
      %v670 = vpop.f32.mrb[0].mxu0
      %v671 = vadd.f32 %v314, %v670
      %v672 = vpop.f32.mrb[0].mxu0
      %v673 = vpop.f32.mrb[0].mxu0
      %v674 = vadd.f32 %v314, %v673
      %v675 = vpop.f32.mrb[0].mxu0
      %676 = vmatprep.mubr.bf16.mxu0 %v418
      %677 = vmatmul.mubr.bf16.gmra.mrb[0].mxu0 %v417
      %v678 = vpop.f32.mrb[0].mxu0
      %v679 = vadd.f32 %v314, %v678
      %v680 = vpop.f32.mrb[0].mxu0
      %v681 = vpop.f32.mrb[0].mxu0
      %v682 = vadd.f32 %v314, %v681
      %v683 = vpop.f32.mrb[0].mxu0
      %684 = vdwg.mxu0
      %685 = vmatprep.subr.bf16.mxu0 0
      %686 = vmatpush1.bf16.msra.mxu0 %v556
      %687 = vmatprep.subr.bf16.mxu0 0
      %688 = vmatpush1.bf16.msra.mxu0 %v557
      %689 = vmatprep.subr.bf16.mxu0 0
      %690 = vmatpush1.bf16.msra.mxu0 %v558
      %691 = vmatprep.subr.bf16.mxu0 0
      %692 = vmatpush1.bf16.msra.mxu0 %v559
      %693 = vmatprep.subr.bf16.mxu0 0
      %694 = vmatpush1.bf16.msra.mxu0 %v560
      %695 = vmatprep.subr.bf16.mxu0 0
      %696 = vmatpush1.bf16.msra.mxu0 %v561
      %697 = vmatprep.subr.bf16.mxu0 0
      %698 = vmatpush1.bf16.msra.mxu0 %v562
      %699 = vmatprep.subr.bf16.mxu0 0
      %700 = vmatpush1.bf16.msra.mxu0 %v563
      %701 = vmatprep.subr.bf16.mxu0 0
      %702 = vmatpush1.bf16.msra.mxu0 0
      %703 = vmatprep.subr.bf16.mxu0 0
      %704 = vmatpush1.bf16.msra.mxu0 0
      %705 = vmatprep.subr.bf16.mxu0 0
      %706 = vmatpush1.bf16.msra.mxu0 0
      %707 = vmatprep.subr.bf16.mxu0 0
      %708 = vmatpush1.bf16.msra.mxu0 0
      %709 = vmatprep.subr.bf16.mxu0 0
      %710 = vmatpush1.bf16.msra.mxu0 0
      %711 = vmatprep.subr.bf16.mxu0 0
      %712 = vmatpush1.bf16.msra.mxu0 0
      %713 = vmatprep.subr.bf16.mxu0 0
      %714 = vmatpush1.bf16.msra.mxu0 0
      %715 = vmatprep.subr.bf16.mxu0 0
      %716 = vmatpush1.bf16.msra.mxu0 0
      %717 = vmatprep.mubr.bf16.mxu0 0
      %718 = vmatmul.mubr.bf16.gmra.mrb[0].mxu0 %v398
      %v719 = vpop.f32.mrb[0].mxu0
      %v720 = vadd.f32 %v623, %v719
      %v721 = vpop.f32.mrb[0].mxu0
      %v722 = vpop.f32.mrb[0].mxu0
      %v723 = vadd.f32 %v626, %v722
      %v724 = vpop.f32.mrb[0].mxu0
      %725 = vmatprep.mubr.bf16.mxu0 0
      %726 = vmatmul.mubr.bf16.gmra.mrb[0].mxu0 %v401
      %v727 = vpop.f32.mrb[0].mxu0
      %v728 = vadd.f32 %v631, %v727
      %v729 = vpop.f32.mrb[0].mxu0
      %v730 = vpop.f32.mrb[0].mxu0
      %v731 = vadd.f32 %v634, %v730
      %v732 = vpop.f32.mrb[0].mxu0
      %733 = vmatprep.mubr.bf16.mxu0 0
      %734 = vmatmul.mubr.bf16.gmra.mrb[0].mxu0 %v404
      %v735 = vpop.f32.mrb[0].mxu0
      %v736 = vadd.f32 %v639, %v735
      %v737 = vpop.f32.mrb[0].mxu0
      %v738 = vpop.f32.mrb[0].mxu0
      %v739 = vadd.f32 %v642, %v738
      %v740 = vpop.f32.mrb[0].mxu0
      %741 = vmatprep.mubr.bf16.mxu0 0
      %742 = vmatmul.mubr.bf16.gmra.mrb[0].mxu0 %v407
      %v743 = vpop.f32.mrb[0].mxu0
      %v744 = vadd.f32 %v647, %v743
      %v745 = vpop.f32.mrb[0].mxu0
      %v746 = vpop.f32.mrb[0].mxu0
      %v747 = vadd.f32 %v650, %v746
      %v748 = vpop.f32.mrb[0].mxu0
      %749 = vmatprep.mubr.bf16.mxu0 0
      %750 = vmatmul.mubr.bf16.gmra.mrb[0].mxu0 %v410
      %v751 = vpop.f32.mrb[0].mxu0
      %v752 = vadd.f32 %v655, %v751
      %v753 = vpop.f32.mrb[0].mxu0
      %v754 = vpop.f32.mrb[0].mxu0
      %v755 = vadd.f32 %v658, %v754
      %v756 = vpop.f32.mrb[0].mxu0
      %757 = vmatprep.mubr.bf16.mxu0 0
      %758 = vmatmul.mubr.bf16.gmra.mrb[0].mxu0 %v413
      %v759 = vpop.f32.mrb[0].mxu0
      %v760 = vadd.f32 %v663, %v759
      %v761 = vpop.f32.mrb[0].mxu0
      %v762 = vpop.f32.mrb[0].mxu0
      %v763 = vadd.f32 %v666, %v762
      %v764 = vpop.f32.mrb[0].mxu0
      %765 = vmatprep.mubr.bf16.mxu0 0
      %766 = vmatmul.mubr.bf16.gmra.mrb[0].mxu0 %v416
      %v767 = vpop.f32.mrb[0].mxu0
      %v768 = vadd.f32 %v671, %v767
      %v769 = vpop.f32.mrb[0].mxu0
      %v770 = vpop.f32.mrb[0].mxu0
      %v771 = vadd.f32 %v674, %v770
      %v772 = vpop.f32.mrb[0].mxu0
      %773 = vmatprep.mubr.bf16.mxu0 0
      %774 = vmatmul.mubr.bf16.gmra.mrb[0].mxu0 %v419
      %v775 = vpop.f32.mrb[0].mxu0
      %v776 = vadd.f32 %v679, %v775
      %v777 = vpop.f32.mrb[0].mxu0
      %v778 = vpop.f32.mrb[0].mxu0
      %v779 = vadd.f32 %v682, %v778
      %v780 = vpop.f32.mrb[0].mxu0
      %781 = vdwg.mxu0
      %v782 = vmax.f32 %v720, 0.0
      %v783 = vmax.f32 %v723, 0.0
      %v784 = vmax.f32 %v728, 0.0
      %v785 = vmax.f32 %v731, 0.0
      %v786 = vmax.f32 %v736, 0.0
      %v787 = vmax.f32 %v739, 0.0
      %v788 = vmax.f32 %v744, 0.0
      %v789 = vmax.f32 %v747, 0.0
      %v790 = vmax.f32 %v752, 0.0
      %v791 = vmax.f32 %v755, 0.0
      %v792 = vmax.f32 %v760, 0.0
      %v793 = vmax.f32 %v763, 0.0
      %v794 = vmax.f32 %v768, 0.0
      %v795 = vmax.f32 %v771, 0.0
      %v796 = vmax.f32 %v776, 0.0
      %v797 = vmax.f32 %v779, 0.0
      %v798 = vpack.c.bf16 %v783, %v782
      %v799 = vpack.c.bf16 %v785, %v784
      %v800 = vpack.c.bf16 %v787, %v786
      %v801 = vpack.c.bf16 %v789, %v788
      %v802 = vpack.c.bf16 %v791, %v790
      %v803 = vpack.c.bf16 %v793, %v792
      %v804 = vpack.c.bf16 %v795, %v794
      %v805 = vpack.c.bf16 %v797, %v796
      %v814 = vunpack.c.l.b16 %v798
      %v815 = vunpack.c.h.b16 %v798
      %v816 = vunpack.c.l.b16 %v799
      %v817 = vunpack.c.h.b16 %v799
      %v818 = vunpack.c.l.b16 %v800
      %v819 = vunpack.c.h.b16 %v800
      %v820 = vunpack.c.l.b16 %v801
      %v821 = vunpack.c.h.b16 %v801
      %v822 = vunpack.c.l.b16 %v802
      %v823 = vunpack.c.h.b16 %v802
      %v824 = vunpack.c.l.b16 %v803
      %v825 = vunpack.c.h.b16 %v803
      %v826 = vunpack.c.l.b16 %v804
      %v827 = vunpack.c.h.b16 %v804
      %v828 = vunpack.c.l.b16 %v805
      %v829 = vunpack.c.h.b16 %v805
      %v830 = vpack.c.b16 %v814, %v814
      %v831 = vpack.c.b16 %v815, %v815
      %v832 = vpack.c.b16 %v816, %v816
      %v833 = vpack.c.b16 %v817, %v817
      %v834 = vpack.c.b16 %v818, %v818
      %v835 = vpack.c.b16 %v819, %v819
      %v836 = vpack.c.b16 %v820, %v820
      %v837 = vpack.c.b16 %v821, %v821
      %v838 = vpack.c.b16 %v822, %v822
      %v839 = vpack.c.b16 %v823, %v823
      %v840 = vpack.c.b16 %v824, %v824
      %v841 = vpack.c.b16 %v825, %v825
      %v842 = vpack.c.b16 %v826, %v826
      %v843 = vpack.c.b16 %v827, %v827
      %v844 = vpack.c.b16 %v828, %v828
      %v845 = vpack.c.b16 %v829, %v829
      %862 = vst [vmem:[%s226] sm:$0xf] %v830
      %863 = vst [vmem:[%s226 + $0x4] sm:$0xf] %v831
      %864 = vst [vmem:[%s226 + $0x8] sm:$0xf] %v832
      %865 = vst [vmem:[%s226 + $0xc] sm:$0xf] %v833
      %866 = vst [vmem:[%s226 + $0x10] sm:$0xf] %v834
      %867 = vst [vmem:[%s226 + $0x14] sm:$0xf] %v835
      %868 = vst [vmem:[%s226 + $0x18] sm:$0xf] %v836
      %869 = vst [vmem:[%s226 + $0x1c] sm:$0xf] %v837
      %870 = vst [vmem:[%s226 + $0x20] sm:$0xf] %v838
      %871 = vst [vmem:[%s226 + $0x24] sm:$0xf] %v839
      %872 = vst [vmem:[%s226 + $0x28] sm:$0xf] %v840
      %873 = vst [vmem:[%s226 + $0x2c] sm:$0xf] %v841
      %874 = vst [vmem:[%s226 + $0x30] sm:$0xf] %v842
      %875 = vst [vmem:[%s226 + $0x34] sm:$0xf] %v843
      %876 = vst [vmem:[%s226 + $0x38] sm:$0xf] %v844
      %877 = vst [vmem:[%s226 + $0x3c] sm:$0xf] %v845
      %s878 = smul.u32 16, %s18
      %p879 = scmp.lt.s32.totalorder %s878, 63
      %s880 = scalar_select %p879, %s878, 63
      %p881 = scmp.lt.s32.totalorder %s19, 0
      %s882 = scalar_select %p881, %s19, 0
      %s883 = sadd.s32 %s882, %s880
      %s884 = smul.addr %s883, 4
      %s885 = scalar_lea.vmem %s3, %s884
      // Predicated region
      $region33: #{alexnet_forward.8} parent=31 // pred_check
        %p886 = pneg %p124
      $region34: #{alexnet_forward.8} parent=31 // pred_check_branch
        %888 = sbr.rel (%p886) target = $region36
      $region35: #{alexnet_forward.8} parent=31 // pred_region
        %s889 = smul.u32 16, %s18
      $region36: #{alexnet_forward.8} parent=31 // pred_fallthru
        _
    $region32: #{alexnet_forward.8} parent=5 // pred_fallthru
      _
    %p890 = scmp.le.s32.totalorder 2, %s9
    // Predicated region
    $region37: #{alexnet_forward.8} parent=5 // pred_check
      %p891 = pneg %p890
    $region38: #{alexnet_forward.8} parent=5 // pred_check_branch
      %893 = sbr.rel (%p891) target = $region40
    $region39: #{alexnet_forward.8} parent=5 // pred_region
      %s894 = ssub.s32 %s9, 2
      // Predicated region
      $region41: #{alexnet_forward.8} parent=39 // pred_check
        %p895 = pneg %p130
      $region42: #{alexnet_forward.8} parent=39 // pred_check_branch
        %897 = sbr.rel (%p895) target = $region44
      $region43: #{alexnet_forward.8} parent=39 // pred_region
        %s898 = smul.u32 16, %s20
        %p899 = scmp.lt.s32.totalorder %s898, 63
        %s900 = scalar_select %p899, %s898, 63
        %p901 = scmp.lt.s32.totalorder %s21, 0
        %s902 = scalar_select %p901, %s21, 0
        %s903 = sadd.s32 %s902, %s900
        %s904 = smul.addr %s903, 4
        %s905 = scalar_lea.vmem %s3, %s904
      $region44: #{alexnet_forward.8} parent=39 // pred_fallthru
        _
    $region40: #{alexnet_forward.8} parent=5 // pred_fallthru
      _
  $region6: #{alexnet_forward.8} parent=0 // loop_footer
    %s13 = sadd.s32 1, %s9
  $region7: #{alexnet_forward.8} parent=0 // loop_footer_branch
    %8 = sbr.rel target = $region3
  $region8: #{alexnet_forward.8} parent=0 // loop_exit
    _

// kernel: alexnet_forward.9
$region0: #{alexnet_forward.9}
  #allocation0 [shape = 'u32[]', space=smem, size = 0x4, offset = 0x4, fixed_abs, tag = 'smem constant byte address 0x4 - core index']
  #allocation1 [shape = 'u32[144,128]{1,0:T(1,128)}', space=vmem, size = 0x12000, scoped, tag = 'internal scratch']
  %s0 = inlined_call_operand.vmem [shape: bf16[9,64,128], index: 0, kind: input, shape index: {}]
  %s1 = inlined_call_operand.vmem [shape: bf16[64,128], index: 1, kind: output, shape index: {}]
  %s2 = sld [smem:[#allocation0]]
  $region14: #{alexnet_forward.9} parent=0
    _
  %s4 = ssub.s32 1, %s2
  %s5 = scalar_select 0, %s4, %s2
  // Predicated region
  $region2: #{alexnet_forward.9} parent=0 // pred_check
    _
  $region3: #{alexnet_forward.9} parent=0 // pred_check_branch
    %7 = sbr.rel (0) target = $region5
  $region4: #{alexnet_forward.9} parent=0 // pred_region
    _
  $region5: #{alexnet_forward.9} parent=0 // pred_fallthru
    _
  %v8 = vld [vmem:[%s0] sm:$0xf]
  %v9 = vld [vmem:[%s0 + $0x4] sm:$0xf]
  %v10 = vld [vmem:[%s0 + $0x8] sm:$0xf]
  %v11 = vld [vmem:[%s0 + $0xc] sm:$0xf]
  %v12 = vld [vmem:[%s0 + $0x10] sm:$0xf]
  %v13 = vld [vmem:[%s0 + $0x14] sm:$0xf]
  %v14 = vld [vmem:[%s0 + $0x18] sm:$0xf]
  %v15 = vld [vmem:[%s0 + $0x1c] sm:$0xf]
  %v16 = vld [vmem:[%s0 + $0x20] sm:$0xf]
  %v17 = vld [vmem:[%s0 + $0x24] sm:$0xf]
  %v18 = vld [vmem:[%s0 + $0x28] sm:$0xf]
  %v19 = vld [vmem:[%s0 + $0x2c] sm:$0xf]
  %v20 = vld [vmem:[%s0 + $0x30] sm:$0xf]
  %v21 = vld [vmem:[%s0 + $0x34] sm:$0xf]
  %v22 = vld [vmem:[%s0 + $0x38] sm:$0xf]
  %v23 = vld [vmem:[%s0 + $0x3c] sm:$0xf]
  %v24 = vld [vmem:[%s0 + $0x40] sm:$0xf]
  %v25 = vld [vmem:[%s0 + $0x44] sm:$0xf]
  %v26 = vld [vmem:[%s0 + $0x48] sm:$0xf]
  %v27 = vld [vmem:[%s0 + $0x4c] sm:$0xf]
  %v28 = vld [vmem:[%s0 + $0x50] sm:$0xf]
  %v29 = vld [vmem:[%s0 + $0x54] sm:$0xf]
  %v30 = vld [vmem:[%s0 + $0x58] sm:$0xf]
  %v31 = vld [vmem:[%s0 + $0x5c] sm:$0xf]
  %v32 = vld [vmem:[%s0 + $0x60] sm:$0xf]
  %v33 = vld [vmem:[%s0 + $0x64] sm:$0xf]
  %v34 = vld [vmem:[%s0 + $0x68] sm:$0xf]
  %v35 = vld [vmem:[%s0 + $0x6c] sm:$0xf]
  %v36 = vld [vmem:[%s0 + $0x70] sm:$0xf]
  %v37 = vld [vmem:[%s0 + $0x74] sm:$0xf]
  %v38 = vld [vmem:[%s0 + $0x78] sm:$0xf]
  %v39 = vld [vmem:[%s0 + $0x7c] sm:$0xf]
  %v40 = vld [vmem:[%s0 + $0x80] sm:$0xf]
  %v41 = vld [vmem:[%s0 + $0x84] sm:$0xf]
  %v42 = vld [vmem:[%s0 + $0x88] sm:$0xf]
  %v43 = vld [vmem:[%s0 + $0x8c] sm:$0xf]
  %v44 = vld [vmem:[%s0 + $0x90] sm:$0xf]
  %v45 = vld [vmem:[%s0 + $0x94] sm:$0xf]
  %v46 = vld [vmem:[%s0 + $0x98] sm:$0xf]
  %v47 = vld [vmem:[%s0 + $0x9c] sm:$0xf]
  %v48 = vld [vmem:[%s0 + $0xa0] sm:$0xf]
  %v49 = vld [vmem:[%s0 + $0xa4] sm:$0xf]
  %v50 = vld [vmem:[%s0 + $0xa8] sm:$0xf]
  %v51 = vld [vmem:[%s0 + $0xac] sm:$0xf]
  %v52 = vld [vmem:[%s0 + $0xb0] sm:$0xf]
  %v53 = vld [vmem:[%s0 + $0xb4] sm:$0xf]
  %v54 = vld [vmem:[%s0 + $0xb8] sm:$0xf]
  %v55 = vld [vmem:[%s0 + $0xbc] sm:$0xf]
  %v56 = vld [vmem:[%s0 + $0xc0] sm:$0xf]
  %v57 = vld [vmem:[%s0 + $0xc4] sm:$0xf]
  %v58 = vld [vmem:[%s0 + $0xc8] sm:$0xf]
  %v59 = vld [vmem:[%s0 + $0xcc] sm:$0xf]
  %v60 = vld [vmem:[%s0 + $0xd0] sm:$0xf]
  %v61 = vld [vmem:[%s0 + $0xd4] sm:$0xf]
  %v62 = vld [vmem:[%s0 + $0xd8] sm:$0xf]
  %v63 = vld [vmem:[%s0 + $0xdc] sm:$0xf]
  %v64 = vld [vmem:[%s0 + $0xe0] sm:$0xf]
  %v65 = vld [vmem:[%s0 + $0xe4] sm:$0xf]
  %v66 = vld [vmem:[%s0 + $0xe8] sm:$0xf]
  %v67 = vld [vmem:[%s0 + $0xec] sm:$0xf]
  %v68 = vld [vmem:[%s0 + $0xf0] sm:$0xf]
  %v69 = vld [vmem:[%s0 + $0xf4] sm:$0xf]
  %v70 = vld [vmem:[%s0 + $0xf8] sm:$0xf]
  %v71 = vld [vmem:[%s0 + $0xfc] sm:$0xf]
  %v72 = vld [vmem:[%s0 + $0x100] sm:$0xf]
  %v73 = vld [vmem:[%s0 + $0x104] sm:$0xf]
  %v74 = vld [vmem:[%s0 + $0x108] sm:$0xf]
  %v75 = vld [vmem:[%s0 + $0x10c] sm:$0xf]
  %v76 = vld [vmem:[%s0 + $0x110] sm:$0xf]
  %v77 = vld [vmem:[%s0 + $0x114] sm:$0xf]
  %v78 = vld [vmem:[%s0 + $0x118] sm:$0xf]
  %v79 = vld [vmem:[%s0 + $0x11c] sm:$0xf]
  %v80 = vmax.bf16 %v8, %v16
  %v81 = vmax.bf16 %v9, %v17
  %v82 = vmax.bf16 %v10, %v18
  %v83 = vmax.bf16 %v11, %v19
  %v84 = vmax.bf16 %v12, %v20
  %v85 = vmax.bf16 %v13, %v21
  %v86 = vmax.bf16 %v14, %v22
  %v87 = vmax.bf16 %v15, %v23
  %v88 = vmax.bf16 %v24, %v32
  %v89 = vmax.bf16 %v25, %v33
  %v90 = vmax.bf16 %v26, %v34
  %v91 = vmax.bf16 %v27, %v35
  %v92 = vmax.bf16 %v28, %v36
  %v93 = vmax.bf16 %v29, %v37
  %v94 = vmax.bf16 %v30, %v38
  %v95 = vmax.bf16 %v31, %v39
  %v96 = vmax.bf16 %v40, %v48
  %v97 = vmax.bf16 %v41, %v49
  %v98 = vmax.bf16 %v42, %v50
  %v99 = vmax.bf16 %v43, %v51
  %v100 = vmax.bf16 %v44, %v52
  %v101 = vmax.bf16 %v45, %v53
  %v102 = vmax.bf16 %v46, %v54
  %v103 = vmax.bf16 %v47, %v55
  %v104 = vmax.bf16 %v56, %v64
  %v105 = vmax.bf16 %v57, %v65
  %v106 = vmax.bf16 %v58, %v66
  %v107 = vmax.bf16 %v59, %v67
  %v108 = vmax.bf16 %v60, %v68
  %v109 = vmax.bf16 %v61, %v69
  %v110 = vmax.bf16 %v62, %v70
  %v111 = vmax.bf16 %v63, %v71
  %v112 = vmax.bf16 %v80, %v88
  %v113 = vmax.bf16 %v81, %v89
  %v114 = vmax.bf16 %v82, %v90
  %v115 = vmax.bf16 %v83, %v91
  %v116 = vmax.bf16 %v84, %v92
  %v117 = vmax.bf16 %v85, %v93
  %v118 = vmax.bf16 %v86, %v94
  %v119 = vmax.bf16 %v87, %v95
  %v120 = vmax.bf16 %v96, %v104
  %v121 = vmax.bf16 %v97, %v105
  %v122 = vmax.bf16 %v98, %v106
  %v123 = vmax.bf16 %v99, %v107
  %v124 = vmax.bf16 %v100, %v108
  %v125 = vmax.bf16 %v101, %v109
  %v126 = vmax.bf16 %v102, %v110
  %v127 = vmax.bf16 %v103, %v111
  %v128 = vmax.bf16 %v112, %v120
  %v129 = vmax.bf16 %v113, %v121
  %v130 = vmax.bf16 %v114, %v122
  %v131 = vmax.bf16 %v115, %v123
  %v132 = vmax.bf16 %v116, %v124
  %v133 = vmax.bf16 %v117, %v125
  %v134 = vmax.bf16 %v118, %v126
  %v135 = vmax.bf16 %v119, %v127
  %v136 = vmax.bf16 %v128, %v72
  %v137 = vmax.bf16 %v129, %v73
  %v138 = vmax.bf16 %v130, %v74
  %v139 = vmax.bf16 %v131, %v75
  %v140 = vmax.bf16 %v132, %v76
  %v141 = vmax.bf16 %v133, %v77
  %v142 = vmax.bf16 %v134, %v78
  %v143 = vmax.bf16 %v135, %v79
  %144 = vst [vmem:[%s1] sm:$0xf] %v136
  %145 = vst [vmem:[%s1 + $0x4] sm:$0xf] %v137
  %146 = vst [vmem:[%s1 + $0x8] sm:$0xf] %v138
  %147 = vst [vmem:[%s1 + $0xc] sm:$0xf] %v139
  %148 = vst [vmem:[%s1 + $0x10] sm:$0xf] %v140
  %149 = vst [vmem:[%s1 + $0x14] sm:$0xf] %v141
  %150 = vst [vmem:[%s1 + $0x18] sm:$0xf] %v142
  %151 = vst [vmem:[%s1 + $0x1c] sm:$0xf] %v143
  // Predicated region
  $region6: #{alexnet_forward.9} parent=0 // pred_check
    _
  $region7: #{alexnet_forward.9} parent=0 // pred_check_branch
    %153 = sbr.rel (0) target = $region9
  $region8: #{alexnet_forward.9} parent=0 // pred_region
    _
  $region9: #{alexnet_forward.9} parent=0 // pred_fallthru
    _
  // Predicated region
  $region10: #{alexnet_forward.9} parent=0 // pred_check
    _
  $region11: #{alexnet_forward.9} parent=0 // pred_check_branch
    %155 = sbr.rel (0) target = $region13
  $region12: #{alexnet_forward.9} parent=0 // pred_region
    _
  $region13: #{alexnet_forward.9} parent=0 // pred_fallthru
    _

// kernel: alexnet_forward.10
$region0: #{alexnet_forward.10}
  #allocation0 [shape = 'u32[]', space=smem, size = 0x4, offset = 0x4, fixed_abs, tag = 'smem constant byte address 0x4 - core index']
  #allocation1 [shape = 'u32[144,128]{1,0:T(1,128)}', space=vmem, size = 0x12000, scoped, tag = 'internal scratch']
  %s0 = inlined_call_operand.vmem [shape: bf16[128,1664], index: 0, kind: input, shape index: {}]
  %s1 = inlined_call_operand.vmem [shape: bf16[1664,256], index: 1, kind: input, shape index: {}]
  %s2 = inlined_call_operand.vmem [shape: f32[1,256], index: 2, kind: input, shape index: {}]
  %s3 = inlined_call_operand.vmem [shape: bf16[128,256], index: 3, kind: output, shape index: {}]
  %s4 = sld [smem:[#allocation0]]
  $region22: #{alexnet_forward.10} parent=0
    _
  %s6 = ssub.s32 1, %s4
  %s7 = scalar_select 0, %s6, %s4
  // Predicated region
  $region2: #{alexnet_forward.10} parent=0 // pred_check
    _
  $region3: #{alexnet_forward.10} parent=0 // pred_check_branch
    %9 = sbr.rel (0) target = $region5
  $region4: #{alexnet_forward.10} parent=0 // pred_region
    _
  $region5: #{alexnet_forward.10} parent=0 // pred_fallthru
    _
  // Predicated region
  $region6: #{alexnet_forward.10} parent=0 // pred_check
    _
  $region7: #{alexnet_forward.10} parent=0 // pred_check_branch
    %11 = sbr.rel (0) target = $region9
  $region8: #{alexnet_forward.10} parent=0 // pred_region
    _
  $region9: #{alexnet_forward.10} parent=0 // pred_fallthru
    _
  // Predicated region
  $region10: #{alexnet_forward.10} parent=0 // pred_check
    _
  $region11: #{alexnet_forward.10} parent=0 // pred_check_branch
    %13 = sbr.rel (0) target = $region13
  $region12: #{alexnet_forward.10} parent=0 // pred_region
    _
  $region13: #{alexnet_forward.10} parent=0 // pred_fallthru
    _
  %v15 = vld [vmem:[%s0] sm:$0xff]
  %v16 = vld [vmem:[%s0 + $0x8] sm:$0xff]
  %v17 = vld [vmem:[%s0 + $0x10] sm:$0xff]
  %v18 = vld [vmem:[%s0 + $0x18] sm:$0xff]
  %v19 = vld [vmem:[%s0 + $0x20] sm:$0xff]
  %v20 = vld [vmem:[%s0 + $0x28] sm:$0xff]
  %v21 = vld [vmem:[%s0 + $0x30] sm:$0xf]
  %v22 = vld [vmem:[%s0 + $0x34] sm:$0xff]
  %v23 = vld [vmem:[%s0 + $0x3c] sm:$0xff]
  %v24 = vld [vmem:[%s0 + $0x44] sm:$0xff]
  %v25 = vld [vmem:[%s0 + $0x4c] sm:$0xff]
  %v26 = vld [vmem:[%s0 + $0x54] sm:$0xff]
  %v27 = vld [vmem:[%s0 + $0x5c] sm:$0xff]
  %v28 = vld [vmem:[%s0 + $0x64] sm:$0xf]
  %v29 = vld [vmem:[%s0 + $0x68] sm:$0xff]
  %v30 = vld [vmem:[%s0 + $0x70] sm:$0xff]
  %v31 = vld [vmem:[%s0 + $0x78] sm:$0xff]
  %v32 = vld [vmem:[%s0 + $0x80] sm:$0xff]
  %v33 = vld [vmem:[%s0 + $0x88] sm:$0xff]
  %v34 = vld [vmem:[%s0 + $0x90] sm:$0xff]
  %v35 = vld [vmem:[%s0 + $0x98] sm:$0xf]
  %v36 = vld [vmem:[%s0 + $0x9c] sm:$0xff]
  %v37 = vld [vmem:[%s0 + $0xa4] sm:$0xff]
  %v38 = vld [vmem:[%s0 + $0xac] sm:$0xff]
  %v39 = vld [vmem:[%s0 + $0xb4] sm:$0xff]
  %v40 = vld [vmem:[%s0 + $0xbc] sm:$0xff]
  %v41 = vld [vmem:[%s0 + $0xc4] sm:$0xff]
  %v42 = vld [vmem:[%s0 + $0xcc] sm:$0xf]
  %v43 = vld [vmem:[%s0 + $0xd0] sm:$0xff]
  %v44 = vld [vmem:[%s0 + $0xd8] sm:$0xff]
  %v45 = vld [vmem:[%s0 + $0xe0] sm:$0xff]
  %v46 = vld [vmem:[%s0 + $0xe8] sm:$0xff]
  %v47 = vld [vmem:[%s0 + $0xf0] sm:$0xff]
  %v48 = vld [vmem:[%s0 + $0xf8] sm:$0xff]
  %v49 = vld [vmem:[%s0 + $0x100] sm:$0xf]
  %v50 = vld [vmem:[%s0 + $0x104] sm:$0xff]
  %v51 = vld [vmem:[%s0 + $0x10c] sm:$0xff]
  %v52 = vld [vmem:[%s0 + $0x114] sm:$0xff]
  %v53 = vld [vmem:[%s0 + $0x11c] sm:$0xff]
  %v54 = vld [vmem:[%s0 + $0x124] sm:$0xff]
  %v55 = vld [vmem:[%s0 + $0x12c] sm:$0xff]
  %v56 = vld [vmem:[%s0 + $0x134] sm:$0xf]
  %v57 = vld [vmem:[%s0 + $0x138] sm:$0xff]
  %v58 = vld [vmem:[%s0 + $0x140] sm:$0xff]
  %v59 = vld [vmem:[%s0 + $0x148] sm:$0xff]
  %v60 = vld [vmem:[%s0 + $0x150] sm:$0xff]
  %v61 = vld [vmem:[%s0 + $0x158] sm:$0xff]
  %v62 = vld [vmem:[%s0 + $0x160] sm:$0xff]
  %v63 = vld [vmem:[%s0 + $0x168] sm:$0xf]
  %v64 = vld [vmem:[%s0 + $0x16c] sm:$0xff]
  %v65 = vld [vmem:[%s0 + $0x174] sm:$0xff]
  %v66 = vld [vmem:[%s0 + $0x17c] sm:$0xff]
  %v67 = vld [vmem:[%s0 + $0x184] sm:$0xff]
  %v68 = vld [vmem:[%s0 + $0x18c] sm:$0xff]
  %v69 = vld [vmem:[%s0 + $0x194] sm:$0xff]
  %v70 = vld [vmem:[%s0 + $0x19c] sm:$0xf]
  %v71 = vld [vmem:[%s0 + $0x1a0] sm:$0xff]
  %v72 = vld [vmem:[%s0 + $0x1a8] sm:$0xff]
  %v73 = vld [vmem:[%s0 + $0x1b0] sm:$0xff]
  %v74 = vld [vmem:[%s0 + $0x1b8] sm:$0xff]
  %v75 = vld [vmem:[%s0 + $0x1c0] sm:$0xff]
  %v76 = vld [vmem:[%s0 + $0x1c8] sm:$0xff]
  %v77 = vld [vmem:[%s0 + $0x1d0] sm:$0xf]
  %v78 = vld [vmem:[%s0 + $0x1d4] sm:$0xff]
  %v79 = vld [vmem:[%s0 + $0x1dc] sm:$0xff]
  %v80 = vld [vmem:[%s0 + $0x1e4] sm:$0xff]
  %v81 = vld [vmem:[%s0 + $0x1ec] sm:$0xff]
  %v82 = vld [vmem:[%s0 + $0x1f4] sm:$0xff]
  %v83 = vld [vmem:[%s0 + $0x1fc] sm:$0xff]
  %v84 = vld [vmem:[%s0 + $0x204] sm:$0xf]
  %v85 = vld [vmem:[%s0 + $0x208] sm:$0xff]
  %v86 = vld [vmem:[%s0 + $0x210] sm:$0xff]
  %v87 = vld [vmem:[%s0 + $0x218] sm:$0xff]
  %v88 = vld [vmem:[%s0 + $0x220] sm:$0xff]
  %v89 = vld [vmem:[%s0 + $0x228] sm:$0xff]
  %v90 = vld [vmem:[%s0 + $0x230] sm:$0xff]
  %v91 = vld [vmem:[%s0 + $0x238] sm:$0xf]
  %v92 = vld [vmem:[%s0 + $0x23c] sm:$0xff]
  %v93 = vld [vmem:[%s0 + $0x244] sm:$0xff]
  %v94 = vld [vmem:[%s0 + $0x24c] sm:$0xff]
  %v95 = vld [vmem:[%s0 + $0x254] sm:$0xff]
  %v96 = vld [vmem:[%s0 + $0x25c] sm:$0xff]
  %v97 = vld [vmem:[%s0 + $0x264] sm:$0xff]
  %v98 = vld [vmem:[%s0 + $0x26c] sm:$0xf]
  %v99 = vld [vmem:[%s0 + $0x270] sm:$0xff]
  %v100 = vld [vmem:[%s0 + $0x278] sm:$0xff]
  %v101 = vld [vmem:[%s0 + $0x280] sm:$0xff]
  %v102 = vld [vmem:[%s0 + $0x288] sm:$0xff]
  %v103 = vld [vmem:[%s0 + $0x290] sm:$0xff]
  %v104 = vld [vmem:[%s0 + $0x298] sm:$0xff]
  %v105 = vld [vmem:[%s0 + $0x2a0] sm:$0xf]
  %v106 = vld [vmem:[%s0 + $0x2a4] sm:$0xff]
  %v107 = vld [vmem:[%s0 + $0x2ac] sm:$0xff]
  %v108 = vld [vmem:[%s0 + $0x2b4] sm:$0xff]
  %v109 = vld [vmem:[%s0 + $0x2bc] sm:$0xff]
  %v110 = vld [vmem:[%s0 + $0x2c4] sm:$0xff]
  %v111 = vld [vmem:[%s0 + $0x2cc] sm:$0xff]
  %v112 = vld [vmem:[%s0 + $0x2d4] sm:$0xf]
  %v113 = vld [vmem:[%s0 + $0x2d8] sm:$0xff]
  %v114 = vld [vmem:[%s0 + $0x2e0] sm:$0xff]
  %v115 = vld [vmem:[%s0 + $0x2e8] sm:$0xff]
  %v116 = vld [vmem:[%s0 + $0x2f0] sm:$0xff]
  %v117 = vld [vmem:[%s0 + $0x2f8] sm:$0xff]
  %v118 = vld [vmem:[%s0 + $0x300] sm:$0xff]
  %v119 = vld [vmem:[%s0 + $0x308] sm:$0xf]
  %v120 = vld [vmem:[%s0 + $0x30c] sm:$0xff]
  %v121 = vld [vmem:[%s0 + $0x314] sm:$0xff]
  %v122 = vld [vmem:[%s0 + $0x31c] sm:$0xff]
  %v123 = vld [vmem:[%s0 + $0x324] sm:$0xff]
  %v124 = vld [vmem:[%s0 + $0x32c] sm:$0xff]
  %v125 = vld [vmem:[%s0 + $0x334] sm:$0xff]
  %v126 = vld [vmem:[%s0 + $0x33c] sm:$0xf]
  %v127 = vld [vmem:[%s1] sm:$0xff]
  %v128 = vld [vmem:[%s1 + $0x8] sm:$0xff]
  %v129 = vld [vmem:[%s1 + $0x10] sm:$0xff]
  %v130 = vld [vmem:[%s1 + $0x18] sm:$0xff]
  %v131 = vld [vmem:[%s1 + $0x20] sm:$0xff]
  %v132 = vld [vmem:[%s1 + $0x28] sm:$0xff]
  %v133 = vld [vmem:[%s1 + $0x30] sm:$0xff]
  %v134 = vld [vmem:[%s1 + $0x38] sm:$0xff]
  %v135 = vld [vmem:[%s1 + $0x40] sm:$0xff]
  %v136 = vld [vmem:[%s1 + $0x48] sm:$0xff]
  %v137 = vld [vmem:[%s1 + $0x50] sm:$0xff]
  %v138 = vld [vmem:[%s1 + $0x58] sm:$0xff]
  %v139 = vld [vmem:[%s1 + $0x60] sm:$0xff]
  %v140 = vld [vmem:[%s1 + $0x68] sm:$0xff]
  %v141 = vld [vmem:[%s1 + $0x70] sm:$0xff]
  %v142 = vld [vmem:[%s1 + $0x78] sm:$0xff]
  %v143 = vld [vmem:[%s1 + $0x80] sm:$0xff]
  %v144 = vld [vmem:[%s1 + $0x88] sm:$0xff]
  %v145 = vld [vmem:[%s1 + $0x90] sm:$0xff]
  %v146 = vld [vmem:[%s1 + $0x98] sm:$0xff]
  %v147 = vld [vmem:[%s1 + $0xa0] sm:$0xff]
  %v148 = vld [vmem:[%s1 + $0xa8] sm:$0xff]
  %v149 = vld [vmem:[%s1 + $0xb0] sm:$0xff]
  %v150 = vld [vmem:[%s1 + $0xb8] sm:$0xff]
  %v151 = vld [vmem:[%s1 + $0xc0] sm:$0xff]
  %v152 = vld [vmem:[%s1 + $0xc8] sm:$0xff]
  %v153 = vld [vmem:[%s1 + $0xd0] sm:$0xff]
  %v154 = vld [vmem:[%s1 + $0xd8] sm:$0xff]
  %v155 = vld [vmem:[%s1 + $0xe0] sm:$0xff]
  %v156 = vld [vmem:[%s1 + $0xe8] sm:$0xff]
  %v157 = vld [vmem:[%s1 + $0xf0] sm:$0xff]
  %v158 = vld [vmem:[%s1 + $0xf8] sm:$0xff]
  %v159 = vld [vmem:[%s1 + $0x100] sm:$0xff]
  %v160 = vld [vmem:[%s1 + $0x108] sm:$0xff]
  %v161 = vld [vmem:[%s1 + $0x110] sm:$0xff]
  %v162 = vld [vmem:[%s1 + $0x118] sm:$0xff]
  %v163 = vld [vmem:[%s1 + $0x120] sm:$0xff]
  %v164 = vld [vmem:[%s1 + $0x128] sm:$0xff]
  %v165 = vld [vmem:[%s1 + $0x130] sm:$0xff]
  %v166 = vld [vmem:[%s1 + $0x138] sm:$0xff]
  %v167 = vld [vmem:[%s1 + $0x140] sm:$0xff]
  %v168 = vld [vmem:[%s1 + $0x148] sm:$0xff]
  %v169 = vld [vmem:[%s1 + $0x150] sm:$0xff]
  %v170 = vld [vmem:[%s1 + $0x158] sm:$0xff]
  %v171 = vld [vmem:[%s1 + $0x160] sm:$0xff]
  %v172 = vld [vmem:[%s1 + $0x168] sm:$0xff]
  %v173 = vld [vmem:[%s1 + $0x170] sm:$0xff]
  %v174 = vld [vmem:[%s1 + $0x178] sm:$0xff]
  %v175 = vld [vmem:[%s1 + $0x180] sm:$0xff]
  %v176 = vld [vmem:[%s1 + $0x188] sm:$0xff]
  %v177 = vld [vmem:[%s1 + $0x190] sm:$0xff]
  %v178 = vld [vmem:[%s1 + $0x198] sm:$0xff]
  %v179 = vld [vmem:[%s1 + $0x1a0] sm:$0xff]
  %v180 = vld [vmem:[%s1 + $0x1a8] sm:$0xff]
  %v181 = vld [vmem:[%s1 + $0x1b0] sm:$0xff]
  %v182 = vld [vmem:[%s1 + $0x1b8] sm:$0xff]
  %v183 = vld [vmem:[%s1 + $0x1c0] sm:$0xff]
  %v184 = vld [vmem:[%s1 + $0x1c8] sm:$0xff]
  %v185 = vld [vmem:[%s1 + $0x1d0] sm:$0xff]
  %v186 = vld [vmem:[%s1 + $0x1d8] sm:$0xff]
  %v187 = vld [vmem:[%s1 + $0x1e0] sm:$0xff]
  %v188 = vld [vmem:[%s1 + $0x1e8] sm:$0xff]
  %v189 = vld [vmem:[%s1 + $0x1f0] sm:$0xff]
  %v190 = vld [vmem:[%s1 + $0x1f8] sm:$0xff]
  %v191 = vld [vmem:[%s1 + $0x200] sm:$0xff]
  %v192 = vld [vmem:[%s1 + $0x208] sm:$0xff]
  %v193 = vld [vmem:[%s1 + $0x210] sm:$0xff]
  %v194 = vld [vmem:[%s1 + $0x218] sm:$0xff]
  %v195 = vld [vmem:[%s1 + $0x220] sm:$0xff]
  %v196 = vld [vmem:[%s1 + $0x228] sm:$0xff]
  %v197 = vld [vmem:[%s1 + $0x230] sm:$0xff]
  %v198 = vld [vmem:[%s1 + $0x238] sm:$0xff]
  %v199 = vld [vmem:[%s1 + $0x240] sm:$0xff]
  %v200 = vld [vmem:[%s1 + $0x248] sm:$0xff]
  %v201 = vld [vmem:[%s1 + $0x250] sm:$0xff]
  %v202 = vld [vmem:[%s1 + $0x258] sm:$0xff]
  %v203 = vld [vmem:[%s1 + $0x260] sm:$0xff]
  %v204 = vld [vmem:[%s1 + $0x268] sm:$0xff]
  %v205 = vld [vmem:[%s1 + $0x270] sm:$0xff]
  %v206 = vld [vmem:[%s1 + $0x278] sm:$0xff]
  %v207 = vld [vmem:[%s1 + $0x280] sm:$0xff]
  %v208 = vld [vmem:[%s1 + $0x288] sm:$0xff]
  %v209 = vld [vmem:[%s1 + $0x290] sm:$0xff]
  %v210 = vld [vmem:[%s1 + $0x298] sm:$0xff]
  %v211 = vld [vmem:[%s1 + $0x2a0] sm:$0xff]
  %v212 = vld [vmem:[%s1 + $0x2a8] sm:$0xff]
  %v213 = vld [vmem:[%s1 + $0x2b0] sm:$0xff]
  %v214 = vld [vmem:[%s1 + $0x2b8] sm:$0xff]
  %v215 = vld [vmem:[%s1 + $0x2c0] sm:$0xff]
  %v216 = vld [vmem:[%s1 + $0x2c8] sm:$0xff]
  %v217 = vld [vmem:[%s1 + $0x2d0] sm:$0xff]
  %v218 = vld [vmem:[%s1 + $0x2d8] sm:$0xff]
  %v219 = vld [vmem:[%s1 + $0x2e0] sm:$0xff]
  %v220 = vld [vmem:[%s1 + $0x2e8] sm:$0xff]
  %v221 = vld [vmem:[%s1 + $0x2f0] sm:$0xff]
  %v222 = vld [vmem:[%s1 + $0x2f8] sm:$0xff]
  %v223 = vld [vmem:[%s1 + $0x300] sm:$0xff]
  %v224 = vld [vmem:[%s1 + $0x308] sm:$0xff]
  %v225 = vld [vmem:[%s1 + $0x310] sm:$0xff]
  %v226 = vld [vmem:[%s1 + $0x318] sm:$0xff]
  %v227 = vld [vmem:[%s1 + $0x320] sm:$0xff]
  %v228 = vld [vmem:[%s1 + $0x328] sm:$0xff]
  %v229 = vld [vmem:[%s1 + $0x330] sm:$0xff]
  %v230 = vld [vmem:[%s1 + $0x338] sm:$0xff]
  %v231 = vld [vmem:[%s1 + $0x340] sm:$0xff]
  %v232 = vld [vmem:[%s1 + $0x348] sm:$0xff]
  %v233 = vld [vmem:[%s1 + $0x350] sm:$0xff]
  %v234 = vld [vmem:[%s1 + $0x358] sm:$0xff]
  %v235 = vld [vmem:[%s1 + $0x360] sm:$0xff]
  %v236 = vld [vmem:[%s1 + $0x368] sm:$0xff]
  %v237 = vld [vmem:[%s1 + $0x370] sm:$0xff]
  %v238 = vld [vmem:[%s1 + $0x378] sm:$0xff]
  %v239 = vld [vmem:[%s1 + $0x380] sm:$0xff]
  %v240 = vld [vmem:[%s1 + $0x388] sm:$0xff]
  %v241 = vld [vmem:[%s1 + $0x390] sm:$0xff]
  %v242 = vld [vmem:[%s1 + $0x398] sm:$0xff]
  %v243 = vld [vmem:[%s1 + $0x3a0] sm:$0xff]
  %v244 = vld [vmem:[%s1 + $0x3a8] sm:$0xff]
  %v245 = vld [vmem:[%s1 + $0x3b0] sm:$0xff]
  %v246 = vld [vmem:[%s1 + $0x3b8] sm:$0xff]
  %v247 = vld [vmem:[%s1 + $0x3c0] sm:$0xff]
  %v248 = vld [vmem:[%s1 + $0x3c8] sm:$0xff]
  %v249 = vld [vmem:[%s1 + $0x3d0] sm:$0xff]
  %v250 = vld [vmem:[%s1 + $0x3d8] sm:$0xff]
  %v251 = vld [vmem:[%s1 + $0x3e0] sm:$0xff]
  %v252 = vld [vmem:[%s1 + $0x3e8] sm:$0xff]
  %v253 = vld [vmem:[%s1 + $0x3f0] sm:$0xff]
  %v254 = vld [vmem:[%s1 + $0x3f8] sm:$0xff]
  %v255 = vld [vmem:[%s1 + $0x400] sm:$0xff]
  %v256 = vld [vmem:[%s1 + $0x408] sm:$0xff]
  %v257 = vld [vmem:[%s1 + $0x410] sm:$0xff]
  %v258 = vld [vmem:[%s1 + $0x418] sm:$0xff]
  %v259 = vld [vmem:[%s1 + $0x420] sm:$0xff]
  %v260 = vld [vmem:[%s1 + $0x428] sm:$0xff]
  %v261 = vld [vmem:[%s1 + $0x430] sm:$0xff]
  %v262 = vld [vmem:[%s1 + $0x438] sm:$0xff]
  %v263 = vld [vmem:[%s1 + $0x440] sm:$0xff]
  %v264 = vld [vmem:[%s1 + $0x448] sm:$0xff]
  %v265 = vld [vmem:[%s1 + $0x450] sm:$0xff]
  %v266 = vld [vmem:[%s1 + $0x458] sm:$0xff]
  %v267 = vld [vmem:[%s1 + $0x460] sm:$0xff]
  %v268 = vld [vmem:[%s1 + $0x468] sm:$0xff]
  %v269 = vld [vmem:[%s1 + $0x470] sm:$0xff]
  %v270 = vld [vmem:[%s1 + $0x478] sm:$0xff]
  %v271 = vld [vmem:[%s1 + $0x480] sm:$0xff]
  %v272 = vld [vmem:[%s1 + $0x488] sm:$0xff]
  %v273 = vld [vmem:[%s1 + $0x490] sm:$0xff]
  %v274 = vld [vmem:[%s1 + $0x498] sm:$0xff]
  %v275 = vld [vmem:[%s1 + $0x4a0] sm:$0xff]
  %v276 = vld [vmem:[%s1 + $0x4a8] sm:$0xff]
  %v277 = vld [vmem:[%s1 + $0x4b0] sm:$0xff]
  %v278 = vld [vmem:[%s1 + $0x4b8] sm:$0xff]
  %v279 = vld [vmem:[%s1 + $0x4c0] sm:$0xff]
  %v280 = vld [vmem:[%s1 + $0x4c8] sm:$0xff]
  %v281 = vld [vmem:[%s1 + $0x4d0] sm:$0xff]
  %v282 = vld [vmem:[%s1 + $0x4d8] sm:$0xff]
  %v283 = vld [vmem:[%s1 + $0x4e0] sm:$0xff]
  %v284 = vld [vmem:[%s1 + $0x4e8] sm:$0xff]
  %v285 = vld [vmem:[%s1 + $0x4f0] sm:$0xff]
  %v286 = vld [vmem:[%s1 + $0x4f8] sm:$0xff]
  %v287 = vld [vmem:[%s1 + $0x500] sm:$0xff]
  %v288 = vld [vmem:[%s1 + $0x508] sm:$0xff]
  %v289 = vld [vmem:[%s1 + $0x510] sm:$0xff]
  %v290 = vld [vmem:[%s1 + $0x518] sm:$0xff]
  %v291 = vld [vmem:[%s1 + $0x520] sm:$0xff]
  %v292 = vld [vmem:[%s1 + $0x528] sm:$0xff]
  %v293 = vld [vmem:[%s1 + $0x530] sm:$0xff]
  %v294 = vld [vmem:[%s1 + $0x538] sm:$0xff]
  %v295 = vld [vmem:[%s1 + $0x540] sm:$0xff]
  %v296 = vld [vmem:[%s1 + $0x548] sm:$0xff]
  %v297 = vld [vmem:[%s1 + $0x550] sm:$0xff]
  %v298 = vld [vmem:[%s1 + $0x558] sm:$0xff]
  %v299 = vld [vmem:[%s1 + $0x560] sm:$0xff]
  %v300 = vld [vmem:[%s1 + $0x568] sm:$0xff]
  %v301 = vld [vmem:[%s1 + $0x570] sm:$0xff]
  %v302 = vld [vmem:[%s1 + $0x578] sm:$0xff]
  %v303 = vld [vmem:[%s1 + $0x580] sm:$0xff]
  %v304 = vld [vmem:[%s1 + $0x588] sm:$0xff]
  %v305 = vld [vmem:[%s1 + $0x590] sm:$0xff]
  %v306 = vld [vmem:[%s1 + $0x598] sm:$0xff]
  %v307 = vld [vmem:[%s1 + $0x5a0] sm:$0xff]
  %v308 = vld [vmem:[%s1 + $0x5a8] sm:$0xff]
  %v309 = vld [vmem:[%s1 + $0x5b0] sm:$0xff]
  %v310 = vld [vmem:[%s1 + $0x5b8] sm:$0xff]
  %v311 = vld [vmem:[%s1 + $0x5c0] sm:$0xff]
  %v312 = vld [vmem:[%s1 + $0x5c8] sm:$0xff]
  %v313 = vld [vmem:[%s1 + $0x5d0] sm:$0xff]
  %v314 = vld [vmem:[%s1 + $0x5d8] sm:$0xff]
  %v315 = vld [vmem:[%s1 + $0x5e0] sm:$0xff]
  %v316 = vld [vmem:[%s1 + $0x5e8] sm:$0xff]
  %v317 = vld [vmem:[%s1 + $0x5f0] sm:$0xff]
  %v318 = vld [vmem:[%s1 + $0x5f8] sm:$0xff]
  %v319 = vld [vmem:[%s1 + $0x600] sm:$0xff]
  %v320 = vld [vmem:[%s1 + $0x608] sm:$0xff]
  %v321 = vld [vmem:[%s1 + $0x610] sm:$0xff]
  %v322 = vld [vmem:[%s1 + $0x618] sm:$0xff]
  %v323 = vld [vmem:[%s1 + $0x620] sm:$0xff]
  %v324 = vld [vmem:[%s1 + $0x628] sm:$0xff]
  %v325 = vld [vmem:[%s1 + $0x630] sm:$0xff]
  %v326 = vld [vmem:[%s1 + $0x638] sm:$0xff]
  %v327 = vld [vmem:[%s1 + $0x640] sm:$0xff]
  %v328 = vld [vmem:[%s1 + $0x648] sm:$0xff]
  %v329 = vld [vmem:[%s1 + $0x650] sm:$0xff]
  %v330 = vld [vmem:[%s1 + $0x658] sm:$0xff]
  %v331 = vld [vmem:[%s1 + $0x660] sm:$0xff]
  %v332 = vld [vmem:[%s1 + $0x668] sm:$0xff]
  %v333 = vld [vmem:[%s1 + $0x670] sm:$0xff]
  %v334 = vld [vmem:[%s1 + $0x678] sm:$0xff]
  %v335 = vld [vmem:[%s2] sm:$0x3]
  %v337 = vlaneseq
  %v338 = vshrl.u32 %v337, 7
  %v339 = vsub.s32 0, %v338
  %v340 = vrot.slane %v335, %v339
  %v341 = vlaneseq
  %v342 = vshrl.u32 %v341, 7
  %v343 = vsub.s32 1, %v342
  %v344 = vrot.slane %v335, %v343
  %v459 = vunpack.c.l.b16 %v15
  %v460 = vunpack.c.h.b16 %v15
  %v461 = vunpack.c.l.b16 %v16
  %v462 = vunpack.c.h.b16 %v16
  %v463 = vunpack.c.l.b16 %v17
  %v464 = vunpack.c.h.b16 %v17
  %v465 = vunpack.c.l.b16 %v18
  %v466 = vunpack.c.h.b16 %v18
  %v467 = vunpack.c.l.b16 %v19
  %v468 = vunpack.c.h.b16 %v19
  %v469 = vunpack.c.l.b16 %v20
  %v470 = vunpack.c.h.b16 %v20
  %v471 = vunpack.c.l.b16 %v21
  %v472 = vunpack.c.l.b16 %v22
  %v473 = vunpack.c.h.b16 %v22
  %v474 = vunpack.c.l.b16 %v23
  %v475 = vunpack.c.h.b16 %v23
  %v476 = vunpack.c.l.b16 %v24
  %v477 = vunpack.c.h.b16 %v24
  %v478 = vunpack.c.l.b16 %v25
  %v479 = vunpack.c.h.b16 %v25
  %v480 = vunpack.c.l.b16 %v26
  %v481 = vunpack.c.h.b16 %v26
  %v482 = vunpack.c.l.b16 %v27
  %v483 = vunpack.c.h.b16 %v27
  %v484 = vunpack.c.l.b16 %v28
  %v485 = vunpack.c.l.b16 %v29
  %v486 = vunpack.c.h.b16 %v29
  %v487 = vunpack.c.l.b16 %v30
  %v488 = vunpack.c.h.b16 %v30
  %v489 = vunpack.c.l.b16 %v31
  %v490 = vunpack.c.h.b16 %v31
  %v491 = vunpack.c.l.b16 %v32
  %v492 = vunpack.c.h.b16 %v32
  %v493 = vunpack.c.l.b16 %v33
  %v494 = vunpack.c.h.b16 %v33
  %v495 = vunpack.c.l.b16 %v34
  %v496 = vunpack.c.h.b16 %v34
  %v497 = vunpack.c.l.b16 %v35
  %v498 = vunpack.c.l.b16 %v36
  %v499 = vunpack.c.h.b16 %v36
  %v500 = vunpack.c.l.b16 %v37
  %v501 = vunpack.c.h.b16 %v37
  %v502 = vunpack.c.l.b16 %v38
  %v503 = vunpack.c.h.b16 %v38
  %v504 = vunpack.c.l.b16 %v39
  %v505 = vunpack.c.h.b16 %v39
  %v506 = vunpack.c.l.b16 %v40
  %v507 = vunpack.c.h.b16 %v40
  %v508 = vunpack.c.l.b16 %v41
  %v509 = vunpack.c.h.b16 %v41
  %v510 = vunpack.c.l.b16 %v42
  %v511 = vunpack.c.l.b16 %v43
  %v512 = vunpack.c.h.b16 %v43
  %v513 = vunpack.c.l.b16 %v44
  %v514 = vunpack.c.h.b16 %v44
  %v515 = vunpack.c.l.b16 %v45
  %v516 = vunpack.c.h.b16 %v45
  %v517 = vunpack.c.l.b16 %v46
  %v518 = vunpack.c.h.b16 %v46
  %v519 = vunpack.c.l.b16 %v47
  %v520 = vunpack.c.h.b16 %v47
  %v521 = vunpack.c.l.b16 %v48
  %v522 = vunpack.c.h.b16 %v48
  %v523 = vunpack.c.l.b16 %v49
  %v524 = vunpack.c.l.b16 %v50
  %v525 = vunpack.c.h.b16 %v50
  %v526 = vunpack.c.l.b16 %v51
  %v527 = vunpack.c.h.b16 %v51
  %v528 = vunpack.c.l.b16 %v52
  %v529 = vunpack.c.h.b16 %v52
  %v530 = vunpack.c.l.b16 %v53
  %v531 = vunpack.c.h.b16 %v53
  %v532 = vunpack.c.l.b16 %v54
  %v533 = vunpack.c.h.b16 %v54
  %v534 = vunpack.c.l.b16 %v55
  %v535 = vunpack.c.h.b16 %v55
  %v536 = vunpack.c.l.b16 %v56
  %v537 = vunpack.c.l.b16 %v57
  %v538 = vunpack.c.h.b16 %v57
  %v539 = vunpack.c.l.b16 %v58
  %v540 = vunpack.c.h.b16 %v58
  %v541 = vunpack.c.l.b16 %v59
  %v542 = vunpack.c.h.b16 %v59
  %v543 = vunpack.c.l.b16 %v60
  %v544 = vunpack.c.h.b16 %v60
  %v545 = vunpack.c.l.b16 %v61
  %v546 = vunpack.c.h.b16 %v61
  %v547 = vunpack.c.l.b16 %v62
  %v548 = vunpack.c.h.b16 %v62
  %v549 = vunpack.c.l.b16 %v63
  %v550 = vunpack.c.l.b16 %v64
  %v551 = vunpack.c.h.b16 %v64
  %v552 = vunpack.c.l.b16 %v65
  %v553 = vunpack.c.h.b16 %v65
  %v554 = vunpack.c.l.b16 %v66
  %v555 = vunpack.c.h.b16 %v66
  %v556 = vunpack.c.l.b16 %v67
  %v557 = vunpack.c.h.b16 %v67
  %v558 = vunpack.c.l.b16 %v68
  %v559 = vunpack.c.h.b16 %v68
  %v560 = vunpack.c.l.b16 %v69
  %v561 = vunpack.c.h.b16 %v69
  %v562 = vunpack.c.l.b16 %v70
  %v563 = vunpack.c.l.b16 %v71
  %v564 = vunpack.c.h.b16 %v71
  %v565 = vunpack.c.l.b16 %v72
  %v566 = vunpack.c.h.b16 %v72
  %v567 = vunpack.c.l.b16 %v73
  %v568 = vunpack.c.h.b16 %v73
  %v569 = vunpack.c.l.b16 %v74
  %v570 = vunpack.c.h.b16 %v74
  %v571 = vunpack.c.l.b16 %v75
  %v572 = vunpack.c.h.b16 %v75
  %v573 = vunpack.c.l.b16 %v76
  %v574 = vunpack.c.h.b16 %v76
  %v575 = vunpack.c.l.b16 %v77
  %v576 = vunpack.c.l.b16 %v78
  %v577 = vunpack.c.h.b16 %v78
  %v578 = vunpack.c.l.b16 %v79
  %v579 = vunpack.c.h.b16 %v79
  %v580 = vunpack.c.l.b16 %v80
  %v581 = vunpack.c.h.b16 %v80
  %v582 = vunpack.c.l.b16 %v81
  %v583 = vunpack.c.h.b16 %v81
  %v584 = vunpack.c.l.b16 %v82
  %v585 = vunpack.c.h.b16 %v82
  %v586 = vunpack.c.l.b16 %v83
  %v587 = vunpack.c.h.b16 %v83
  %v588 = vunpack.c.l.b16 %v84
  %v589 = vunpack.c.l.b16 %v85
  %v590 = vunpack.c.h.b16 %v85
  %v591 = vunpack.c.l.b16 %v86
  %v592 = vunpack.c.h.b16 %v86
  %v593 = vunpack.c.l.b16 %v87
  %v594 = vunpack.c.h.b16 %v87
  %v595 = vunpack.c.l.b16 %v88
  %v596 = vunpack.c.h.b16 %v88
  %v597 = vunpack.c.l.b16 %v89
  %v598 = vunpack.c.h.b16 %v89
  %v599 = vunpack.c.l.b16 %v90
  %v600 = vunpack.c.h.b16 %v90
  %v601 = vunpack.c.l.b16 %v91
  %v602 = vunpack.c.l.b16 %v92
  %v603 = vunpack.c.h.b16 %v92
  %v604 = vunpack.c.l.b16 %v93
  %v605 = vunpack.c.h.b16 %v93
  %v606 = vunpack.c.l.b16 %v94
  %v607 = vunpack.c.h.b16 %v94
  %v608 = vunpack.c.l.b16 %v95
  %v609 = vunpack.c.h.b16 %v95
  %v610 = vunpack.c.l.b16 %v96
  %v611 = vunpack.c.h.b16 %v96
  %v612 = vunpack.c.l.b16 %v97
  %v613 = vunpack.c.h.b16 %v97
  %v614 = vunpack.c.l.b16 %v98
  %v615 = vunpack.c.l.b16 %v99
  %v616 = vunpack.c.h.b16 %v99
  %v617 = vunpack.c.l.b16 %v100
  %v618 = vunpack.c.h.b16 %v100
  %v619 = vunpack.c.l.b16 %v101
  %v620 = vunpack.c.h.b16 %v101
  %v621 = vunpack.c.l.b16 %v102
  %v622 = vunpack.c.h.b16 %v102
  %v623 = vunpack.c.l.b16 %v103
  %v624 = vunpack.c.h.b16 %v103
  %v625 = vunpack.c.l.b16 %v104
  %v626 = vunpack.c.h.b16 %v104
  %v627 = vunpack.c.l.b16 %v105
  %v628 = vunpack.c.l.b16 %v106
  %v629 = vunpack.c.h.b16 %v106
  %v630 = vunpack.c.l.b16 %v107
  %v631 = vunpack.c.h.b16 %v107
  %v632 = vunpack.c.l.b16 %v108
  %v633 = vunpack.c.h.b16 %v108
  %v634 = vunpack.c.l.b16 %v109
  %v635 = vunpack.c.h.b16 %v109
  %v636 = vunpack.c.l.b16 %v110
  %v637 = vunpack.c.h.b16 %v110
  %v638 = vunpack.c.l.b16 %v111
  %v639 = vunpack.c.h.b16 %v111
  %v640 = vunpack.c.l.b16 %v112
  %v641 = vunpack.c.l.b16 %v113
  %v642 = vunpack.c.h.b16 %v113
  %v643 = vunpack.c.l.b16 %v114
  %v644 = vunpack.c.h.b16 %v114
  %v645 = vunpack.c.l.b16 %v115
  %v646 = vunpack.c.h.b16 %v115
  %v647 = vunpack.c.l.b16 %v116
  %v648 = vunpack.c.h.b16 %v116
  %v649 = vunpack.c.l.b16 %v117
  %v650 = vunpack.c.h.b16 %v117
  %v651 = vunpack.c.l.b16 %v118
  %v652 = vunpack.c.h.b16 %v118
  %v653 = vunpack.c.l.b16 %v119
  %v654 = vunpack.c.l.b16 %v120
  %v655 = vunpack.c.h.b16 %v120
  %v656 = vunpack.c.l.b16 %v121
  %v657 = vunpack.c.h.b16 %v121
  %v658 = vunpack.c.l.b16 %v122
  %v659 = vunpack.c.h.b16 %v122
  %v660 = vunpack.c.l.b16 %v123
  %v661 = vunpack.c.h.b16 %v123
  %v662 = vunpack.c.l.b16 %v124
  %v663 = vunpack.c.h.b16 %v124
  %v664 = vunpack.c.l.b16 %v125
  %v665 = vunpack.c.h.b16 %v125
  %v666 = vunpack.c.l.b16 %v126
  %v667 = vpack.c.b16 %v472, %v459
  %v668 = vpack.c.b16 %v473, %v460
  %v669 = vpack.c.b16 %v474, %v461
  %v670 = vpack.c.b16 %v475, %v462
  %v671 = vpack.c.b16 %v476, %v463
  %v672 = vpack.c.b16 %v477, %v464
  %v673 = vpack.c.b16 %v478, %v465
  %v674 = vpack.c.b16 %v479, %v466
  %v675 = vpack.c.b16 %v480, %v467
  %v676 = vpack.c.b16 %v481, %v468
  %v677 = vpack.c.b16 %v482, %v469
  %v678 = vpack.c.b16 %v483, %v470
  %v679 = vpack.c.b16 %v484, %v471
  %v680 = vpack.c.b16 %v498, %v485
  %v681 = vpack.c.b16 %v499, %v486
  %v682 = vpack.c.b16 %v500, %v487
  %v683 = vpack.c.b16 %v501, %v488
  %v684 = vpack.c.b16 %v502, %v489
  %v685 = vpack.c.b16 %v503, %v490
  %v686 = vpack.c.b16 %v504, %v491
  %v687 = vpack.c.b16 %v505, %v492
  %v688 = vpack.c.b16 %v506, %v493
  %v689 = vpack.c.b16 %v507, %v494
  %v690 = vpack.c.b16 %v508, %v495
  %v691 = vpack.c.b16 %v509, %v496
  %v692 = vpack.c.b16 %v510, %v497
  %v693 = vpack.c.b16 %v524, %v511
  %v694 = vpack.c.b16 %v525, %v512
  %v695 = vpack.c.b16 %v526, %v513
  %v696 = vpack.c.b16 %v527, %v514
  %v697 = vpack.c.b16 %v528, %v515
  %v698 = vpack.c.b16 %v529, %v516
  %v699 = vpack.c.b16 %v530, %v517
  %v700 = vpack.c.b16 %v531, %v518
  %v701 = vpack.c.b16 %v532, %v519
  %v702 = vpack.c.b16 %v533, %v520
  %v703 = vpack.c.b16 %v534, %v521
  %v704 = vpack.c.b16 %v535, %v522
  %v705 = vpack.c.b16 %v536, %v523
  %v706 = vpack.c.b16 %v550, %v537
  %v707 = vpack.c.b16 %v551, %v538
  %v708 = vpack.c.b16 %v552, %v539
  %v709 = vpack.c.b16 %v553, %v540
  %v710 = vpack.c.b16 %v554, %v541
  %v711 = vpack.c.b16 %v555, %v542
  %v712 = vpack.c.b16 %v556, %v543
  %v713 = vpack.c.b16 %v557, %v544
  %v714 = vpack.c.b16 %v558, %v545
  %v715 = vpack.c.b16 %v559, %v546
  %v716 = vpack.c.b16 %v560, %v547
  %v717 = vpack.c.b16 %v561, %v548
  %v718 = vpack.c.b16 %v562, %v549
  %v719 = vpack.c.b16 %v576, %v563
  %v720 = vpack.c.b16 %v577, %v564
  %v721 = vpack.c.b16 %v578, %v565
  %v722 = vpack.c.b16 %v579, %v566
  %v723 = vpack.c.b16 %v580, %v567
  %v724 = vpack.c.b16 %v581, %v568
  %v725 = vpack.c.b16 %v582, %v569
  %v726 = vpack.c.b16 %v583, %v570
  %v727 = vpack.c.b16 %v584, %v571
  %v728 = vpack.c.b16 %v585, %v572
  %v729 = vpack.c.b16 %v586, %v573
  %v730 = vpack.c.b16 %v587, %v574
  %v731 = vpack.c.b16 %v588, %v575
  %v732 = vpack.c.b16 %v602, %v589
  %v733 = vpack.c.b16 %v603, %v590
  %v734 = vpack.c.b16 %v604, %v591
  %v735 = vpack.c.b16 %v605, %v592
  %v736 = vpack.c.b16 %v606, %v593
  %v737 = vpack.c.b16 %v607, %v594
  %v738 = vpack.c.b16 %v608, %v595
  %v739 = vpack.c.b16 %v609, %v596
  %v740 = vpack.c.b16 %v610, %v597
  %v741 = vpack.c.b16 %v611, %v598
  %v742 = vpack.c.b16 %v612, %v599
  %v743 = vpack.c.b16 %v613, %v600
  %v744 = vpack.c.b16 %v614, %v601
  %v745 = vpack.c.b16 %v628, %v615
  %v746 = vpack.c.b16 %v629, %v616
  %v747 = vpack.c.b16 %v630, %v617
  %v748 = vpack.c.b16 %v631, %v618
  %v749 = vpack.c.b16 %v632, %v619
  %v750 = vpack.c.b16 %v633, %v620
  %v751 = vpack.c.b16 %v634, %v621
  %v752 = vpack.c.b16 %v635, %v622
  %v753 = vpack.c.b16 %v636, %v623
  %v754 = vpack.c.b16 %v637, %v624
  %v755 = vpack.c.b16 %v638, %v625
  %v756 = vpack.c.b16 %v639, %v626
  %v757 = vpack.c.b16 %v640, %v627
  %v758 = vpack.c.b16 %v654, %v641
  %v759 = vpack.c.b16 %v655, %v642
  %v760 = vpack.c.b16 %v656, %v643
  %v761 = vpack.c.b16 %v657, %v644
  %v762 = vpack.c.b16 %v658, %v645
  %v763 = vpack.c.b16 %v659, %v646
  %v764 = vpack.c.b16 %v660, %v647
  %v765 = vpack.c.b16 %v661, %v648
  %v766 = vpack.c.b16 %v662, %v649
  %v767 = vpack.c.b16 %v663, %v650
  %v768 = vpack.c.b16 %v664, %v651
  %v769 = vpack.c.b16 %v665, %v652
  %v770 = vpack.c.b16 %v666, %v653
  %v1083 = vunpack.c.l.b16 %v127
  %v1084 = vunpack.c.h.b16 %v127
  %v1085 = vunpack.c.l.b16 %v128
  %v1086 = vunpack.c.h.b16 %v128
  %v1087 = vunpack.c.l.b16 %v129
  %v1088 = vunpack.c.h.b16 %v129
  %v1089 = vunpack.c.l.b16 %v130
  %v1090 = vunpack.c.h.b16 %v130
  %v1091 = vunpack.c.l.b16 %v131
  %v1092 = vunpack.c.h.b16 %v131
  %v1093 = vunpack.c.l.b16 %v132
  %v1094 = vunpack.c.h.b16 %v132
  %v1095 = vunpack.c.l.b16 %v133
  %v1096 = vunpack.c.h.b16 %v133
  %v1097 = vunpack.c.l.b16 %v134
  %v1098 = vunpack.c.h.b16 %v134
  %v1099 = vunpack.c.l.b16 %v135
  %v1100 = vunpack.c.h.b16 %v135
  %v1101 = vunpack.c.l.b16 %v136
  %v1102 = vunpack.c.h.b16 %v136
  %v1103 = vunpack.c.l.b16 %v137
  %v1104 = vunpack.c.h.b16 %v137
  %v1105 = vunpack.c.l.b16 %v138
  %v1106 = vunpack.c.h.b16 %v138
  %v1107 = vunpack.c.l.b16 %v139
  %v1108 = vunpack.c.h.b16 %v139
  %v1109 = vunpack.c.l.b16 %v140
  %v1110 = vunpack.c.h.b16 %v140
  %v1111 = vunpack.c.l.b16 %v141
  %v1112 = vunpack.c.h.b16 %v141
  %v1113 = vunpack.c.l.b16 %v142
  %v1114 = vunpack.c.h.b16 %v142
  %v1115 = vunpack.c.l.b16 %v143
  %v1116 = vunpack.c.h.b16 %v143
  %v1117 = vunpack.c.l.b16 %v144
  %v1118 = vunpack.c.h.b16 %v144
  %v1119 = vunpack.c.l.b16 %v145
  %v1120 = vunpack.c.h.b16 %v145
  %v1121 = vunpack.c.l.b16 %v146
  %v1122 = vunpack.c.h.b16 %v146
  %v1123 = vunpack.c.l.b16 %v147
  %v1124 = vunpack.c.h.b16 %v147
  %v1125 = vunpack.c.l.b16 %v148
  %v1126 = vunpack.c.h.b16 %v148
  %v1127 = vunpack.c.l.b16 %v149
  %v1128 = vunpack.c.h.b16 %v149
  %v1129 = vunpack.c.l.b16 %v150
  %v1130 = vunpack.c.h.b16 %v150
  %v1131 = vunpack.c.l.b16 %v151
  %v1132 = vunpack.c.h.b16 %v151
  %v1133 = vunpack.c.l.b16 %v152
  %v1134 = vunpack.c.h.b16 %v152
  %v1135 = vunpack.c.l.b16 %v153
  %v1136 = vunpack.c.h.b16 %v153
  %v1137 = vunpack.c.l.b16 %v154
  %v1138 = vunpack.c.h.b16 %v154
  %v1139 = vunpack.c.l.b16 %v155
  %v1140 = vunpack.c.h.b16 %v155
  %v1141 = vunpack.c.l.b16 %v156
  %v1142 = vunpack.c.h.b16 %v156
  %v1143 = vunpack.c.l.b16 %v157
  %v1144 = vunpack.c.h.b16 %v157
  %v1145 = vunpack.c.l.b16 %v158
  %v1146 = vunpack.c.h.b16 %v158
  %v1147 = vunpack.c.l.b16 %v159
  %v1148 = vunpack.c.h.b16 %v159
  %v1149 = vunpack.c.l.b16 %v160
  %v1150 = vunpack.c.h.b16 %v160
  %v1151 = vunpack.c.l.b16 %v161
  %v1152 = vunpack.c.h.b16 %v161
  %v1153 = vunpack.c.l.b16 %v162
  %v1154 = vunpack.c.h.b16 %v162
  %v1155 = vunpack.c.l.b16 %v163
  %v1156 = vunpack.c.h.b16 %v163
  %v1157 = vunpack.c.l.b16 %v164
  %v1158 = vunpack.c.h.b16 %v164
  %v1159 = vunpack.c.l.b16 %v165
  %v1160 = vunpack.c.h.b16 %v165
  %v1161 = vunpack.c.l.b16 %v166
  %v1162 = vunpack.c.h.b16 %v166
  %v1163 = vunpack.c.l.b16 %v167
  %v1164 = vunpack.c.h.b16 %v167
  %v1165 = vunpack.c.l.b16 %v168
  %v1166 = vunpack.c.h.b16 %v168
  %v1167 = vunpack.c.l.b16 %v169
  %v1168 = vunpack.c.h.b16 %v169
  %v1169 = vunpack.c.l.b16 %v170
  %v1170 = vunpack.c.h.b16 %v170
  %v1171 = vunpack.c.l.b16 %v171
  %v1172 = vunpack.c.h.b16 %v171
  %v1173 = vunpack.c.l.b16 %v172
  %v1174 = vunpack.c.h.b16 %v172
  %v1175 = vunpack.c.l.b16 %v173
  %v1176 = vunpack.c.h.b16 %v173
  %v1177 = vunpack.c.l.b16 %v174
  %v1178 = vunpack.c.h.b16 %v174
  %v1179 = vunpack.c.l.b16 %v175
  %v1180 = vunpack.c.h.b16 %v175
  %v1181 = vunpack.c.l.b16 %v176
  %v1182 = vunpack.c.h.b16 %v176
  %v1183 = vunpack.c.l.b16 %v177
  %v1184 = vunpack.c.h.b16 %v177
  %v1185 = vunpack.c.l.b16 %v178
  %v1186 = vunpack.c.h.b16 %v178
  %v1187 = vunpack.c.l.b16 %v179
  %v1188 = vunpack.c.h.b16 %v179
  %v1189 = vunpack.c.l.b16 %v180
  %v1190 = vunpack.c.h.b16 %v180
  %v1191 = vunpack.c.l.b16 %v181
  %v1192 = vunpack.c.h.b16 %v181
  %v1193 = vunpack.c.l.b16 %v182
  %v1194 = vunpack.c.h.b16 %v182
  %v1195 = vunpack.c.l.b16 %v183
  %v1196 = vunpack.c.h.b16 %v183
  %v1197 = vunpack.c.l.b16 %v184
  %v1198 = vunpack.c.h.b16 %v184
  %v1199 = vunpack.c.l.b16 %v185
  %v1200 = vunpack.c.h.b16 %v185
  %v1201 = vunpack.c.l.b16 %v186
  %v1202 = vunpack.c.h.b16 %v186
  %v1203 = vunpack.c.l.b16 %v187
  %v1204 = vunpack.c.h.b16 %v187
  %v1205 = vunpack.c.l.b16 %v188
  %v1206 = vunpack.c.h.b16 %v188
  %v1207 = vunpack.c.l.b16 %v189
  %v1208 = vunpack.c.h.b16 %v189
  %v1209 = vunpack.c.l.b16 %v190
  %v1210 = vunpack.c.h.b16 %v190
  %v1211 = vunpack.c.l.b16 %v191
  %v1212 = vunpack.c.h.b16 %v191
  %v1213 = vunpack.c.l.b16 %v192
  %v1214 = vunpack.c.h.b16 %v192
  %v1215 = vunpack.c.l.b16 %v193
  %v1216 = vunpack.c.h.b16 %v193
  %v1217 = vunpack.c.l.b16 %v194
  %v1218 = vunpack.c.h.b16 %v194
  %v1219 = vunpack.c.l.b16 %v195
  %v1220 = vunpack.c.h.b16 %v195
  %v1221 = vunpack.c.l.b16 %v196
  %v1222 = vunpack.c.h.b16 %v196
  %v1223 = vunpack.c.l.b16 %v197
  %v1224 = vunpack.c.h.b16 %v197
  %v1225 = vunpack.c.l.b16 %v198
  %v1226 = vunpack.c.h.b16 %v198
  %v1227 = vunpack.c.l.b16 %v199
  %v1228 = vunpack.c.h.b16 %v199
  %v1229 = vunpack.c.l.b16 %v200
  %v1230 = vunpack.c.h.b16 %v200
  %v1231 = vunpack.c.l.b16 %v201
  %v1232 = vunpack.c.h.b16 %v201
  %v1233 = vunpack.c.l.b16 %v202
  %v1234 = vunpack.c.h.b16 %v202
  %v1235 = vunpack.c.l.b16 %v203
  %v1236 = vunpack.c.h.b16 %v203
  %v1237 = vunpack.c.l.b16 %v204
  %v1238 = vunpack.c.h.b16 %v204
  %v1239 = vunpack.c.l.b16 %v205
  %v1240 = vunpack.c.h.b16 %v205
  %v1241 = vunpack.c.l.b16 %v206
  %v1242 = vunpack.c.h.b16 %v206
  %v1243 = vunpack.c.l.b16 %v207
  %v1244 = vunpack.c.h.b16 %v207
  %v1245 = vunpack.c.l.b16 %v208
  %v1246 = vunpack.c.h.b16 %v208
  %v1247 = vunpack.c.l.b16 %v209
  %v1248 = vunpack.c.h.b16 %v209
  %v1249 = vunpack.c.l.b16 %v210
  %v1250 = vunpack.c.h.b16 %v210
  %v1251 = vunpack.c.l.b16 %v211
  %v1252 = vunpack.c.h.b16 %v211
  %v1253 = vunpack.c.l.b16 %v212
  %v1254 = vunpack.c.h.b16 %v212
  %v1255 = vunpack.c.l.b16 %v213
  %v1256 = vunpack.c.h.b16 %v213
  %v1257 = vunpack.c.l.b16 %v214
  %v1258 = vunpack.c.h.b16 %v214
  %v1259 = vunpack.c.l.b16 %v215
  %v1260 = vunpack.c.h.b16 %v215
  %v1261 = vunpack.c.l.b16 %v216
  %v1262 = vunpack.c.h.b16 %v216
  %v1263 = vunpack.c.l.b16 %v217
  %v1264 = vunpack.c.h.b16 %v217
  %v1265 = vunpack.c.l.b16 %v218
  %v1266 = vunpack.c.h.b16 %v218
  %v1267 = vunpack.c.l.b16 %v219
  %v1268 = vunpack.c.h.b16 %v219
  %v1269 = vunpack.c.l.b16 %v220
  %v1270 = vunpack.c.h.b16 %v220
  %v1271 = vunpack.c.l.b16 %v221
  %v1272 = vunpack.c.h.b16 %v221
  %v1273 = vunpack.c.l.b16 %v222
  %v1274 = vunpack.c.h.b16 %v222
  %v1275 = vunpack.c.l.b16 %v223
  %v1276 = vunpack.c.h.b16 %v223
  %v1277 = vunpack.c.l.b16 %v224
  %v1278 = vunpack.c.h.b16 %v224
  %v1279 = vunpack.c.l.b16 %v225
  %v1280 = vunpack.c.h.b16 %v225
  %v1281 = vunpack.c.l.b16 %v226
  %v1282 = vunpack.c.h.b16 %v226
  %v1283 = vunpack.c.l.b16 %v227
  %v1284 = vunpack.c.h.b16 %v227
  %v1285 = vunpack.c.l.b16 %v228
  %v1286 = vunpack.c.h.b16 %v228
  %v1287 = vunpack.c.l.b16 %v229
  %v1288 = vunpack.c.h.b16 %v229
  %v1289 = vunpack.c.l.b16 %v230
  %v1290 = vunpack.c.h.b16 %v230
  %v1291 = vunpack.c.l.b16 %v231
  %v1292 = vunpack.c.h.b16 %v231
  %v1293 = vunpack.c.l.b16 %v232
  %v1294 = vunpack.c.h.b16 %v232
  %v1295 = vunpack.c.l.b16 %v233
  %v1296 = vunpack.c.h.b16 %v233
  %v1297 = vunpack.c.l.b16 %v234
  %v1298 = vunpack.c.h.b16 %v234
  %v1299 = vunpack.c.l.b16 %v235
  %v1300 = vunpack.c.h.b16 %v235
  %v1301 = vunpack.c.l.b16 %v236
  %v1302 = vunpack.c.h.b16 %v236
  %v1303 = vunpack.c.l.b16 %v237
  %v1304 = vunpack.c.h.b16 %v237
  %v1305 = vunpack.c.l.b16 %v238
  %v1306 = vunpack.c.h.b16 %v238
  %v1307 = vunpack.c.l.b16 %v239
  %v1308 = vunpack.c.h.b16 %v239
  %v1309 = vunpack.c.l.b16 %v240
  %v1310 = vunpack.c.h.b16 %v240
  %v1311 = vunpack.c.l.b16 %v241
  %v1312 = vunpack.c.h.b16 %v241
  %v1313 = vunpack.c.l.b16 %v242
  %v1314 = vunpack.c.h.b16 %v242
  %v1315 = vunpack.c.l.b16 %v243
  %v1316 = vunpack.c.h.b16 %v243
  %v1317 = vunpack.c.l.b16 %v244
  %v1318 = vunpack.c.h.b16 %v244
  %v1319 = vunpack.c.l.b16 %v245
  %v1320 = vunpack.c.h.b16 %v245
  %v1321 = vunpack.c.l.b16 %v246
  %v1322 = vunpack.c.h.b16 %v246
  %v1323 = vunpack.c.l.b16 %v247
  %v1324 = vunpack.c.h.b16 %v247
  %v1325 = vunpack.c.l.b16 %v248
  %v1326 = vunpack.c.h.b16 %v248
  %v1327 = vunpack.c.l.b16 %v249
  %v1328 = vunpack.c.h.b16 %v249
  %v1329 = vunpack.c.l.b16 %v250
  %v1330 = vunpack.c.h.b16 %v250
  %v1331 = vunpack.c.l.b16 %v251
  %v1332 = vunpack.c.h.b16 %v251
  %v1333 = vunpack.c.l.b16 %v252
  %v1334 = vunpack.c.h.b16 %v252
  %v1335 = vunpack.c.l.b16 %v253
  %v1336 = vunpack.c.h.b16 %v253
  %v1337 = vunpack.c.l.b16 %v254
  %v1338 = vunpack.c.h.b16 %v254
  %v1339 = vunpack.c.l.b16 %v255
  %v1340 = vunpack.c.h.b16 %v255
  %v1341 = vunpack.c.l.b16 %v256
  %v1342 = vunpack.c.h.b16 %v256
  %v1343 = vunpack.c.l.b16 %v257
  %v1344 = vunpack.c.h.b16 %v257
  %v1345 = vunpack.c.l.b16 %v258
  %v1346 = vunpack.c.h.b16 %v258
  %v1347 = vunpack.c.l.b16 %v259
  %v1348 = vunpack.c.h.b16 %v259
  %v1349 = vunpack.c.l.b16 %v260
  %v1350 = vunpack.c.h.b16 %v260
  %v1351 = vunpack.c.l.b16 %v261
  %v1352 = vunpack.c.h.b16 %v261
  %v1353 = vunpack.c.l.b16 %v262
  %v1354 = vunpack.c.h.b16 %v262
  %v1355 = vunpack.c.l.b16 %v263
  %v1356 = vunpack.c.h.b16 %v263
  %v1357 = vunpack.c.l.b16 %v264
  %v1358 = vunpack.c.h.b16 %v264
  %v1359 = vunpack.c.l.b16 %v265
  %v1360 = vunpack.c.h.b16 %v265
  %v1361 = vunpack.c.l.b16 %v266
  %v1362 = vunpack.c.h.b16 %v266
  %v1363 = vunpack.c.l.b16 %v267
  %v1364 = vunpack.c.h.b16 %v267
  %v1365 = vunpack.c.l.b16 %v268
  %v1366 = vunpack.c.h.b16 %v268
  %v1367 = vunpack.c.l.b16 %v269
  %v1368 = vunpack.c.h.b16 %v269
  %v1369 = vunpack.c.l.b16 %v270
  %v1370 = vunpack.c.h.b16 %v270
  %v1371 = vunpack.c.l.b16 %v271
  %v1372 = vunpack.c.h.b16 %v271
  %v1373 = vunpack.c.l.b16 %v272
  %v1374 = vunpack.c.h.b16 %v272
  %v1375 = vunpack.c.l.b16 %v273
  %v1376 = vunpack.c.h.b16 %v273
  %v1377 = vunpack.c.l.b16 %v274
  %v1378 = vunpack.c.h.b16 %v274
  %v1379 = vunpack.c.l.b16 %v275
  %v1380 = vunpack.c.h.b16 %v275
  %v1381 = vunpack.c.l.b16 %v276
  %v1382 = vunpack.c.h.b16 %v276
  %v1383 = vunpack.c.l.b16 %v277
  %v1384 = vunpack.c.h.b16 %v277
  %v1385 = vunpack.c.l.b16 %v278
  %v1386 = vunpack.c.h.b16 %v278
  %v1387 = vunpack.c.l.b16 %v279
  %v1388 = vunpack.c.h.b16 %v279
  %v1389 = vunpack.c.l.b16 %v280
  %v1390 = vunpack.c.h.b16 %v280
  %v1391 = vunpack.c.l.b16 %v281
  %v1392 = vunpack.c.h.b16 %v281
  %v1393 = vunpack.c.l.b16 %v282
  %v1394 = vunpack.c.h.b16 %v282
  %v1395 = vunpack.c.l.b16 %v283
  %v1396 = vunpack.c.h.b16 %v283
  %v1397 = vunpack.c.l.b16 %v284
  %v1398 = vunpack.c.h.b16 %v284
  %v1399 = vunpack.c.l.b16 %v285
  %v1400 = vunpack.c.h.b16 %v285
  %v1401 = vunpack.c.l.b16 %v286
  %v1402 = vunpack.c.h.b16 %v286
  %v1403 = vunpack.c.l.b16 %v287
  %v1404 = vunpack.c.h.b16 %v287
  %v1405 = vunpack.c.l.b16 %v288
  %v1406 = vunpack.c.h.b16 %v288
  %v1407 = vunpack.c.l.b16 %v289
  %v1408 = vunpack.c.h.b16 %v289
  %v1409 = vunpack.c.l.b16 %v290
  %v1410 = vunpack.c.h.b16 %v290
  %v1411 = vunpack.c.l.b16 %v291
  %v1412 = vunpack.c.h.b16 %v291
  %v1413 = vunpack.c.l.b16 %v292
  %v1414 = vunpack.c.h.b16 %v292
  %v1415 = vunpack.c.l.b16 %v293
  %v1416 = vunpack.c.h.b16 %v293
  %v1417 = vunpack.c.l.b16 %v294
  %v1418 = vunpack.c.h.b16 %v294
  %v1419 = vunpack.c.l.b16 %v295
  %v1420 = vunpack.c.h.b16 %v295
  %v1421 = vunpack.c.l.b16 %v296
  %v1422 = vunpack.c.h.b16 %v296
  %v1423 = vunpack.c.l.b16 %v297
  %v1424 = vunpack.c.h.b16 %v297
  %v1425 = vunpack.c.l.b16 %v298
  %v1426 = vunpack.c.h.b16 %v298
  %v1427 = vunpack.c.l.b16 %v299
  %v1428 = vunpack.c.h.b16 %v299
  %v1429 = vunpack.c.l.b16 %v300
  %v1430 = vunpack.c.h.b16 %v300
  %v1431 = vunpack.c.l.b16 %v301
  %v1432 = vunpack.c.h.b16 %v301
  %v1433 = vunpack.c.l.b16 %v302
  %v1434 = vunpack.c.h.b16 %v302
  %v1435 = vunpack.c.l.b16 %v303
  %v1436 = vunpack.c.h.b16 %v303
  %v1437 = vunpack.c.l.b16 %v304
  %v1438 = vunpack.c.h.b16 %v304
  %v1439 = vunpack.c.l.b16 %v305
  %v1440 = vunpack.c.h.b16 %v305
  %v1441 = vunpack.c.l.b16 %v306
  %v1442 = vunpack.c.h.b16 %v306
  %v1443 = vunpack.c.l.b16 %v307
  %v1444 = vunpack.c.h.b16 %v307
  %v1445 = vunpack.c.l.b16 %v308
  %v1446 = vunpack.c.h.b16 %v308
  %v1447 = vunpack.c.l.b16 %v309
  %v1448 = vunpack.c.h.b16 %v309
  %v1449 = vunpack.c.l.b16 %v310
  %v1450 = vunpack.c.h.b16 %v310
  %v1451 = vunpack.c.l.b16 %v311
  %v1452 = vunpack.c.h.b16 %v311
  %v1453 = vunpack.c.l.b16 %v312
  %v1454 = vunpack.c.h.b16 %v312
  %v1455 = vunpack.c.l.b16 %v313
  %v1456 = vunpack.c.h.b16 %v313
  %v1457 = vunpack.c.l.b16 %v314
  %v1458 = vunpack.c.h.b16 %v314
  %v1459 = vunpack.c.l.b16 %v315
  %v1460 = vunpack.c.h.b16 %v315
  %v1461 = vunpack.c.l.b16 %v316
  %v1462 = vunpack.c.h.b16 %v316
  %v1463 = vunpack.c.l.b16 %v317
  %v1464 = vunpack.c.h.b16 %v317
  %v1465 = vunpack.c.l.b16 %v318
  %v1466 = vunpack.c.h.b16 %v318
  %v1467 = vunpack.c.l.b16 %v319
  %v1468 = vunpack.c.h.b16 %v319
  %v1469 = vunpack.c.l.b16 %v320
  %v1470 = vunpack.c.h.b16 %v320
  %v1471 = vunpack.c.l.b16 %v321
  %v1472 = vunpack.c.h.b16 %v321
  %v1473 = vunpack.c.l.b16 %v322
  %v1474 = vunpack.c.h.b16 %v322
  %v1475 = vunpack.c.l.b16 %v323
  %v1476 = vunpack.c.h.b16 %v323
  %v1477 = vunpack.c.l.b16 %v324
  %v1478 = vunpack.c.h.b16 %v324
  %v1479 = vunpack.c.l.b16 %v325
  %v1480 = vunpack.c.h.b16 %v325
  %v1481 = vunpack.c.l.b16 %v326
  %v1482 = vunpack.c.h.b16 %v326
  %v1483 = vunpack.c.l.b16 %v327
  %v1484 = vunpack.c.h.b16 %v327
  %v1485 = vunpack.c.l.b16 %v328
  %v1486 = vunpack.c.h.b16 %v328
  %v1487 = vunpack.c.l.b16 %v329
  %v1488 = vunpack.c.h.b16 %v329
  %v1489 = vunpack.c.l.b16 %v330
  %v1490 = vunpack.c.h.b16 %v330
  %v1491 = vunpack.c.l.b16 %v331
  %v1492 = vunpack.c.h.b16 %v331
  %v1493 = vunpack.c.l.b16 %v332
  %v1494 = vunpack.c.h.b16 %v332
  %v1495 = vunpack.c.l.b16 %v333
  %v1496 = vunpack.c.h.b16 %v333
  %v1497 = vunpack.c.l.b16 %v334
  %v1498 = vunpack.c.h.b16 %v334
  %v1499 = vpack.c.b16 %v1085, %v1083
  %v1500 = vpack.c.b16 %v1086, %v1084
  %v1501 = vpack.c.b16 %v1089, %v1087
  %v1502 = vpack.c.b16 %v1090, %v1088
  %v1503 = vpack.c.b16 %v1093, %v1091
  %v1504 = vpack.c.b16 %v1094, %v1092
  %v1505 = vpack.c.b16 %v1097, %v1095
  %v1506 = vpack.c.b16 %v1098, %v1096
  %v1507 = vpack.c.b16 %v1101, %v1099
  %v1508 = vpack.c.b16 %v1102, %v1100
  %v1509 = vpack.c.b16 %v1105, %v1103
  %v1510 = vpack.c.b16 %v1106, %v1104
  %v1511 = vpack.c.b16 %v1109, %v1107
  %v1512 = vpack.c.b16 %v1110, %v1108
  %v1513 = vpack.c.b16 %v1113, %v1111
  %v1514 = vpack.c.b16 %v1114, %v1112
  %v1515 = vpack.c.b16 %v1117, %v1115
  %v1516 = vpack.c.b16 %v1118, %v1116
  %v1517 = vpack.c.b16 %v1121, %v1119
  %v1518 = vpack.c.b16 %v1122, %v1120
  %v1519 = vpack.c.b16 %v1125, %v1123
  %v1520 = vpack.c.b16 %v1126, %v1124
  %v1521 = vpack.c.b16 %v1129, %v1127
  %v1522 = vpack.c.b16 %v1130, %v1128
  %v1523 = vpack.c.b16 %v1133, %v1131
  %v1524 = vpack.c.b16 %v1134, %v1132
  %v1525 = vpack.c.b16 %v1137, %v1135
  %v1526 = vpack.c.b16 %v1138, %v1136
  %v1527 = vpack.c.b16 %v1141, %v1139
  %v1528 = vpack.c.b16 %v1142, %v1140
  %v1529 = vpack.c.b16 %v1145, %v1143
  %v1530 = vpack.c.b16 %v1146, %v1144
  %v1531 = vpack.c.b16 %v1149, %v1147
  %v1532 = vpack.c.b16 %v1150, %v1148
  %v1533 = vpack.c.b16 %v1153, %v1151
  %v1534 = vpack.c.b16 %v1154, %v1152
  %v1535 = vpack.c.b16 %v1157, %v1155
  %v1536 = vpack.c.b16 %v1158, %v1156
  %v1537 = vpack.c.b16 %v1161, %v1159
  %v1538 = vpack.c.b16 %v1162, %v1160
  %v1539 = vpack.c.b16 %v1165, %v1163
  %v1540 = vpack.c.b16 %v1166, %v1164
  %v1541 = vpack.c.b16 %v1169, %v1167
  %v1542 = vpack.c.b16 %v1170, %v1168
  %v1543 = vpack.c.b16 %v1173, %v1171
  %v1544 = vpack.c.b16 %v1174, %v1172
  %v1545 = vpack.c.b16 %v1177, %v1175
  %v1546 = vpack.c.b16 %v1178, %v1176
  %v1547 = vpack.c.b16 %v1181, %v1179
  %v1548 = vpack.c.b16 %v1182, %v1180
  %v1549 = vpack.c.b16 %v1185, %v1183
  %v1550 = vpack.c.b16 %v1186, %v1184
  %v1551 = vpack.c.b16 %v1189, %v1187
  %v1552 = vpack.c.b16 %v1190, %v1188
  %v1553 = vpack.c.b16 %v1193, %v1191
  %v1554 = vpack.c.b16 %v1194, %v1192
  %v1555 = vpack.c.b16 %v1197, %v1195
  %v1556 = vpack.c.b16 %v1198, %v1196
  %v1557 = vpack.c.b16 %v1201, %v1199
  %v1558 = vpack.c.b16 %v1202, %v1200
  %v1559 = vpack.c.b16 %v1205, %v1203
  %v1560 = vpack.c.b16 %v1206, %v1204
  %v1561 = vpack.c.b16 %v1209, %v1207
  %v1562 = vpack.c.b16 %v1210, %v1208
  %v1563 = vpack.c.b16 %v1213, %v1211
  %v1564 = vpack.c.b16 %v1214, %v1212
  %v1565 = vpack.c.b16 %v1217, %v1215
  %v1566 = vpack.c.b16 %v1218, %v1216
  %v1567 = vpack.c.b16 %v1221, %v1219
  %v1568 = vpack.c.b16 %v1222, %v1220
  %v1569 = vpack.c.b16 %v1225, %v1223
  %v1570 = vpack.c.b16 %v1226, %v1224
  %v1571 = vpack.c.b16 %v1229, %v1227
  %v1572 = vpack.c.b16 %v1230, %v1228
  %v1573 = vpack.c.b16 %v1233, %v1231
  %v1574 = vpack.c.b16 %v1234, %v1232
  %v1575 = vpack.c.b16 %v1237, %v1235
  %v1576 = vpack.c.b16 %v1238, %v1236
  %v1577 = vpack.c.b16 %v1241, %v1239
  %v1578 = vpack.c.b16 %v1242, %v1240
  %v1579 = vpack.c.b16 %v1245, %v1243
  %v1580 = vpack.c.b16 %v1246, %v1244
  %v1581 = vpack.c.b16 %v1249, %v1247
  %v1582 = vpack.c.b16 %v1250, %v1248
  %v1583 = vpack.c.b16 %v1253, %v1251
  %v1584 = vpack.c.b16 %v1254, %v1252
  %v1585 = vpack.c.b16 %v1257, %v1255
  %v1586 = vpack.c.b16 %v1258, %v1256
  %v1587 = vpack.c.b16 %v1261, %v1259
  %v1588 = vpack.c.b16 %v1262, %v1260
  %v1589 = vpack.c.b16 %v1265, %v1263
  %v1590 = vpack.c.b16 %v1266, %v1264
  %v1591 = vpack.c.b16 %v1269, %v1267
  %v1592 = vpack.c.b16 %v1270, %v1268
  %v1593 = vpack.c.b16 %v1273, %v1271
  %v1594 = vpack.c.b16 %v1274, %v1272
  %v1595 = vpack.c.b16 %v1277, %v1275
  %v1596 = vpack.c.b16 %v1278, %v1276
  %v1597 = vpack.c.b16 %v1281, %v1279
  %v1598 = vpack.c.b16 %v1282, %v1280
  %v1599 = vpack.c.b16 %v1285, %v1283
  %v1600 = vpack.c.b16 %v1286, %v1284
  %v1601 = vpack.c.b16 %v1289, %v1287
  %v1602 = vpack.c.b16 %v1290, %v1288
  %v1603 = vpack.c.b16 %v1293, %v1291
  %v1604 = vpack.c.b16 %v1294, %v1292
  %v1605 = vpack.c.b16 %v1297, %v1295
  %v1606 = vpack.c.b16 %v1298, %v1296
  %v1607 = vpack.c.b16 %v1301, %v1299
  %v1608 = vpack.c.b16 %v1302, %v1300
  %v1609 = vpack.c.b16 %v1305, %v1303
  %v1610 = vpack.c.b16 %v1306, %v1304
  %v1611 = vpack.c.b16 %v1309, %v1307
  %v1612 = vpack.c.b16 %v1310, %v1308
  %v1613 = vpack.c.b16 %v1313, %v1311
  %v1614 = vpack.c.b16 %v1314, %v1312
  %v1615 = vpack.c.b16 %v1317, %v1315
  %v1616 = vpack.c.b16 %v1318, %v1316
  %v1617 = vpack.c.b16 %v1321, %v1319
  %v1618 = vpack.c.b16 %v1322, %v1320
  %v1619 = vpack.c.b16 %v1325, %v1323
  %v1620 = vpack.c.b16 %v1326, %v1324
  %v1621 = vpack.c.b16 %v1329, %v1327
  %v1622 = vpack.c.b16 %v1330, %v1328
  %v1623 = vpack.c.b16 %v1333, %v1331
  %v1624 = vpack.c.b16 %v1334, %v1332
  %v1625 = vpack.c.b16 %v1337, %v1335
  %v1626 = vpack.c.b16 %v1338, %v1336
  %v1627 = vpack.c.b16 %v1341, %v1339
  %v1628 = vpack.c.b16 %v1342, %v1340
  %v1629 = vpack.c.b16 %v1345, %v1343
  %v1630 = vpack.c.b16 %v1346, %v1344
  %v1631 = vpack.c.b16 %v1349, %v1347
  %v1632 = vpack.c.b16 %v1350, %v1348
  %v1633 = vpack.c.b16 %v1353, %v1351
  %v1634 = vpack.c.b16 %v1354, %v1352
  %v1635 = vpack.c.b16 %v1357, %v1355
  %v1636 = vpack.c.b16 %v1358, %v1356
  %v1637 = vpack.c.b16 %v1361, %v1359
  %v1638 = vpack.c.b16 %v1362, %v1360
  %v1639 = vpack.c.b16 %v1365, %v1363
  %v1640 = vpack.c.b16 %v1366, %v1364
  %v1641 = vpack.c.b16 %v1369, %v1367
  %v1642 = vpack.c.b16 %v1370, %v1368
  %v1643 = vpack.c.b16 %v1373, %v1371
  %v1644 = vpack.c.b16 %v1374, %v1372
  %v1645 = vpack.c.b16 %v1377, %v1375
  %v1646 = vpack.c.b16 %v1378, %v1376
  %v1647 = vpack.c.b16 %v1381, %v1379
  %v1648 = vpack.c.b16 %v1382, %v1380
  %v1649 = vpack.c.b16 %v1385, %v1383
  %v1650 = vpack.c.b16 %v1386, %v1384
  %v1651 = vpack.c.b16 %v1389, %v1387
  %v1652 = vpack.c.b16 %v1390, %v1388
  %v1653 = vpack.c.b16 %v1393, %v1391
  %v1654 = vpack.c.b16 %v1394, %v1392
  %v1655 = vpack.c.b16 %v1397, %v1395
  %v1656 = vpack.c.b16 %v1398, %v1396
  %v1657 = vpack.c.b16 %v1401, %v1399
  %v1658 = vpack.c.b16 %v1402, %v1400
  %v1659 = vpack.c.b16 %v1405, %v1403
  %v1660 = vpack.c.b16 %v1406, %v1404
  %v1661 = vpack.c.b16 %v1409, %v1407
  %v1662 = vpack.c.b16 %v1410, %v1408
  %v1663 = vpack.c.b16 %v1413, %v1411
  %v1664 = vpack.c.b16 %v1414, %v1412
  %v1665 = vpack.c.b16 %v1417, %v1415
  %v1666 = vpack.c.b16 %v1418, %v1416
  %v1667 = vpack.c.b16 %v1421, %v1419
  %v1668 = vpack.c.b16 %v1422, %v1420
  %v1669 = vpack.c.b16 %v1425, %v1423
  %v1670 = vpack.c.b16 %v1426, %v1424
  %v1671 = vpack.c.b16 %v1429, %v1427
  %v1672 = vpack.c.b16 %v1430, %v1428
  %v1673 = vpack.c.b16 %v1433, %v1431
  %v1674 = vpack.c.b16 %v1434, %v1432
  %v1675 = vpack.c.b16 %v1437, %v1435
  %v1676 = vpack.c.b16 %v1438, %v1436
  %v1677 = vpack.c.b16 %v1441, %v1439
  %v1678 = vpack.c.b16 %v1442, %v1440
  %v1679 = vpack.c.b16 %v1445, %v1443
  %v1680 = vpack.c.b16 %v1446, %v1444
  %v1681 = vpack.c.b16 %v1449, %v1447
  %v1682 = vpack.c.b16 %v1450, %v1448
  %v1683 = vpack.c.b16 %v1453, %v1451
  %v1684 = vpack.c.b16 %v1454, %v1452
  %v1685 = vpack.c.b16 %v1457, %v1455
  %v1686 = vpack.c.b16 %v1458, %v1456
  %v1687 = vpack.c.b16 %v1461, %v1459
  %v1688 = vpack.c.b16 %v1462, %v1460
  %v1689 = vpack.c.b16 %v1465, %v1463
  %v1690 = vpack.c.b16 %v1466, %v1464
  %v1691 = vpack.c.b16 %v1469, %v1467
  %v1692 = vpack.c.b16 %v1470, %v1468
  %v1693 = vpack.c.b16 %v1473, %v1471
  %v1694 = vpack.c.b16 %v1474, %v1472
  %v1695 = vpack.c.b16 %v1477, %v1475
  %v1696 = vpack.c.b16 %v1478, %v1476
  %v1697 = vpack.c.b16 %v1481, %v1479
  %v1698 = vpack.c.b16 %v1482, %v1480
  %v1699 = vpack.c.b16 %v1485, %v1483
  %v1700 = vpack.c.b16 %v1486, %v1484
  %v1701 = vpack.c.b16 %v1489, %v1487
  %v1702 = vpack.c.b16 %v1490, %v1488
  %v1703 = vpack.c.b16 %v1493, %v1491
  %v1704 = vpack.c.b16 %v1494, %v1492
  %v1705 = vpack.c.b16 %v1497, %v1495
  %v1706 = vpack.c.b16 %v1498, %v1496
  %1915 = vmatprep.subr.bf16.mxu0 %v1500
  %1916 = vmatpush1.bf16.msra.mxu0 %v1499
  %1917 = vmatprep.subr.bf16.mxu0 %v1502
  %1918 = vmatpush1.bf16.msra.mxu0 %v1501
  %1919 = vmatprep.subr.bf16.mxu0 %v1504
  %1920 = vmatpush1.bf16.msra.mxu0 %v1503
  %1921 = vmatprep.subr.bf16.mxu0 %v1506
  %1922 = vmatpush1.bf16.msra.mxu0 %v1505
  %1923 = vmatprep.subr.bf16.mxu0 %v1508
  %1924 = vmatpush1.bf16.msra.mxu0 %v1507
  %1925 = vmatprep.subr.bf16.mxu0 %v1510
  %1926 = vmatpush1.bf16.msra.mxu0 %v1509
  %1927 = vmatprep.subr.bf16.mxu0 %v1512
  %1928 = vmatpush1.bf16.msra.mxu0 %v1511
  %1929 = vmatprep.subr.bf16.mxu0 %v1514
  %1930 = vmatpush1.bf16.msra.mxu0 %v1513
  %1931 = vmatprep.subr.bf16.mxu0 %v1516
  %1932 = vmatpush1.bf16.msra.mxu0 %v1515
  %1933 = vmatprep.subr.bf16.mxu0 %v1518
  %1934 = vmatpush1.bf16.msra.mxu0 %v1517
  %1935 = vmatprep.subr.bf16.mxu0 %v1520
  %1936 = vmatpush1.bf16.msra.mxu0 %v1519
  %1937 = vmatprep.subr.bf16.mxu0 %v1522
  %1938 = vmatpush1.bf16.msra.mxu0 %v1521
  %1939 = vmatprep.subr.bf16.mxu0 %v1524
  %1940 = vmatpush1.bf16.msra.mxu0 %v1523
  %1941 = vmatprep.subr.bf16.mxu0 %v1526
  %1942 = vmatpush1.bf16.msra.mxu0 %v1525
  %1943 = vmatprep.subr.bf16.mxu0 %v1528
  %1944 = vmatpush1.bf16.msra.mxu0 %v1527
  %1945 = vmatprep.subr.bf16.mxu0 %v1530
  %1946 = vmatpush1.bf16.msra.mxu0 %v1529
  %1947 = vmatprep.mubr.bf16.mxu0 %v668
  %1948 = vmatmul.mubr.bf16.gmra.mrb[0].mxu0 %v667
  %v1949 = vpop.f32.mrb[0].mxu0
  %v1950 = vadd.f32 %v340, %v1949
  %v1951 = vpop.f32.mrb[0].mxu0
  %v1952 = vadd.f32 %v344, %v1951
  %v1953 = vpop.f32.mrb[0].mxu0
  %v1954 = vadd.f32 %v340, %v1953
  %v1955 = vpop.f32.mrb[0].mxu0
  %v1956 = vadd.f32 %v344, %v1955
  %1957 = vmatprep.mubr.bf16.mxu0 %v681
  %1958 = vmatmul.mubr.bf16.gmra.mrb[0].mxu0 %v680
  %v1959 = vpop.f32.mrb[0].mxu0
  %v1960 = vadd.f32 %v340, %v1959
  %v1961 = vpop.f32.mrb[0].mxu0
  %v1962 = vadd.f32 %v344, %v1961
  %v1963 = vpop.f32.mrb[0].mxu0
  %v1964 = vadd.f32 %v340, %v1963
  %v1965 = vpop.f32.mrb[0].mxu0
  %v1966 = vadd.f32 %v344, %v1965
  %1967 = vmatprep.mubr.bf16.mxu0 %v694
  %1968 = vmatmul.mubr.bf16.gmra.mrb[0].mxu0 %v693
  %v1969 = vpop.f32.mrb[0].mxu0
  %v1970 = vadd.f32 %v340, %v1969
  %v1971 = vpop.f32.mrb[0].mxu0
  %v1972 = vadd.f32 %v344, %v1971
  %v1973 = vpop.f32.mrb[0].mxu0
  %v1974 = vadd.f32 %v340, %v1973
  %v1975 = vpop.f32.mrb[0].mxu0
  %v1976 = vadd.f32 %v344, %v1975
  %1977 = vmatprep.mubr.bf16.mxu0 %v707
  %1978 = vmatmul.mubr.bf16.gmra.mrb[0].mxu0 %v706
  %v1979 = vpop.f32.mrb[0].mxu0
  %v1980 = vadd.f32 %v340, %v1979
  %v1981 = vpop.f32.mrb[0].mxu0
  %v1982 = vadd.f32 %v344, %v1981
  %v1983 = vpop.f32.mrb[0].mxu0
  %v1984 = vadd.f32 %v340, %v1983
  %v1985 = vpop.f32.mrb[0].mxu0
  %v1986 = vadd.f32 %v344, %v1985
  %1987 = vmatprep.mubr.bf16.mxu0 %v720
  %1988 = vmatmul.mubr.bf16.gmra.mrb[0].mxu0 %v719
  %v1989 = vpop.f32.mrb[0].mxu0
  %v1990 = vadd.f32 %v340, %v1989
  %v1991 = vpop.f32.mrb[0].mxu0
  %v1992 = vadd.f32 %v344, %v1991
  %v1993 = vpop.f32.mrb[0].mxu0
  %v1994 = vadd.f32 %v340, %v1993
  %v1995 = vpop.f32.mrb[0].mxu0
  %v1996 = vadd.f32 %v344, %v1995
  %1997 = vmatprep.mubr.bf16.mxu0 %v733
  %1998 = vmatmul.mubr.bf16.gmra.mrb[0].mxu0 %v732
  %v1999 = vpop.f32.mrb[0].mxu0
  %v2000 = vadd.f32 %v340, %v1999
  %v2001 = vpop.f32.mrb[0].mxu0
  %v2002 = vadd.f32 %v344, %v2001
  %v2003 = vpop.f32.mrb[0].mxu0
  %v2004 = vadd.f32 %v340, %v2003
  %v2005 = vpop.f32.mrb[0].mxu0
  %v2006 = vadd.f32 %v344, %v2005
  %2007 = vmatprep.mubr.bf16.mxu0 %v746
  %2008 = vmatmul.mubr.bf16.gmra.mrb[0].mxu0 %v745
  %v2009 = vpop.f32.mrb[0].mxu0
  %v2010 = vadd.f32 %v340, %v2009
  %v2011 = vpop.f32.mrb[0].mxu0
  %v2012 = vadd.f32 %v344, %v2011
  %v2013 = vpop.f32.mrb[0].mxu0
  %v2014 = vadd.f32 %v340, %v2013
  %v2015 = vpop.f32.mrb[0].mxu0
  %v2016 = vadd.f32 %v344, %v2015
  %2017 = vmatprep.mubr.bf16.mxu0 %v759
  %2018 = vmatmul.mubr.bf16.gmra.mrb[0].mxu0 %v758
  %v2019 = vpop.f32.mrb[0].mxu0
  %v2020 = vadd.f32 %v340, %v2019
  %v2021 = vpop.f32.mrb[0].mxu0
  %v2022 = vadd.f32 %v344, %v2021
  %v2023 = vpop.f32.mrb[0].mxu0
  %v2024 = vadd.f32 %v340, %v2023
  %v2025 = vpop.f32.mrb[0].mxu0
  %v2026 = vadd.f32 %v344, %v2025
  %2027 = vdwg.mxu0
  %2028 = vmatprep.subr.bf16.mxu0 %v1532
  %2029 = vmatpush1.bf16.msra.mxu0 %v1531
  %2030 = vmatprep.subr.bf16.mxu0 %v1534
  %2031 = vmatpush1.bf16.msra.mxu0 %v1533
  %2032 = vmatprep.subr.bf16.mxu0 %v1536
  %2033 = vmatpush1.bf16.msra.mxu0 %v1535
  %2034 = vmatprep.subr.bf16.mxu0 %v1538
  %2035 = vmatpush1.bf16.msra.mxu0 %v1537
  %2036 = vmatprep.subr.bf16.mxu0 %v1540
  %2037 = vmatpush1.bf16.msra.mxu0 %v1539
  %2038 = vmatprep.subr.bf16.mxu0 %v1542
  %2039 = vmatpush1.bf16.msra.mxu0 %v1541
  %2040 = vmatprep.subr.bf16.mxu0 %v1544
  %2041 = vmatpush1.bf16.msra.mxu0 %v1543
  %2042 = vmatprep.subr.bf16.mxu0 %v1546
  %2043 = vmatpush1.bf16.msra.mxu0 %v1545
  %2044 = vmatprep.subr.bf16.mxu0 %v1548
  %2045 = vmatpush1.bf16.msra.mxu0 %v1547
  %2046 = vmatprep.subr.bf16.mxu0 %v1550
  %2047 = vmatpush1.bf16.msra.mxu0 %v1549
  %2048 = vmatprep.subr.bf16.mxu0 %v1552
  %2049 = vmatpush1.bf16.msra.mxu0 %v1551
  %2050 = vmatprep.subr.bf16.mxu0 %v1554
  %2051 = vmatpush1.bf16.msra.mxu0 %v1553
  %2052 = vmatprep.subr.bf16.mxu0 %v1556
  %2053 = vmatpush1.bf16.msra.mxu0 %v1555
  %2054 = vmatprep.subr.bf16.mxu0 %v1558
  %2055 = vmatpush1.bf16.msra.mxu0 %v1557
  %2056 = vmatprep.subr.bf16.mxu0 %v1560
  %2057 = vmatpush1.bf16.msra.mxu0 %v1559
  %2058 = vmatprep.subr.bf16.mxu0 %v1562
  %2059 = vmatpush1.bf16.msra.mxu0 %v1561
  %2060 = vmatprep.mubr.bf16.mxu0 %v670
  %2061 = vmatmul.mubr.bf16.gmra.mrb[0].mxu0 %v669
  %v2062 = vpop.f32.mrb[0].mxu0
  %v2063 = vadd.f32 %v1950, %v2062
  %v2064 = vpop.f32.mrb[0].mxu0
  %v2065 = vadd.f32 %v1952, %v2064
  %v2066 = vpop.f32.mrb[0].mxu0
  %v2067 = vadd.f32 %v1954, %v2066
  %v2068 = vpop.f32.mrb[0].mxu0
  %v2069 = vadd.f32 %v1956, %v2068
  %2070 = vmatprep.mubr.bf16.mxu0 %v683
  %2071 = vmatmul.mubr.bf16.gmra.mrb[0].mxu0 %v682
  %v2072 = vpop.f32.mrb[0].mxu0
  %v2073 = vadd.f32 %v1960, %v2072
  %v2074 = vpop.f32.mrb[0].mxu0
  %v2075 = vadd.f32 %v1962, %v2074
  %v2076 = vpop.f32.mrb[0].mxu0
  %v2077 = vadd.f32 %v1964, %v2076
  %v2078 = vpop.f32.mrb[0].mxu0
  %v2079 = vadd.f32 %v1966, %v2078
  %2080 = vmatprep.mubr.bf16.mxu0 %v696
  %2081 = vmatmul.mubr.bf16.gmra.mrb[0].mxu0 %v695
  %v2082 = vpop.f32.mrb[0].mxu0
  %v2083 = vadd.f32 %v1970, %v2082
  %v2084 = vpop.f32.mrb[0].mxu0
  %v2085 = vadd.f32 %v1972, %v2084
  %v2086 = vpop.f32.mrb[0].mxu0
  %v2087 = vadd.f32 %v1974, %v2086
  %v2088 = vpop.f32.mrb[0].mxu0
  %v2089 = vadd.f32 %v1976, %v2088
  %2090 = vmatprep.mubr.bf16.mxu0 %v709
  %2091 = vmatmul.mubr.bf16.gmra.mrb[0].mxu0 %v708
  %v2092 = vpop.f32.mrb[0].mxu0
  %v2093 = vadd.f32 %v1980, %v2092
  %v2094 = vpop.f32.mrb[0].mxu0
  %v2095 = vadd.f32 %v1982, %v2094
  %v2096 = vpop.f32.mrb[0].mxu0
  %v2097 = vadd.f32 %v1984, %v2096
  %v2098 = vpop.f32.mrb[0].mxu0
  %v2099 = vadd.f32 %v1986, %v2098
  %2100 = vmatprep.mubr.bf16.mxu0 %v722
  %2101 = vmatmul.mubr.bf16.gmra.mrb[0].mxu0 %v721
  %v2102 = vpop.f32.mrb[0].mxu0
  %v2103 = vadd.f32 %v1990, %v2102
  %v2104 = vpop.f32.mrb[0].mxu0
  %v2105 = vadd.f32 %v1992, %v2104
  %v2106 = vpop.f32.mrb[0].mxu0
  %v2107 = vadd.f32 %v1994, %v2106
  %v2108 = vpop.f32.mrb[0].mxu0
  %v2109 = vadd.f32 %v1996, %v2108
  %2110 = vmatprep.mubr.bf16.mxu0 %v735
  %2111 = vmatmul.mubr.bf16.gmra.mrb[0].mxu0 %v734
  %v2112 = vpop.f32.mrb[0].mxu0
  %v2113 = vadd.f32 %v2000, %v2112
  %v2114 = vpop.f32.mrb[0].mxu0
  %v2115 = vadd.f32 %v2002, %v2114
  %v2116 = vpop.f32.mrb[0].mxu0
  %v2117 = vadd.f32 %v2004, %v2116
  %v2118 = vpop.f32.mrb[0].mxu0
  %v2119 = vadd.f32 %v2006, %v2118
  %2120 = vmatprep.mubr.bf16.mxu0 %v748
  %2121 = vmatmul.mubr.bf16.gmra.mrb[0].mxu0 %v747
  %v2122 = vpop.f32.mrb[0].mxu0
  %v2123 = vadd.f32 %v2010, %v2122
  %v2124 = vpop.f32.mrb[0].mxu0
  %v2125 = vadd.f32 %v2012, %v2124
  %v2126 = vpop.f32.mrb[0].mxu0
  %v2127 = vadd.f32 %v2014, %v2126
  %v2128 = vpop.f32.mrb[0].mxu0
  %v2129 = vadd.f32 %v2016, %v2128
  %2130 = vmatprep.mubr.bf16.mxu0 %v761
  %2131 = vmatmul.mubr.bf16.gmra.mrb[0].mxu0 %v760
  %v2132 = vpop.f32.mrb[0].mxu0
  %v2133 = vadd.f32 %v2020, %v2132
  %v2134 = vpop.f32.mrb[0].mxu0
  %v2135 = vadd.f32 %v2022, %v2134
  %v2136 = vpop.f32.mrb[0].mxu0
  %v2137 = vadd.f32 %v2024, %v2136
  %v2138 = vpop.f32.mrb[0].mxu0
  %v2139 = vadd.f32 %v2026, %v2138
  %2140 = vdwg.mxu0
  %2141 = vmatprep.subr.bf16.mxu0 %v1564
  %2142 = vmatpush1.bf16.msra.mxu0 %v1563
  %2143 = vmatprep.subr.bf16.mxu0 %v1566
  %2144 = vmatpush1.bf16.msra.mxu0 %v1565
  %2145 = vmatprep.subr.bf16.mxu0 %v1568
  %2146 = vmatpush1.bf16.msra.mxu0 %v1567
  %2147 = vmatprep.subr.bf16.mxu0 %v1570
  %2148 = vmatpush1.bf16.msra.mxu0 %v1569
  %2149 = vmatprep.subr.bf16.mxu0 %v1572
  %2150 = vmatpush1.bf16.msra.mxu0 %v1571
  %2151 = vmatprep.subr.bf16.mxu0 %v1574
  %2152 = vmatpush1.bf16.msra.mxu0 %v1573
  %2153 = vmatprep.subr.bf16.mxu0 %v1576
  %2154 = vmatpush1.bf16.msra.mxu0 %v1575
  %2155 = vmatprep.subr.bf16.mxu0 %v1578
  %2156 = vmatpush1.bf16.msra.mxu0 %v1577
  %2157 = vmatprep.subr.bf16.mxu0 %v1580
  %2158 = vmatpush1.bf16.msra.mxu0 %v1579
  %2159 = vmatprep.subr.bf16.mxu0 %v1582
  %2160 = vmatpush1.bf16.msra.mxu0 %v1581
  %2161 = vmatprep.subr.bf16.mxu0 %v1584
  %2162 = vmatpush1.bf16.msra.mxu0 %v1583
  %2163 = vmatprep.subr.bf16.mxu0 %v1586
  %2164 = vmatpush1.bf16.msra.mxu0 %v1585
  %2165 = vmatprep.subr.bf16.mxu0 %v1588
  %2166 = vmatpush1.bf16.msra.mxu0 %v1587
  %2167 = vmatprep.subr.bf16.mxu0 %v1590
  %2168 = vmatpush1.bf16.msra.mxu0 %v1589
  %2169 = vmatprep.subr.bf16.mxu0 %v1592
  %2170 = vmatpush1.bf16.msra.mxu0 %v1591
  %2171 = vmatprep.subr.bf16.mxu0 %v1594
  %2172 = vmatpush1.bf16.msra.mxu0 %v1593
  %2173 = vmatprep.mubr.bf16.mxu0 %v672
  %2174 = vmatmul.mubr.bf16.gmra.mrb[0].mxu0 %v671
  %v2175 = vpop.f32.mrb[0].mxu0
  %v2176 = vadd.f32 %v2063, %v2175
  %v2177 = vpop.f32.mrb[0].mxu0
  %v2178 = vadd.f32 %v2065, %v2177
  %v2179 = vpop.f32.mrb[0].mxu0
  %v2180 = vadd.f32 %v2067, %v2179
  %v2181 = vpop.f32.mrb[0].mxu0
  %v2182 = vadd.f32 %v2069, %v2181
  %2183 = vmatprep.mubr.bf16.mxu0 %v685
  %2184 = vmatmul.mubr.bf16.gmra.mrb[0].mxu0 %v684
  %v2185 = vpop.f32.mrb[0].mxu0
  %v2186 = vadd.f32 %v2073, %v2185
  %v2187 = vpop.f32.mrb[0].mxu0
  %v2188 = vadd.f32 %v2075, %v2187
  %v2189 = vpop.f32.mrb[0].mxu0
  %v2190 = vadd.f32 %v2077, %v2189
  %v2191 = vpop.f32.mrb[0].mxu0
  %v2192 = vadd.f32 %v2079, %v2191
  %2193 = vmatprep.mubr.bf16.mxu0 %v698
  %2194 = vmatmul.mubr.bf16.gmra.mrb[0].mxu0 %v697
  %v2195 = vpop.f32.mrb[0].mxu0
  %v2196 = vadd.f32 %v2083, %v2195
  %v2197 = vpop.f32.mrb[0].mxu0
  %v2198 = vadd.f32 %v2085, %v2197
  %v2199 = vpop.f32.mrb[0].mxu0
  %v2200 = vadd.f32 %v2087, %v2199
  %v2201 = vpop.f32.mrb[0].mxu0
  %v2202 = vadd.f32 %v2089, %v2201
  %2203 = vmatprep.mubr.bf16.mxu0 %v711
  %2204 = vmatmul.mubr.bf16.gmra.mrb[0].mxu0 %v710
  %v2205 = vpop.f32.mrb[0].mxu0
  %v2206 = vadd.f32 %v2093, %v2205
  %v2207 = vpop.f32.mrb[0].mxu0
  %v2208 = vadd.f32 %v2095, %v2207
  %v2209 = vpop.f32.mrb[0].mxu0
  %v2210 = vadd.f32 %v2097, %v2209
  %v2211 = vpop.f32.mrb[0].mxu0
  %v2212 = vadd.f32 %v2099, %v2211
  %2213 = vmatprep.mubr.bf16.mxu0 %v724
  %2214 = vmatmul.mubr.bf16.gmra.mrb[0].mxu0 %v723
  %v2215 = vpop.f32.mrb[0].mxu0
  %v2216 = vadd.f32 %v2103, %v2215
  %v2217 = vpop.f32.mrb[0].mxu0
  %v2218 = vadd.f32 %v2105, %v2217
  %v2219 = vpop.f32.mrb[0].mxu0
  %v2220 = vadd.f32 %v2107, %v2219
  %v2221 = vpop.f32.mrb[0].mxu0
  %v2222 = vadd.f32 %v2109, %v2221
  %2223 = vmatprep.mubr.bf16.mxu0 %v737
  %2224 = vmatmul.mubr.bf16.gmra.mrb[0].mxu0 %v736
  %v2225 = vpop.f32.mrb[0].mxu0
  %v2226 = vadd.f32 %v2113, %v2225
  %v2227 = vpop.f32.mrb[0].mxu0
  %v2228 = vadd.f32 %v2115, %v2227
  %v2229 = vpop.f32.mrb[0].mxu0
  %v2230 = vadd.f32 %v2117, %v2229
  %v2231 = vpop.f32.mrb[0].mxu0
  %v2232 = vadd.f32 %v2119, %v2231
  %2233 = vmatprep.mubr.bf16.mxu0 %v750
  %2234 = vmatmul.mubr.bf16.gmra.mrb[0].mxu0 %v749
  %v2235 = vpop.f32.mrb[0].mxu0
  %v2236 = vadd.f32 %v2123, %v2235
  %v2237 = vpop.f32.mrb[0].mxu0
  %v2238 = vadd.f32 %v2125, %v2237
  %v2239 = vpop.f32.mrb[0].mxu0
  %v2240 = vadd.f32 %v2127, %v2239
  %v2241 = vpop.f32.mrb[0].mxu0
  %v2242 = vadd.f32 %v2129, %v2241
  %2243 = vmatprep.mubr.bf16.mxu0 %v763
  %2244 = vmatmul.mubr.bf16.gmra.mrb[0].mxu0 %v762
  %v2245 = vpop.f32.mrb[0].mxu0
  %v2246 = vadd.f32 %v2133, %v2245
  %v2247 = vpop.f32.mrb[0].mxu0
  %v2248 = vadd.f32 %v2135, %v2247
  %v2249 = vpop.f32.mrb[0].mxu0
  %v2250 = vadd.f32 %v2137, %v2249
  %v2251 = vpop.f32.mrb[0].mxu0
  %v2252 = vadd.f32 %v2139, %v2251
  %2253 = vdwg.mxu0
  %2254 = vmatprep.subr.bf16.mxu0 %v1596
  %2255 = vmatpush1.bf16.msra.mxu0 %v1595
  %2256 = vmatprep.subr.bf16.mxu0 %v1598
  %2257 = vmatpush1.bf16.msra.mxu0 %v1597
  %2258 = vmatprep.subr.bf16.mxu0 %v1600
  %2259 = vmatpush1.bf16.msra.mxu0 %v1599
  %2260 = vmatprep.subr.bf16.mxu0 %v1602
  %2261 = vmatpush1.bf16.msra.mxu0 %v1601
  %2262 = vmatprep.subr.bf16.mxu0 %v1604
  %2263 = vmatpush1.bf16.msra.mxu0 %v1603
  %2264 = vmatprep.subr.bf16.mxu0 %v1606
  %2265 = vmatpush1.bf16.msra.mxu0 %v1605
  %2266 = vmatprep.subr.bf16.mxu0 %v1608
  %2267 = vmatpush1.bf16.msra.mxu0 %v1607
  %2268 = vmatprep.subr.bf16.mxu0 %v1610
  %2269 = vmatpush1.bf16.msra.mxu0 %v1609
  %2270 = vmatprep.subr.bf16.mxu0 %v1612
  %2271 = vmatpush1.bf16.msra.mxu0 %v1611
  %2272 = vmatprep.subr.bf16.mxu0 %v1614
  %2273 = vmatpush1.bf16.msra.mxu0 %v1613
  %2274 = vmatprep.subr.bf16.mxu0 %v1616
  %2275 = vmatpush1.bf16.msra.mxu0 %v1615
  %2276 = vmatprep.subr.bf16.mxu0 %v1618
  %2277 = vmatpush1.bf16.msra.mxu0 %v1617
  %2278 = vmatprep.subr.bf16.mxu0 %v1620
  %2279 = vmatpush1.bf16.msra.mxu0 %v1619
  %2280 = vmatprep.subr.bf16.mxu0 %v1622
  %2281 = vmatpush1.bf16.msra.mxu0 %v1621
  %2282 = vmatprep.subr.bf16.mxu0 %v1624
  %2283 = vmatpush1.bf16.msra.mxu0 %v1623
  %2284 = vmatprep.subr.bf16.mxu0 %v1626
  %2285 = vmatpush1.bf16.msra.mxu0 %v1625
  %2286 = vmatprep.mubr.bf16.mxu0 %v674
  %2287 = vmatmul.mubr.bf16.gmra.mrb[0].mxu0 %v673
  %v2288 = vpop.f32.mrb[0].mxu0
  %v2289 = vadd.f32 %v2176, %v2288
  %v2290 = vpop.f32.mrb[0].mxu0
  %v2291 = vadd.f32 %v2178, %v2290
  %v2292 = vpop.f32.mrb[0].mxu0
  %v2293 = vadd.f32 %v2180, %v2292
  %v2294 = vpop.f32.mrb[0].mxu0
  %v2295 = vadd.f32 %v2182, %v2294
  %2296 = vmatprep.mubr.bf16.mxu0 %v687
  %2297 = vmatmul.mubr.bf16.gmra.mrb[0].mxu0 %v686
  %v2298 = vpop.f32.mrb[0].mxu0
  %v2299 = vadd.f32 %v2186, %v2298
  %v2300 = vpop.f32.mrb[0].mxu0
  %v2301 = vadd.f32 %v2188, %v2300
  %v2302 = vpop.f32.mrb[0].mxu0
  %v2303 = vadd.f32 %v2190, %v2302
  %v2304 = vpop.f32.mrb[0].mxu0
  %v2305 = vadd.f32 %v2192, %v2304
  %2306 = vmatprep.mubr.bf16.mxu0 %v700
  %2307 = vmatmul.mubr.bf16.gmra.mrb[0].mxu0 %v699
  %v2308 = vpop.f32.mrb[0].mxu0
  %v2309 = vadd.f32 %v2196, %v2308
  %v2310 = vpop.f32.mrb[0].mxu0
  %v2311 = vadd.f32 %v2198, %v2310
  %v2312 = vpop.f32.mrb[0].mxu0
  %v2313 = vadd.f32 %v2200, %v2312
  %v2314 = vpop.f32.mrb[0].mxu0
  %v2315 = vadd.f32 %v2202, %v2314
  %2316 = vmatprep.mubr.bf16.mxu0 %v713
  %2317 = vmatmul.mubr.bf16.gmra.mrb[0].mxu0 %v712
  %v2318 = vpop.f32.mrb[0].mxu0
  %v2319 = vadd.f32 %v2206, %v2318
  %v2320 = vpop.f32.mrb[0].mxu0
  %v2321 = vadd.f32 %v2208, %v2320
  %v2322 = vpop.f32.mrb[0].mxu0
  %v2323 = vadd.f32 %v2210, %v2322
  %v2324 = vpop.f32.mrb[0].mxu0
  %v2325 = vadd.f32 %v2212, %v2324
  %2326 = vmatprep.mubr.bf16.mxu0 %v726
  %2327 = vmatmul.mubr.bf16.gmra.mrb[0].mxu0 %v725
  %v2328 = vpop.f32.mrb[0].mxu0
  %v2329 = vadd.f32 %v2216, %v2328
  %v2330 = vpop.f32.mrb[0].mxu0
  %v2331 = vadd.f32 %v2218, %v2330
  %v2332 = vpop.f32.mrb[0].mxu0
  %v2333 = vadd.f32 %v2220, %v2332
  %v2334 = vpop.f32.mrb[0].mxu0
  %v2335 = vadd.f32 %v2222, %v2334
  %2336 = vmatprep.mubr.bf16.mxu0 %v739
  %2337 = vmatmul.mubr.bf16.gmra.mrb[0].mxu0 %v738
  %v2338 = vpop.f32.mrb[0].mxu0
  %v2339 = vadd.f32 %v2226, %v2338
  %v2340 = vpop.f32.mrb[0].mxu0
  %v2341 = vadd.f32 %v2228, %v2340
  %v2342 = vpop.f32.mrb[0].mxu0
  %v2343 = vadd.f32 %v2230, %v2342
  %v2344 = vpop.f32.mrb[0].mxu0
  %v2345 = vadd.f32 %v2232, %v2344
  %2346 = vmatprep.mubr.bf16.mxu0 %v752
  %2347 = vmatmul.mubr.bf16.gmra.mrb[0].mxu0 %v751
  %v2348 = vpop.f32.mrb[0].mxu0
  %v2349 = vadd.f32 %v2236, %v2348
  %v2350 = vpop.f32.mrb[0].mxu0
  %v2351 = vadd.f32 %v2238, %v2350
  %v2352 = vpop.f32.mrb[0].mxu0
  %v2353 = vadd.f32 %v2240, %v2352
  %v2354 = vpop.f32.mrb[0].mxu0
  %v2355 = vadd.f32 %v2242, %v2354
  %2356 = vmatprep.mubr.bf16.mxu0 %v765
  %2357 = vmatmul.mubr.bf16.gmra.mrb[0].mxu0 %v764
  %v2358 = vpop.f32.mrb[0].mxu0
  %v2359 = vadd.f32 %v2246, %v2358
  %v2360 = vpop.f32.mrb[0].mxu0
  %v2361 = vadd.f32 %v2248, %v2360
  %v2362 = vpop.f32.mrb[0].mxu0
  %v2363 = vadd.f32 %v2250, %v2362
  %v2364 = vpop.f32.mrb[0].mxu0
  %v2365 = vadd.f32 %v2252, %v2364
  %2366 = vdwg.mxu0
  %2367 = vmatprep.subr.bf16.mxu0 %v1628
  %2368 = vmatpush1.bf16.msra.mxu0 %v1627
  %2369 = vmatprep.subr.bf16.mxu0 %v1630
  %2370 = vmatpush1.bf16.msra.mxu0 %v1629
  %2371 = vmatprep.subr.bf16.mxu0 %v1632
  %2372 = vmatpush1.bf16.msra.mxu0 %v1631
  %2373 = vmatprep.subr.bf16.mxu0 %v1634
  %2374 = vmatpush1.bf16.msra.mxu0 %v1633
  %2375 = vmatprep.subr.bf16.mxu0 %v1636
  %2376 = vmatpush1.bf16.msra.mxu0 %v1635
  %2377 = vmatprep.subr.bf16.mxu0 %v1638
  %2378 = vmatpush1.bf16.msra.mxu0 %v1637
  %2379 = vmatprep.subr.bf16.mxu0 %v1640
  %2380 = vmatpush1.bf16.msra.mxu0 %v1639
  %2381 = vmatprep.subr.bf16.mxu0 %v1642
  %2382 = vmatpush1.bf16.msra.mxu0 %v1641
  %2383 = vmatprep.subr.bf16.mxu0 %v1644
  %2384 = vmatpush1.bf16.msra.mxu0 %v1643
  %2385 = vmatprep.subr.bf16.mxu0 %v1646
  %2386 = vmatpush1.bf16.msra.mxu0 %v1645
  %2387 = vmatprep.subr.bf16.mxu0 %v1648
  %2388 = vmatpush1.bf16.msra.mxu0 %v1647
  %2389 = vmatprep.subr.bf16.mxu0 %v1650
  %2390 = vmatpush1.bf16.msra.mxu0 %v1649
  %2391 = vmatprep.subr.bf16.mxu0 %v1652
  %2392 = vmatpush1.bf16.msra.mxu0 %v1651
  %2393 = vmatprep.subr.bf16.mxu0 %v1654
  %2394 = vmatpush1.bf16.msra.mxu0 %v1653
  %2395 = vmatprep.subr.bf16.mxu0 %v1656
  %2396 = vmatpush1.bf16.msra.mxu0 %v1655
  %2397 = vmatprep.subr.bf16.mxu0 %v1658
  %2398 = vmatpush1.bf16.msra.mxu0 %v1657
  %2399 = vmatprep.mubr.bf16.mxu0 %v676
  %2400 = vmatmul.mubr.bf16.gmra.mrb[0].mxu0 %v675
  %v2401 = vpop.f32.mrb[0].mxu0
  %v2402 = vadd.f32 %v2289, %v2401
  %v2403 = vpop.f32.mrb[0].mxu0
  %v2404 = vadd.f32 %v2291, %v2403
  %v2405 = vpop.f32.mrb[0].mxu0
  %v2406 = vadd.f32 %v2293, %v2405
  %v2407 = vpop.f32.mrb[0].mxu0
  %v2408 = vadd.f32 %v2295, %v2407
  %2409 = vmatprep.mubr.bf16.mxu0 %v689
  %2410 = vmatmul.mubr.bf16.gmra.mrb[0].mxu0 %v688
  %v2411 = vpop.f32.mrb[0].mxu0
  %v2412 = vadd.f32 %v2299, %v2411
  %v2413 = vpop.f32.mrb[0].mxu0
  %v2414 = vadd.f32 %v2301, %v2413
  %v2415 = vpop.f32.mrb[0].mxu0
  %v2416 = vadd.f32 %v2303, %v2415
  %v2417 = vpop.f32.mrb[0].mxu0
  %v2418 = vadd.f32 %v2305, %v2417
  %2419 = vmatprep.mubr.bf16.mxu0 %v702
  %2420 = vmatmul.mubr.bf16.gmra.mrb[0].mxu0 %v701
  %v2421 = vpop.f32.mrb[0].mxu0
  %v2422 = vadd.f32 %v2309, %v2421
  %v2423 = vpop.f32.mrb[0].mxu0
  %v2424 = vadd.f32 %v2311, %v2423
  %v2425 = vpop.f32.mrb[0].mxu0
  %v2426 = vadd.f32 %v2313, %v2425
  %v2427 = vpop.f32.mrb[0].mxu0
  %v2428 = vadd.f32 %v2315, %v2427
  %2429 = vmatprep.mubr.bf16.mxu0 %v715
  %2430 = vmatmul.mubr.bf16.gmra.mrb[0].mxu0 %v714
  %v2431 = vpop.f32.mrb[0].mxu0
  %v2432 = vadd.f32 %v2319, %v2431
  %v2433 = vpop.f32.mrb[0].mxu0
  %v2434 = vadd.f32 %v2321, %v2433
  %v2435 = vpop.f32.mrb[0].mxu0
  %v2436 = vadd.f32 %v2323, %v2435
  %v2437 = vpop.f32.mrb[0].mxu0
  %v2438 = vadd.f32 %v2325, %v2437
  %2439 = vmatprep.mubr.bf16.mxu0 %v728
  %2440 = vmatmul.mubr.bf16.gmra.mrb[0].mxu0 %v727
  %v2441 = vpop.f32.mrb[0].mxu0
  %v2442 = vadd.f32 %v2329, %v2441
  %v2443 = vpop.f32.mrb[0].mxu0
  %v2444 = vadd.f32 %v2331, %v2443
  %v2445 = vpop.f32.mrb[0].mxu0
  %v2446 = vadd.f32 %v2333, %v2445
  %v2447 = vpop.f32.mrb[0].mxu0
  %v2448 = vadd.f32 %v2335, %v2447
  %2449 = vmatprep.mubr.bf16.mxu0 %v741
  %2450 = vmatmul.mubr.bf16.gmra.mrb[0].mxu0 %v740
  %v2451 = vpop.f32.mrb[0].mxu0
  %v2452 = vadd.f32 %v2339, %v2451
  %v2453 = vpop.f32.mrb[0].mxu0
  %v2454 = vadd.f32 %v2341, %v2453
  %v2455 = vpop.f32.mrb[0].mxu0
  %v2456 = vadd.f32 %v2343, %v2455
  %v2457 = vpop.f32.mrb[0].mxu0
  %v2458 = vadd.f32 %v2345, %v2457
  %2459 = vmatprep.mubr.bf16.mxu0 %v754
  %2460 = vmatmul.mubr.bf16.gmra.mrb[0].mxu0 %v753
  %v2461 = vpop.f32.mrb[0].mxu0
  %v2462 = vadd.f32 %v2349, %v2461
  %v2463 = vpop.f32.mrb[0].mxu0
  %v2464 = vadd.f32 %v2351, %v2463
  %v2465 = vpop.f32.mrb[0].mxu0
  %v2466 = vadd.f32 %v2353, %v2465
  %v2467 = vpop.f32.mrb[0].mxu0
  %v2468 = vadd.f32 %v2355, %v2467
  %2469 = vmatprep.mubr.bf16.mxu0 %v767
  %2470 = vmatmul.mubr.bf16.gmra.mrb[0].mxu0 %v766
  %v2471 = vpop.f32.mrb[0].mxu0
  %v2472 = vadd.f32 %v2359, %v2471
  %v2473 = vpop.f32.mrb[0].mxu0
  %v2474 = vadd.f32 %v2361, %v2473
  %v2475 = vpop.f32.mrb[0].mxu0
  %v2476 = vadd.f32 %v2363, %v2475
  %v2477 = vpop.f32.mrb[0].mxu0
  %v2478 = vadd.f32 %v2365, %v2477
  %2479 = vdwg.mxu0
  %2480 = vmatprep.subr.bf16.mxu0 %v1660
  %2481 = vmatpush1.bf16.msra.mxu0 %v1659
  %2482 = vmatprep.subr.bf16.mxu0 %v1662
  %2483 = vmatpush1.bf16.msra.mxu0 %v1661
  %2484 = vmatprep.subr.bf16.mxu0 %v1664
  %2485 = vmatpush1.bf16.msra.mxu0 %v1663
  %2486 = vmatprep.subr.bf16.mxu0 %v1666
  %2487 = vmatpush1.bf16.msra.mxu0 %v1665
  %2488 = vmatprep.subr.bf16.mxu0 %v1668
  %2489 = vmatpush1.bf16.msra.mxu0 %v1667
  %2490 = vmatprep.subr.bf16.mxu0 %v1670
  %2491 = vmatpush1.bf16.msra.mxu0 %v1669
  %2492 = vmatprep.subr.bf16.mxu0 %v1672
  %2493 = vmatpush1.bf16.msra.mxu0 %v1671
  %2494 = vmatprep.subr.bf16.mxu0 %v1674
  %2495 = vmatpush1.bf16.msra.mxu0 %v1673
  %2496 = vmatprep.subr.bf16.mxu0 %v1676
  %2497 = vmatpush1.bf16.msra.mxu0 %v1675
  %2498 = vmatprep.subr.bf16.mxu0 %v1678
  %2499 = vmatpush1.bf16.msra.mxu0 %v1677
  %2500 = vmatprep.subr.bf16.mxu0 %v1680
  %2501 = vmatpush1.bf16.msra.mxu0 %v1679
  %2502 = vmatprep.subr.bf16.mxu0 %v1682
  %2503 = vmatpush1.bf16.msra.mxu0 %v1681
  %2504 = vmatprep.subr.bf16.mxu0 %v1684
  %2505 = vmatpush1.bf16.msra.mxu0 %v1683
  %2506 = vmatprep.subr.bf16.mxu0 %v1686
  %2507 = vmatpush1.bf16.msra.mxu0 %v1685
  %2508 = vmatprep.subr.bf16.mxu0 %v1688
  %2509 = vmatpush1.bf16.msra.mxu0 %v1687
  %2510 = vmatprep.subr.bf16.mxu0 %v1690
  %2511 = vmatpush1.bf16.msra.mxu0 %v1689
  %2512 = vmatprep.mubr.bf16.mxu0 %v678
  %2513 = vmatmul.mubr.bf16.gmra.mrb[0].mxu0 %v677
  %v2514 = vpop.f32.mrb[0].mxu0
  %v2515 = vadd.f32 %v2402, %v2514
  %v2516 = vpop.f32.mrb[0].mxu0
  %v2517 = vadd.f32 %v2404, %v2516
  %v2518 = vpop.f32.mrb[0].mxu0
  %v2519 = vadd.f32 %v2406, %v2518
  %v2520 = vpop.f32.mrb[0].mxu0
  %v2521 = vadd.f32 %v2408, %v2520
  %2522 = vmatprep.mubr.bf16.mxu0 %v691
  %2523 = vmatmul.mubr.bf16.gmra.mrb[0].mxu0 %v690
  %v2524 = vpop.f32.mrb[0].mxu0
  %v2525 = vadd.f32 %v2412, %v2524
  %v2526 = vpop.f32.mrb[0].mxu0
  %v2527 = vadd.f32 %v2414, %v2526
  %v2528 = vpop.f32.mrb[0].mxu0
  %v2529 = vadd.f32 %v2416, %v2528
  %v2530 = vpop.f32.mrb[0].mxu0
  %v2531 = vadd.f32 %v2418, %v2530
  %2532 = vmatprep.mubr.bf16.mxu0 %v704
  %2533 = vmatmul.mubr.bf16.gmra.mrb[0].mxu0 %v703
  %v2534 = vpop.f32.mrb[0].mxu0
  %v2535 = vadd.f32 %v2422, %v2534
  %v2536 = vpop.f32.mrb[0].mxu0
  %v2537 = vadd.f32 %v2424, %v2536
  %v2538 = vpop.f32.mrb[0].mxu0
  %v2539 = vadd.f32 %v2426, %v2538
  %v2540 = vpop.f32.mrb[0].mxu0
  %v2541 = vadd.f32 %v2428, %v2540
  %2542 = vmatprep.mubr.bf16.mxu0 %v717
  %2543 = vmatmul.mubr.bf16.gmra.mrb[0].mxu0 %v716
  %v2544 = vpop.f32.mrb[0].mxu0
  %v2545 = vadd.f32 %v2432, %v2544
  %v2546 = vpop.f32.mrb[0].mxu0
  %v2547 = vadd.f32 %v2434, %v2546
  %v2548 = vpop.f32.mrb[0].mxu0
  %v2549 = vadd.f32 %v2436, %v2548
  %v2550 = vpop.f32.mrb[0].mxu0
  %v2551 = vadd.f32 %v2438, %v2550
  %2552 = vmatprep.mubr.bf16.mxu0 %v730
  %2553 = vmatmul.mubr.bf16.gmra.mrb[0].mxu0 %v729
  %v2554 = vpop.f32.mrb[0].mxu0
  %v2555 = vadd.f32 %v2442, %v2554
  %v2556 = vpop.f32.mrb[0].mxu0
  %v2557 = vadd.f32 %v2444, %v2556
  %v2558 = vpop.f32.mrb[0].mxu0
  %v2559 = vadd.f32 %v2446, %v2558
  %v2560 = vpop.f32.mrb[0].mxu0
  %v2561 = vadd.f32 %v2448, %v2560
  %2562 = vmatprep.mubr.bf16.mxu0 %v743
  %2563 = vmatmul.mubr.bf16.gmra.mrb[0].mxu0 %v742
  %v2564 = vpop.f32.mrb[0].mxu0
  %v2565 = vadd.f32 %v2452, %v2564
  %v2566 = vpop.f32.mrb[0].mxu0
  %v2567 = vadd.f32 %v2454, %v2566
  %v2568 = vpop.f32.mrb[0].mxu0
  %v2569 = vadd.f32 %v2456, %v2568
  %v2570 = vpop.f32.mrb[0].mxu0
  %v2571 = vadd.f32 %v2458, %v2570
  %2572 = vmatprep.mubr.bf16.mxu0 %v756
  %2573 = vmatmul.mubr.bf16.gmra.mrb[0].mxu0 %v755
  %v2574 = vpop.f32.mrb[0].mxu0
  %v2575 = vadd.f32 %v2462, %v2574
  %v2576 = vpop.f32.mrb[0].mxu0
  %v2577 = vadd.f32 %v2464, %v2576
  %v2578 = vpop.f32.mrb[0].mxu0
  %v2579 = vadd.f32 %v2466, %v2578
  %v2580 = vpop.f32.mrb[0].mxu0
  %v2581 = vadd.f32 %v2468, %v2580
  %2582 = vmatprep.mubr.bf16.mxu0 %v769
  %2583 = vmatmul.mubr.bf16.gmra.mrb[0].mxu0 %v768
  %v2584 = vpop.f32.mrb[0].mxu0
  %v2585 = vadd.f32 %v2472, %v2584
  %v2586 = vpop.f32.mrb[0].mxu0
  %v2587 = vadd.f32 %v2474, %v2586
  %v2588 = vpop.f32.mrb[0].mxu0
  %v2589 = vadd.f32 %v2476, %v2588
  %v2590 = vpop.f32.mrb[0].mxu0
  %v2591 = vadd.f32 %v2478, %v2590
  %2592 = vdwg.mxu0
  %2593 = vmatprep.subr.bf16.mxu0 %v1692
  %2594 = vmatpush1.bf16.msra.mxu0 %v1691
  %2595 = vmatprep.subr.bf16.mxu0 %v1694
  %2596 = vmatpush1.bf16.msra.mxu0 %v1693
  %2597 = vmatprep.subr.bf16.mxu0 %v1696
  %2598 = vmatpush1.bf16.msra.mxu0 %v1695
  %2599 = vmatprep.subr.bf16.mxu0 %v1698
  %2600 = vmatpush1.bf16.msra.mxu0 %v1697
  %2601 = vmatprep.subr.bf16.mxu0 %v1700
  %2602 = vmatpush1.bf16.msra.mxu0 %v1699
  %2603 = vmatprep.subr.bf16.mxu0 %v1702
  %2604 = vmatpush1.bf16.msra.mxu0 %v1701
  %2605 = vmatprep.subr.bf16.mxu0 %v1704
  %2606 = vmatpush1.bf16.msra.mxu0 %v1703
  %2607 = vmatprep.subr.bf16.mxu0 %v1706
  %2608 = vmatpush1.bf16.msra.mxu0 %v1705
  %2609 = vmatprep.subr.bf16.mxu0 0
  %2610 = vmatpush1.bf16.msra.mxu0 0
  %2611 = vmatprep.subr.bf16.mxu0 0
  %2612 = vmatpush1.bf16.msra.mxu0 0
  %2613 = vmatprep.subr.bf16.mxu0 0
  %2614 = vmatpush1.bf16.msra.mxu0 0
  %2615 = vmatprep.subr.bf16.mxu0 0
  %2616 = vmatpush1.bf16.msra.mxu0 0
  %2617 = vmatprep.subr.bf16.mxu0 0
  %2618 = vmatpush1.bf16.msra.mxu0 0
  %2619 = vmatprep.subr.bf16.mxu0 0
  %2620 = vmatpush1.bf16.msra.mxu0 0
  %2621 = vmatprep.subr.bf16.mxu0 0
  %2622 = vmatpush1.bf16.msra.mxu0 0
  %2623 = vmatprep.subr.bf16.mxu0 0
  %2624 = vmatpush1.bf16.msra.mxu0 0
  %2625 = vmatprep.mubr.bf16.mxu0 0
  %2626 = vmatmul.mubr.bf16.gmra.mrb[0].mxu0 %v679
  %v2627 = vpop.f32.mrb[0].mxu0
  %v2628 = vadd.f32 %v2515, %v2627
  %v2629 = vpop.f32.mrb[0].mxu0
  %v2630 = vadd.f32 %v2517, %v2629
  %v2631 = vpop.f32.mrb[0].mxu0
  %v2632 = vadd.f32 %v2519, %v2631
  %v2633 = vpop.f32.mrb[0].mxu0
  %v2634 = vadd.f32 %v2521, %v2633
  %2635 = vmatprep.mubr.bf16.mxu0 0
  %2636 = vmatmul.mubr.bf16.gmra.mrb[0].mxu0 %v692
  %v2637 = vpop.f32.mrb[0].mxu0
  %v2638 = vadd.f32 %v2525, %v2637
  %v2639 = vpop.f32.mrb[0].mxu0
  %v2640 = vadd.f32 %v2527, %v2639
  %v2641 = vpop.f32.mrb[0].mxu0
  %v2642 = vadd.f32 %v2529, %v2641
  %v2643 = vpop.f32.mrb[0].mxu0
  %v2644 = vadd.f32 %v2531, %v2643
  %2645 = vmatprep.mubr.bf16.mxu0 0
  %2646 = vmatmul.mubr.bf16.gmra.mrb[0].mxu0 %v705
  %v2647 = vpop.f32.mrb[0].mxu0
  %v2648 = vadd.f32 %v2535, %v2647
  %v2649 = vpop.f32.mrb[0].mxu0
  %v2650 = vadd.f32 %v2537, %v2649
  %v2651 = vpop.f32.mrb[0].mxu0
  %v2652 = vadd.f32 %v2539, %v2651
  %v2653 = vpop.f32.mrb[0].mxu0
  %v2654 = vadd.f32 %v2541, %v2653
  %2655 = vmatprep.mubr.bf16.mxu0 0
  %2656 = vmatmul.mubr.bf16.gmra.mrb[0].mxu0 %v718
  %v2657 = vpop.f32.mrb[0].mxu0
  %v2658 = vadd.f32 %v2545, %v2657
  %v2659 = vpop.f32.mrb[0].mxu0
  %v2660 = vadd.f32 %v2547, %v2659
  %v2661 = vpop.f32.mrb[0].mxu0
  %v2662 = vadd.f32 %v2549, %v2661
  %v2663 = vpop.f32.mrb[0].mxu0
  %v2664 = vadd.f32 %v2551, %v2663
  %2665 = vmatprep.mubr.bf16.mxu0 0
  %2666 = vmatmul.mubr.bf16.gmra.mrb[0].mxu0 %v731
  %v2667 = vpop.f32.mrb[0].mxu0
  %v2668 = vadd.f32 %v2555, %v2667
  %v2669 = vpop.f32.mrb[0].mxu0
  %v2670 = vadd.f32 %v2557, %v2669
  %v2671 = vpop.f32.mrb[0].mxu0
  %v2672 = vadd.f32 %v2559, %v2671
  %v2673 = vpop.f32.mrb[0].mxu0
  %v2674 = vadd.f32 %v2561, %v2673
  %2675 = vmatprep.mubr.bf16.mxu0 0
  %2676 = vmatmul.mubr.bf16.gmra.mrb[0].mxu0 %v744
  %v2677 = vpop.f32.mrb[0].mxu0
  %v2678 = vadd.f32 %v2565, %v2677
  %v2679 = vpop.f32.mrb[0].mxu0
  %v2680 = vadd.f32 %v2567, %v2679
  %v2681 = vpop.f32.mrb[0].mxu0
  %v2682 = vadd.f32 %v2569, %v2681
  %v2683 = vpop.f32.mrb[0].mxu0
  %v2684 = vadd.f32 %v2571, %v2683
  %2685 = vmatprep.mubr.bf16.mxu0 0
  %2686 = vmatmul.mubr.bf16.gmra.mrb[0].mxu0 %v757
  %v2687 = vpop.f32.mrb[0].mxu0
  %v2688 = vadd.f32 %v2575, %v2687
  %v2689 = vpop.f32.mrb[0].mxu0
  %v2690 = vadd.f32 %v2577, %v2689
  %v2691 = vpop.f32.mrb[0].mxu0
  %v2692 = vadd.f32 %v2579, %v2691
  %v2693 = vpop.f32.mrb[0].mxu0
  %v2694 = vadd.f32 %v2581, %v2693
  %2695 = vmatprep.mubr.bf16.mxu0 0
  %2696 = vmatmul.mubr.bf16.gmra.mrb[0].mxu0 %v770
  %v2697 = vpop.f32.mrb[0].mxu0
  %v2698 = vadd.f32 %v2585, %v2697
  %v2699 = vpop.f32.mrb[0].mxu0
  %v2700 = vadd.f32 %v2587, %v2699
  %v2701 = vpop.f32.mrb[0].mxu0
  %v2702 = vadd.f32 %v2589, %v2701
  %v2703 = vpop.f32.mrb[0].mxu0
  %v2704 = vadd.f32 %v2591, %v2703
  %2705 = vdwg.mxu0
  %v2706 = vmax.f32 %v2628, 0.0
  %v2707 = vmax.f32 %v2630, 0.0
  %v2708 = vmax.f32 %v2632, 0.0
  %v2709 = vmax.f32 %v2634, 0.0
  %v2710 = vmax.f32 %v2638, 0.0
  %v2711 = vmax.f32 %v2640, 0.0
  %v2712 = vmax.f32 %v2642, 0.0
  %v2713 = vmax.f32 %v2644, 0.0
  %v2714 = vmax.f32 %v2648, 0.0
  %v2715 = vmax.f32 %v2650, 0.0
  %v2716 = vmax.f32 %v2652, 0.0
  %v2717 = vmax.f32 %v2654, 0.0
  %v2718 = vmax.f32 %v2658, 0.0
  %v2719 = vmax.f32 %v2660, 0.0
  %v2720 = vmax.f32 %v2662, 0.0
  %v2721 = vmax.f32 %v2664, 0.0
  %v2722 = vmax.f32 %v2668, 0.0
  %v2723 = vmax.f32 %v2670, 0.0
  %v2724 = vmax.f32 %v2672, 0.0
  %v2725 = vmax.f32 %v2674, 0.0
  %v2726 = vmax.f32 %v2678, 0.0
  %v2727 = vmax.f32 %v2680, 0.0
  %v2728 = vmax.f32 %v2682, 0.0
  %v2729 = vmax.f32 %v2684, 0.0
  %v2730 = vmax.f32 %v2688, 0.0
  %v2731 = vmax.f32 %v2690, 0.0
  %v2732 = vmax.f32 %v2692, 0.0
  %v2733 = vmax.f32 %v2694, 0.0
  %v2734 = vmax.f32 %v2698, 0.0
  %v2735 = vmax.f32 %v2700, 0.0
  %v2736 = vmax.f32 %v2702, 0.0
  %v2737 = vmax.f32 %v2704, 0.0
  %v2738 = vpack.c.bf16 %v2708, %v2706
  %v2739 = vpack.c.bf16 %v2709, %v2707
  %v2740 = vpack.c.bf16 %v2712, %v2710
  %v2741 = vpack.c.bf16 %v2713, %v2711
  %v2742 = vpack.c.bf16 %v2716, %v2714
  %v2743 = vpack.c.bf16 %v2717, %v2715
  %v2744 = vpack.c.bf16 %v2720, %v2718
  %v2745 = vpack.c.bf16 %v2721, %v2719
  %v2746 = vpack.c.bf16 %v2724, %v2722
  %v2747 = vpack.c.bf16 %v2725, %v2723
  %v2748 = vpack.c.bf16 %v2728, %v2726
  %v2749 = vpack.c.bf16 %v2729, %v2727
  %v2750 = vpack.c.bf16 %v2732, %v2730
  %v2751 = vpack.c.bf16 %v2733, %v2731
  %v2752 = vpack.c.bf16 %v2736, %v2734
  %v2753 = vpack.c.bf16 %v2737, %v2735
  %v2770 = vunpack.c.l.b16 %v2738
  %v2771 = vunpack.c.l.b16 %v2739
  %v2772 = vunpack.c.h.b16 %v2738
  %v2773 = vunpack.c.h.b16 %v2739
  %v2774 = vunpack.c.l.b16 %v2740
  %v2775 = vunpack.c.l.b16 %v2741
  %v2776 = vunpack.c.h.b16 %v2740
  %v2777 = vunpack.c.h.b16 %v2741
  %v2778 = vunpack.c.l.b16 %v2742
  %v2779 = vunpack.c.l.b16 %v2743
  %v2780 = vunpack.c.h.b16 %v2742
  %v2781 = vunpack.c.h.b16 %v2743
  %v2782 = vunpack.c.l.b16 %v2744
  %v2783 = vunpack.c.l.b16 %v2745
  %v2784 = vunpack.c.h.b16 %v2744
  %v2785 = vunpack.c.h.b16 %v2745
  %v2786 = vunpack.c.l.b16 %v2746
  %v2787 = vunpack.c.l.b16 %v2747
  %v2788 = vunpack.c.h.b16 %v2746
  %v2789 = vunpack.c.h.b16 %v2747
  %v2790 = vunpack.c.l.b16 %v2748
  %v2791 = vunpack.c.l.b16 %v2749
  %v2792 = vunpack.c.h.b16 %v2748
  %v2793 = vunpack.c.h.b16 %v2749
  %v2794 = vunpack.c.l.b16 %v2750
  %v2795 = vunpack.c.l.b16 %v2751
  %v2796 = vunpack.c.h.b16 %v2750
  %v2797 = vunpack.c.h.b16 %v2751
  %v2798 = vunpack.c.l.b16 %v2752
  %v2799 = vunpack.c.l.b16 %v2753
  %v2800 = vunpack.c.h.b16 %v2752
  %v2801 = vunpack.c.h.b16 %v2753
  %v2802 = vpack.c.b16 %v2771, %v2770
  %v2803 = vpack.c.b16 %v2773, %v2772
  %v2804 = vpack.c.b16 %v2775, %v2774
  %v2805 = vpack.c.b16 %v2777, %v2776
  %v2806 = vpack.c.b16 %v2779, %v2778
  %v2807 = vpack.c.b16 %v2781, %v2780
  %v2808 = vpack.c.b16 %v2783, %v2782
  %v2809 = vpack.c.b16 %v2785, %v2784
  %v2810 = vpack.c.b16 %v2787, %v2786
  %v2811 = vpack.c.b16 %v2789, %v2788
  %v2812 = vpack.c.b16 %v2791, %v2790
  %v2813 = vpack.c.b16 %v2793, %v2792
  %v2814 = vpack.c.b16 %v2795, %v2794
  %v2815 = vpack.c.b16 %v2797, %v2796
  %v2816 = vpack.c.b16 %v2799, %v2798
  %v2817 = vpack.c.b16 %v2801, %v2800
  %2834 = vst [vmem:[%s3] sm:$0xff] %v2802
  %2835 = vst [vmem:[%s3 + $0x8] sm:$0xff] %v2803
  %2836 = vst [vmem:[%s3 + $0x10] sm:$0xff] %v2804
  %2837 = vst [vmem:[%s3 + $0x18] sm:$0xff] %v2805
  %2838 = vst [vmem:[%s3 + $0x20] sm:$0xff] %v2806
  %2839 = vst [vmem:[%s3 + $0x28] sm:$0xff] %v2807
  %2840 = vst [vmem:[%s3 + $0x30] sm:$0xff] %v2808
  %2841 = vst [vmem:[%s3 + $0x38] sm:$0xff] %v2809
  %2842 = vst [vmem:[%s3 + $0x40] sm:$0xff] %v2810
  %2843 = vst [vmem:[%s3 + $0x48] sm:$0xff] %v2811
  %2844 = vst [vmem:[%s3 + $0x50] sm:$0xff] %v2812
  %2845 = vst [vmem:[%s3 + $0x58] sm:$0xff] %v2813
  %2846 = vst [vmem:[%s3 + $0x60] sm:$0xff] %v2814
  %2847 = vst [vmem:[%s3 + $0x68] sm:$0xff] %v2815
  %2848 = vst [vmem:[%s3 + $0x70] sm:$0xff] %v2816
  %2849 = vst [vmem:[%s3 + $0x78] sm:$0xff] %v2817
  // Predicated region
  $region14: #{alexnet_forward.10} parent=0 // pred_check
    _
  $region15: #{alexnet_forward.10} parent=0 // pred_check_branch
    %2851 = sbr.rel (0) target = $region17
  $region16: #{alexnet_forward.10} parent=0 // pred_region
    _
  $region17: #{alexnet_forward.10} parent=0 // pred_fallthru
    _
  // Predicated region
  $region18: #{alexnet_forward.10} parent=0 // pred_check
    _
  $region19: #{alexnet_forward.10} parent=0 // pred_check_branch
    %2853 = sbr.rel (0) target = $region21
  $region20: #{alexnet_forward.10} parent=0 // pred_region
    _
  $region21: #{alexnet_forward.10} parent=0 // pred_fallthru
    _

// kernel: alexnet_forward.11
$region0: #{alexnet_forward.11}
  #allocation0 [shape = 'u32[]', space=smem, size = 0x4, offset = 0x4, fixed_abs, tag = 'smem constant byte address 0x4 - core index']
  #allocation1 [shape = 'u32[144,128]{1,0:T(1,128)}', space=vmem, size = 0x12000, scoped, tag = 'internal scratch']
  %s0 = inlined_call_operand.vmem [shape: bf16[9,32,128], index: 0, kind: input, shape index: {}]
  %s1 = inlined_call_operand.vmem [shape: bf16[32,128], index: 1, kind: output, shape index: {}]
  %s2 = sld [smem:[#allocation0]]
  $region14: #{alexnet_forward.11} parent=0
    _
  %s4 = ssub.s32 1, %s2
  %s5 = scalar_select 0, %s4, %s2
  // Predicated region
  $region2: #{alexnet_forward.11} parent=0 // pred_check
    _
  $region3: #{alexnet_forward.11} parent=0 // pred_check_branch
    %7 = sbr.rel (0) target = $region5
  $region4: #{alexnet_forward.11} parent=0 // pred_region
    _
  $region5: #{alexnet_forward.11} parent=0 // pred_fallthru
    _
  %v8 = vld [vmem:[%s0] sm:$0xf]
  %v9 = vld [vmem:[%s0 + $0x4] sm:$0xf]
  %v10 = vld [vmem:[%s0 + $0x8] sm:$0xf]
  %v11 = vld [vmem:[%s0 + $0xc] sm:$0xf]
  %v12 = vld [vmem:[%s0 + $0x10] sm:$0xf]
  %v13 = vld [vmem:[%s0 + $0x14] sm:$0xf]
  %v14 = vld [vmem:[%s0 + $0x18] sm:$0xf]
  %v15 = vld [vmem:[%s0 + $0x1c] sm:$0xf]
  %v16 = vld [vmem:[%s0 + $0x20] sm:$0xf]
  %v17 = vld [vmem:[%s0 + $0x24] sm:$0xf]
  %v18 = vld [vmem:[%s0 + $0x28] sm:$0xf]
  %v19 = vld [vmem:[%s0 + $0x2c] sm:$0xf]
  %v20 = vld [vmem:[%s0 + $0x30] sm:$0xf]
  %v21 = vld [vmem:[%s0 + $0x34] sm:$0xf]
  %v22 = vld [vmem:[%s0 + $0x38] sm:$0xf]
  %v23 = vld [vmem:[%s0 + $0x3c] sm:$0xf]
  %v24 = vld [vmem:[%s0 + $0x40] sm:$0xf]
  %v25 = vld [vmem:[%s0 + $0x44] sm:$0xf]
  %v26 = vld [vmem:[%s0 + $0x48] sm:$0xf]
  %v27 = vld [vmem:[%s0 + $0x4c] sm:$0xf]
  %v28 = vld [vmem:[%s0 + $0x50] sm:$0xf]
  %v29 = vld [vmem:[%s0 + $0x54] sm:$0xf]
  %v30 = vld [vmem:[%s0 + $0x58] sm:$0xf]
  %v31 = vld [vmem:[%s0 + $0x5c] sm:$0xf]
  %v32 = vld [vmem:[%s0 + $0x60] sm:$0xf]
  %v33 = vld [vmem:[%s0 + $0x64] sm:$0xf]
  %v34 = vld [vmem:[%s0 + $0x68] sm:$0xf]
  %v35 = vld [vmem:[%s0 + $0x6c] sm:$0xf]
  %v36 = vld [vmem:[%s0 + $0x70] sm:$0xf]
  %v37 = vld [vmem:[%s0 + $0x74] sm:$0xf]
  %v38 = vld [vmem:[%s0 + $0x78] sm:$0xf]
  %v39 = vld [vmem:[%s0 + $0x7c] sm:$0xf]
  %v40 = vld [vmem:[%s0 + $0x80] sm:$0xf]
  %v41 = vld [vmem:[%s0 + $0x84] sm:$0xf]
  %v42 = vld [vmem:[%s0 + $0x88] sm:$0xf]
  %v43 = vld [vmem:[%s0 + $0x8c] sm:$0xf]
  %v44 = vmax.bf16 %v8, %v12
  %v45 = vmax.bf16 %v9, %v13
  %v46 = vmax.bf16 %v10, %v14
  %v47 = vmax.bf16 %v11, %v15
  %v48 = vmax.bf16 %v16, %v20
  %v49 = vmax.bf16 %v17, %v21
  %v50 = vmax.bf16 %v18, %v22
  %v51 = vmax.bf16 %v19, %v23
  %v52 = vmax.bf16 %v24, %v28
  %v53 = vmax.bf16 %v25, %v29
  %v54 = vmax.bf16 %v26, %v30
  %v55 = vmax.bf16 %v27, %v31
  %v56 = vmax.bf16 %v32, %v36
  %v57 = vmax.bf16 %v33, %v37
  %v58 = vmax.bf16 %v34, %v38
  %v59 = vmax.bf16 %v35, %v39
  %v60 = vmax.bf16 %v44, %v48
  %v61 = vmax.bf16 %v45, %v49
  %v62 = vmax.bf16 %v46, %v50
  %v63 = vmax.bf16 %v47, %v51
  %v64 = vmax.bf16 %v52, %v56
  %v65 = vmax.bf16 %v53, %v57
  %v66 = vmax.bf16 %v54, %v58
  %v67 = vmax.bf16 %v55, %v59
  %v68 = vmax.bf16 %v60, %v64
  %v69 = vmax.bf16 %v61, %v65
  %v70 = vmax.bf16 %v62, %v66
  %v71 = vmax.bf16 %v63, %v67
  %v72 = vmax.bf16 %v68, %v40
  %v73 = vmax.bf16 %v69, %v41
  %v74 = vmax.bf16 %v70, %v42
  %v75 = vmax.bf16 %v71, %v43
  %76 = vst [vmem:[%s1] sm:$0xf] %v72
  %77 = vst [vmem:[%s1 + $0x4] sm:$0xf] %v73
  %78 = vst [vmem:[%s1 + $0x8] sm:$0xf] %v74
  %79 = vst [vmem:[%s1 + $0xc] sm:$0xf] %v75
  // Predicated region
  $region6: #{alexnet_forward.11} parent=0 // pred_check
    _
  $region7: #{alexnet_forward.11} parent=0 // pred_check_branch
    %81 = sbr.rel (0) target = $region9
  $region8: #{alexnet_forward.11} parent=0 // pred_region
    _
  $region9: #{alexnet_forward.11} parent=0 // pred_fallthru
    _
  // Predicated region
  $region10: #{alexnet_forward.11} parent=0 // pred_check
    _
  $region11: #{alexnet_forward.11} parent=0 // pred_check_branch
    %83 = sbr.rel (0) target = $region13
  $region12: #{alexnet_forward.11} parent=0 // pred_region
    _
  $region13: #{alexnet_forward.11} parent=0 // pred_fallthru
    _

// kernel: alexnet_forward.12
$region0: #{alexnet_forward.12}
  #allocation0 [shape = 'u32[]', space=smem, size = 0x4, offset = 0x4, fixed_abs, tag = 'smem constant byte address 0x4 - core index']
  #allocation1 [shape = 'u32[144,128]{1,0:T(1,128)}', space=vmem, size = 0x12000, scoped, tag = 'internal scratch']
  %s0 = inlined_call_operand.vmem [shape: bf16[32,1792], index: 0, kind: input, shape index: {}]
  %s1 = inlined_call_operand.vmem [shape: bf16[1792,384], index: 1, kind: input, shape index: {}]
  %s2 = inlined_call_operand.vmem [shape: f32[1,384], index: 2, kind: input, shape index: {}]
  %s3 = inlined_call_operand.vmem [shape: bf16[32,384], index: 3, kind: output, shape index: {}]
  %s4 = sld [smem:[#allocation0]]
  $region22: #{alexnet_forward.12} parent=0
    _
  %s6 = ssub.s32 1, %s4
  %s7 = scalar_select 0, %s6, %s4
  // Predicated region
  $region2: #{alexnet_forward.12} parent=0 // pred_check
    _
  $region3: #{alexnet_forward.12} parent=0 // pred_check_branch
    %9 = sbr.rel (0) target = $region5
  $region4: #{alexnet_forward.12} parent=0 // pred_region
    _
  $region5: #{alexnet_forward.12} parent=0 // pred_fallthru
    _
  // Predicated region
  $region6: #{alexnet_forward.12} parent=0 // pred_check
    _
  $region7: #{alexnet_forward.12} parent=0 // pred_check_branch
    %11 = sbr.rel (0) target = $region9
  $region8: #{alexnet_forward.12} parent=0 // pred_region
    _
  $region9: #{alexnet_forward.12} parent=0 // pred_fallthru
    _
  // Predicated region
  $region10: #{alexnet_forward.12} parent=0 // pred_check
    _
  $region11: #{alexnet_forward.12} parent=0 // pred_check_branch
    %13 = sbr.rel (0) target = $region13
  $region12: #{alexnet_forward.12} parent=0 // pred_region
    _
  $region13: #{alexnet_forward.12} parent=0 // pred_fallthru
    _
  %v15 = vld [vmem:[%s0] sm:$0xff]
  %v16 = vld [vmem:[%s0 + $0x8] sm:$0xff]
  %v17 = vld [vmem:[%s0 + $0x10] sm:$0xff]
  %v18 = vld [vmem:[%s0 + $0x18] sm:$0xff]
  %v19 = vld [vmem:[%s0 + $0x20] sm:$0xff]
  %v20 = vld [vmem:[%s0 + $0x28] sm:$0xff]
  %v21 = vld [vmem:[%s0 + $0x30] sm:$0xff]
  %v22 = vld [vmem:[%s0 + $0x38] sm:$0xff]
  %v23 = vld [vmem:[%s0 + $0x40] sm:$0xff]
  %v24 = vld [vmem:[%s0 + $0x48] sm:$0xff]
  %v25 = vld [vmem:[%s0 + $0x50] sm:$0xff]
  %v26 = vld [vmem:[%s0 + $0x58] sm:$0xff]
  %v27 = vld [vmem:[%s0 + $0x60] sm:$0xff]
  %v28 = vld [vmem:[%s0 + $0x68] sm:$0xff]
  %v29 = vld [vmem:[%s0 + $0x70] sm:$0xff]
  %v30 = vld [vmem:[%s0 + $0x78] sm:$0xff]
  %v31 = vld [vmem:[%s0 + $0x80] sm:$0xff]
  %v32 = vld [vmem:[%s0 + $0x88] sm:$0xff]
  %v33 = vld [vmem:[%s0 + $0x90] sm:$0xff]
  %v34 = vld [vmem:[%s0 + $0x98] sm:$0xff]
  %v35 = vld [vmem:[%s0 + $0xa0] sm:$0xff]
  %v36 = vld [vmem:[%s0 + $0xa8] sm:$0xff]
  %v37 = vld [vmem:[%s0 + $0xb0] sm:$0xff]
  %v38 = vld [vmem:[%s0 + $0xb8] sm:$0xff]
  %v39 = vld [vmem:[%s0 + $0xc0] sm:$0xff]
  %v40 = vld [vmem:[%s0 + $0xc8] sm:$0xff]
  %v41 = vld [vmem:[%s0 + $0xd0] sm:$0xff]
  %v42 = vld [vmem:[%s0 + $0xd8] sm:$0xff]
  %v43 = vld [vmem:[%s1] sm:$0xff]
  %v44 = vld [vmem:[%s1 + $0x8] sm:$0xf]
  %v45 = vld [vmem:[%s1 + $0xc] sm:$0xff]
  %v46 = vld [vmem:[%s1 + $0x14] sm:$0xf]
  %v47 = vld [vmem:[%s1 + $0x18] sm:$0xff]
  %v48 = vld [vmem:[%s1 + $0x20] sm:$0xf]
  %v49 = vld [vmem:[%s1 + $0x24] sm:$0xff]
  %v50 = vld [vmem:[%s1 + $0x2c] sm:$0xf]
  %v51 = vld [vmem:[%s1 + $0x30] sm:$0xff]
  %v52 = vld [vmem:[%s1 + $0x38] sm:$0xf]
  %v53 = vld [vmem:[%s1 + $0x3c] sm:$0xff]
  %v54 = vld [vmem:[%s1 + $0x44] sm:$0xf]
  %v55 = vld [vmem:[%s1 + $0x48] sm:$0xff]
  %v56 = vld [vmem:[%s1 + $0x50] sm:$0xf]
  %v57 = vld [vmem:[%s1 + $0x54] sm:$0xff]
  %v58 = vld [vmem:[%s1 + $0x5c] sm:$0xf]
  %v59 = vld [vmem:[%s1 + $0x60] sm:$0xff]
  %v60 = vld [vmem:[%s1 + $0x68] sm:$0xf]
  %v61 = vld [vmem:[%s1 + $0x6c] sm:$0xff]
  %v62 = vld [vmem:[%s1 + $0x74] sm:$0xf]
  %v63 = vld [vmem:[%s1 + $0x78] sm:$0xff]
  %v64 = vld [vmem:[%s1 + $0x80] sm:$0xf]
  %v65 = vld [vmem:[%s1 + $0x84] sm:$0xff]
  %v66 = vld [vmem:[%s1 + $0x8c] sm:$0xf]
  %v67 = vld [vmem:[%s1 + $0x90] sm:$0xff]
  %v68 = vld [vmem:[%s1 + $0x98] sm:$0xf]
  %v69 = vld [vmem:[%s1 + $0x9c] sm:$0xff]
  %v70 = vld [vmem:[%s1 + $0xa4] sm:$0xf]
  %v71 = vld [vmem:[%s1 + $0xa8] sm:$0xff]
  %v72 = vld [vmem:[%s1 + $0xb0] sm:$0xf]
  %v73 = vld [vmem:[%s1 + $0xb4] sm:$0xff]
  %v74 = vld [vmem:[%s1 + $0xbc] sm:$0xf]
  %v75 = vld [vmem:[%s1 + $0xc0] sm:$0xff]
  %v76 = vld [vmem:[%s1 + $0xc8] sm:$0xf]
  %v77 = vld [vmem:[%s1 + $0xcc] sm:$0xff]
  %v78 = vld [vmem:[%s1 + $0xd4] sm:$0xf]
  %v79 = vld [vmem:[%s1 + $0xd8] sm:$0xff]
  %v80 = vld [vmem:[%s1 + $0xe0] sm:$0xf]
  %v81 = vld [vmem:[%s1 + $0xe4] sm:$0xff]
  %v82 = vld [vmem:[%s1 + $0xec] sm:$0xf]
  %v83 = vld [vmem:[%s1 + $0xf0] sm:$0xff]
  %v84 = vld [vmem:[%s1 + $0xf8] sm:$0xf]
  %v85 = vld [vmem:[%s1 + $0xfc] sm:$0xff]
  %v86 = vld [vmem:[%s1 + $0x104] sm:$0xf]
  %v87 = vld [vmem:[%s1 + $0x108] sm:$0xff]
  %v88 = vld [vmem:[%s1 + $0x110] sm:$0xf]
  %v89 = vld [vmem:[%s1 + $0x114] sm:$0xff]
  %v90 = vld [vmem:[%s1 + $0x11c] sm:$0xf]
  %v91 = vld [vmem:[%s1 + $0x120] sm:$0xff]
  %v92 = vld [vmem:[%s1 + $0x128] sm:$0xf]
  %v93 = vld [vmem:[%s1 + $0x12c] sm:$0xff]
  %v94 = vld [vmem:[%s1 + $0x134] sm:$0xf]
  %v95 = vld [vmem:[%s1 + $0x138] sm:$0xff]
  %v96 = vld [vmem:[%s1 + $0x140] sm:$0xf]
  %v97 = vld [vmem:[%s1 + $0x144] sm:$0xff]
  %v98 = vld [vmem:[%s1 + $0x14c] sm:$0xf]
  %v99 = vld [vmem:[%s1 + $0x150] sm:$0xff]
  %v100 = vld [vmem:[%s1 + $0x158] sm:$0xf]
  %v101 = vld [vmem:[%s1 + $0x15c] sm:$0xff]
  %v102 = vld [vmem:[%s1 + $0x164] sm:$0xf]
  %v103 = vld [vmem:[%s1 + $0x168] sm:$0xff]
  %v104 = vld [vmem:[%s1 + $0x170] sm:$0xf]
  %v105 = vld [vmem:[%s1 + $0x174] sm:$0xff]
  %v106 = vld [vmem:[%s1 + $0x17c] sm:$0xf]
  %v107 = vld [vmem:[%s1 + $0x180] sm:$0xff]
  %v108 = vld [vmem:[%s1 + $0x188] sm:$0xf]
  %v109 = vld [vmem:[%s1 + $0x18c] sm:$0xff]
  %v110 = vld [vmem:[%s1 + $0x194] sm:$0xf]
  %v111 = vld [vmem:[%s1 + $0x198] sm:$0xff]
  %v112 = vld [vmem:[%s1 + $0x1a0] sm:$0xf]
  %v113 = vld [vmem:[%s1 + $0x1a4] sm:$0xff]
  %v114 = vld [vmem:[%s1 + $0x1ac] sm:$0xf]
  %v115 = vld [vmem:[%s1 + $0x1b0] sm:$0xff]
  %v116 = vld [vmem:[%s1 + $0x1b8] sm:$0xf]
  %v117 = vld [vmem:[%s1 + $0x1bc] sm:$0xff]
  %v118 = vld [vmem:[%s1 + $0x1c4] sm:$0xf]
  %v119 = vld [vmem:[%s1 + $0x1c8] sm:$0xff]
  %v120 = vld [vmem:[%s1 + $0x1d0] sm:$0xf]
  %v121 = vld [vmem:[%s1 + $0x1d4] sm:$0xff]
  %v122 = vld [vmem:[%s1 + $0x1dc] sm:$0xf]
  %v123 = vld [vmem:[%s1 + $0x1e0] sm:$0xff]
  %v124 = vld [vmem:[%s1 + $0x1e8] sm:$0xf]
  %v125 = vld [vmem:[%s1 + $0x1ec] sm:$0xff]
  %v126 = vld [vmem:[%s1 + $0x1f4] sm:$0xf]
  %v127 = vld [vmem:[%s1 + $0x1f8] sm:$0xff]
  %v128 = vld [vmem:[%s1 + $0x200] sm:$0xf]
  %v129 = vld [vmem:[%s1 + $0x204] sm:$0xff]
  %v130 = vld [vmem:[%s1 + $0x20c] sm:$0xf]
  %v131 = vld [vmem:[%s1 + $0x210] sm:$0xff]
  %v132 = vld [vmem:[%s1 + $0x218] sm:$0xf]
  %v133 = vld [vmem:[%s1 + $0x21c] sm:$0xff]
  %v134 = vld [vmem:[%s1 + $0x224] sm:$0xf]
  %v135 = vld [vmem:[%s1 + $0x228] sm:$0xff]
  %v136 = vld [vmem:[%s1 + $0x230] sm:$0xf]
  %v137 = vld [vmem:[%s1 + $0x234] sm:$0xff]
  %v138 = vld [vmem:[%s1 + $0x23c] sm:$0xf]
  %v139 = vld [vmem:[%s1 + $0x240] sm:$0xff]
  %v140 = vld [vmem:[%s1 + $0x248] sm:$0xf]
  %v141 = vld [vmem:[%s1 + $0x24c] sm:$0xff]
  %v142 = vld [vmem:[%s1 + $0x254] sm:$0xf]
  %v143 = vld [vmem:[%s1 + $0x258] sm:$0xff]
  %v144 = vld [vmem:[%s1 + $0x260] sm:$0xf]
  %v145 = vld [vmem:[%s1 + $0x264] sm:$0xff]
  %v146 = vld [vmem:[%s1 + $0x26c] sm:$0xf]
  %v147 = vld [vmem:[%s1 + $0x270] sm:$0xff]
  %v148 = vld [vmem:[%s1 + $0x278] sm:$0xf]
  %v149 = vld [vmem:[%s1 + $0x27c] sm:$0xff]
  %v150 = vld [vmem:[%s1 + $0x284] sm:$0xf]
  %v151 = vld [vmem:[%s1 + $0x288] sm:$0xff]
  %v152 = vld [vmem:[%s1 + $0x290] sm:$0xf]
  %v153 = vld [vmem:[%s1 + $0x294] sm:$0xff]
  %v154 = vld [vmem:[%s1 + $0x29c] sm:$0xf]
  %v155 = vld [vmem:[%s1 + $0x2a0] sm:$0xff]
  %v156 = vld [vmem:[%s1 + $0x2a8] sm:$0xf]
  %v157 = vld [vmem:[%s1 + $0x2ac] sm:$0xff]
  %v158 = vld [vmem:[%s1 + $0x2b4] sm:$0xf]
  %v159 = vld [vmem:[%s1 + $0x2b8] sm:$0xff]
  %v160 = vld [vmem:[%s1 + $0x2c0] sm:$0xf]
  %v161 = vld [vmem:[%s1 + $0x2c4] sm:$0xff]
  %v162 = vld [vmem:[%s1 + $0x2cc] sm:$0xf]
  %v163 = vld [vmem:[%s1 + $0x2d0] sm:$0xff]
  %v164 = vld [vmem:[%s1 + $0x2d8] sm:$0xf]
  %v165 = vld [vmem:[%s1 + $0x2dc] sm:$0xff]
  %v166 = vld [vmem:[%s1 + $0x2e4] sm:$0xf]
  %v167 = vld [vmem:[%s1 + $0x2e8] sm:$0xff]
  %v168 = vld [vmem:[%s1 + $0x2f0] sm:$0xf]
  %v169 = vld [vmem:[%s1 + $0x2f4] sm:$0xff]
  %v170 = vld [vmem:[%s1 + $0x2fc] sm:$0xf]
  %v171 = vld [vmem:[%s1 + $0x300] sm:$0xff]
  %v172 = vld [vmem:[%s1 + $0x308] sm:$0xf]
  %v173 = vld [vmem:[%s1 + $0x30c] sm:$0xff]
  %v174 = vld [vmem:[%s1 + $0x314] sm:$0xf]
  %v175 = vld [vmem:[%s1 + $0x318] sm:$0xff]
  %v176 = vld [vmem:[%s1 + $0x320] sm:$0xf]
  %v177 = vld [vmem:[%s1 + $0x324] sm:$0xff]
  %v178 = vld [vmem:[%s1 + $0x32c] sm:$0xf]
  %v179 = vld [vmem:[%s1 + $0x330] sm:$0xff]
  %v180 = vld [vmem:[%s1 + $0x338] sm:$0xf]
  %v181 = vld [vmem:[%s1 + $0x33c] sm:$0xff]
  %v182 = vld [vmem:[%s1 + $0x344] sm:$0xf]
  %v183 = vld [vmem:[%s1 + $0x348] sm:$0xff]
  %v184 = vld [vmem:[%s1 + $0x350] sm:$0xf]
  %v185 = vld [vmem:[%s1 + $0x354] sm:$0xff]
  %v186 = vld [vmem:[%s1 + $0x35c] sm:$0xf]
  %v187 = vld [vmem:[%s1 + $0x360] sm:$0xff]
  %v188 = vld [vmem:[%s1 + $0x368] sm:$0xf]
  %v189 = vld [vmem:[%s1 + $0x36c] sm:$0xff]
  %v190 = vld [vmem:[%s1 + $0x374] sm:$0xf]
  %v191 = vld [vmem:[%s1 + $0x378] sm:$0xff]
  %v192 = vld [vmem:[%s1 + $0x380] sm:$0xf]
  %v193 = vld [vmem:[%s1 + $0x384] sm:$0xff]
  %v194 = vld [vmem:[%s1 + $0x38c] sm:$0xf]
  %v195 = vld [vmem:[%s1 + $0x390] sm:$0xff]
  %v196 = vld [vmem:[%s1 + $0x398] sm:$0xf]
  %v197 = vld [vmem:[%s1 + $0x39c] sm:$0xff]
  %v198 = vld [vmem:[%s1 + $0x3a4] sm:$0xf]
  %v199 = vld [vmem:[%s1 + $0x3a8] sm:$0xff]
  %v200 = vld [vmem:[%s1 + $0x3b0] sm:$0xf]
  %v201 = vld [vmem:[%s1 + $0x3b4] sm:$0xff]
  %v202 = vld [vmem:[%s1 + $0x3bc] sm:$0xf]
  %v203 = vld [vmem:[%s1 + $0x3c0] sm:$0xff]
  %v204 = vld [vmem:[%s1 + $0x3c8] sm:$0xf]
  %v205 = vld [vmem:[%s1 + $0x3cc] sm:$0xff]
  %v206 = vld [vmem:[%s1 + $0x3d4] sm:$0xf]
  %v207 = vld [vmem:[%s1 + $0x3d8] sm:$0xff]
  %v208 = vld [vmem:[%s1 + $0x3e0] sm:$0xf]
  %v209 = vld [vmem:[%s1 + $0x3e4] sm:$0xff]
  %v210 = vld [vmem:[%s1 + $0x3ec] sm:$0xf]
  %v211 = vld [vmem:[%s1 + $0x3f0] sm:$0xff]
  %v212 = vld [vmem:[%s1 + $0x3f8] sm:$0xf]
  %v213 = vld [vmem:[%s1 + $0x3fc] sm:$0xff]
  %v214 = vld [vmem:[%s1 + $0x404] sm:$0xf]
  %v215 = vld [vmem:[%s1 + $0x408] sm:$0xff]
  %v216 = vld [vmem:[%s1 + $0x410] sm:$0xf]
  %v217 = vld [vmem:[%s1 + $0x414] sm:$0xff]
  %v218 = vld [vmem:[%s1 + $0x41c] sm:$0xf]
  %v219 = vld [vmem:[%s1 + $0x420] sm:$0xff]
  %v220 = vld [vmem:[%s1 + $0x428] sm:$0xf]
  %v221 = vld [vmem:[%s1 + $0x42c] sm:$0xff]
  %v222 = vld [vmem:[%s1 + $0x434] sm:$0xf]
  %v223 = vld [vmem:[%s1 + $0x438] sm:$0xff]
  %v224 = vld [vmem:[%s1 + $0x440] sm:$0xf]
  %v225 = vld [vmem:[%s1 + $0x444] sm:$0xff]
  %v226 = vld [vmem:[%s1 + $0x44c] sm:$0xf]
  %v227 = vld [vmem:[%s1 + $0x450] sm:$0xff]
  %v228 = vld [vmem:[%s1 + $0x458] sm:$0xf]
  %v229 = vld [vmem:[%s1 + $0x45c] sm:$0xff]
  %v230 = vld [vmem:[%s1 + $0x464] sm:$0xf]
  %v231 = vld [vmem:[%s1 + $0x468] sm:$0xff]
  %v232 = vld [vmem:[%s1 + $0x470] sm:$0xf]
  %v233 = vld [vmem:[%s1 + $0x474] sm:$0xff]
  %v234 = vld [vmem:[%s1 + $0x47c] sm:$0xf]
  %v235 = vld [vmem:[%s1 + $0x480] sm:$0xff]
  %v236 = vld [vmem:[%s1 + $0x488] sm:$0xf]
  %v237 = vld [vmem:[%s1 + $0x48c] sm:$0xff]
  %v238 = vld [vmem:[%s1 + $0x494] sm:$0xf]
  %v239 = vld [vmem:[%s1 + $0x498] sm:$0xff]
  %v240 = vld [vmem:[%s1 + $0x4a0] sm:$0xf]
  %v241 = vld [vmem:[%s1 + $0x4a4] sm:$0xff]
  %v242 = vld [vmem:[%s1 + $0x4ac] sm:$0xf]
  %v243 = vld [vmem:[%s1 + $0x4b0] sm:$0xff]
  %v244 = vld [vmem:[%s1 + $0x4b8] sm:$0xf]
  %v245 = vld [vmem:[%s1 + $0x4bc] sm:$0xff]
  %v246 = vld [vmem:[%s1 + $0x4c4] sm:$0xf]
  %v247 = vld [vmem:[%s1 + $0x4c8] sm:$0xff]
  %v248 = vld [vmem:[%s1 + $0x4d0] sm:$0xf]
  %v249 = vld [vmem:[%s1 + $0x4d4] sm:$0xff]
  %v250 = vld [vmem:[%s1 + $0x4dc] sm:$0xf]
  %v251 = vld [vmem:[%s1 + $0x4e0] sm:$0xff]
  %v252 = vld [vmem:[%s1 + $0x4e8] sm:$0xf]
  %v253 = vld [vmem:[%s1 + $0x4ec] sm:$0xff]
  %v254 = vld [vmem:[%s1 + $0x4f4] sm:$0xf]
  %v255 = vld [vmem:[%s1 + $0x4f8] sm:$0xff]
  %v256 = vld [vmem:[%s1 + $0x500] sm:$0xf]
  %v257 = vld [vmem:[%s1 + $0x504] sm:$0xff]
  %v258 = vld [vmem:[%s1 + $0x50c] sm:$0xf]
  %v259 = vld [vmem:[%s1 + $0x510] sm:$0xff]
  %v260 = vld [vmem:[%s1 + $0x518] sm:$0xf]
  %v261 = vld [vmem:[%s1 + $0x51c] sm:$0xff]
  %v262 = vld [vmem:[%s1 + $0x524] sm:$0xf]
  %v263 = vld [vmem:[%s1 + $0x528] sm:$0xff]
  %v264 = vld [vmem:[%s1 + $0x530] sm:$0xf]
  %v265 = vld [vmem:[%s1 + $0x534] sm:$0xff]
  %v266 = vld [vmem:[%s1 + $0x53c] sm:$0xf]
  %v267 = vld [vmem:[%s1 + $0x540] sm:$0xff]
  %v268 = vld [vmem:[%s1 + $0x548] sm:$0xf]
  %v269 = vld [vmem:[%s1 + $0x54c] sm:$0xff]
  %v270 = vld [vmem:[%s1 + $0x554] sm:$0xf]
  %v271 = vld [vmem:[%s1 + $0x558] sm:$0xff]
  %v272 = vld [vmem:[%s1 + $0x560] sm:$0xf]
  %v273 = vld [vmem:[%s1 + $0x564] sm:$0xff]
  %v274 = vld [vmem:[%s1 + $0x56c] sm:$0xf]
  %v275 = vld [vmem:[%s1 + $0x570] sm:$0xff]
  %v276 = vld [vmem:[%s1 + $0x578] sm:$0xf]
  %v277 = vld [vmem:[%s1 + $0x57c] sm:$0xff]
  %v278 = vld [vmem:[%s1 + $0x584] sm:$0xf]
  %v279 = vld [vmem:[%s1 + $0x588] sm:$0xff]
  %v280 = vld [vmem:[%s1 + $0x590] sm:$0xf]
  %v281 = vld [vmem:[%s1 + $0x594] sm:$0xff]
  %v282 = vld [vmem:[%s1 + $0x59c] sm:$0xf]
  %v283 = vld [vmem:[%s1 + $0x5a0] sm:$0xff]
  %v284 = vld [vmem:[%s1 + $0x5a8] sm:$0xf]
  %v285 = vld [vmem:[%s1 + $0x5ac] sm:$0xff]
  %v286 = vld [vmem:[%s1 + $0x5b4] sm:$0xf]
  %v287 = vld [vmem:[%s1 + $0x5b8] sm:$0xff]
  %v288 = vld [vmem:[%s1 + $0x5c0] sm:$0xf]
  %v289 = vld [vmem:[%s1 + $0x5c4] sm:$0xff]
  %v290 = vld [vmem:[%s1 + $0x5cc] sm:$0xf]
  %v291 = vld [vmem:[%s1 + $0x5d0] sm:$0xff]
  %v292 = vld [vmem:[%s1 + $0x5d8] sm:$0xf]
  %v293 = vld [vmem:[%s1 + $0x5dc] sm:$0xff]
  %v294 = vld [vmem:[%s1 + $0x5e4] sm:$0xf]
  %v295 = vld [vmem:[%s1 + $0x5e8] sm:$0xff]
  %v296 = vld [vmem:[%s1 + $0x5f0] sm:$0xf]
  %v297 = vld [vmem:[%s1 + $0x5f4] sm:$0xff]
  %v298 = vld [vmem:[%s1 + $0x5fc] sm:$0xf]
  %v299 = vld [vmem:[%s1 + $0x600] sm:$0xff]
  %v300 = vld [vmem:[%s1 + $0x608] sm:$0xf]
  %v301 = vld [vmem:[%s1 + $0x60c] sm:$0xff]
  %v302 = vld [vmem:[%s1 + $0x614] sm:$0xf]
  %v303 = vld [vmem:[%s1 + $0x618] sm:$0xff]
  %v304 = vld [vmem:[%s1 + $0x620] sm:$0xf]
  %v305 = vld [vmem:[%s1 + $0x624] sm:$0xff]
  %v306 = vld [vmem:[%s1 + $0x62c] sm:$0xf]
  %v307 = vld [vmem:[%s1 + $0x630] sm:$0xff]
  %v308 = vld [vmem:[%s1 + $0x638] sm:$0xf]
  %v309 = vld [vmem:[%s1 + $0x63c] sm:$0xff]
  %v310 = vld [vmem:[%s1 + $0x644] sm:$0xf]
  %v311 = vld [vmem:[%s1 + $0x648] sm:$0xff]
  %v312 = vld [vmem:[%s1 + $0x650] sm:$0xf]
  %v313 = vld [vmem:[%s1 + $0x654] sm:$0xff]
  %v314 = vld [vmem:[%s1 + $0x65c] sm:$0xf]
  %v315 = vld [vmem:[%s1 + $0x660] sm:$0xff]
  %v316 = vld [vmem:[%s1 + $0x668] sm:$0xf]
  %v317 = vld [vmem:[%s1 + $0x66c] sm:$0xff]
  %v318 = vld [vmem:[%s1 + $0x674] sm:$0xf]
  %v319 = vld [vmem:[%s1 + $0x678] sm:$0xff]
  %v320 = vld [vmem:[%s1 + $0x680] sm:$0xf]
  %v321 = vld [vmem:[%s1 + $0x684] sm:$0xff]
  %v322 = vld [vmem:[%s1 + $0x68c] sm:$0xf]
  %v323 = vld [vmem:[%s1 + $0x690] sm:$0xff]
  %v324 = vld [vmem:[%s1 + $0x698] sm:$0xf]
  %v325 = vld [vmem:[%s1 + $0x69c] sm:$0xff]
  %v326 = vld [vmem:[%s1 + $0x6a4] sm:$0xf]
  %v327 = vld [vmem:[%s1 + $0x6a8] sm:$0xff]
  %v328 = vld [vmem:[%s1 + $0x6b0] sm:$0xf]
  %v329 = vld [vmem:[%s1 + $0x6b4] sm:$0xff]
  %v330 = vld [vmem:[%s1 + $0x6bc] sm:$0xf]
  %v331 = vld [vmem:[%s1 + $0x6c0] sm:$0xff]
  %v332 = vld [vmem:[%s1 + $0x6c8] sm:$0xf]
  %v333 = vld [vmem:[%s1 + $0x6cc] sm:$0xff]
  %v334 = vld [vmem:[%s1 + $0x6d4] sm:$0xf]
  %v335 = vld [vmem:[%s1 + $0x6d8] sm:$0xff]
  %v336 = vld [vmem:[%s1 + $0x6e0] sm:$0xf]
  %v337 = vld [vmem:[%s1 + $0x6e4] sm:$0xff]
  %v338 = vld [vmem:[%s1 + $0x6ec] sm:$0xf]
  %v339 = vld [vmem:[%s1 + $0x6f0] sm:$0xff]
  %v340 = vld [vmem:[%s1 + $0x6f8] sm:$0xf]
  %v341 = vld [vmem:[%s1 + $0x6fc] sm:$0xff]
  %v342 = vld [vmem:[%s1 + $0x704] sm:$0xf]
  %v343 = vld [vmem:[%s1 + $0x708] sm:$0xff]
  %v344 = vld [vmem:[%s1 + $0x710] sm:$0xf]
  %v345 = vld [vmem:[%s1 + $0x714] sm:$0xff]
  %v346 = vld [vmem:[%s1 + $0x71c] sm:$0xf]
  %v347 = vld [vmem:[%s1 + $0x720] sm:$0xff]
  %v348 = vld [vmem:[%s1 + $0x728] sm:$0xf]
  %v349 = vld [vmem:[%s1 + $0x72c] sm:$0xff]
  %v350 = vld [vmem:[%s1 + $0x734] sm:$0xf]
  %v351 = vld [vmem:[%s1 + $0x738] sm:$0xff]
  %v352 = vld [vmem:[%s1 + $0x740] sm:$0xf]
  %v353 = vld [vmem:[%s1 + $0x744] sm:$0xff]
  %v354 = vld [vmem:[%s1 + $0x74c] sm:$0xf]
  %v355 = vld [vmem:[%s1 + $0x750] sm:$0xff]
  %v356 = vld [vmem:[%s1 + $0x758] sm:$0xf]
  %v357 = vld [vmem:[%s1 + $0x75c] sm:$0xff]
  %v358 = vld [vmem:[%s1 + $0x764] sm:$0xf]
  %v359 = vld [vmem:[%s1 + $0x768] sm:$0xff]
  %v360 = vld [vmem:[%s1 + $0x770] sm:$0xf]
  %v361 = vld [vmem:[%s1 + $0x774] sm:$0xff]
  %v362 = vld [vmem:[%s1 + $0x77c] sm:$0xf]
  %v363 = vld [vmem:[%s1 + $0x780] sm:$0xff]
  %v364 = vld [vmem:[%s1 + $0x788] sm:$0xf]
  %v365 = vld [vmem:[%s1 + $0x78c] sm:$0xff]
  %v366 = vld [vmem:[%s1 + $0x794] sm:$0xf]
  %v367 = vld [vmem:[%s1 + $0x798] sm:$0xff]
  %v368 = vld [vmem:[%s1 + $0x7a0] sm:$0xf]
  %v369 = vld [vmem:[%s1 + $0x7a4] sm:$0xff]
  %v370 = vld [vmem:[%s1 + $0x7ac] sm:$0xf]
  %v371 = vld [vmem:[%s1 + $0x7b0] sm:$0xff]
  %v372 = vld [vmem:[%s1 + $0x7b8] sm:$0xf]
  %v373 = vld [vmem:[%s1 + $0x7bc] sm:$0xff]
  %v374 = vld [vmem:[%s1 + $0x7c4] sm:$0xf]
  %v375 = vld [vmem:[%s1 + $0x7c8] sm:$0xff]
  %v376 = vld [vmem:[%s1 + $0x7d0] sm:$0xf]
  %v377 = vld [vmem:[%s1 + $0x7d4] sm:$0xff]
  %v378 = vld [vmem:[%s1 + $0x7dc] sm:$0xf]
  %v379 = vld [vmem:[%s1 + $0x7e0] sm:$0xff]
  %v380 = vld [vmem:[%s1 + $0x7e8] sm:$0xf]
  %v381 = vld [vmem:[%s1 + $0x7ec] sm:$0xff]
  %v382 = vld [vmem:[%s1 + $0x7f4] sm:$0xf]
  %v383 = vld [vmem:[%s1 + $0x7f8] sm:$0xff]
  %v384 = vld [vmem:[%s1 + $0x800] sm:$0xf]
  %v385 = vld [vmem:[%s1 + $0x804] sm:$0xff]
  %v386 = vld [vmem:[%s1 + $0x80c] sm:$0xf]
  %v387 = vld [vmem:[%s1 + $0x810] sm:$0xff]
  %v388 = vld [vmem:[%s1 + $0x818] sm:$0xf]
  %v389 = vld [vmem:[%s1 + $0x81c] sm:$0xff]
  %v390 = vld [vmem:[%s1 + $0x824] sm:$0xf]
  %v391 = vld [vmem:[%s1 + $0x828] sm:$0xff]
  %v392 = vld [vmem:[%s1 + $0x830] sm:$0xf]
  %v393 = vld [vmem:[%s1 + $0x834] sm:$0xff]
  %v394 = vld [vmem:[%s1 + $0x83c] sm:$0xf]
  %v395 = vld [vmem:[%s1 + $0x840] sm:$0xff]
  %v396 = vld [vmem:[%s1 + $0x848] sm:$0xf]
  %v397 = vld [vmem:[%s1 + $0x84c] sm:$0xff]
  %v398 = vld [vmem:[%s1 + $0x854] sm:$0xf]
  %v399 = vld [vmem:[%s1 + $0x858] sm:$0xff]
  %v400 = vld [vmem:[%s1 + $0x860] sm:$0xf]
  %v401 = vld [vmem:[%s1 + $0x864] sm:$0xff]
  %v402 = vld [vmem:[%s1 + $0x86c] sm:$0xf]
  %v403 = vld [vmem:[%s1 + $0x870] sm:$0xff]
  %v404 = vld [vmem:[%s1 + $0x878] sm:$0xf]
  %v405 = vld [vmem:[%s1 + $0x87c] sm:$0xff]
  %v406 = vld [vmem:[%s1 + $0x884] sm:$0xf]
  %v407 = vld [vmem:[%s1 + $0x888] sm:$0xff]
  %v408 = vld [vmem:[%s1 + $0x890] sm:$0xf]
  %v409 = vld [vmem:[%s1 + $0x894] sm:$0xff]
  %v410 = vld [vmem:[%s1 + $0x89c] sm:$0xf]
  %v411 = vld [vmem:[%s1 + $0x8a0] sm:$0xff]
  %v412 = vld [vmem:[%s1 + $0x8a8] sm:$0xf]
  %v413 = vld [vmem:[%s1 + $0x8ac] sm:$0xff]
  %v414 = vld [vmem:[%s1 + $0x8b4] sm:$0xf]
  %v415 = vld [vmem:[%s1 + $0x8b8] sm:$0xff]
  %v416 = vld [vmem:[%s1 + $0x8c0] sm:$0xf]
  %v417 = vld [vmem:[%s1 + $0x8c4] sm:$0xff]
  %v418 = vld [vmem:[%s1 + $0x8cc] sm:$0xf]
  %v419 = vld [vmem:[%s1 + $0x8d0] sm:$0xff]
  %v420 = vld [vmem:[%s1 + $0x8d8] sm:$0xf]
  %v421 = vld [vmem:[%s1 + $0x8dc] sm:$0xff]
  %v422 = vld [vmem:[%s1 + $0x8e4] sm:$0xf]
  %v423 = vld [vmem:[%s1 + $0x8e8] sm:$0xff]
  %v424 = vld [vmem:[%s1 + $0x8f0] sm:$0xf]
  %v425 = vld [vmem:[%s1 + $0x8f4] sm:$0xff]
  %v426 = vld [vmem:[%s1 + $0x8fc] sm:$0xf]
  %v427 = vld [vmem:[%s1 + $0x900] sm:$0xff]
  %v428 = vld [vmem:[%s1 + $0x908] sm:$0xf]
  %v429 = vld [vmem:[%s1 + $0x90c] sm:$0xff]
  %v430 = vld [vmem:[%s1 + $0x914] sm:$0xf]
  %v431 = vld [vmem:[%s1 + $0x918] sm:$0xff]
  %v432 = vld [vmem:[%s1 + $0x920] sm:$0xf]
  %v433 = vld [vmem:[%s1 + $0x924] sm:$0xff]
  %v434 = vld [vmem:[%s1 + $0x92c] sm:$0xf]
  %v435 = vld [vmem:[%s1 + $0x930] sm:$0xff]
  %v436 = vld [vmem:[%s1 + $0x938] sm:$0xf]
  %v437 = vld [vmem:[%s1 + $0x93c] sm:$0xff]
  %v438 = vld [vmem:[%s1 + $0x944] sm:$0xf]
  %v439 = vld [vmem:[%s1 + $0x948] sm:$0xff]
  %v440 = vld [vmem:[%s1 + $0x950] sm:$0xf]
  %v441 = vld [vmem:[%s1 + $0x954] sm:$0xff]
  %v442 = vld [vmem:[%s1 + $0x95c] sm:$0xf]
  %v443 = vld [vmem:[%s1 + $0x960] sm:$0xff]
  %v444 = vld [vmem:[%s1 + $0x968] sm:$0xf]
  %v445 = vld [vmem:[%s1 + $0x96c] sm:$0xff]
  %v446 = vld [vmem:[%s1 + $0x974] sm:$0xf]
  %v447 = vld [vmem:[%s1 + $0x978] sm:$0xff]
  %v448 = vld [vmem:[%s1 + $0x980] sm:$0xf]
  %v449 = vld [vmem:[%s1 + $0x984] sm:$0xff]
  %v450 = vld [vmem:[%s1 + $0x98c] sm:$0xf]
  %v451 = vld [vmem:[%s1 + $0x990] sm:$0xff]
  %v452 = vld [vmem:[%s1 + $0x998] sm:$0xf]
  %v453 = vld [vmem:[%s1 + $0x99c] sm:$0xff]
  %v454 = vld [vmem:[%s1 + $0x9a4] sm:$0xf]
  %v455 = vld [vmem:[%s1 + $0x9a8] sm:$0xff]
  %v456 = vld [vmem:[%s1 + $0x9b0] sm:$0xf]
  %v457 = vld [vmem:[%s1 + $0x9b4] sm:$0xff]
  %v458 = vld [vmem:[%s1 + $0x9bc] sm:$0xf]
  %v459 = vld [vmem:[%s1 + $0x9c0] sm:$0xff]
  %v460 = vld [vmem:[%s1 + $0x9c8] sm:$0xf]
  %v461 = vld [vmem:[%s1 + $0x9cc] sm:$0xff]
  %v462 = vld [vmem:[%s1 + $0x9d4] sm:$0xf]
  %v463 = vld [vmem:[%s1 + $0x9d8] sm:$0xff]
  %v464 = vld [vmem:[%s1 + $0x9e0] sm:$0xf]
  %v465 = vld [vmem:[%s1 + $0x9e4] sm:$0xff]
  %v466 = vld [vmem:[%s1 + $0x9ec] sm:$0xf]
  %v467 = vld [vmem:[%s1 + $0x9f0] sm:$0xff]
  %v468 = vld [vmem:[%s1 + $0x9f8] sm:$0xf]
  %v469 = vld [vmem:[%s1 + $0x9fc] sm:$0xff]
  %v470 = vld [vmem:[%s1 + $0xa04] sm:$0xf]
  %v471 = vld [vmem:[%s1 + $0xa08] sm:$0xff]
  %v472 = vld [vmem:[%s1 + $0xa10] sm:$0xf]
  %v473 = vld [vmem:[%s1 + $0xa14] sm:$0xff]
  %v474 = vld [vmem:[%s1 + $0xa1c] sm:$0xf]
  %v475 = vld [vmem:[%s1 + $0xa20] sm:$0xff]
  %v476 = vld [vmem:[%s1 + $0xa28] sm:$0xf]
  %v477 = vld [vmem:[%s1 + $0xa2c] sm:$0xff]
  %v478 = vld [vmem:[%s1 + $0xa34] sm:$0xf]
  %v479 = vld [vmem:[%s1 + $0xa38] sm:$0xff]
  %v480 = vld [vmem:[%s1 + $0xa40] sm:$0xf]
  %v481 = vld [vmem:[%s1 + $0xa44] sm:$0xff]
  %v482 = vld [vmem:[%s1 + $0xa4c] sm:$0xf]
  %v483 = vld [vmem:[%s1 + $0xa50] sm:$0xff]
  %v484 = vld [vmem:[%s1 + $0xa58] sm:$0xf]
  %v485 = vld [vmem:[%s1 + $0xa5c] sm:$0xff]
  %v486 = vld [vmem:[%s1 + $0xa64] sm:$0xf]
  %v487 = vld [vmem:[%s1 + $0xa68] sm:$0xff]
  %v488 = vld [vmem:[%s1 + $0xa70] sm:$0xf]
  %v489 = vld [vmem:[%s1 + $0xa74] sm:$0xff]
  %v490 = vld [vmem:[%s1 + $0xa7c] sm:$0xf]
  %v491 = vld [vmem:[%s2] sm:$0x7]
  %v493 = vlaneseq
  %v494 = vshrl.u32 %v493, 7
  %v495 = vsub.s32 0, %v494
  %v496 = vrot.slane %v491, %v495
  %v497 = vlaneseq
  %v498 = vshrl.u32 %v497, 7
  %v499 = vsub.s32 1, %v498
  %v500 = vrot.slane %v491, %v499
  %v501 = vlaneseq
  %v502 = vshrl.u32 %v501, 7
  %v503 = vsub.s32 2, %v502
  %v504 = vrot.slane %v491, %v503
  %v536 = vunpack.c.l.b16 %v15
  %v537 = vunpack.c.h.b16 %v15
  %v538 = vunpack.c.l.b16 %v16
  %v539 = vunpack.c.h.b16 %v16
  %v540 = vunpack.c.l.b16 %v17
  %v541 = vunpack.c.h.b16 %v17
  %v542 = vunpack.c.l.b16 %v18
  %v543 = vunpack.c.h.b16 %v18
  %v544 = vunpack.c.l.b16 %v19
  %v545 = vunpack.c.h.b16 %v19
  %v546 = vunpack.c.l.b16 %v20
  %v547 = vunpack.c.h.b16 %v20
  %v548 = vunpack.c.l.b16 %v21
  %v549 = vunpack.c.h.b16 %v21
  %v550 = vunpack.c.l.b16 %v22
  %v551 = vunpack.c.h.b16 %v22
  %v552 = vunpack.c.l.b16 %v23
  %v553 = vunpack.c.h.b16 %v23
  %v554 = vunpack.c.l.b16 %v24
  %v555 = vunpack.c.h.b16 %v24
  %v556 = vunpack.c.l.b16 %v25
  %v557 = vunpack.c.h.b16 %v25
  %v558 = vunpack.c.l.b16 %v26
  %v559 = vunpack.c.h.b16 %v26
  %v560 = vunpack.c.l.b16 %v27
  %v561 = vunpack.c.h.b16 %v27
  %v562 = vunpack.c.l.b16 %v28
  %v563 = vunpack.c.h.b16 %v28
  %v564 = vunpack.c.l.b16 %v29
  %v565 = vunpack.c.h.b16 %v29
  %v566 = vunpack.c.l.b16 %v30
  %v567 = vunpack.c.h.b16 %v30
  %v568 = vunpack.c.l.b16 %v31
  %v569 = vunpack.c.h.b16 %v31
  %v570 = vunpack.c.l.b16 %v32
  %v571 = vunpack.c.h.b16 %v32
  %v572 = vunpack.c.l.b16 %v33
  %v573 = vunpack.c.h.b16 %v33
  %v574 = vunpack.c.l.b16 %v34
  %v575 = vunpack.c.h.b16 %v34
  %v576 = vunpack.c.l.b16 %v35
  %v577 = vunpack.c.h.b16 %v35
  %v578 = vunpack.c.l.b16 %v36
  %v579 = vunpack.c.h.b16 %v36
  %v580 = vunpack.c.l.b16 %v37
  %v581 = vunpack.c.h.b16 %v37
  %v582 = vunpack.c.l.b16 %v38
  %v583 = vunpack.c.h.b16 %v38
  %v584 = vunpack.c.l.b16 %v39
  %v585 = vunpack.c.h.b16 %v39
  %v586 = vunpack.c.l.b16 %v40
  %v587 = vunpack.c.h.b16 %v40
  %v588 = vunpack.c.l.b16 %v41
  %v589 = vunpack.c.h.b16 %v41
  %v590 = vunpack.c.l.b16 %v42
  %v591 = vunpack.c.h.b16 %v42
  %v592 = vpack.c.b16 %v550, %v536
  %v593 = vpack.c.b16 %v551, %v537
  %v594 = vpack.c.b16 %v552, %v538
  %v595 = vpack.c.b16 %v553, %v539
  %v596 = vpack.c.b16 %v554, %v540
  %v597 = vpack.c.b16 %v555, %v541
  %v598 = vpack.c.b16 %v556, %v542
  %v599 = vpack.c.b16 %v557, %v543
  %v600 = vpack.c.b16 %v558, %v544
  %v601 = vpack.c.b16 %v559, %v545
  %v602 = vpack.c.b16 %v560, %v546
  %v603 = vpack.c.b16 %v561, %v547
  %v604 = vpack.c.b16 %v562, %v548
  %v605 = vpack.c.b16 %v563, %v549
  %v606 = vpack.c.b16 %v578, %v564
  %v607 = vpack.c.b16 %v579, %v565
  %v608 = vpack.c.b16 %v580, %v566
  %v609 = vpack.c.b16 %v581, %v567
  %v610 = vpack.c.b16 %v582, %v568
  %v611 = vpack.c.b16 %v583, %v569
  %v612 = vpack.c.b16 %v584, %v570
  %v613 = vpack.c.b16 %v585, %v571
  %v614 = vpack.c.b16 %v586, %v572
  %v615 = vpack.c.b16 %v587, %v573
  %v616 = vpack.c.b16 %v588, %v574
  %v617 = vpack.c.b16 %v589, %v575
  %v618 = vpack.c.b16 %v590, %v576
  %v619 = vpack.c.b16 %v591, %v577
  %v1096 = vunpack.c.l.b16 %v43
  %v1097 = vunpack.c.h.b16 %v43
  %v1098 = vunpack.c.l.b16 %v44
  %v1099 = vunpack.c.l.b16 %v45
  %v1100 = vunpack.c.h.b16 %v45
  %v1101 = vunpack.c.l.b16 %v46
  %v1102 = vunpack.c.l.b16 %v47
  %v1103 = vunpack.c.h.b16 %v47
  %v1104 = vunpack.c.l.b16 %v48
  %v1105 = vunpack.c.l.b16 %v49
  %v1106 = vunpack.c.h.b16 %v49
  %v1107 = vunpack.c.l.b16 %v50
  %v1108 = vunpack.c.l.b16 %v51
  %v1109 = vunpack.c.h.b16 %v51
  %v1110 = vunpack.c.l.b16 %v52
  %v1111 = vunpack.c.l.b16 %v53
  %v1112 = vunpack.c.h.b16 %v53
  %v1113 = vunpack.c.l.b16 %v54
  %v1114 = vunpack.c.l.b16 %v55
  %v1115 = vunpack.c.h.b16 %v55
  %v1116 = vunpack.c.l.b16 %v56
  %v1117 = vunpack.c.l.b16 %v57
  %v1118 = vunpack.c.h.b16 %v57
  %v1119 = vunpack.c.l.b16 %v58
  %v1120 = vunpack.c.l.b16 %v59
  %v1121 = vunpack.c.h.b16 %v59
  %v1122 = vunpack.c.l.b16 %v60
  %v1123 = vunpack.c.l.b16 %v61
  %v1124 = vunpack.c.h.b16 %v61
  %v1125 = vunpack.c.l.b16 %v62
  %v1126 = vunpack.c.l.b16 %v63
  %v1127 = vunpack.c.h.b16 %v63
  %v1128 = vunpack.c.l.b16 %v64
  %v1129 = vunpack.c.l.b16 %v65
  %v1130 = vunpack.c.h.b16 %v65
  %v1131 = vunpack.c.l.b16 %v66
  %v1132 = vunpack.c.l.b16 %v67
  %v1133 = vunpack.c.h.b16 %v67
  %v1134 = vunpack.c.l.b16 %v68
  %v1135 = vunpack.c.l.b16 %v69
  %v1136 = vunpack.c.h.b16 %v69
  %v1137 = vunpack.c.l.b16 %v70
  %v1138 = vunpack.c.l.b16 %v71
  %v1139 = vunpack.c.h.b16 %v71
  %v1140 = vunpack.c.l.b16 %v72
  %v1141 = vunpack.c.l.b16 %v73
  %v1142 = vunpack.c.h.b16 %v73
  %v1143 = vunpack.c.l.b16 %v74
  %v1144 = vunpack.c.l.b16 %v75
  %v1145 = vunpack.c.h.b16 %v75
  %v1146 = vunpack.c.l.b16 %v76
  %v1147 = vunpack.c.l.b16 %v77
  %v1148 = vunpack.c.h.b16 %v77
  %v1149 = vunpack.c.l.b16 %v78
  %v1150 = vunpack.c.l.b16 %v79
  %v1151 = vunpack.c.h.b16 %v79
  %v1152 = vunpack.c.l.b16 %v80
  %v1153 = vunpack.c.l.b16 %v81
  %v1154 = vunpack.c.h.b16 %v81
  %v1155 = vunpack.c.l.b16 %v82
  %v1156 = vunpack.c.l.b16 %v83
  %v1157 = vunpack.c.h.b16 %v83
  %v1158 = vunpack.c.l.b16 %v84
  %v1159 = vunpack.c.l.b16 %v85
  %v1160 = vunpack.c.h.b16 %v85
  %v1161 = vunpack.c.l.b16 %v86
  %v1162 = vunpack.c.l.b16 %v87
  %v1163 = vunpack.c.h.b16 %v87
  %v1164 = vunpack.c.l.b16 %v88
  %v1165 = vunpack.c.l.b16 %v89
  %v1166 = vunpack.c.h.b16 %v89
  %v1167 = vunpack.c.l.b16 %v90
  %v1168 = vunpack.c.l.b16 %v91
  %v1169 = vunpack.c.h.b16 %v91
  %v1170 = vunpack.c.l.b16 %v92
  %v1171 = vunpack.c.l.b16 %v93
  %v1172 = vunpack.c.h.b16 %v93
  %v1173 = vunpack.c.l.b16 %v94
  %v1174 = vunpack.c.l.b16 %v95
  %v1175 = vunpack.c.h.b16 %v95
  %v1176 = vunpack.c.l.b16 %v96
  %v1177 = vunpack.c.l.b16 %v97
  %v1178 = vunpack.c.h.b16 %v97
  %v1179 = vunpack.c.l.b16 %v98
  %v1180 = vunpack.c.l.b16 %v99
  %v1181 = vunpack.c.h.b16 %v99
  %v1182 = vunpack.c.l.b16 %v100
  %v1183 = vunpack.c.l.b16 %v101
  %v1184 = vunpack.c.h.b16 %v101
  %v1185 = vunpack.c.l.b16 %v102
  %v1186 = vunpack.c.l.b16 %v103
  %v1187 = vunpack.c.h.b16 %v103
  %v1188 = vunpack.c.l.b16 %v104
  %v1189 = vunpack.c.l.b16 %v105
  %v1190 = vunpack.c.h.b16 %v105
  %v1191 = vunpack.c.l.b16 %v106
  %v1192 = vunpack.c.l.b16 %v107
  %v1193 = vunpack.c.h.b16 %v107
  %v1194 = vunpack.c.l.b16 %v108
  %v1195 = vunpack.c.l.b16 %v109
  %v1196 = vunpack.c.h.b16 %v109
  %v1197 = vunpack.c.l.b16 %v110
  %v1198 = vunpack.c.l.b16 %v111
  %v1199 = vunpack.c.h.b16 %v111
  %v1200 = vunpack.c.l.b16 %v112
  %v1201 = vunpack.c.l.b16 %v113
  %v1202 = vunpack.c.h.b16 %v113
  %v1203 = vunpack.c.l.b16 %v114
  %v1204 = vunpack.c.l.b16 %v115
  %v1205 = vunpack.c.h.b16 %v115
  %v1206 = vunpack.c.l.b16 %v116
  %v1207 = vunpack.c.l.b16 %v117
  %v1208 = vunpack.c.h.b16 %v117
  %v1209 = vunpack.c.l.b16 %v118
  %v1210 = vunpack.c.l.b16 %v119
  %v1211 = vunpack.c.h.b16 %v119
  %v1212 = vunpack.c.l.b16 %v120
  %v1213 = vunpack.c.l.b16 %v121
  %v1214 = vunpack.c.h.b16 %v121
  %v1215 = vunpack.c.l.b16 %v122
  %v1216 = vunpack.c.l.b16 %v123
  %v1217 = vunpack.c.h.b16 %v123
  %v1218 = vunpack.c.l.b16 %v124
  %v1219 = vunpack.c.l.b16 %v125
  %v1220 = vunpack.c.h.b16 %v125
  %v1221 = vunpack.c.l.b16 %v126
  %v1222 = vunpack.c.l.b16 %v127
  %v1223 = vunpack.c.h.b16 %v127
  %v1224 = vunpack.c.l.b16 %v128
  %v1225 = vunpack.c.l.b16 %v129
  %v1226 = vunpack.c.h.b16 %v129
  %v1227 = vunpack.c.l.b16 %v130
  %v1228 = vunpack.c.l.b16 %v131
  %v1229 = vunpack.c.h.b16 %v131
  %v1230 = vunpack.c.l.b16 %v132
  %v1231 = vunpack.c.l.b16 %v133
  %v1232 = vunpack.c.h.b16 %v133
  %v1233 = vunpack.c.l.b16 %v134
  %v1234 = vunpack.c.l.b16 %v135
  %v1235 = vunpack.c.h.b16 %v135
  %v1236 = vunpack.c.l.b16 %v136
  %v1237 = vunpack.c.l.b16 %v137
  %v1238 = vunpack.c.h.b16 %v137
  %v1239 = vunpack.c.l.b16 %v138
  %v1240 = vunpack.c.l.b16 %v139
  %v1241 = vunpack.c.h.b16 %v139
  %v1242 = vunpack.c.l.b16 %v140
  %v1243 = vunpack.c.l.b16 %v141
  %v1244 = vunpack.c.h.b16 %v141
  %v1245 = vunpack.c.l.b16 %v142
  %v1246 = vunpack.c.l.b16 %v143
  %v1247 = vunpack.c.h.b16 %v143
  %v1248 = vunpack.c.l.b16 %v144
  %v1249 = vunpack.c.l.b16 %v145
  %v1250 = vunpack.c.h.b16 %v145
  %v1251 = vunpack.c.l.b16 %v146
  %v1252 = vunpack.c.l.b16 %v147
  %v1253 = vunpack.c.h.b16 %v147
  %v1254 = vunpack.c.l.b16 %v148
  %v1255 = vunpack.c.l.b16 %v149
  %v1256 = vunpack.c.h.b16 %v149
  %v1257 = vunpack.c.l.b16 %v150
  %v1258 = vunpack.c.l.b16 %v151
  %v1259 = vunpack.c.h.b16 %v151
  %v1260 = vunpack.c.l.b16 %v152
  %v1261 = vunpack.c.l.b16 %v153
  %v1262 = vunpack.c.h.b16 %v153
  %v1263 = vunpack.c.l.b16 %v154
  %v1264 = vunpack.c.l.b16 %v155
  %v1265 = vunpack.c.h.b16 %v155
  %v1266 = vunpack.c.l.b16 %v156
  %v1267 = vunpack.c.l.b16 %v157
  %v1268 = vunpack.c.h.b16 %v157
  %v1269 = vunpack.c.l.b16 %v158
  %v1270 = vunpack.c.l.b16 %v159
  %v1271 = vunpack.c.h.b16 %v159
  %v1272 = vunpack.c.l.b16 %v160
  %v1273 = vunpack.c.l.b16 %v161
  %v1274 = vunpack.c.h.b16 %v161
  %v1275 = vunpack.c.l.b16 %v162
  %v1276 = vunpack.c.l.b16 %v163
  %v1277 = vunpack.c.h.b16 %v163
  %v1278 = vunpack.c.l.b16 %v164
  %v1279 = vunpack.c.l.b16 %v165
  %v1280 = vunpack.c.h.b16 %v165
  %v1281 = vunpack.c.l.b16 %v166
  %v1282 = vunpack.c.l.b16 %v167
  %v1283 = vunpack.c.h.b16 %v167
  %v1284 = vunpack.c.l.b16 %v168
  %v1285 = vunpack.c.l.b16 %v169
  %v1286 = vunpack.c.h.b16 %v169
  %v1287 = vunpack.c.l.b16 %v170
  %v1288 = vunpack.c.l.b16 %v171
  %v1289 = vunpack.c.h.b16 %v171
  %v1290 = vunpack.c.l.b16 %v172
  %v1291 = vunpack.c.l.b16 %v173
  %v1292 = vunpack.c.h.b16 %v173
  %v1293 = vunpack.c.l.b16 %v174
  %v1294 = vunpack.c.l.b16 %v175
  %v1295 = vunpack.c.h.b16 %v175
  %v1296 = vunpack.c.l.b16 %v176
  %v1297 = vunpack.c.l.b16 %v177
  %v1298 = vunpack.c.h.b16 %v177
  %v1299 = vunpack.c.l.b16 %v178
  %v1300 = vunpack.c.l.b16 %v179
  %v1301 = vunpack.c.h.b16 %v179
  %v1302 = vunpack.c.l.b16 %v180
  %v1303 = vunpack.c.l.b16 %v181
  %v1304 = vunpack.c.h.b16 %v181
  %v1305 = vunpack.c.l.b16 %v182
  %v1306 = vunpack.c.l.b16 %v183
  %v1307 = vunpack.c.h.b16 %v183
  %v1308 = vunpack.c.l.b16 %v184
  %v1309 = vunpack.c.l.b16 %v185
  %v1310 = vunpack.c.h.b16 %v185
  %v1311 = vunpack.c.l.b16 %v186
  %v1312 = vunpack.c.l.b16 %v187
  %v1313 = vunpack.c.h.b16 %v187
  %v1314 = vunpack.c.l.b16 %v188
  %v1315 = vunpack.c.l.b16 %v189
  %v1316 = vunpack.c.h.b16 %v189
  %v1317 = vunpack.c.l.b16 %v190
  %v1318 = vunpack.c.l.b16 %v191
  %v1319 = vunpack.c.h.b16 %v191
  %v1320 = vunpack.c.l.b16 %v192
  %v1321 = vunpack.c.l.b16 %v193
  %v1322 = vunpack.c.h.b16 %v193
  %v1323 = vunpack.c.l.b16 %v194
  %v1324 = vunpack.c.l.b16 %v195
  %v1325 = vunpack.c.h.b16 %v195
  %v1326 = vunpack.c.l.b16 %v196
  %v1327 = vunpack.c.l.b16 %v197
  %v1328 = vunpack.c.h.b16 %v197
  %v1329 = vunpack.c.l.b16 %v198
  %v1330 = vunpack.c.l.b16 %v199
  %v1331 = vunpack.c.h.b16 %v199
  %v1332 = vunpack.c.l.b16 %v200
  %v1333 = vunpack.c.l.b16 %v201
  %v1334 = vunpack.c.h.b16 %v201
  %v1335 = vunpack.c.l.b16 %v202
  %v1336 = vunpack.c.l.b16 %v203
  %v1337 = vunpack.c.h.b16 %v203
  %v1338 = vunpack.c.l.b16 %v204
  %v1339 = vunpack.c.l.b16 %v205
  %v1340 = vunpack.c.h.b16 %v205
  %v1341 = vunpack.c.l.b16 %v206
  %v1342 = vunpack.c.l.b16 %v207
  %v1343 = vunpack.c.h.b16 %v207
  %v1344 = vunpack.c.l.b16 %v208
  %v1345 = vunpack.c.l.b16 %v209
  %v1346 = vunpack.c.h.b16 %v209
  %v1347 = vunpack.c.l.b16 %v210
  %v1348 = vunpack.c.l.b16 %v211
  %v1349 = vunpack.c.h.b16 %v211
  %v1350 = vunpack.c.l.b16 %v212
  %v1351 = vunpack.c.l.b16 %v213
  %v1352 = vunpack.c.h.b16 %v213
  %v1353 = vunpack.c.l.b16 %v214
  %v1354 = vunpack.c.l.b16 %v215
  %v1355 = vunpack.c.h.b16 %v215
  %v1356 = vunpack.c.l.b16 %v216
  %v1357 = vunpack.c.l.b16 %v217
  %v1358 = vunpack.c.h.b16 %v217
  %v1359 = vunpack.c.l.b16 %v218
  %v1360 = vunpack.c.l.b16 %v219
  %v1361 = vunpack.c.h.b16 %v219
  %v1362 = vunpack.c.l.b16 %v220
  %v1363 = vunpack.c.l.b16 %v221
  %v1364 = vunpack.c.h.b16 %v221
  %v1365 = vunpack.c.l.b16 %v222
  %v1366 = vunpack.c.l.b16 %v223
  %v1367 = vunpack.c.h.b16 %v223
  %v1368 = vunpack.c.l.b16 %v224
  %v1369 = vunpack.c.l.b16 %v225
  %v1370 = vunpack.c.h.b16 %v225
  %v1371 = vunpack.c.l.b16 %v226
  %v1372 = vunpack.c.l.b16 %v227
  %v1373 = vunpack.c.h.b16 %v227
  %v1374 = vunpack.c.l.b16 %v228
  %v1375 = vunpack.c.l.b16 %v229
  %v1376 = vunpack.c.h.b16 %v229
  %v1377 = vunpack.c.l.b16 %v230
  %v1378 = vunpack.c.l.b16 %v231
  %v1379 = vunpack.c.h.b16 %v231
  %v1380 = vunpack.c.l.b16 %v232
  %v1381 = vunpack.c.l.b16 %v233
  %v1382 = vunpack.c.h.b16 %v233
  %v1383 = vunpack.c.l.b16 %v234
  %v1384 = vunpack.c.l.b16 %v235
  %v1385 = vunpack.c.h.b16 %v235
  %v1386 = vunpack.c.l.b16 %v236
  %v1387 = vunpack.c.l.b16 %v237
  %v1388 = vunpack.c.h.b16 %v237
  %v1389 = vunpack.c.l.b16 %v238
  %v1390 = vunpack.c.l.b16 %v239
  %v1391 = vunpack.c.h.b16 %v239
  %v1392 = vunpack.c.l.b16 %v240
  %v1393 = vunpack.c.l.b16 %v241
  %v1394 = vunpack.c.h.b16 %v241
  %v1395 = vunpack.c.l.b16 %v242
  %v1396 = vunpack.c.l.b16 %v243
  %v1397 = vunpack.c.h.b16 %v243
  %v1398 = vunpack.c.l.b16 %v244
  %v1399 = vunpack.c.l.b16 %v245
  %v1400 = vunpack.c.h.b16 %v245
  %v1401 = vunpack.c.l.b16 %v246
  %v1402 = vunpack.c.l.b16 %v247
  %v1403 = vunpack.c.h.b16 %v247
  %v1404 = vunpack.c.l.b16 %v248
  %v1405 = vunpack.c.l.b16 %v249
  %v1406 = vunpack.c.h.b16 %v249
  %v1407 = vunpack.c.l.b16 %v250
  %v1408 = vunpack.c.l.b16 %v251
  %v1409 = vunpack.c.h.b16 %v251
  %v1410 = vunpack.c.l.b16 %v252
  %v1411 = vunpack.c.l.b16 %v253
  %v1412 = vunpack.c.h.b16 %v253
  %v1413 = vunpack.c.l.b16 %v254
  %v1414 = vunpack.c.l.b16 %v255
  %v1415 = vunpack.c.h.b16 %v255
  %v1416 = vunpack.c.l.b16 %v256
  %v1417 = vunpack.c.l.b16 %v257
  %v1418 = vunpack.c.h.b16 %v257
  %v1419 = vunpack.c.l.b16 %v258
  %v1420 = vunpack.c.l.b16 %v259
  %v1421 = vunpack.c.h.b16 %v259
  %v1422 = vunpack.c.l.b16 %v260
  %v1423 = vunpack.c.l.b16 %v261
  %v1424 = vunpack.c.h.b16 %v261
  %v1425 = vunpack.c.l.b16 %v262
  %v1426 = vunpack.c.l.b16 %v263
  %v1427 = vunpack.c.h.b16 %v263
  %v1428 = vunpack.c.l.b16 %v264
  %v1429 = vunpack.c.l.b16 %v265
  %v1430 = vunpack.c.h.b16 %v265
  %v1431 = vunpack.c.l.b16 %v266
  %v1432 = vunpack.c.l.b16 %v267
  %v1433 = vunpack.c.h.b16 %v267
  %v1434 = vunpack.c.l.b16 %v268
  %v1435 = vunpack.c.l.b16 %v269
  %v1436 = vunpack.c.h.b16 %v269
  %v1437 = vunpack.c.l.b16 %v270
  %v1438 = vunpack.c.l.b16 %v271
  %v1439 = vunpack.c.h.b16 %v271
  %v1440 = vunpack.c.l.b16 %v272
  %v1441 = vunpack.c.l.b16 %v273
  %v1442 = vunpack.c.h.b16 %v273
  %v1443 = vunpack.c.l.b16 %v274
  %v1444 = vunpack.c.l.b16 %v275
  %v1445 = vunpack.c.h.b16 %v275
  %v1446 = vunpack.c.l.b16 %v276
  %v1447 = vunpack.c.l.b16 %v277
  %v1448 = vunpack.c.h.b16 %v277
  %v1449 = vunpack.c.l.b16 %v278
  %v1450 = vunpack.c.l.b16 %v279
  %v1451 = vunpack.c.h.b16 %v279
  %v1452 = vunpack.c.l.b16 %v280
  %v1453 = vunpack.c.l.b16 %v281
  %v1454 = vunpack.c.h.b16 %v281
  %v1455 = vunpack.c.l.b16 %v282
  %v1456 = vunpack.c.l.b16 %v283
  %v1457 = vunpack.c.h.b16 %v283
  %v1458 = vunpack.c.l.b16 %v284
  %v1459 = vunpack.c.l.b16 %v285
  %v1460 = vunpack.c.h.b16 %v285
  %v1461 = vunpack.c.l.b16 %v286
  %v1462 = vunpack.c.l.b16 %v287
  %v1463 = vunpack.c.h.b16 %v287
  %v1464 = vunpack.c.l.b16 %v288
  %v1465 = vunpack.c.l.b16 %v289
  %v1466 = vunpack.c.h.b16 %v289
  %v1467 = vunpack.c.l.b16 %v290
  %v1468 = vunpack.c.l.b16 %v291
  %v1469 = vunpack.c.h.b16 %v291
  %v1470 = vunpack.c.l.b16 %v292
  %v1471 = vunpack.c.l.b16 %v293
  %v1472 = vunpack.c.h.b16 %v293
  %v1473 = vunpack.c.l.b16 %v294
  %v1474 = vunpack.c.l.b16 %v295
  %v1475 = vunpack.c.h.b16 %v295
  %v1476 = vunpack.c.l.b16 %v296
  %v1477 = vunpack.c.l.b16 %v297
  %v1478 = vunpack.c.h.b16 %v297
  %v1479 = vunpack.c.l.b16 %v298
  %v1480 = vunpack.c.l.b16 %v299
  %v1481 = vunpack.c.h.b16 %v299
  %v1482 = vunpack.c.l.b16 %v300
  %v1483 = vunpack.c.l.b16 %v301
  %v1484 = vunpack.c.h.b16 %v301
  %v1485 = vunpack.c.l.b16 %v302
  %v1486 = vunpack.c.l.b16 %v303
  %v1487 = vunpack.c.h.b16 %v303
  %v1488 = vunpack.c.l.b16 %v304
  %v1489 = vunpack.c.l.b16 %v305
  %v1490 = vunpack.c.h.b16 %v305
  %v1491 = vunpack.c.l.b16 %v306
  %v1492 = vunpack.c.l.b16 %v307
  %v1493 = vunpack.c.h.b16 %v307
  %v1494 = vunpack.c.l.b16 %v308
  %v1495 = vunpack.c.l.b16 %v309
  %v1496 = vunpack.c.h.b16 %v309
  %v1497 = vunpack.c.l.b16 %v310
  %v1498 = vunpack.c.l.b16 %v311
  %v1499 = vunpack.c.h.b16 %v311
  %v1500 = vunpack.c.l.b16 %v312
  %v1501 = vunpack.c.l.b16 %v313
  %v1502 = vunpack.c.h.b16 %v313
  %v1503 = vunpack.c.l.b16 %v314
  %v1504 = vunpack.c.l.b16 %v315
  %v1505 = vunpack.c.h.b16 %v315
  %v1506 = vunpack.c.l.b16 %v316
  %v1507 = vunpack.c.l.b16 %v317
  %v1508 = vunpack.c.h.b16 %v317
  %v1509 = vunpack.c.l.b16 %v318
  %v1510 = vunpack.c.l.b16 %v319
  %v1511 = vunpack.c.h.b16 %v319
  %v1512 = vunpack.c.l.b16 %v320
  %v1513 = vunpack.c.l.b16 %v321
  %v1514 = vunpack.c.h.b16 %v321
  %v1515 = vunpack.c.l.b16 %v322
  %v1516 = vunpack.c.l.b16 %v323
  %v1517 = vunpack.c.h.b16 %v323
  %v1518 = vunpack.c.l.b16 %v324
  %v1519 = vunpack.c.l.b16 %v325
  %v1520 = vunpack.c.h.b16 %v325
  %v1521 = vunpack.c.l.b16 %v326
  %v1522 = vunpack.c.l.b16 %v327
  %v1523 = vunpack.c.h.b16 %v327
  %v1524 = vunpack.c.l.b16 %v328
  %v1525 = vunpack.c.l.b16 %v329
  %v1526 = vunpack.c.h.b16 %v329
  %v1527 = vunpack.c.l.b16 %v330
  %v1528 = vunpack.c.l.b16 %v331
  %v1529 = vunpack.c.h.b16 %v331
  %v1530 = vunpack.c.l.b16 %v332
  %v1531 = vunpack.c.l.b16 %v333
  %v1532 = vunpack.c.h.b16 %v333
  %v1533 = vunpack.c.l.b16 %v334
  %v1534 = vunpack.c.l.b16 %v335
  %v1535 = vunpack.c.h.b16 %v335
  %v1536 = vunpack.c.l.b16 %v336
  %v1537 = vunpack.c.l.b16 %v337
  %v1538 = vunpack.c.h.b16 %v337
  %v1539 = vunpack.c.l.b16 %v338
  %v1540 = vunpack.c.l.b16 %v339
  %v1541 = vunpack.c.h.b16 %v339
  %v1542 = vunpack.c.l.b16 %v340
  %v1543 = vunpack.c.l.b16 %v341
  %v1544 = vunpack.c.h.b16 %v341
  %v1545 = vunpack.c.l.b16 %v342
  %v1546 = vunpack.c.l.b16 %v343
  %v1547 = vunpack.c.h.b16 %v343
  %v1548 = vunpack.c.l.b16 %v344
  %v1549 = vunpack.c.l.b16 %v345
  %v1550 = vunpack.c.h.b16 %v345
  %v1551 = vunpack.c.l.b16 %v346
  %v1552 = vunpack.c.l.b16 %v347
  %v1553 = vunpack.c.h.b16 %v347
  %v1554 = vunpack.c.l.b16 %v348
  %v1555 = vunpack.c.l.b16 %v349
  %v1556 = vunpack.c.h.b16 %v349
  %v1557 = vunpack.c.l.b16 %v350
  %v1558 = vunpack.c.l.b16 %v351
  %v1559 = vunpack.c.h.b16 %v351
  %v1560 = vunpack.c.l.b16 %v352
  %v1561 = vunpack.c.l.b16 %v353
  %v1562 = vunpack.c.h.b16 %v353
  %v1563 = vunpack.c.l.b16 %v354
  %v1564 = vunpack.c.l.b16 %v355
  %v1565 = vunpack.c.h.b16 %v355
  %v1566 = vunpack.c.l.b16 %v356
  %v1567 = vunpack.c.l.b16 %v357
  %v1568 = vunpack.c.h.b16 %v357
  %v1569 = vunpack.c.l.b16 %v358
  %v1570 = vunpack.c.l.b16 %v359
  %v1571 = vunpack.c.h.b16 %v359
  %v1572 = vunpack.c.l.b16 %v360
  %v1573 = vunpack.c.l.b16 %v361
  %v1574 = vunpack.c.h.b16 %v361
  %v1575 = vunpack.c.l.b16 %v362
  %v1576 = vunpack.c.l.b16 %v363
  %v1577 = vunpack.c.h.b16 %v363
  %v1578 = vunpack.c.l.b16 %v364
  %v1579 = vunpack.c.l.b16 %v365
  %v1580 = vunpack.c.h.b16 %v365
  %v1581 = vunpack.c.l.b16 %v366
  %v1582 = vunpack.c.l.b16 %v367
  %v1583 = vunpack.c.h.b16 %v367
  %v1584 = vunpack.c.l.b16 %v368
  %v1585 = vunpack.c.l.b16 %v369
  %v1586 = vunpack.c.h.b16 %v369
  %v1587 = vunpack.c.l.b16 %v370
  %v1588 = vunpack.c.l.b16 %v371
  %v1589 = vunpack.c.h.b16 %v371
  %v1590 = vunpack.c.l.b16 %v372
  %v1591 = vunpack.c.l.b16 %v373
  %v1592 = vunpack.c.h.b16 %v373
  %v1593 = vunpack.c.l.b16 %v374
  %v1594 = vunpack.c.l.b16 %v375
  %v1595 = vunpack.c.h.b16 %v375
  %v1596 = vunpack.c.l.b16 %v376
  %v1597 = vunpack.c.l.b16 %v377
  %v1598 = vunpack.c.h.b16 %v377
  %v1599 = vunpack.c.l.b16 %v378
  %v1600 = vunpack.c.l.b16 %v379
  %v1601 = vunpack.c.h.b16 %v379
  %v1602 = vunpack.c.l.b16 %v380
  %v1603 = vunpack.c.l.b16 %v381
  %v1604 = vunpack.c.h.b16 %v381
  %v1605 = vunpack.c.l.b16 %v382
  %v1606 = vunpack.c.l.b16 %v383
  %v1607 = vunpack.c.h.b16 %v383
  %v1608 = vunpack.c.l.b16 %v384
  %v1609 = vunpack.c.l.b16 %v385
  %v1610 = vunpack.c.h.b16 %v385
  %v1611 = vunpack.c.l.b16 %v386
  %v1612 = vunpack.c.l.b16 %v387
  %v1613 = vunpack.c.h.b16 %v387
  %v1614 = vunpack.c.l.b16 %v388
  %v1615 = vunpack.c.l.b16 %v389
  %v1616 = vunpack.c.h.b16 %v389
  %v1617 = vunpack.c.l.b16 %v390
  %v1618 = vunpack.c.l.b16 %v391
  %v1619 = vunpack.c.h.b16 %v391
  %v1620 = vunpack.c.l.b16 %v392
  %v1621 = vunpack.c.l.b16 %v393
  %v1622 = vunpack.c.h.b16 %v393
  %v1623 = vunpack.c.l.b16 %v394
  %v1624 = vunpack.c.l.b16 %v395
  %v1625 = vunpack.c.h.b16 %v395
  %v1626 = vunpack.c.l.b16 %v396
  %v1627 = vunpack.c.l.b16 %v397
  %v1628 = vunpack.c.h.b16 %v397
  %v1629 = vunpack.c.l.b16 %v398
  %v1630 = vunpack.c.l.b16 %v399
  %v1631 = vunpack.c.h.b16 %v399
  %v1632 = vunpack.c.l.b16 %v400
  %v1633 = vunpack.c.l.b16 %v401
  %v1634 = vunpack.c.h.b16 %v401
  %v1635 = vunpack.c.l.b16 %v402
  %v1636 = vunpack.c.l.b16 %v403
  %v1637 = vunpack.c.h.b16 %v403
  %v1638 = vunpack.c.l.b16 %v404
  %v1639 = vunpack.c.l.b16 %v405
  %v1640 = vunpack.c.h.b16 %v405
  %v1641 = vunpack.c.l.b16 %v406
  %v1642 = vunpack.c.l.b16 %v407
  %v1643 = vunpack.c.h.b16 %v407
  %v1644 = vunpack.c.l.b16 %v408
  %v1645 = vunpack.c.l.b16 %v409
  %v1646 = vunpack.c.h.b16 %v409
  %v1647 = vunpack.c.l.b16 %v410
  %v1648 = vunpack.c.l.b16 %v411
  %v1649 = vunpack.c.h.b16 %v411
  %v1650 = vunpack.c.l.b16 %v412
  %v1651 = vunpack.c.l.b16 %v413
  %v1652 = vunpack.c.h.b16 %v413
  %v1653 = vunpack.c.l.b16 %v414
  %v1654 = vunpack.c.l.b16 %v415
  %v1655 = vunpack.c.h.b16 %v415
  %v1656 = vunpack.c.l.b16 %v416
  %v1657 = vunpack.c.l.b16 %v417
  %v1658 = vunpack.c.h.b16 %v417
  %v1659 = vunpack.c.l.b16 %v418
  %v1660 = vunpack.c.l.b16 %v419
  %v1661 = vunpack.c.h.b16 %v419
  %v1662 = vunpack.c.l.b16 %v420
  %v1663 = vunpack.c.l.b16 %v421
  %v1664 = vunpack.c.h.b16 %v421
  %v1665 = vunpack.c.l.b16 %v422
  %v1666 = vunpack.c.l.b16 %v423
  %v1667 = vunpack.c.h.b16 %v423
  %v1668 = vunpack.c.l.b16 %v424
  %v1669 = vunpack.c.l.b16 %v425
  %v1670 = vunpack.c.h.b16 %v425
  %v1671 = vunpack.c.l.b16 %v426
  %v1672 = vunpack.c.l.b16 %v427
  %v1673 = vunpack.c.h.b16 %v427
  %v1674 = vunpack.c.l.b16 %v428
  %v1675 = vunpack.c.l.b16 %v429
  %v1676 = vunpack.c.h.b16 %v429
  %v1677 = vunpack.c.l.b16 %v430
  %v1678 = vunpack.c.l.b16 %v431
  %v1679 = vunpack.c.h.b16 %v431
  %v1680 = vunpack.c.l.b16 %v432
  %v1681 = vunpack.c.l.b16 %v433
  %v1682 = vunpack.c.h.b16 %v433
  %v1683 = vunpack.c.l.b16 %v434
  %v1684 = vunpack.c.l.b16 %v435
  %v1685 = vunpack.c.h.b16 %v435
  %v1686 = vunpack.c.l.b16 %v436
  %v1687 = vunpack.c.l.b16 %v437
  %v1688 = vunpack.c.h.b16 %v437
  %v1689 = vunpack.c.l.b16 %v438
  %v1690 = vunpack.c.l.b16 %v439
  %v1691 = vunpack.c.h.b16 %v439
  %v1692 = vunpack.c.l.b16 %v440
  %v1693 = vunpack.c.l.b16 %v441
  %v1694 = vunpack.c.h.b16 %v441
  %v1695 = vunpack.c.l.b16 %v442
  %v1696 = vunpack.c.l.b16 %v443
  %v1697 = vunpack.c.h.b16 %v443
  %v1698 = vunpack.c.l.b16 %v444
  %v1699 = vunpack.c.l.b16 %v445
  %v1700 = vunpack.c.h.b16 %v445
  %v1701 = vunpack.c.l.b16 %v446
  %v1702 = vunpack.c.l.b16 %v447
  %v1703 = vunpack.c.h.b16 %v447
  %v1704 = vunpack.c.l.b16 %v448
  %v1705 = vunpack.c.l.b16 %v449
  %v1706 = vunpack.c.h.b16 %v449
  %v1707 = vunpack.c.l.b16 %v450
  %v1708 = vunpack.c.l.b16 %v451
  %v1709 = vunpack.c.h.b16 %v451
  %v1710 = vunpack.c.l.b16 %v452
  %v1711 = vunpack.c.l.b16 %v453
  %v1712 = vunpack.c.h.b16 %v453
  %v1713 = vunpack.c.l.b16 %v454
  %v1714 = vunpack.c.l.b16 %v455
  %v1715 = vunpack.c.h.b16 %v455
  %v1716 = vunpack.c.l.b16 %v456
  %v1717 = vunpack.c.l.b16 %v457
  %v1718 = vunpack.c.h.b16 %v457
  %v1719 = vunpack.c.l.b16 %v458
  %v1720 = vunpack.c.l.b16 %v459
  %v1721 = vunpack.c.h.b16 %v459
  %v1722 = vunpack.c.l.b16 %v460
  %v1723 = vunpack.c.l.b16 %v461
  %v1724 = vunpack.c.h.b16 %v461
  %v1725 = vunpack.c.l.b16 %v462
  %v1726 = vunpack.c.l.b16 %v463
  %v1727 = vunpack.c.h.b16 %v463
  %v1728 = vunpack.c.l.b16 %v464
  %v1729 = vunpack.c.l.b16 %v465
  %v1730 = vunpack.c.h.b16 %v465
  %v1731 = vunpack.c.l.b16 %v466
  %v1732 = vunpack.c.l.b16 %v467
  %v1733 = vunpack.c.h.b16 %v467
  %v1734 = vunpack.c.l.b16 %v468
  %v1735 = vunpack.c.l.b16 %v469
  %v1736 = vunpack.c.h.b16 %v469
  %v1737 = vunpack.c.l.b16 %v470
  %v1738 = vunpack.c.l.b16 %v471
  %v1739 = vunpack.c.h.b16 %v471
  %v1740 = vunpack.c.l.b16 %v472
  %v1741 = vunpack.c.l.b16 %v473
  %v1742 = vunpack.c.h.b16 %v473
  %v1743 = vunpack.c.l.b16 %v474
  %v1744 = vunpack.c.l.b16 %v475
  %v1745 = vunpack.c.h.b16 %v475
  %v1746 = vunpack.c.l.b16 %v476
  %v1747 = vunpack.c.l.b16 %v477
  %v1748 = vunpack.c.h.b16 %v477
  %v1749 = vunpack.c.l.b16 %v478
  %v1750 = vunpack.c.l.b16 %v479
  %v1751 = vunpack.c.h.b16 %v479
  %v1752 = vunpack.c.l.b16 %v480
  %v1753 = vunpack.c.l.b16 %v481
  %v1754 = vunpack.c.h.b16 %v481
  %v1755 = vunpack.c.l.b16 %v482
  %v1756 = vunpack.c.l.b16 %v483
  %v1757 = vunpack.c.h.b16 %v483
  %v1758 = vunpack.c.l.b16 %v484
  %v1759 = vunpack.c.l.b16 %v485
  %v1760 = vunpack.c.h.b16 %v485
  %v1761 = vunpack.c.l.b16 %v486
  %v1762 = vunpack.c.l.b16 %v487
  %v1763 = vunpack.c.h.b16 %v487
  %v1764 = vunpack.c.l.b16 %v488
  %v1765 = vunpack.c.l.b16 %v489
  %v1766 = vunpack.c.h.b16 %v489
  %v1767 = vunpack.c.l.b16 %v490
  %v1768 = vpack.c.b16 %v1099, %v1096
  %v1769 = vpack.c.b16 %v1100, %v1097
  %v1770 = vpack.c.b16 %v1101, %v1098
  %v1771 = vpack.c.b16 %v1105, %v1102
  %v1772 = vpack.c.b16 %v1106, %v1103
  %v1773 = vpack.c.b16 %v1107, %v1104
  %v1774 = vpack.c.b16 %v1111, %v1108
  %v1775 = vpack.c.b16 %v1112, %v1109
  %v1776 = vpack.c.b16 %v1113, %v1110
  %v1777 = vpack.c.b16 %v1117, %v1114
  %v1778 = vpack.c.b16 %v1118, %v1115
  %v1779 = vpack.c.b16 %v1119, %v1116
  %v1780 = vpack.c.b16 %v1123, %v1120
  %v1781 = vpack.c.b16 %v1124, %v1121
  %v1782 = vpack.c.b16 %v1125, %v1122
  %v1783 = vpack.c.b16 %v1129, %v1126
  %v1784 = vpack.c.b16 %v1130, %v1127
  %v1785 = vpack.c.b16 %v1131, %v1128
  %v1786 = vpack.c.b16 %v1135, %v1132
  %v1787 = vpack.c.b16 %v1136, %v1133
  %v1788 = vpack.c.b16 %v1137, %v1134
  %v1789 = vpack.c.b16 %v1141, %v1138
  %v1790 = vpack.c.b16 %v1142, %v1139
  %v1791 = vpack.c.b16 %v1143, %v1140
  %v1792 = vpack.c.b16 %v1147, %v1144
  %v1793 = vpack.c.b16 %v1148, %v1145
  %v1794 = vpack.c.b16 %v1149, %v1146
  %v1795 = vpack.c.b16 %v1153, %v1150
  %v1796 = vpack.c.b16 %v1154, %v1151
  %v1797 = vpack.c.b16 %v1155, %v1152
  %v1798 = vpack.c.b16 %v1159, %v1156
  %v1799 = vpack.c.b16 %v1160, %v1157
  %v1800 = vpack.c.b16 %v1161, %v1158
  %v1801 = vpack.c.b16 %v1165, %v1162
  %v1802 = vpack.c.b16 %v1166, %v1163
  %v1803 = vpack.c.b16 %v1167, %v1164
  %v1804 = vpack.c.b16 %v1171, %v1168
  %v1805 = vpack.c.b16 %v1172, %v1169
  %v1806 = vpack.c.b16 %v1173, %v1170
  %v1807 = vpack.c.b16 %v1177, %v1174
  %v1808 = vpack.c.b16 %v1178, %v1175
  %v1809 = vpack.c.b16 %v1179, %v1176
  %v1810 = vpack.c.b16 %v1183, %v1180
  %v1811 = vpack.c.b16 %v1184, %v1181
  %v1812 = vpack.c.b16 %v1185, %v1182
  %v1813 = vpack.c.b16 %v1189, %v1186
  %v1814 = vpack.c.b16 %v1190, %v1187
  %v1815 = vpack.c.b16 %v1191, %v1188
  %v1816 = vpack.c.b16 %v1195, %v1192
  %v1817 = vpack.c.b16 %v1196, %v1193
  %v1818 = vpack.c.b16 %v1197, %v1194
  %v1819 = vpack.c.b16 %v1201, %v1198
  %v1820 = vpack.c.b16 %v1202, %v1199
  %v1821 = vpack.c.b16 %v1203, %v1200
  %v1822 = vpack.c.b16 %v1207, %v1204
  %v1823 = vpack.c.b16 %v1208, %v1205
  %v1824 = vpack.c.b16 %v1209, %v1206
  %v1825 = vpack.c.b16 %v1213, %v1210
  %v1826 = vpack.c.b16 %v1214, %v1211
  %v1827 = vpack.c.b16 %v1215, %v1212
  %v1828 = vpack.c.b16 %v1219, %v1216
  %v1829 = vpack.c.b16 %v1220, %v1217
  %v1830 = vpack.c.b16 %v1221, %v1218
  %v1831 = vpack.c.b16 %v1225, %v1222
  %v1832 = vpack.c.b16 %v1226, %v1223
  %v1833 = vpack.c.b16 %v1227, %v1224
  %v1834 = vpack.c.b16 %v1231, %v1228
  %v1835 = vpack.c.b16 %v1232, %v1229
  %v1836 = vpack.c.b16 %v1233, %v1230
  %v1837 = vpack.c.b16 %v1237, %v1234
  %v1838 = vpack.c.b16 %v1238, %v1235
  %v1839 = vpack.c.b16 %v1239, %v1236
  %v1840 = vpack.c.b16 %v1243, %v1240
  %v1841 = vpack.c.b16 %v1244, %v1241
  %v1842 = vpack.c.b16 %v1245, %v1242
  %v1843 = vpack.c.b16 %v1249, %v1246
  %v1844 = vpack.c.b16 %v1250, %v1247
  %v1845 = vpack.c.b16 %v1251, %v1248
  %v1846 = vpack.c.b16 %v1255, %v1252
  %v1847 = vpack.c.b16 %v1256, %v1253
  %v1848 = vpack.c.b16 %v1257, %v1254
  %v1849 = vpack.c.b16 %v1261, %v1258
  %v1850 = vpack.c.b16 %v1262, %v1259
  %v1851 = vpack.c.b16 %v1263, %v1260
  %v1852 = vpack.c.b16 %v1267, %v1264
  %v1853 = vpack.c.b16 %v1268, %v1265
  %v1854 = vpack.c.b16 %v1269, %v1266
  %v1855 = vpack.c.b16 %v1273, %v1270
  %v1856 = vpack.c.b16 %v1274, %v1271
  %v1857 = vpack.c.b16 %v1275, %v1272
  %v1858 = vpack.c.b16 %v1279, %v1276
  %v1859 = vpack.c.b16 %v1280, %v1277
  %v1860 = vpack.c.b16 %v1281, %v1278
  %v1861 = vpack.c.b16 %v1285, %v1282
  %v1862 = vpack.c.b16 %v1286, %v1283
  %v1863 = vpack.c.b16 %v1287, %v1284
  %v1864 = vpack.c.b16 %v1291, %v1288
  %v1865 = vpack.c.b16 %v1292, %v1289
  %v1866 = vpack.c.b16 %v1293, %v1290
  %v1867 = vpack.c.b16 %v1297, %v1294
  %v1868 = vpack.c.b16 %v1298, %v1295
  %v1869 = vpack.c.b16 %v1299, %v1296
  %v1870 = vpack.c.b16 %v1303, %v1300
  %v1871 = vpack.c.b16 %v1304, %v1301
  %v1872 = vpack.c.b16 %v1305, %v1302
  %v1873 = vpack.c.b16 %v1309, %v1306
  %v1874 = vpack.c.b16 %v1310, %v1307
  %v1875 = vpack.c.b16 %v1311, %v1308
  %v1876 = vpack.c.b16 %v1315, %v1312
  %v1877 = vpack.c.b16 %v1316, %v1313
  %v1878 = vpack.c.b16 %v1317, %v1314
  %v1879 = vpack.c.b16 %v1321, %v1318
  %v1880 = vpack.c.b16 %v1322, %v1319
  %v1881 = vpack.c.b16 %v1323, %v1320
  %v1882 = vpack.c.b16 %v1327, %v1324
  %v1883 = vpack.c.b16 %v1328, %v1325
  %v1884 = vpack.c.b16 %v1329, %v1326
  %v1885 = vpack.c.b16 %v1333, %v1330
  %v1886 = vpack.c.b16 %v1334, %v1331
  %v1887 = vpack.c.b16 %v1335, %v1332
  %v1888 = vpack.c.b16 %v1339, %v1336
  %v1889 = vpack.c.b16 %v1340, %v1337
  %v1890 = vpack.c.b16 %v1341, %v1338
  %v1891 = vpack.c.b16 %v1345, %v1342
  %v1892 = vpack.c.b16 %v1346, %v1343
  %v1893 = vpack.c.b16 %v1347, %v1344
  %v1894 = vpack.c.b16 %v1351, %v1348
  %v1895 = vpack.c.b16 %v1352, %v1349
  %v1896 = vpack.c.b16 %v1353, %v1350
  %v1897 = vpack.c.b16 %v1357, %v1354
  %v1898 = vpack.c.b16 %v1358, %v1355
  %v1899 = vpack.c.b16 %v1359, %v1356
  %v1900 = vpack.c.b16 %v1363, %v1360
  %v1901 = vpack.c.b16 %v1364, %v1361
  %v1902 = vpack.c.b16 %v1365, %v1362
  %v1903 = vpack.c.b16 %v1369, %v1366
  %v1904 = vpack.c.b16 %v1370, %v1367
  %v1905 = vpack.c.b16 %v1371, %v1368
  %v1906 = vpack.c.b16 %v1375, %v1372
  %v1907 = vpack.c.b16 %v1376, %v1373
  %v1908 = vpack.c.b16 %v1377, %v1374
  %v1909 = vpack.c.b16 %v1381, %v1378
  %v1910 = vpack.c.b16 %v1382, %v1379
  %v1911 = vpack.c.b16 %v1383, %v1380
  %v1912 = vpack.c.b16 %v1387, %v1384
  %v1913 = vpack.c.b16 %v1388, %v1385
  %v1914 = vpack.c.b16 %v1389, %v1386
  %v1915 = vpack.c.b16 %v1393, %v1390
  %v1916 = vpack.c.b16 %v1394, %v1391
  %v1917 = vpack.c.b16 %v1395, %v1392
  %v1918 = vpack.c.b16 %v1399, %v1396
  %v1919 = vpack.c.b16 %v1400, %v1397
  %v1920 = vpack.c.b16 %v1401, %v1398
  %v1921 = vpack.c.b16 %v1405, %v1402
  %v1922 = vpack.c.b16 %v1406, %v1403
  %v1923 = vpack.c.b16 %v1407, %v1404
  %v1924 = vpack.c.b16 %v1411, %v1408
  %v1925 = vpack.c.b16 %v1412, %v1409
  %v1926 = vpack.c.b16 %v1413, %v1410
  %v1927 = vpack.c.b16 %v1417, %v1414
  %v1928 = vpack.c.b16 %v1418, %v1415
  %v1929 = vpack.c.b16 %v1419, %v1416
  %v1930 = vpack.c.b16 %v1423, %v1420
  %v1931 = vpack.c.b16 %v1424, %v1421
  %v1932 = vpack.c.b16 %v1425, %v1422
  %v1933 = vpack.c.b16 %v1429, %v1426
  %v1934 = vpack.c.b16 %v1430, %v1427
  %v1935 = vpack.c.b16 %v1431, %v1428
  %v1936 = vpack.c.b16 %v1435, %v1432
  %v1937 = vpack.c.b16 %v1436, %v1433
  %v1938 = vpack.c.b16 %v1437, %v1434
  %v1939 = vpack.c.b16 %v1441, %v1438
  %v1940 = vpack.c.b16 %v1442, %v1439
  %v1941 = vpack.c.b16 %v1443, %v1440
  %v1942 = vpack.c.b16 %v1447, %v1444
  %v1943 = vpack.c.b16 %v1448, %v1445
  %v1944 = vpack.c.b16 %v1449, %v1446
  %v1945 = vpack.c.b16 %v1453, %v1450
  %v1946 = vpack.c.b16 %v1454, %v1451
  %v1947 = vpack.c.b16 %v1455, %v1452
  %v1948 = vpack.c.b16 %v1459, %v1456
  %v1949 = vpack.c.b16 %v1460, %v1457
  %v1950 = vpack.c.b16 %v1461, %v1458
  %v1951 = vpack.c.b16 %v1465, %v1462
  %v1952 = vpack.c.b16 %v1466, %v1463
  %v1953 = vpack.c.b16 %v1467, %v1464
  %v1954 = vpack.c.b16 %v1471, %v1468
  %v1955 = vpack.c.b16 %v1472, %v1469
  %v1956 = vpack.c.b16 %v1473, %v1470
  %v1957 = vpack.c.b16 %v1477, %v1474
  %v1958 = vpack.c.b16 %v1478, %v1475
  %v1959 = vpack.c.b16 %v1479, %v1476
  %v1960 = vpack.c.b16 %v1483, %v1480
  %v1961 = vpack.c.b16 %v1484, %v1481
  %v1962 = vpack.c.b16 %v1485, %v1482
  %v1963 = vpack.c.b16 %v1489, %v1486
  %v1964 = vpack.c.b16 %v1490, %v1487
  %v1965 = vpack.c.b16 %v1491, %v1488
  %v1966 = vpack.c.b16 %v1495, %v1492
  %v1967 = vpack.c.b16 %v1496, %v1493
  %v1968 = vpack.c.b16 %v1497, %v1494
  %v1969 = vpack.c.b16 %v1501, %v1498
  %v1970 = vpack.c.b16 %v1502, %v1499
  %v1971 = vpack.c.b16 %v1503, %v1500
  %v1972 = vpack.c.b16 %v1507, %v1504
  %v1973 = vpack.c.b16 %v1508, %v1505
  %v1974 = vpack.c.b16 %v1509, %v1506
  %v1975 = vpack.c.b16 %v1513, %v1510
  %v1976 = vpack.c.b16 %v1514, %v1511
  %v1977 = vpack.c.b16 %v1515, %v1512
  %v1978 = vpack.c.b16 %v1519, %v1516
  %v1979 = vpack.c.b16 %v1520, %v1517
  %v1980 = vpack.c.b16 %v1521, %v1518
  %v1981 = vpack.c.b16 %v1525, %v1522
  %v1982 = vpack.c.b16 %v1526, %v1523
  %v1983 = vpack.c.b16 %v1527, %v1524
  %v1984 = vpack.c.b16 %v1531, %v1528
  %v1985 = vpack.c.b16 %v1532, %v1529
  %v1986 = vpack.c.b16 %v1533, %v1530
  %v1987 = vpack.c.b16 %v1537, %v1534
  %v1988 = vpack.c.b16 %v1538, %v1535
  %v1989 = vpack.c.b16 %v1539, %v1536
  %v1990 = vpack.c.b16 %v1543, %v1540
  %v1991 = vpack.c.b16 %v1544, %v1541
  %v1992 = vpack.c.b16 %v1545, %v1542
  %v1993 = vpack.c.b16 %v1549, %v1546
  %v1994 = vpack.c.b16 %v1550, %v1547
  %v1995 = vpack.c.b16 %v1551, %v1548
  %v1996 = vpack.c.b16 %v1555, %v1552
  %v1997 = vpack.c.b16 %v1556, %v1553
  %v1998 = vpack.c.b16 %v1557, %v1554
  %v1999 = vpack.c.b16 %v1561, %v1558
  %v2000 = vpack.c.b16 %v1562, %v1559
  %v2001 = vpack.c.b16 %v1563, %v1560
  %v2002 = vpack.c.b16 %v1567, %v1564
  %v2003 = vpack.c.b16 %v1568, %v1565
  %v2004 = vpack.c.b16 %v1569, %v1566
  %v2005 = vpack.c.b16 %v1573, %v1570
  %v2006 = vpack.c.b16 %v1574, %v1571
  %v2007 = vpack.c.b16 %v1575, %v1572
  %v2008 = vpack.c.b16 %v1579, %v1576
  %v2009 = vpack.c.b16 %v1580, %v1577
  %v2010 = vpack.c.b16 %v1581, %v1578
  %v2011 = vpack.c.b16 %v1585, %v1582
  %v2012 = vpack.c.b16 %v1586, %v1583
  %v2013 = vpack.c.b16 %v1587, %v1584
  %v2014 = vpack.c.b16 %v1591, %v1588
  %v2015 = vpack.c.b16 %v1592, %v1589
  %v2016 = vpack.c.b16 %v1593, %v1590
  %v2017 = vpack.c.b16 %v1597, %v1594
  %v2018 = vpack.c.b16 %v1598, %v1595
  %v2019 = vpack.c.b16 %v1599, %v1596
  %v2020 = vpack.c.b16 %v1603, %v1600
  %v2021 = vpack.c.b16 %v1604, %v1601
  %v2022 = vpack.c.b16 %v1605, %v1602
  %v2023 = vpack.c.b16 %v1609, %v1606
  %v2024 = vpack.c.b16 %v1610, %v1607
  %v2025 = vpack.c.b16 %v1611, %v1608
  %v2026 = vpack.c.b16 %v1615, %v1612
  %v2027 = vpack.c.b16 %v1616, %v1613
  %v2028 = vpack.c.b16 %v1617, %v1614
  %v2029 = vpack.c.b16 %v1621, %v1618
  %v2030 = vpack.c.b16 %v1622, %v1619
  %v2031 = vpack.c.b16 %v1623, %v1620
  %v2032 = vpack.c.b16 %v1627, %v1624
  %v2033 = vpack.c.b16 %v1628, %v1625
  %v2034 = vpack.c.b16 %v1629, %v1626
  %v2035 = vpack.c.b16 %v1633, %v1630
  %v2036 = vpack.c.b16 %v1634, %v1631
  %v2037 = vpack.c.b16 %v1635, %v1632
  %v2038 = vpack.c.b16 %v1639, %v1636
  %v2039 = vpack.c.b16 %v1640, %v1637
  %v2040 = vpack.c.b16 %v1641, %v1638
  %v2041 = vpack.c.b16 %v1645, %v1642
  %v2042 = vpack.c.b16 %v1646, %v1643
  %v2043 = vpack.c.b16 %v1647, %v1644
  %v2044 = vpack.c.b16 %v1651, %v1648
  %v2045 = vpack.c.b16 %v1652, %v1649
  %v2046 = vpack.c.b16 %v1653, %v1650
  %v2047 = vpack.c.b16 %v1657, %v1654
  %v2048 = vpack.c.b16 %v1658, %v1655
  %v2049 = vpack.c.b16 %v1659, %v1656
  %v2050 = vpack.c.b16 %v1663, %v1660
  %v2051 = vpack.c.b16 %v1664, %v1661
  %v2052 = vpack.c.b16 %v1665, %v1662
  %v2053 = vpack.c.b16 %v1669, %v1666
  %v2054 = vpack.c.b16 %v1670, %v1667
  %v2055 = vpack.c.b16 %v1671, %v1668
  %v2056 = vpack.c.b16 %v1675, %v1672
  %v2057 = vpack.c.b16 %v1676, %v1673
  %v2058 = vpack.c.b16 %v1677, %v1674
  %v2059 = vpack.c.b16 %v1681, %v1678
  %v2060 = vpack.c.b16 %v1682, %v1679
  %v2061 = vpack.c.b16 %v1683, %v1680
  %v2062 = vpack.c.b16 %v1687, %v1684
  %v2063 = vpack.c.b16 %v1688, %v1685
  %v2064 = vpack.c.b16 %v1689, %v1686
  %v2065 = vpack.c.b16 %v1693, %v1690
  %v2066 = vpack.c.b16 %v1694, %v1691
  %v2067 = vpack.c.b16 %v1695, %v1692
  %v2068 = vpack.c.b16 %v1699, %v1696
  %v2069 = vpack.c.b16 %v1700, %v1697
  %v2070 = vpack.c.b16 %v1701, %v1698
  %v2071 = vpack.c.b16 %v1705, %v1702
  %v2072 = vpack.c.b16 %v1706, %v1703
  %v2073 = vpack.c.b16 %v1707, %v1704
  %v2074 = vpack.c.b16 %v1711, %v1708
  %v2075 = vpack.c.b16 %v1712, %v1709
  %v2076 = vpack.c.b16 %v1713, %v1710
  %v2077 = vpack.c.b16 %v1717, %v1714
  %v2078 = vpack.c.b16 %v1718, %v1715
  %v2079 = vpack.c.b16 %v1719, %v1716
  %v2080 = vpack.c.b16 %v1723, %v1720
  %v2081 = vpack.c.b16 %v1724, %v1721
  %v2082 = vpack.c.b16 %v1725, %v1722
  %v2083 = vpack.c.b16 %v1729, %v1726
  %v2084 = vpack.c.b16 %v1730, %v1727
  %v2085 = vpack.c.b16 %v1731, %v1728
  %v2086 = vpack.c.b16 %v1735, %v1732
  %v2087 = vpack.c.b16 %v1736, %v1733
  %v2088 = vpack.c.b16 %v1737, %v1734
  %v2089 = vpack.c.b16 %v1741, %v1738
  %v2090 = vpack.c.b16 %v1742, %v1739
  %v2091 = vpack.c.b16 %v1743, %v1740
  %v2092 = vpack.c.b16 %v1747, %v1744
  %v2093 = vpack.c.b16 %v1748, %v1745
  %v2094 = vpack.c.b16 %v1749, %v1746
  %v2095 = vpack.c.b16 %v1753, %v1750
  %v2096 = vpack.c.b16 %v1754, %v1751
  %v2097 = vpack.c.b16 %v1755, %v1752
  %v2098 = vpack.c.b16 %v1759, %v1756
  %v2099 = vpack.c.b16 %v1760, %v1757
  %v2100 = vpack.c.b16 %v1761, %v1758
  %v2101 = vpack.c.b16 %v1765, %v1762
  %v2102 = vpack.c.b16 %v1766, %v1763
  %v2103 = vpack.c.b16 %v1767, %v1764
  %2440 = vmatprep.subr.bf16.mxu0 %v1769
  %2441 = vmatpush1.bf16.msra.mxu0 %v1768
  %2442 = vmatprep.subr.bf16.mxu0 %v1772
  %2443 = vmatpush1.bf16.msra.mxu0 %v1771
  %2444 = vmatprep.subr.bf16.mxu0 %v1775
  %2445 = vmatpush1.bf16.msra.mxu0 %v1774
  %2446 = vmatprep.subr.bf16.mxu0 %v1778
  %2447 = vmatpush1.bf16.msra.mxu0 %v1777
  %2448 = vmatprep.subr.bf16.mxu0 %v1781
  %2449 = vmatpush1.bf16.msra.mxu0 %v1780
  %2450 = vmatprep.subr.bf16.mxu0 %v1784
  %2451 = vmatpush1.bf16.msra.mxu0 %v1783
  %2452 = vmatprep.subr.bf16.mxu0 %v1787
  %2453 = vmatpush1.bf16.msra.mxu0 %v1786
  %2454 = vmatprep.subr.bf16.mxu0 %v1790
  %2455 = vmatpush1.bf16.msra.mxu0 %v1789
  %2456 = vmatprep.subr.bf16.mxu0 %v1793
  %2457 = vmatpush1.bf16.msra.mxu0 %v1792
  %2458 = vmatprep.subr.bf16.mxu0 %v1796
  %2459 = vmatpush1.bf16.msra.mxu0 %v1795
  %2460 = vmatprep.subr.bf16.mxu0 %v1799
  %2461 = vmatpush1.bf16.msra.mxu0 %v1798
  %2462 = vmatprep.subr.bf16.mxu0 %v1802
  %2463 = vmatpush1.bf16.msra.mxu0 %v1801
  %2464 = vmatprep.subr.bf16.mxu0 %v1805
  %2465 = vmatpush1.bf16.msra.mxu0 %v1804
  %2466 = vmatprep.subr.bf16.mxu0 %v1808
  %2467 = vmatpush1.bf16.msra.mxu0 %v1807
  %2468 = vmatprep.subr.bf16.mxu0 %v1811
  %2469 = vmatpush1.bf16.msra.mxu0 %v1810
  %2470 = vmatprep.subr.bf16.mxu0 %v1814
  %2471 = vmatpush1.bf16.msra.mxu0 %v1813
  %2472 = vmatprep.mubr.bf16.mxu0 %v593
  %2473 = vmatmul.mubr.bf16.gmra.mrb[0].mxu0 %v592
  %v2474 = vpop.f32.mrb[0].mxu0
  %v2475 = vadd.f32 %v496, %v2474
  %v2476 = vpop.f32.mrb[0].mxu0
  %v2477 = vadd.f32 %v500, %v2476
  %v2478 = vpop.f32.mrb[0].mxu0
  %v2479 = vadd.f32 %v496, %v2478
  %v2480 = vpop.f32.mrb[0].mxu0
  %v2481 = vadd.f32 %v500, %v2480
  %2482 = vmatprep.mubr.bf16.mxu0 %v607
  %2483 = vmatmul.mubr.bf16.gmra.mrb[0].mxu0 %v606
  %v2484 = vpop.f32.mrb[0].mxu0
  %v2485 = vadd.f32 %v496, %v2484
  %v2486 = vpop.f32.mrb[0].mxu0
  %v2487 = vadd.f32 %v500, %v2486
  %v2488 = vpop.f32.mrb[0].mxu0
  %v2489 = vadd.f32 %v496, %v2488
  %v2490 = vpop.f32.mrb[0].mxu0
  %v2491 = vadd.f32 %v500, %v2490
  %2492 = vdwg.mxu0
  %2493 = vmatprep.subr.bf16.mxu0 %v1817
  %2494 = vmatpush1.bf16.msra.mxu0 %v1816
  %2495 = vmatprep.subr.bf16.mxu0 %v1820
  %2496 = vmatpush1.bf16.msra.mxu0 %v1819
  %2497 = vmatprep.subr.bf16.mxu0 %v1823
  %2498 = vmatpush1.bf16.msra.mxu0 %v1822
  %2499 = vmatprep.subr.bf16.mxu0 %v1826
  %2500 = vmatpush1.bf16.msra.mxu0 %v1825
  %2501 = vmatprep.subr.bf16.mxu0 %v1829
  %2502 = vmatpush1.bf16.msra.mxu0 %v1828
  %2503 = vmatprep.subr.bf16.mxu0 %v1832
  %2504 = vmatpush1.bf16.msra.mxu0 %v1831
  %2505 = vmatprep.subr.bf16.mxu0 %v1835
  %2506 = vmatpush1.bf16.msra.mxu0 %v1834
  %2507 = vmatprep.subr.bf16.mxu0 %v1838
  %2508 = vmatpush1.bf16.msra.mxu0 %v1837
  %2509 = vmatprep.subr.bf16.mxu0 %v1841
  %2510 = vmatpush1.bf16.msra.mxu0 %v1840
  %2511 = vmatprep.subr.bf16.mxu0 %v1844
  %2512 = vmatpush1.bf16.msra.mxu0 %v1843
  %2513 = vmatprep.subr.bf16.mxu0 %v1847
  %2514 = vmatpush1.bf16.msra.mxu0 %v1846
  %2515 = vmatprep.subr.bf16.mxu0 %v1850
  %2516 = vmatpush1.bf16.msra.mxu0 %v1849
  %2517 = vmatprep.subr.bf16.mxu0 %v1853
  %2518 = vmatpush1.bf16.msra.mxu0 %v1852
  %2519 = vmatprep.subr.bf16.mxu0 %v1856
  %2520 = vmatpush1.bf16.msra.mxu0 %v1855
  %2521 = vmatprep.subr.bf16.mxu0 %v1859
  %2522 = vmatpush1.bf16.msra.mxu0 %v1858
  %2523 = vmatprep.subr.bf16.mxu0 %v1862
  %2524 = vmatpush1.bf16.msra.mxu0 %v1861
  %2525 = vmatprep.mubr.bf16.mxu0 %v595
  %2526 = vmatmul.mubr.bf16.gmra.mrb[0].mxu0 %v594
  %v2527 = vpop.f32.mrb[0].mxu0
  %v2528 = vadd.f32 %v2475, %v2527
  %v2529 = vpop.f32.mrb[0].mxu0
  %v2530 = vadd.f32 %v2477, %v2529
  %v2531 = vpop.f32.mrb[0].mxu0
  %v2532 = vadd.f32 %v2479, %v2531
  %v2533 = vpop.f32.mrb[0].mxu0
  %v2534 = vadd.f32 %v2481, %v2533
  %2535 = vmatprep.mubr.bf16.mxu0 %v609
  %2536 = vmatmul.mubr.bf16.gmra.mrb[0].mxu0 %v608
  %v2537 = vpop.f32.mrb[0].mxu0
  %v2538 = vadd.f32 %v2485, %v2537
  %v2539 = vpop.f32.mrb[0].mxu0
  %v2540 = vadd.f32 %v2487, %v2539
  %v2541 = vpop.f32.mrb[0].mxu0
  %v2542 = vadd.f32 %v2489, %v2541
  %v2543 = vpop.f32.mrb[0].mxu0
  %v2544 = vadd.f32 %v2491, %v2543
  %2545 = vdwg.mxu0
  %2546 = vmatprep.subr.bf16.mxu0 %v1865
  %2547 = vmatpush1.bf16.msra.mxu0 %v1864
  %2548 = vmatprep.subr.bf16.mxu0 %v1868
  %2549 = vmatpush1.bf16.msra.mxu0 %v1867
  %2550 = vmatprep.subr.bf16.mxu0 %v1871
  %2551 = vmatpush1.bf16.msra.mxu0 %v1870
  %2552 = vmatprep.subr.bf16.mxu0 %v1874
  %2553 = vmatpush1.bf16.msra.mxu0 %v1873
  %2554 = vmatprep.subr.bf16.mxu0 %v1877
  %2555 = vmatpush1.bf16.msra.mxu0 %v1876
  %2556 = vmatprep.subr.bf16.mxu0 %v1880
  %2557 = vmatpush1.bf16.msra.mxu0 %v1879
  %2558 = vmatprep.subr.bf16.mxu0 %v1883
  %2559 = vmatpush1.bf16.msra.mxu0 %v1882
  %2560 = vmatprep.subr.bf16.mxu0 %v1886
  %2561 = vmatpush1.bf16.msra.mxu0 %v1885
  %2562 = vmatprep.subr.bf16.mxu0 %v1889
  %2563 = vmatpush1.bf16.msra.mxu0 %v1888
  %2564 = vmatprep.subr.bf16.mxu0 %v1892
  %2565 = vmatpush1.bf16.msra.mxu0 %v1891
  %2566 = vmatprep.subr.bf16.mxu0 %v1895
  %2567 = vmatpush1.bf16.msra.mxu0 %v1894
  %2568 = vmatprep.subr.bf16.mxu0 %v1898
  %2569 = vmatpush1.bf16.msra.mxu0 %v1897
  %2570 = vmatprep.subr.bf16.mxu0 %v1901
  %2571 = vmatpush1.bf16.msra.mxu0 %v1900
  %2572 = vmatprep.subr.bf16.mxu0 %v1904
  %2573 = vmatpush1.bf16.msra.mxu0 %v1903
  %2574 = vmatprep.subr.bf16.mxu0 %v1907
  %2575 = vmatpush1.bf16.msra.mxu0 %v1906
  %2576 = vmatprep.subr.bf16.mxu0 %v1910
  %2577 = vmatpush1.bf16.msra.mxu0 %v1909
  %2578 = vmatprep.mubr.bf16.mxu0 %v597
  %2579 = vmatmul.mubr.bf16.gmra.mrb[0].mxu0 %v596
  %v2580 = vpop.f32.mrb[0].mxu0
  %v2581 = vadd.f32 %v2528, %v2580
  %v2582 = vpop.f32.mrb[0].mxu0
  %v2583 = vadd.f32 %v2530, %v2582
  %v2584 = vpop.f32.mrb[0].mxu0
  %v2585 = vadd.f32 %v2532, %v2584
  %v2586 = vpop.f32.mrb[0].mxu0
  %v2587 = vadd.f32 %v2534, %v2586
  %2588 = vmatprep.mubr.bf16.mxu0 %v611
  %2589 = vmatmul.mubr.bf16.gmra.mrb[0].mxu0 %v610
  %v2590 = vpop.f32.mrb[0].mxu0
  %v2591 = vadd.f32 %v2538, %v2590
  %v2592 = vpop.f32.mrb[0].mxu0
  %v2593 = vadd.f32 %v2540, %v2592
  %v2594 = vpop.f32.mrb[0].mxu0
  %v2595 = vadd.f32 %v2542, %v2594
  %v2596 = vpop.f32.mrb[0].mxu0
  %v2597 = vadd.f32 %v2544, %v2596
  %2598 = vdwg.mxu0
  %2599 = vmatprep.subr.bf16.mxu0 %v1913
  %2600 = vmatpush1.bf16.msra.mxu0 %v1912
  %2601 = vmatprep.subr.bf16.mxu0 %v1916
  %2602 = vmatpush1.bf16.msra.mxu0 %v1915
  %2603 = vmatprep.subr.bf16.mxu0 %v1919
  %2604 = vmatpush1.bf16.msra.mxu0 %v1918
  %2605 = vmatprep.subr.bf16.mxu0 %v1922
  %2606 = vmatpush1.bf16.msra.mxu0 %v1921
  %2607 = vmatprep.subr.bf16.mxu0 %v1925
  %2608 = vmatpush1.bf16.msra.mxu0 %v1924
  %2609 = vmatprep.subr.bf16.mxu0 %v1928
  %2610 = vmatpush1.bf16.msra.mxu0 %v1927
  %2611 = vmatprep.subr.bf16.mxu0 %v1931
  %2612 = vmatpush1.bf16.msra.mxu0 %v1930
  %2613 = vmatprep.subr.bf16.mxu0 %v1934
  %2614 = vmatpush1.bf16.msra.mxu0 %v1933
  %2615 = vmatprep.subr.bf16.mxu0 %v1937
  %2616 = vmatpush1.bf16.msra.mxu0 %v1936
  %2617 = vmatprep.subr.bf16.mxu0 %v1940
  %2618 = vmatpush1.bf16.msra.mxu0 %v1939
  %2619 = vmatprep.subr.bf16.mxu0 %v1943
  %2620 = vmatpush1.bf16.msra.mxu0 %v1942
  %2621 = vmatprep.subr.bf16.mxu0 %v1946
  %2622 = vmatpush1.bf16.msra.mxu0 %v1945
  %2623 = vmatprep.subr.bf16.mxu0 %v1949
  %2624 = vmatpush1.bf16.msra.mxu0 %v1948
  %2625 = vmatprep.subr.bf16.mxu0 %v1952
  %2626 = vmatpush1.bf16.msra.mxu0 %v1951
  %2627 = vmatprep.subr.bf16.mxu0 %v1955
  %2628 = vmatpush1.bf16.msra.mxu0 %v1954
  %2629 = vmatprep.subr.bf16.mxu0 %v1958
  %2630 = vmatpush1.bf16.msra.mxu0 %v1957
  %2631 = vmatprep.mubr.bf16.mxu0 %v599
  %2632 = vmatmul.mubr.bf16.gmra.mrb[0].mxu0 %v598
  %v2633 = vpop.f32.mrb[0].mxu0
  %v2634 = vadd.f32 %v2581, %v2633
  %v2635 = vpop.f32.mrb[0].mxu0
  %v2636 = vadd.f32 %v2583, %v2635
  %v2637 = vpop.f32.mrb[0].mxu0
  %v2638 = vadd.f32 %v2585, %v2637
  %v2639 = vpop.f32.mrb[0].mxu0
  %v2640 = vadd.f32 %v2587, %v2639
  %2641 = vmatprep.mubr.bf16.mxu0 %v613
  %2642 = vmatmul.mubr.bf16.gmra.mrb[0].mxu0 %v612
  %v2643 = vpop.f32.mrb[0].mxu0
  %v2644 = vadd.f32 %v2591, %v2643
  %v2645 = vpop.f32.mrb[0].mxu0
  %v2646 = vadd.f32 %v2593, %v2645
  %v2647 = vpop.f32.mrb[0].mxu0
  %v2648 = vadd.f32 %v2595, %v2647
  %v2649 = vpop.f32.mrb[0].mxu0
  %v2650 = vadd.f32 %v2597, %v2649
  %2651 = vdwg.mxu0
  %2652 = vmatprep.subr.bf16.mxu0 %v1961
  %2653 = vmatpush1.bf16.msra.mxu0 %v1960
  %2654 = vmatprep.subr.bf16.mxu0 %v1964
  %2655 = vmatpush1.bf16.msra.mxu0 %v1963
  %2656 = vmatprep.subr.bf16.mxu0 %v1967
  %2657 = vmatpush1.bf16.msra.mxu0 %v1966
  %2658 = vmatprep.subr.bf16.mxu0 %v1970
  %2659 = vmatpush1.bf16.msra.mxu0 %v1969
  %2660 = vmatprep.subr.bf16.mxu0 %v1973
  %2661 = vmatpush1.bf16.msra.mxu0 %v1972
  %2662 = vmatprep.subr.bf16.mxu0 %v1976
  %2663 = vmatpush1.bf16.msra.mxu0 %v1975
  %2664 = vmatprep.subr.bf16.mxu0 %v1979
  %2665 = vmatpush1.bf16.msra.mxu0 %v1978
  %2666 = vmatprep.subr.bf16.mxu0 %v1982
  %2667 = vmatpush1.bf16.msra.mxu0 %v1981
  %2668 = vmatprep.subr.bf16.mxu0 %v1985
  %2669 = vmatpush1.bf16.msra.mxu0 %v1984
  %2670 = vmatprep.subr.bf16.mxu0 %v1988
  %2671 = vmatpush1.bf16.msra.mxu0 %v1987
  %2672 = vmatprep.subr.bf16.mxu0 %v1991
  %2673 = vmatpush1.bf16.msra.mxu0 %v1990
  %2674 = vmatprep.subr.bf16.mxu0 %v1994
  %2675 = vmatpush1.bf16.msra.mxu0 %v1993
  %2676 = vmatprep.subr.bf16.mxu0 %v1997
  %2677 = vmatpush1.bf16.msra.mxu0 %v1996
  %2678 = vmatprep.subr.bf16.mxu0 %v2000
  %2679 = vmatpush1.bf16.msra.mxu0 %v1999
  %2680 = vmatprep.subr.bf16.mxu0 %v2003
  %2681 = vmatpush1.bf16.msra.mxu0 %v2002
  %2682 = vmatprep.subr.bf16.mxu0 %v2006
  %2683 = vmatpush1.bf16.msra.mxu0 %v2005
  %2684 = vmatprep.mubr.bf16.mxu0 %v601
  %2685 = vmatmul.mubr.bf16.gmra.mrb[0].mxu0 %v600
  %v2686 = vpop.f32.mrb[0].mxu0
  %v2687 = vadd.f32 %v2634, %v2686
  %v2688 = vpop.f32.mrb[0].mxu0
  %v2689 = vadd.f32 %v2636, %v2688
  %v2690 = vpop.f32.mrb[0].mxu0
  %v2691 = vadd.f32 %v2638, %v2690
  %v2692 = vpop.f32.mrb[0].mxu0
  %v2693 = vadd.f32 %v2640, %v2692
  %2694 = vmatprep.mubr.bf16.mxu0 %v615
  %2695 = vmatmul.mubr.bf16.gmra.mrb[0].mxu0 %v614
  %v2696 = vpop.f32.mrb[0].mxu0
  %v2697 = vadd.f32 %v2644, %v2696
  %v2698 = vpop.f32.mrb[0].mxu0
  %v2699 = vadd.f32 %v2646, %v2698
  %v2700 = vpop.f32.mrb[0].mxu0
  %v2701 = vadd.f32 %v2648, %v2700
  %v2702 = vpop.f32.mrb[0].mxu0
  %v2703 = vadd.f32 %v2650, %v2702
  %2704 = vdwg.mxu0
  %2705 = vmatprep.subr.bf16.mxu0 %v2009
  %2706 = vmatpush1.bf16.msra.mxu0 %v2008
  %2707 = vmatprep.subr.bf16.mxu0 %v2012
  %2708 = vmatpush1.bf16.msra.mxu0 %v2011
  %2709 = vmatprep.subr.bf16.mxu0 %v2015
  %2710 = vmatpush1.bf16.msra.mxu0 %v2014
  %2711 = vmatprep.subr.bf16.mxu0 %v2018
  %2712 = vmatpush1.bf16.msra.mxu0 %v2017
  %2713 = vmatprep.subr.bf16.mxu0 %v2021
  %2714 = vmatpush1.bf16.msra.mxu0 %v2020
  %2715 = vmatprep.subr.bf16.mxu0 %v2024
  %2716 = vmatpush1.bf16.msra.mxu0 %v2023
  %2717 = vmatprep.subr.bf16.mxu0 %v2027
  %2718 = vmatpush1.bf16.msra.mxu0 %v2026
  %2719 = vmatprep.subr.bf16.mxu0 %v2030
  %2720 = vmatpush1.bf16.msra.mxu0 %v2029
  %2721 = vmatprep.subr.bf16.mxu0 %v2033
  %2722 = vmatpush1.bf16.msra.mxu0 %v2032
  %2723 = vmatprep.subr.bf16.mxu0 %v2036
  %2724 = vmatpush1.bf16.msra.mxu0 %v2035
  %2725 = vmatprep.subr.bf16.mxu0 %v2039
  %2726 = vmatpush1.bf16.msra.mxu0 %v2038
  %2727 = vmatprep.subr.bf16.mxu0 %v2042
  %2728 = vmatpush1.bf16.msra.mxu0 %v2041
  %2729 = vmatprep.subr.bf16.mxu0 %v2045
  %2730 = vmatpush1.bf16.msra.mxu0 %v2044
  %2731 = vmatprep.subr.bf16.mxu0 %v2048
  %2732 = vmatpush1.bf16.msra.mxu0 %v2047
  %2733 = vmatprep.subr.bf16.mxu0 %v2051
  %2734 = vmatpush1.bf16.msra.mxu0 %v2050
  %2735 = vmatprep.subr.bf16.mxu0 %v2054
  %2736 = vmatpush1.bf16.msra.mxu0 %v2053
  %2737 = vmatprep.mubr.bf16.mxu0 %v603
  %2738 = vmatmul.mubr.bf16.gmra.mrb[0].mxu0 %v602
  %v2739 = vpop.f32.mrb[0].mxu0
  %v2740 = vadd.f32 %v2687, %v2739
  %v2741 = vpop.f32.mrb[0].mxu0
  %v2742 = vadd.f32 %v2689, %v2741
  %v2743 = vpop.f32.mrb[0].mxu0
  %v2744 = vadd.f32 %v2691, %v2743
  %v2745 = vpop.f32.mrb[0].mxu0
  %v2746 = vadd.f32 %v2693, %v2745
  %2747 = vmatprep.mubr.bf16.mxu0 %v617
  %2748 = vmatmul.mubr.bf16.gmra.mrb[0].mxu0 %v616
  %v2749 = vpop.f32.mrb[0].mxu0
  %v2750 = vadd.f32 %v2697, %v2749
  %v2751 = vpop.f32.mrb[0].mxu0
  %v2752 = vadd.f32 %v2699, %v2751
  %v2753 = vpop.f32.mrb[0].mxu0
  %v2754 = vadd.f32 %v2701, %v2753
  %v2755 = vpop.f32.mrb[0].mxu0
  %v2756 = vadd.f32 %v2703, %v2755
  %2757 = vdwg.mxu0
  %2758 = vmatprep.subr.bf16.mxu0 %v2057
  %2759 = vmatpush1.bf16.msra.mxu0 %v2056
  %2760 = vmatprep.subr.bf16.mxu0 %v2060
  %2761 = vmatpush1.bf16.msra.mxu0 %v2059
  %2762 = vmatprep.subr.bf16.mxu0 %v2063
  %2763 = vmatpush1.bf16.msra.mxu0 %v2062
  %2764 = vmatprep.subr.bf16.mxu0 %v2066
  %2765 = vmatpush1.bf16.msra.mxu0 %v2065
  %2766 = vmatprep.subr.bf16.mxu0 %v2069
  %2767 = vmatpush1.bf16.msra.mxu0 %v2068
  %2768 = vmatprep.subr.bf16.mxu0 %v2072
  %2769 = vmatpush1.bf16.msra.mxu0 %v2071
  %2770 = vmatprep.subr.bf16.mxu0 %v2075
  %2771 = vmatpush1.bf16.msra.mxu0 %v2074
  %2772 = vmatprep.subr.bf16.mxu0 %v2078
  %2773 = vmatpush1.bf16.msra.mxu0 %v2077
  %2774 = vmatprep.subr.bf16.mxu0 %v2081
  %2775 = vmatpush1.bf16.msra.mxu0 %v2080
  %2776 = vmatprep.subr.bf16.mxu0 %v2084
  %2777 = vmatpush1.bf16.msra.mxu0 %v2083
  %2778 = vmatprep.subr.bf16.mxu0 %v2087
  %2779 = vmatpush1.bf16.msra.mxu0 %v2086
  %2780 = vmatprep.subr.bf16.mxu0 %v2090
  %2781 = vmatpush1.bf16.msra.mxu0 %v2089
  %2782 = vmatprep.subr.bf16.mxu0 %v2093
  %2783 = vmatpush1.bf16.msra.mxu0 %v2092
  %2784 = vmatprep.subr.bf16.mxu0 %v2096
  %2785 = vmatpush1.bf16.msra.mxu0 %v2095
  %2786 = vmatprep.subr.bf16.mxu0 %v2099
  %2787 = vmatpush1.bf16.msra.mxu0 %v2098
  %2788 = vmatprep.subr.bf16.mxu0 %v2102
  %2789 = vmatpush1.bf16.msra.mxu0 %v2101
  %2790 = vmatprep.mubr.bf16.mxu0 %v605
  %2791 = vmatmul.mubr.bf16.gmra.mrb[0].mxu0 %v604
  %v2792 = vpop.f32.mrb[0].mxu0
  %v2793 = vadd.f32 %v2740, %v2792
  %v2794 = vpop.f32.mrb[0].mxu0
  %v2795 = vadd.f32 %v2742, %v2794
  %v2796 = vpop.f32.mrb[0].mxu0
  %v2797 = vadd.f32 %v2744, %v2796
  %v2798 = vpop.f32.mrb[0].mxu0
  %v2799 = vadd.f32 %v2746, %v2798
  %2800 = vmatprep.mubr.bf16.mxu0 %v619
  %2801 = vmatmul.mubr.bf16.gmra.mrb[0].mxu0 %v618
  %v2802 = vpop.f32.mrb[0].mxu0
  %v2803 = vadd.f32 %v2750, %v2802
  %v2804 = vpop.f32.mrb[0].mxu0
  %v2805 = vadd.f32 %v2752, %v2804
  %v2806 = vpop.f32.mrb[0].mxu0
  %v2807 = vadd.f32 %v2754, %v2806
  %v2808 = vpop.f32.mrb[0].mxu0
  %v2809 = vadd.f32 %v2756, %v2808
  %2810 = vdwg.mxu0
  %2811 = vmatprep.subr.bf16.mxu0 0
  %2812 = vmatpush1.bf16.msra.mxu0 %v1770
  %2813 = vmatprep.subr.bf16.mxu0 0
  %2814 = vmatpush1.bf16.msra.mxu0 %v1773
  %2815 = vmatprep.subr.bf16.mxu0 0
  %2816 = vmatpush1.bf16.msra.mxu0 %v1776
  %2817 = vmatprep.subr.bf16.mxu0 0
  %2818 = vmatpush1.bf16.msra.mxu0 %v1779
  %2819 = vmatprep.subr.bf16.mxu0 0
  %2820 = vmatpush1.bf16.msra.mxu0 %v1782
  %2821 = vmatprep.subr.bf16.mxu0 0
  %2822 = vmatpush1.bf16.msra.mxu0 %v1785
  %2823 = vmatprep.subr.bf16.mxu0 0
  %2824 = vmatpush1.bf16.msra.mxu0 %v1788
  %2825 = vmatprep.subr.bf16.mxu0 0
  %2826 = vmatpush1.bf16.msra.mxu0 %v1791
  %2827 = vmatprep.subr.bf16.mxu0 0
  %2828 = vmatpush1.bf16.msra.mxu0 %v1794
  %2829 = vmatprep.subr.bf16.mxu0 0
  %2830 = vmatpush1.bf16.msra.mxu0 %v1797
  %2831 = vmatprep.subr.bf16.mxu0 0
  %2832 = vmatpush1.bf16.msra.mxu0 %v1800
  %2833 = vmatprep.subr.bf16.mxu0 0
  %2834 = vmatpush1.bf16.msra.mxu0 %v1803
  %2835 = vmatprep.subr.bf16.mxu0 0
  %2836 = vmatpush1.bf16.msra.mxu0 %v1806
  %2837 = vmatprep.subr.bf16.mxu0 0
  %2838 = vmatpush1.bf16.msra.mxu0 %v1809
  %2839 = vmatprep.subr.bf16.mxu0 0
  %2840 = vmatpush1.bf16.msra.mxu0 %v1812
  %2841 = vmatprep.subr.bf16.mxu0 0
  %2842 = vmatpush1.bf16.msra.mxu0 %v1815
  %2843 = vmatprep.mubr.bf16.mxu0 %v593
  %2844 = vmatmul.mubr.bf16.gmra.mrb[0].mxu0 %v592
  %v2845 = vpop.f32.mrb[0].mxu0
  %v2846 = vadd.f32 %v504, %v2845
  %v2847 = vpop.f32.mrb[0].mxu0
  %v2848 = vpop.f32.mrb[0].mxu0
  %v2849 = vadd.f32 %v504, %v2848
  %v2850 = vpop.f32.mrb[0].mxu0
  %2851 = vmatprep.mubr.bf16.mxu0 %v607
  %2852 = vmatmul.mubr.bf16.gmra.mrb[0].mxu0 %v606
  %v2853 = vpop.f32.mrb[0].mxu0
  %v2854 = vadd.f32 %v504, %v2853
  %v2855 = vpop.f32.mrb[0].mxu0
  %v2856 = vpop.f32.mrb[0].mxu0
  %v2857 = vadd.f32 %v504, %v2856
  %v2858 = vpop.f32.mrb[0].mxu0
  %2859 = vdwg.mxu0
  %2860 = vmatprep.subr.bf16.mxu0 0
  %2861 = vmatpush1.bf16.msra.mxu0 %v1818
  %2862 = vmatprep.subr.bf16.mxu0 0
  %2863 = vmatpush1.bf16.msra.mxu0 %v1821
  %2864 = vmatprep.subr.bf16.mxu0 0
  %2865 = vmatpush1.bf16.msra.mxu0 %v1824
  %2866 = vmatprep.subr.bf16.mxu0 0
  %2867 = vmatpush1.bf16.msra.mxu0 %v1827
  %2868 = vmatprep.subr.bf16.mxu0 0
  %2869 = vmatpush1.bf16.msra.mxu0 %v1830
  %2870 = vmatprep.subr.bf16.mxu0 0
  %2871 = vmatpush1.bf16.msra.mxu0 %v1833
  %2872 = vmatprep.subr.bf16.mxu0 0
  %2873 = vmatpush1.bf16.msra.mxu0 %v1836
  %2874 = vmatprep.subr.bf16.mxu0 0
  %2875 = vmatpush1.bf16.msra.mxu0 %v1839
  %2876 = vmatprep.subr.bf16.mxu0 0
  %2877 = vmatpush1.bf16.msra.mxu0 %v1842
  %2878 = vmatprep.subr.bf16.mxu0 0
  %2879 = vmatpush1.bf16.msra.mxu0 %v1845
  %2880 = vmatprep.subr.bf16.mxu0 0
  %2881 = vmatpush1.bf16.msra.mxu0 %v1848
  %2882 = vmatprep.subr.bf16.mxu0 0
  %2883 = vmatpush1.bf16.msra.mxu0 %v1851
  %2884 = vmatprep.subr.bf16.mxu0 0
  %2885 = vmatpush1.bf16.msra.mxu0 %v1854
  %2886 = vmatprep.subr.bf16.mxu0 0
  %2887 = vmatpush1.bf16.msra.mxu0 %v1857
  %2888 = vmatprep.subr.bf16.mxu0 0
  %2889 = vmatpush1.bf16.msra.mxu0 %v1860
  %2890 = vmatprep.subr.bf16.mxu0 0
  %2891 = vmatpush1.bf16.msra.mxu0 %v1863
  %2892 = vmatprep.mubr.bf16.mxu0 %v595
  %2893 = vmatmul.mubr.bf16.gmra.mrb[0].mxu0 %v594
  %v2894 = vpop.f32.mrb[0].mxu0
  %v2895 = vadd.f32 %v2846, %v2894
  %v2896 = vpop.f32.mrb[0].mxu0
  %v2897 = vpop.f32.mrb[0].mxu0
  %v2898 = vadd.f32 %v2849, %v2897
  %v2899 = vpop.f32.mrb[0].mxu0
  %2900 = vmatprep.mubr.bf16.mxu0 %v609
  %2901 = vmatmul.mubr.bf16.gmra.mrb[0].mxu0 %v608
  %v2902 = vpop.f32.mrb[0].mxu0
  %v2903 = vadd.f32 %v2854, %v2902
  %v2904 = vpop.f32.mrb[0].mxu0
  %v2905 = vpop.f32.mrb[0].mxu0
  %v2906 = vadd.f32 %v2857, %v2905
  %v2907 = vpop.f32.mrb[0].mxu0
  %2908 = vdwg.mxu0
  %2909 = vmatprep.subr.bf16.mxu0 0
  %2910 = vmatpush1.bf16.msra.mxu0 %v1866
  %2911 = vmatprep.subr.bf16.mxu0 0
  %2912 = vmatpush1.bf16.msra.mxu0 %v1869
  %2913 = vmatprep.subr.bf16.mxu0 0
  %2914 = vmatpush1.bf16.msra.mxu0 %v1872
  %2915 = vmatprep.subr.bf16.mxu0 0
  %2916 = vmatpush1.bf16.msra.mxu0 %v1875
  %2917 = vmatprep.subr.bf16.mxu0 0
  %2918 = vmatpush1.bf16.msra.mxu0 %v1878
  %2919 = vmatprep.subr.bf16.mxu0 0
  %2920 = vmatpush1.bf16.msra.mxu0 %v1881
  %2921 = vmatprep.subr.bf16.mxu0 0
  %2922 = vmatpush1.bf16.msra.mxu0 %v1884
  %2923 = vmatprep.subr.bf16.mxu0 0
  %2924 = vmatpush1.bf16.msra.mxu0 %v1887
  %2925 = vmatprep.subr.bf16.mxu0 0
  %2926 = vmatpush1.bf16.msra.mxu0 %v1890
  %2927 = vmatprep.subr.bf16.mxu0 0
  %2928 = vmatpush1.bf16.msra.mxu0 %v1893
  %2929 = vmatprep.subr.bf16.mxu0 0
  %2930 = vmatpush1.bf16.msra.mxu0 %v1896
  %2931 = vmatprep.subr.bf16.mxu0 0
  %2932 = vmatpush1.bf16.msra.mxu0 %v1899
  %2933 = vmatprep.subr.bf16.mxu0 0
  %2934 = vmatpush1.bf16.msra.mxu0 %v1902
  %2935 = vmatprep.subr.bf16.mxu0 0
  %2936 = vmatpush1.bf16.msra.mxu0 %v1905
  %2937 = vmatprep.subr.bf16.mxu0 0
  %2938 = vmatpush1.bf16.msra.mxu0 %v1908
  %2939 = vmatprep.subr.bf16.mxu0 0
  %2940 = vmatpush1.bf16.msra.mxu0 %v1911
  %2941 = vmatprep.mubr.bf16.mxu0 %v597
  %2942 = vmatmul.mubr.bf16.gmra.mrb[0].mxu0 %v596
  %v2943 = vpop.f32.mrb[0].mxu0
  %v2944 = vadd.f32 %v2895, %v2943
  %v2945 = vpop.f32.mrb[0].mxu0
  %v2946 = vpop.f32.mrb[0].mxu0
  %v2947 = vadd.f32 %v2898, %v2946
  %v2948 = vpop.f32.mrb[0].mxu0
  %2949 = vmatprep.mubr.bf16.mxu0 %v611
  %2950 = vmatmul.mubr.bf16.gmra.mrb[0].mxu0 %v610
  %v2951 = vpop.f32.mrb[0].mxu0
  %v2952 = vadd.f32 %v2903, %v2951
  %v2953 = vpop.f32.mrb[0].mxu0
  %v2954 = vpop.f32.mrb[0].mxu0
  %v2955 = vadd.f32 %v2906, %v2954
  %v2956 = vpop.f32.mrb[0].mxu0
  %2957 = vdwg.mxu0
  %2958 = vmatprep.subr.bf16.mxu0 0
  %2959 = vmatpush1.bf16.msra.mxu0 %v1914
  %2960 = vmatprep.subr.bf16.mxu0 0
  %2961 = vmatpush1.bf16.msra.mxu0 %v1917
  %2962 = vmatprep.subr.bf16.mxu0 0
  %2963 = vmatpush1.bf16.msra.mxu0 %v1920
  %2964 = vmatprep.subr.bf16.mxu0 0
  %2965 = vmatpush1.bf16.msra.mxu0 %v1923
  %2966 = vmatprep.subr.bf16.mxu0 0
  %2967 = vmatpush1.bf16.msra.mxu0 %v1926
  %2968 = vmatprep.subr.bf16.mxu0 0
  %2969 = vmatpush1.bf16.msra.mxu0 %v1929
  %2970 = vmatprep.subr.bf16.mxu0 0
  %2971 = vmatpush1.bf16.msra.mxu0 %v1932
  %2972 = vmatprep.subr.bf16.mxu0 0
  %2973 = vmatpush1.bf16.msra.mxu0 %v1935
  %2974 = vmatprep.subr.bf16.mxu0 0
  %2975 = vmatpush1.bf16.msra.mxu0 %v1938
  %2976 = vmatprep.subr.bf16.mxu0 0
  %2977 = vmatpush1.bf16.msra.mxu0 %v1941
  %2978 = vmatprep.subr.bf16.mxu0 0
  %2979 = vmatpush1.bf16.msra.mxu0 %v1944
  %2980 = vmatprep.subr.bf16.mxu0 0
  %2981 = vmatpush1.bf16.msra.mxu0 %v1947
  %2982 = vmatprep.subr.bf16.mxu0 0
  %2983 = vmatpush1.bf16.msra.mxu0 %v1950
  %2984 = vmatprep.subr.bf16.mxu0 0
  %2985 = vmatpush1.bf16.msra.mxu0 %v1953
  %2986 = vmatprep.subr.bf16.mxu0 0
  %2987 = vmatpush1.bf16.msra.mxu0 %v1956
  %2988 = vmatprep.subr.bf16.mxu0 0
  %2989 = vmatpush1.bf16.msra.mxu0 %v1959
  %2990 = vmatprep.mubr.bf16.mxu0 %v599
  %2991 = vmatmul.mubr.bf16.gmra.mrb[0].mxu0 %v598
  %v2992 = vpop.f32.mrb[0].mxu0
  %v2993 = vadd.f32 %v2944, %v2992
  %v2994 = vpop.f32.mrb[0].mxu0
  %v2995 = vpop.f32.mrb[0].mxu0
  %v2996 = vadd.f32 %v2947, %v2995
  %v2997 = vpop.f32.mrb[0].mxu0
  %2998 = vmatprep.mubr.bf16.mxu0 %v613
  %2999 = vmatmul.mubr.bf16.gmra.mrb[0].mxu0 %v612
  %v3000 = vpop.f32.mrb[0].mxu0
  %v3001 = vadd.f32 %v2952, %v3000
  %v3002 = vpop.f32.mrb[0].mxu0
  %v3003 = vpop.f32.mrb[0].mxu0
  %v3004 = vadd.f32 %v2955, %v3003
  %v3005 = vpop.f32.mrb[0].mxu0
  %3006 = vdwg.mxu0
  %3007 = vmatprep.subr.bf16.mxu0 0
  %3008 = vmatpush1.bf16.msra.mxu0 %v1962
  %3009 = vmatprep.subr.bf16.mxu0 0
  %3010 = vmatpush1.bf16.msra.mxu0 %v1965
  %3011 = vmatprep.subr.bf16.mxu0 0
  %3012 = vmatpush1.bf16.msra.mxu0 %v1968
  %3013 = vmatprep.subr.bf16.mxu0 0
  %3014 = vmatpush1.bf16.msra.mxu0 %v1971
  %3015 = vmatprep.subr.bf16.mxu0 0
  %3016 = vmatpush1.bf16.msra.mxu0 %v1974
  %3017 = vmatprep.subr.bf16.mxu0 0
  %3018 = vmatpush1.bf16.msra.mxu0 %v1977
  %3019 = vmatprep.subr.bf16.mxu0 0
  %3020 = vmatpush1.bf16.msra.mxu0 %v1980
  %3021 = vmatprep.subr.bf16.mxu0 0
  %3022 = vmatpush1.bf16.msra.mxu0 %v1983
  %3023 = vmatprep.subr.bf16.mxu0 0
  %3024 = vmatpush1.bf16.msra.mxu0 %v1986
  %3025 = vmatprep.subr.bf16.mxu0 0
  %3026 = vmatpush1.bf16.msra.mxu0 %v1989
  %3027 = vmatprep.subr.bf16.mxu0 0
  %3028 = vmatpush1.bf16.msra.mxu0 %v1992
  %3029 = vmatprep.subr.bf16.mxu0 0
  %3030 = vmatpush1.bf16.msra.mxu0 %v1995
  %3031 = vmatprep.subr.bf16.mxu0 0
  %3032 = vmatpush1.bf16.msra.mxu0 %v1998
  %3033 = vmatprep.subr.bf16.mxu0 0
  %3034 = vmatpush1.bf16.msra.mxu0 %v2001
  %3035 = vmatprep.subr.bf16.mxu0 0
  %3036 = vmatpush1.bf16.msra.mxu0 %v2004
  %3037 = vmatprep.subr.bf16.mxu0 0
  %3038 = vmatpush1.bf16.msra.mxu0 %v2007
  %3039 = vmatprep.mubr.bf16.mxu0 %v601
  %3040 = vmatmul.mubr.bf16.gmra.mrb[0].mxu0 %v600
  %v3041 = vpop.f32.mrb[0].mxu0
  %v3042 = vadd.f32 %v2993, %v3041
  %v3043 = vpop.f32.mrb[0].mxu0
  %v3044 = vpop.f32.mrb[0].mxu0
  %v3045 = vadd.f32 %v2996, %v3044
  %v3046 = vpop.f32.mrb[0].mxu0
  %3047 = vmatprep.mubr.bf16.mxu0 %v615
  %3048 = vmatmul.mubr.bf16.gmra.mrb[0].mxu0 %v614
  %v3049 = vpop.f32.mrb[0].mxu0
  %v3050 = vadd.f32 %v3001, %v3049
  %v3051 = vpop.f32.mrb[0].mxu0
  %v3052 = vpop.f32.mrb[0].mxu0
  %v3053 = vadd.f32 %v3004, %v3052
  %v3054 = vpop.f32.mrb[0].mxu0
  %3055 = vdwg.mxu0
  %3056 = vmatprep.subr.bf16.mxu0 0
  %3057 = vmatpush1.bf16.msra.mxu0 %v2010
  %3058 = vmatprep.subr.bf16.mxu0 0
  %3059 = vmatpush1.bf16.msra.mxu0 %v2013
  %3060 = vmatprep.subr.bf16.mxu0 0
  %3061 = vmatpush1.bf16.msra.mxu0 %v2016
  %3062 = vmatprep.subr.bf16.mxu0 0
  %3063 = vmatpush1.bf16.msra.mxu0 %v2019
  %3064 = vmatprep.subr.bf16.mxu0 0
  %3065 = vmatpush1.bf16.msra.mxu0 %v2022
  %3066 = vmatprep.subr.bf16.mxu0 0
  %3067 = vmatpush1.bf16.msra.mxu0 %v2025
  %3068 = vmatprep.subr.bf16.mxu0 0
  %3069 = vmatpush1.bf16.msra.mxu0 %v2028
  %3070 = vmatprep.subr.bf16.mxu0 0
  %3071 = vmatpush1.bf16.msra.mxu0 %v2031
  %3072 = vmatprep.subr.bf16.mxu0 0
  %3073 = vmatpush1.bf16.msra.mxu0 %v2034
  %3074 = vmatprep.subr.bf16.mxu0 0
  %3075 = vmatpush1.bf16.msra.mxu0 %v2037
  %3076 = vmatprep.subr.bf16.mxu0 0
  %3077 = vmatpush1.bf16.msra.mxu0 %v2040
  %3078 = vmatprep.subr.bf16.mxu0 0
  %3079 = vmatpush1.bf16.msra.mxu0 %v2043
  %3080 = vmatprep.subr.bf16.mxu0 0
  %3081 = vmatpush1.bf16.msra.mxu0 %v2046
  %3082 = vmatprep.subr.bf16.mxu0 0
  %3083 = vmatpush1.bf16.msra.mxu0 %v2049
  %3084 = vmatprep.subr.bf16.mxu0 0
  %3085 = vmatpush1.bf16.msra.mxu0 %v2052
  %3086 = vmatprep.subr.bf16.mxu0 0
  %3087 = vmatpush1.bf16.msra.mxu0 %v2055
  %3088 = vmatprep.mubr.bf16.mxu0 %v603
  %3089 = vmatmul.mubr.bf16.gmra.mrb[0].mxu0 %v602
  %v3090 = vpop.f32.mrb[0].mxu0
  %v3091 = vadd.f32 %v3042, %v3090
  %v3092 = vpop.f32.mrb[0].mxu0
  %v3093 = vpop.f32.mrb[0].mxu0
  %v3094 = vadd.f32 %v3045, %v3093
  %v3095 = vpop.f32.mrb[0].mxu0
  %3096 = vmatprep.mubr.bf16.mxu0 %v617
  %3097 = vmatmul.mubr.bf16.gmra.mrb[0].mxu0 %v616
  %v3098 = vpop.f32.mrb[0].mxu0
  %v3099 = vadd.f32 %v3050, %v3098
  %v3100 = vpop.f32.mrb[0].mxu0
  %v3101 = vpop.f32.mrb[0].mxu0
  %v3102 = vadd.f32 %v3053, %v3101
  %v3103 = vpop.f32.mrb[0].mxu0
  %3104 = vdwg.mxu0
  %3105 = vmatprep.subr.bf16.mxu0 0
  %3106 = vmatpush1.bf16.msra.mxu0 %v2058
  %3107 = vmatprep.subr.bf16.mxu0 0
  %3108 = vmatpush1.bf16.msra.mxu0 %v2061
  %3109 = vmatprep.subr.bf16.mxu0 0
  %3110 = vmatpush1.bf16.msra.mxu0 %v2064
  %3111 = vmatprep.subr.bf16.mxu0 0
  %3112 = vmatpush1.bf16.msra.mxu0 %v2067
  %3113 = vmatprep.subr.bf16.mxu0 0
  %3114 = vmatpush1.bf16.msra.mxu0 %v2070
  %3115 = vmatprep.subr.bf16.mxu0 0
  %3116 = vmatpush1.bf16.msra.mxu0 %v2073
  %3117 = vmatprep.subr.bf16.mxu0 0
  %3118 = vmatpush1.bf16.msra.mxu0 %v2076
  %3119 = vmatprep.subr.bf16.mxu0 0
  %3120 = vmatpush1.bf16.msra.mxu0 %v2079
  %3121 = vmatprep.subr.bf16.mxu0 0
  %3122 = vmatpush1.bf16.msra.mxu0 %v2082
  %3123 = vmatprep.subr.bf16.mxu0 0
  %3124 = vmatpush1.bf16.msra.mxu0 %v2085
  %3125 = vmatprep.subr.bf16.mxu0 0
  %3126 = vmatpush1.bf16.msra.mxu0 %v2088
  %3127 = vmatprep.subr.bf16.mxu0 0
  %3128 = vmatpush1.bf16.msra.mxu0 %v2091
  %3129 = vmatprep.subr.bf16.mxu0 0
  %3130 = vmatpush1.bf16.msra.mxu0 %v2094
  %3131 = vmatprep.subr.bf16.mxu0 0
  %3132 = vmatpush1.bf16.msra.mxu0 %v2097
  %3133 = vmatprep.subr.bf16.mxu0 0
  %3134 = vmatpush1.bf16.msra.mxu0 %v2100
  %3135 = vmatprep.subr.bf16.mxu0 0
  %3136 = vmatpush1.bf16.msra.mxu0 %v2103
  %3137 = vmatprep.mubr.bf16.mxu0 %v605
  %3138 = vmatmul.mubr.bf16.gmra.mrb[0].mxu0 %v604
  %v3139 = vpop.f32.mrb[0].mxu0
  %v3140 = vadd.f32 %v3091, %v3139
  %v3141 = vpop.f32.mrb[0].mxu0
  %v3142 = vpop.f32.mrb[0].mxu0
  %v3143 = vadd.f32 %v3094, %v3142
  %v3144 = vpop.f32.mrb[0].mxu0
  %3145 = vmatprep.mubr.bf16.mxu0 %v619
  %3146 = vmatmul.mubr.bf16.gmra.mrb[0].mxu0 %v618
  %v3147 = vpop.f32.mrb[0].mxu0
  %v3148 = vadd.f32 %v3099, %v3147
  %v3149 = vpop.f32.mrb[0].mxu0
  %v3150 = vpop.f32.mrb[0].mxu0
  %v3151 = vadd.f32 %v3102, %v3150
  %v3152 = vpop.f32.mrb[0].mxu0
  %3153 = vdwg.mxu0
  %v3154 = vmax.f32 %v2793, 0.0
  %v3155 = vmax.f32 %v2795, 0.0
  %v3156 = vmax.f32 %v3140, 0.0
  %v3157 = vmax.f32 %v2797, 0.0
  %v3158 = vmax.f32 %v2799, 0.0
  %v3159 = vmax.f32 %v3143, 0.0
  %v3160 = vmax.f32 %v2803, 0.0
  %v3161 = vmax.f32 %v2805, 0.0
  %v3162 = vmax.f32 %v3148, 0.0
  %v3163 = vmax.f32 %v2807, 0.0
  %v3164 = vmax.f32 %v2809, 0.0
  %v3165 = vmax.f32 %v3151, 0.0
  %v3166 = vpack.c.bf16 %v3157, %v3154
  %v3167 = vpack.c.bf16 %v3158, %v3155
  %v3168 = vpack.c.bf16 %v3159, %v3156
  %v3169 = vpack.c.bf16 %v3163, %v3160
  %v3170 = vpack.c.bf16 %v3164, %v3161
  %v3171 = vpack.c.bf16 %v3165, %v3162
  %v3178 = vunpack.c.l.b16 %v3166
  %v3179 = vunpack.c.l.b16 %v3167
  %v3180 = vunpack.c.l.b16 %v3168
  %v3181 = vunpack.c.h.b16 %v3166
  %v3182 = vunpack.c.h.b16 %v3167
  %v3183 = vunpack.c.h.b16 %v3168
  %v3184 = vunpack.c.l.b16 %v3169
  %v3185 = vunpack.c.l.b16 %v3170
  %v3186 = vunpack.c.l.b16 %v3171
  %v3187 = vunpack.c.h.b16 %v3169
  %v3188 = vunpack.c.h.b16 %v3170
  %v3189 = vunpack.c.h.b16 %v3171
  %v3190 = vpack.c.b16 %v3179, %v3178
  %v3191 = vpack.c.b16 %v3180, %v3180
  %v3192 = vpack.c.b16 %v3182, %v3181
  %v3193 = vpack.c.b16 %v3183, %v3183
  %v3194 = vpack.c.b16 %v3185, %v3184
  %v3195 = vpack.c.b16 %v3186, %v3186
  %v3196 = vpack.c.b16 %v3188, %v3187
  %v3197 = vpack.c.b16 %v3189, %v3189
  %3206 = vst [vmem:[%s3] sm:$0xff] %v3190
  %3207 = vst [vmem:[%s3 + $0x8] sm:$0xf] %v3191
  %3208 = vst [vmem:[%s3 + $0xc] sm:$0xff] %v3192
  %3209 = vst [vmem:[%s3 + $0x14] sm:$0xf] %v3193
  %3210 = vst [vmem:[%s3 + $0x18] sm:$0xff] %v3194
  %3211 = vst [vmem:[%s3 + $0x20] sm:$0xf] %v3195
  %3212 = vst [vmem:[%s3 + $0x24] sm:$0xff] %v3196
  %3213 = vst [vmem:[%s3 + $0x2c] sm:$0xf] %v3197
  // Predicated region
  $region14: #{alexnet_forward.12} parent=0 // pred_check
    _
  $region15: #{alexnet_forward.12} parent=0 // pred_check_branch
    %3215 = sbr.rel (0) target = $region17
  $region16: #{alexnet_forward.12} parent=0 // pred_region
    _
  $region17: #{alexnet_forward.12} parent=0 // pred_fallthru
    _
  // Predicated region
  $region18: #{alexnet_forward.12} parent=0 // pred_check
    _
  $region19: #{alexnet_forward.12} parent=0 // pred_check_branch
    %3217 = sbr.rel (0) target = $region21
  $region20: #{alexnet_forward.12} parent=0 // pred_region
    _
  $region21: #{alexnet_forward.12} parent=0 // pred_fallthru
    _

// kernel: alexnet_forward.13
$region0: #{alexnet_forward.13}
  #allocation0 [shape = 'u32[]', space=smem, size = 0x4, offset = 0x4, fixed_abs, tag = 'smem constant byte address 0x4 - core index']
  #allocation1 [shape = 'u32[144,128]{1,0:T(1,128)}', space=vmem, size = 0x12000, scoped, tag = 'internal scratch']
  %s0 = inlined_call_operand.vmem [shape: bf16[32,3456], index: 0, kind: input, shape index: {}]
  %s1 = inlined_call_operand.vmem [shape: bf16[3456,256], index: 1, kind: input, shape index: {}]
  %s2 = inlined_call_operand.vmem [shape: f32[1,256], index: 2, kind: input, shape index: {}]
  %s3 = inlined_call_operand.vmem [shape: bf16[32,256], index: 3, kind: output, shape index: {}]
  %s4 = sld [smem:[#allocation0]]
  $region22: #{alexnet_forward.13} parent=0
    _
  %s6 = ssub.s32 1, %s4
  %s7 = scalar_select 0, %s6, %s4
  // Predicated region
  $region2: #{alexnet_forward.13} parent=0 // pred_check
    _
  $region3: #{alexnet_forward.13} parent=0 // pred_check_branch
    %9 = sbr.rel (0) target = $region5
  $region4: #{alexnet_forward.13} parent=0 // pred_region
    _
  $region5: #{alexnet_forward.13} parent=0 // pred_fallthru
    _
  // Predicated region
  $region6: #{alexnet_forward.13} parent=0 // pred_check
    _
  $region7: #{alexnet_forward.13} parent=0 // pred_check_branch
    %11 = sbr.rel (0) target = $region9
  $region8: #{alexnet_forward.13} parent=0 // pred_region
    _
  $region9: #{alexnet_forward.13} parent=0 // pred_fallthru
    _
  // Predicated region
  $region10: #{alexnet_forward.13} parent=0 // pred_check
    _
  $region11: #{alexnet_forward.13} parent=0 // pred_check_branch
    %13 = sbr.rel (0) target = $region13
  $region12: #{alexnet_forward.13} parent=0 // pred_region
    _
  $region13: #{alexnet_forward.13} parent=0 // pred_fallthru
    _
  %v15 = vld [vmem:[%s0] sm:$0xff]
  %v16 = vld [vmem:[%s0 + $0x8] sm:$0xff]
  %v17 = vld [vmem:[%s0 + $0x10] sm:$0xff]
  %v18 = vld [vmem:[%s0 + $0x18] sm:$0xff]
  %v19 = vld [vmem:[%s0 + $0x20] sm:$0xff]
  %v20 = vld [vmem:[%s0 + $0x28] sm:$0xff]
  %v21 = vld [vmem:[%s0 + $0x30] sm:$0xff]
  %v22 = vld [vmem:[%s0 + $0x38] sm:$0xff]
  %v23 = vld [vmem:[%s0 + $0x40] sm:$0xff]
  %v24 = vld [vmem:[%s0 + $0x48] sm:$0xff]
  %v25 = vld [vmem:[%s0 + $0x50] sm:$0xff]
  %v26 = vld [vmem:[%s0 + $0x58] sm:$0xff]
  %v27 = vld [vmem:[%s0 + $0x60] sm:$0xff]
  %v28 = vld [vmem:[%s0 + $0x68] sm:$0xf]
  %v29 = vld [vmem:[%s0 + $0x6c] sm:$0xff]
  %v30 = vld [vmem:[%s0 + $0x74] sm:$0xff]
  %v31 = vld [vmem:[%s0 + $0x7c] sm:$0xff]
  %v32 = vld [vmem:[%s0 + $0x84] sm:$0xff]
  %v33 = vld [vmem:[%s0 + $0x8c] sm:$0xff]
  %v34 = vld [vmem:[%s0 + $0x94] sm:$0xff]
  %v35 = vld [vmem:[%s0 + $0x9c] sm:$0xff]
  %v36 = vld [vmem:[%s0 + $0xa4] sm:$0xff]
  %v37 = vld [vmem:[%s0 + $0xac] sm:$0xff]
  %v38 = vld [vmem:[%s0 + $0xb4] sm:$0xff]
  %v39 = vld [vmem:[%s0 + $0xbc] sm:$0xff]
  %v40 = vld [vmem:[%s0 + $0xc4] sm:$0xff]
  %v41 = vld [vmem:[%s0 + $0xcc] sm:$0xff]
  %v42 = vld [vmem:[%s0 + $0xd4] sm:$0xf]
  %v43 = vld [vmem:[%s0 + $0xd8] sm:$0xff]
  %v44 = vld [vmem:[%s0 + $0xe0] sm:$0xff]
  %v45 = vld [vmem:[%s0 + $0xe8] sm:$0xff]
  %v46 = vld [vmem:[%s0 + $0xf0] sm:$0xff]
  %v47 = vld [vmem:[%s0 + $0xf8] sm:$0xff]
  %v48 = vld [vmem:[%s0 + $0x100] sm:$0xff]
  %v49 = vld [vmem:[%s0 + $0x108] sm:$0xff]
  %v50 = vld [vmem:[%s0 + $0x110] sm:$0xff]
  %v51 = vld [vmem:[%s0 + $0x118] sm:$0xff]
  %v52 = vld [vmem:[%s0 + $0x120] sm:$0xff]
  %v53 = vld [vmem:[%s0 + $0x128] sm:$0xff]
  %v54 = vld [vmem:[%s0 + $0x130] sm:$0xff]
  %v55 = vld [vmem:[%s0 + $0x138] sm:$0xff]
  %v56 = vld [vmem:[%s0 + $0x140] sm:$0xf]
  %v57 = vld [vmem:[%s0 + $0x144] sm:$0xff]
  %v58 = vld [vmem:[%s0 + $0x14c] sm:$0xff]
  %v59 = vld [vmem:[%s0 + $0x154] sm:$0xff]
  %v60 = vld [vmem:[%s0 + $0x15c] sm:$0xff]
  %v61 = vld [vmem:[%s0 + $0x164] sm:$0xff]
  %v62 = vld [vmem:[%s0 + $0x16c] sm:$0xff]
  %v63 = vld [vmem:[%s0 + $0x174] sm:$0xff]
  %v64 = vld [vmem:[%s0 + $0x17c] sm:$0xff]
  %v65 = vld [vmem:[%s0 + $0x184] sm:$0xff]
  %v66 = vld [vmem:[%s0 + $0x18c] sm:$0xff]
  %v67 = vld [vmem:[%s0 + $0x194] sm:$0xff]
  %v68 = vld [vmem:[%s0 + $0x19c] sm:$0xff]
  %v69 = vld [vmem:[%s0 + $0x1a4] sm:$0xff]
  %v70 = vld [vmem:[%s0 + $0x1ac] sm:$0xf]
  %v71 = vld [vmem:[%s1] sm:$0xff]
  %v72 = vld [vmem:[%s1 + $0x8] sm:$0xff]
  %v73 = vld [vmem:[%s1 + $0x10] sm:$0xff]
  %v74 = vld [vmem:[%s1 + $0x18] sm:$0xff]
  %v75 = vld [vmem:[%s1 + $0x20] sm:$0xff]
  %v76 = vld [vmem:[%s1 + $0x28] sm:$0xff]
  %v77 = vld [vmem:[%s1 + $0x30] sm:$0xff]
  %v78 = vld [vmem:[%s1 + $0x38] sm:$0xff]
  %v79 = vld [vmem:[%s1 + $0x40] sm:$0xff]
  %v80 = vld [vmem:[%s1 + $0x48] sm:$0xff]
  %v81 = vld [vmem:[%s1 + $0x50] sm:$0xff]
  %v82 = vld [vmem:[%s1 + $0x58] sm:$0xff]
  %v83 = vld [vmem:[%s1 + $0x60] sm:$0xff]
  %v84 = vld [vmem:[%s1 + $0x68] sm:$0xff]
  %v85 = vld [vmem:[%s1 + $0x70] sm:$0xff]
  %v86 = vld [vmem:[%s1 + $0x78] sm:$0xff]
  %v87 = vld [vmem:[%s1 + $0x80] sm:$0xff]
  %v88 = vld [vmem:[%s1 + $0x88] sm:$0xff]
  %v89 = vld [vmem:[%s1 + $0x90] sm:$0xff]
  %v90 = vld [vmem:[%s1 + $0x98] sm:$0xff]
  %v91 = vld [vmem:[%s1 + $0xa0] sm:$0xff]
  %v92 = vld [vmem:[%s1 + $0xa8] sm:$0xff]
  %v93 = vld [vmem:[%s1 + $0xb0] sm:$0xff]
  %v94 = vld [vmem:[%s1 + $0xb8] sm:$0xff]
  %v95 = vld [vmem:[%s1 + $0xc0] sm:$0xff]
  %v96 = vld [vmem:[%s1 + $0xc8] sm:$0xff]
  %v97 = vld [vmem:[%s1 + $0xd0] sm:$0xff]
  %v98 = vld [vmem:[%s1 + $0xd8] sm:$0xff]
  %v99 = vld [vmem:[%s1 + $0xe0] sm:$0xff]
  %v100 = vld [vmem:[%s1 + $0xe8] sm:$0xff]
  %v101 = vld [vmem:[%s1 + $0xf0] sm:$0xff]
  %v102 = vld [vmem:[%s1 + $0xf8] sm:$0xff]
  %v103 = vld [vmem:[%s1 + $0x100] sm:$0xff]
  %v104 = vld [vmem:[%s1 + $0x108] sm:$0xff]
  %v105 = vld [vmem:[%s1 + $0x110] sm:$0xff]
  %v106 = vld [vmem:[%s1 + $0x118] sm:$0xff]
  %v107 = vld [vmem:[%s1 + $0x120] sm:$0xff]
  %v108 = vld [vmem:[%s1 + $0x128] sm:$0xff]
  %v109 = vld [vmem:[%s1 + $0x130] sm:$0xff]
  %v110 = vld [vmem:[%s1 + $0x138] sm:$0xff]
  %v111 = vld [vmem:[%s1 + $0x140] sm:$0xff]
  %v112 = vld [vmem:[%s1 + $0x148] sm:$0xff]
  %v113 = vld [vmem:[%s1 + $0x150] sm:$0xff]
  %v114 = vld [vmem:[%s1 + $0x158] sm:$0xff]
  %v115 = vld [vmem:[%s1 + $0x160] sm:$0xff]
  %v116 = vld [vmem:[%s1 + $0x168] sm:$0xff]
  %v117 = vld [vmem:[%s1 + $0x170] sm:$0xff]
  %v118 = vld [vmem:[%s1 + $0x178] sm:$0xff]
  %v119 = vld [vmem:[%s1 + $0x180] sm:$0xff]
  %v120 = vld [vmem:[%s1 + $0x188] sm:$0xff]
  %v121 = vld [vmem:[%s1 + $0x190] sm:$0xff]
  %v122 = vld [vmem:[%s1 + $0x198] sm:$0xff]
  %v123 = vld [vmem:[%s1 + $0x1a0] sm:$0xff]
  %v124 = vld [vmem:[%s1 + $0x1a8] sm:$0xff]
  %v125 = vld [vmem:[%s1 + $0x1b0] sm:$0xff]
  %v126 = vld [vmem:[%s1 + $0x1b8] sm:$0xff]
  %v127 = vld [vmem:[%s1 + $0x1c0] sm:$0xff]
  %v128 = vld [vmem:[%s1 + $0x1c8] sm:$0xff]
  %v129 = vld [vmem:[%s1 + $0x1d0] sm:$0xff]
  %v130 = vld [vmem:[%s1 + $0x1d8] sm:$0xff]
  %v131 = vld [vmem:[%s1 + $0x1e0] sm:$0xff]
  %v132 = vld [vmem:[%s1 + $0x1e8] sm:$0xff]
  %v133 = vld [vmem:[%s1 + $0x1f0] sm:$0xff]
  %v134 = vld [vmem:[%s1 + $0x1f8] sm:$0xff]
  %v135 = vld [vmem:[%s1 + $0x200] sm:$0xff]
  %v136 = vld [vmem:[%s1 + $0x208] sm:$0xff]
  %v137 = vld [vmem:[%s1 + $0x210] sm:$0xff]
  %v138 = vld [vmem:[%s1 + $0x218] sm:$0xff]
  %v139 = vld [vmem:[%s1 + $0x220] sm:$0xff]
  %v140 = vld [vmem:[%s1 + $0x228] sm:$0xff]
  %v141 = vld [vmem:[%s1 + $0x230] sm:$0xff]
  %v142 = vld [vmem:[%s1 + $0x238] sm:$0xff]
  %v143 = vld [vmem:[%s1 + $0x240] sm:$0xff]
  %v144 = vld [vmem:[%s1 + $0x248] sm:$0xff]
  %v145 = vld [vmem:[%s1 + $0x250] sm:$0xff]
  %v146 = vld [vmem:[%s1 + $0x258] sm:$0xff]
  %v147 = vld [vmem:[%s1 + $0x260] sm:$0xff]
  %v148 = vld [vmem:[%s1 + $0x268] sm:$0xff]
  %v149 = vld [vmem:[%s1 + $0x270] sm:$0xff]
  %v150 = vld [vmem:[%s1 + $0x278] sm:$0xff]
  %v151 = vld [vmem:[%s1 + $0x280] sm:$0xff]
  %v152 = vld [vmem:[%s1 + $0x288] sm:$0xff]
  %v153 = vld [vmem:[%s1 + $0x290] sm:$0xff]
  %v154 = vld [vmem:[%s1 + $0x298] sm:$0xff]
  %v155 = vld [vmem:[%s1 + $0x2a0] sm:$0xff]
  %v156 = vld [vmem:[%s1 + $0x2a8] sm:$0xff]
  %v157 = vld [vmem:[%s1 + $0x2b0] sm:$0xff]
  %v158 = vld [vmem:[%s1 + $0x2b8] sm:$0xff]
  %v159 = vld [vmem:[%s1 + $0x2c0] sm:$0xff]
  %v160 = vld [vmem:[%s1 + $0x2c8] sm:$0xff]
  %v161 = vld [vmem:[%s1 + $0x2d0] sm:$0xff]
  %v162 = vld [vmem:[%s1 + $0x2d8] sm:$0xff]
  %v163 = vld [vmem:[%s1 + $0x2e0] sm:$0xff]
  %v164 = vld [vmem:[%s1 + $0x2e8] sm:$0xff]
  %v165 = vld [vmem:[%s1 + $0x2f0] sm:$0xff]
  %v166 = vld [vmem:[%s1 + $0x2f8] sm:$0xff]
  %v167 = vld [vmem:[%s1 + $0x300] sm:$0xff]
  %v168 = vld [vmem:[%s1 + $0x308] sm:$0xff]
  %v169 = vld [vmem:[%s1 + $0x310] sm:$0xff]
  %v170 = vld [vmem:[%s1 + $0x318] sm:$0xff]
  %v171 = vld [vmem:[%s1 + $0x320] sm:$0xff]
  %v172 = vld [vmem:[%s1 + $0x328] sm:$0xff]
  %v173 = vld [vmem:[%s1 + $0x330] sm:$0xff]
  %v174 = vld [vmem:[%s1 + $0x338] sm:$0xff]
  %v175 = vld [vmem:[%s1 + $0x340] sm:$0xff]
  %v176 = vld [vmem:[%s1 + $0x348] sm:$0xff]
  %v177 = vld [vmem:[%s1 + $0x350] sm:$0xff]
  %v178 = vld [vmem:[%s1 + $0x358] sm:$0xff]
  %v179 = vld [vmem:[%s1 + $0x360] sm:$0xff]
  %v180 = vld [vmem:[%s1 + $0x368] sm:$0xff]
  %v181 = vld [vmem:[%s1 + $0x370] sm:$0xff]
  %v182 = vld [vmem:[%s1 + $0x378] sm:$0xff]
  %v183 = vld [vmem:[%s1 + $0x380] sm:$0xff]
  %v184 = vld [vmem:[%s1 + $0x388] sm:$0xff]
  %v185 = vld [vmem:[%s1 + $0x390] sm:$0xff]
  %v186 = vld [vmem:[%s1 + $0x398] sm:$0xff]
  %v187 = vld [vmem:[%s1 + $0x3a0] sm:$0xff]
  %v188 = vld [vmem:[%s1 + $0x3a8] sm:$0xff]
  %v189 = vld [vmem:[%s1 + $0x3b0] sm:$0xff]
  %v190 = vld [vmem:[%s1 + $0x3b8] sm:$0xff]
  %v191 = vld [vmem:[%s1 + $0x3c0] sm:$0xff]
  %v192 = vld [vmem:[%s1 + $0x3c8] sm:$0xff]
  %v193 = vld [vmem:[%s1 + $0x3d0] sm:$0xff]
  %v194 = vld [vmem:[%s1 + $0x3d8] sm:$0xff]
  %v195 = vld [vmem:[%s1 + $0x3e0] sm:$0xff]
  %v196 = vld [vmem:[%s1 + $0x3e8] sm:$0xff]
  %v197 = vld [vmem:[%s1 + $0x3f0] sm:$0xff]
  %v198 = vld [vmem:[%s1 + $0x3f8] sm:$0xff]
  %v199 = vld [vmem:[%s1 + $0x400] sm:$0xff]
  %v200 = vld [vmem:[%s1 + $0x408] sm:$0xff]
  %v201 = vld [vmem:[%s1 + $0x410] sm:$0xff]
  %v202 = vld [vmem:[%s1 + $0x418] sm:$0xff]
  %v203 = vld [vmem:[%s1 + $0x420] sm:$0xff]
  %v204 = vld [vmem:[%s1 + $0x428] sm:$0xff]
  %v205 = vld [vmem:[%s1 + $0x430] sm:$0xff]
  %v206 = vld [vmem:[%s1 + $0x438] sm:$0xff]
  %v207 = vld [vmem:[%s1 + $0x440] sm:$0xff]
  %v208 = vld [vmem:[%s1 + $0x448] sm:$0xff]
  %v209 = vld [vmem:[%s1 + $0x450] sm:$0xff]
  %v210 = vld [vmem:[%s1 + $0x458] sm:$0xff]
  %v211 = vld [vmem:[%s1 + $0x460] sm:$0xff]
  %v212 = vld [vmem:[%s1 + $0x468] sm:$0xff]
  %v213 = vld [vmem:[%s1 + $0x470] sm:$0xff]
  %v214 = vld [vmem:[%s1 + $0x478] sm:$0xff]
  %v215 = vld [vmem:[%s1 + $0x480] sm:$0xff]
  %v216 = vld [vmem:[%s1 + $0x488] sm:$0xff]
  %v217 = vld [vmem:[%s1 + $0x490] sm:$0xff]
  %v218 = vld [vmem:[%s1 + $0x498] sm:$0xff]
  %v219 = vld [vmem:[%s1 + $0x4a0] sm:$0xff]
  %v220 = vld [vmem:[%s1 + $0x4a8] sm:$0xff]
  %v221 = vld [vmem:[%s1 + $0x4b0] sm:$0xff]
  %v222 = vld [vmem:[%s1 + $0x4b8] sm:$0xff]
  %v223 = vld [vmem:[%s1 + $0x4c0] sm:$0xff]
  %v224 = vld [vmem:[%s1 + $0x4c8] sm:$0xff]
  %v225 = vld [vmem:[%s1 + $0x4d0] sm:$0xff]
  %v226 = vld [vmem:[%s1 + $0x4d8] sm:$0xff]
  %v227 = vld [vmem:[%s1 + $0x4e0] sm:$0xff]
  %v228 = vld [vmem:[%s1 + $0x4e8] sm:$0xff]
  %v229 = vld [vmem:[%s1 + $0x4f0] sm:$0xff]
  %v230 = vld [vmem:[%s1 + $0x4f8] sm:$0xff]
  %v231 = vld [vmem:[%s1 + $0x500] sm:$0xff]
  %v232 = vld [vmem:[%s1 + $0x508] sm:$0xff]
  %v233 = vld [vmem:[%s1 + $0x510] sm:$0xff]
  %v234 = vld [vmem:[%s1 + $0x518] sm:$0xff]
  %v235 = vld [vmem:[%s1 + $0x520] sm:$0xff]
  %v236 = vld [vmem:[%s1 + $0x528] sm:$0xff]
  %v237 = vld [vmem:[%s1 + $0x530] sm:$0xff]
  %v238 = vld [vmem:[%s1 + $0x538] sm:$0xff]
  %v239 = vld [vmem:[%s1 + $0x540] sm:$0xff]
  %v240 = vld [vmem:[%s1 + $0x548] sm:$0xff]
  %v241 = vld [vmem:[%s1 + $0x550] sm:$0xff]
  %v242 = vld [vmem:[%s1 + $0x558] sm:$0xff]
  %v243 = vld [vmem:[%s1 + $0x560] sm:$0xff]
  %v244 = vld [vmem:[%s1 + $0x568] sm:$0xff]
  %v245 = vld [vmem:[%s1 + $0x570] sm:$0xff]
  %v246 = vld [vmem:[%s1 + $0x578] sm:$0xff]
  %v247 = vld [vmem:[%s1 + $0x580] sm:$0xff]
  %v248 = vld [vmem:[%s1 + $0x588] sm:$0xff]
  %v249 = vld [vmem:[%s1 + $0x590] sm:$0xff]
  %v250 = vld [vmem:[%s1 + $0x598] sm:$0xff]
  %v251 = vld [vmem:[%s1 + $0x5a0] sm:$0xff]
  %v252 = vld [vmem:[%s1 + $0x5a8] sm:$0xff]
  %v253 = vld [vmem:[%s1 + $0x5b0] sm:$0xff]
  %v254 = vld [vmem:[%s1 + $0x5b8] sm:$0xff]
  %v255 = vld [vmem:[%s1 + $0x5c0] sm:$0xff]
  %v256 = vld [vmem:[%s1 + $0x5c8] sm:$0xff]
  %v257 = vld [vmem:[%s1 + $0x5d0] sm:$0xff]
  %v258 = vld [vmem:[%s1 + $0x5d8] sm:$0xff]
  %v259 = vld [vmem:[%s1 + $0x5e0] sm:$0xff]
  %v260 = vld [vmem:[%s1 + $0x5e8] sm:$0xff]
  %v261 = vld [vmem:[%s1 + $0x5f0] sm:$0xff]
  %v262 = vld [vmem:[%s1 + $0x5f8] sm:$0xff]
  %v263 = vld [vmem:[%s1 + $0x600] sm:$0xff]
  %v264 = vld [vmem:[%s1 + $0x608] sm:$0xff]
  %v265 = vld [vmem:[%s1 + $0x610] sm:$0xff]
  %v266 = vld [vmem:[%s1 + $0x618] sm:$0xff]
  %v267 = vld [vmem:[%s1 + $0x620] sm:$0xff]
  %v268 = vld [vmem:[%s1 + $0x628] sm:$0xff]
  %v269 = vld [vmem:[%s1 + $0x630] sm:$0xff]
  %v270 = vld [vmem:[%s1 + $0x638] sm:$0xff]
  %v271 = vld [vmem:[%s1 + $0x640] sm:$0xff]
  %v272 = vld [vmem:[%s1 + $0x648] sm:$0xff]
  %v273 = vld [vmem:[%s1 + $0x650] sm:$0xff]
  %v274 = vld [vmem:[%s1 + $0x658] sm:$0xff]
  %v275 = vld [vmem:[%s1 + $0x660] sm:$0xff]
  %v276 = vld [vmem:[%s1 + $0x668] sm:$0xff]
  %v277 = vld [vmem:[%s1 + $0x670] sm:$0xff]
  %v278 = vld [vmem:[%s1 + $0x678] sm:$0xff]
  %v279 = vld [vmem:[%s1 + $0x680] sm:$0xff]
  %v280 = vld [vmem:[%s1 + $0x688] sm:$0xff]
  %v281 = vld [vmem:[%s1 + $0x690] sm:$0xff]
  %v282 = vld [vmem:[%s1 + $0x698] sm:$0xff]
  %v283 = vld [vmem:[%s1 + $0x6a0] sm:$0xff]
  %v284 = vld [vmem:[%s1 + $0x6a8] sm:$0xff]
  %v285 = vld [vmem:[%s1 + $0x6b0] sm:$0xff]
  %v286 = vld [vmem:[%s1 + $0x6b8] sm:$0xff]
  %v287 = vld [vmem:[%s1 + $0x6c0] sm:$0xff]
  %v288 = vld [vmem:[%s1 + $0x6c8] sm:$0xff]
  %v289 = vld [vmem:[%s1 + $0x6d0] sm:$0xff]
  %v290 = vld [vmem:[%s1 + $0x6d8] sm:$0xff]
  %v291 = vld [vmem:[%s1 + $0x6e0] sm:$0xff]
  %v292 = vld [vmem:[%s1 + $0x6e8] sm:$0xff]
  %v293 = vld [vmem:[%s1 + $0x6f0] sm:$0xff]
  %v294 = vld [vmem:[%s1 + $0x6f8] sm:$0xff]
  %v295 = vld [vmem:[%s1 + $0x700] sm:$0xff]
  %v296 = vld [vmem:[%s1 + $0x708] sm:$0xff]
  %v297 = vld [vmem:[%s1 + $0x710] sm:$0xff]
  %v298 = vld [vmem:[%s1 + $0x718] sm:$0xff]
  %v299 = vld [vmem:[%s1 + $0x720] sm:$0xff]
  %v300 = vld [vmem:[%s1 + $0x728] sm:$0xff]
  %v301 = vld [vmem:[%s1 + $0x730] sm:$0xff]
  %v302 = vld [vmem:[%s1 + $0x738] sm:$0xff]
  %v303 = vld [vmem:[%s1 + $0x740] sm:$0xff]
  %v304 = vld [vmem:[%s1 + $0x748] sm:$0xff]
  %v305 = vld [vmem:[%s1 + $0x750] sm:$0xff]
  %v306 = vld [vmem:[%s1 + $0x758] sm:$0xff]
  %v307 = vld [vmem:[%s1 + $0x760] sm:$0xff]
  %v308 = vld [vmem:[%s1 + $0x768] sm:$0xff]
  %v309 = vld [vmem:[%s1 + $0x770] sm:$0xff]
  %v310 = vld [vmem:[%s1 + $0x778] sm:$0xff]
  %v311 = vld [vmem:[%s1 + $0x780] sm:$0xff]
  %v312 = vld [vmem:[%s1 + $0x788] sm:$0xff]
  %v313 = vld [vmem:[%s1 + $0x790] sm:$0xff]
  %v314 = vld [vmem:[%s1 + $0x798] sm:$0xff]
  %v315 = vld [vmem:[%s1 + $0x7a0] sm:$0xff]
  %v316 = vld [vmem:[%s1 + $0x7a8] sm:$0xff]
  %v317 = vld [vmem:[%s1 + $0x7b0] sm:$0xff]
  %v318 = vld [vmem:[%s1 + $0x7b8] sm:$0xff]
  %v319 = vld [vmem:[%s1 + $0x7c0] sm:$0xff]
  %v320 = vld [vmem:[%s1 + $0x7c8] sm:$0xff]
  %v321 = vld [vmem:[%s1 + $0x7d0] sm:$0xff]
  %v322 = vld [vmem:[%s1 + $0x7d8] sm:$0xff]
  %v323 = vld [vmem:[%s1 + $0x7e0] sm:$0xff]
  %v324 = vld [vmem:[%s1 + $0x7e8] sm:$0xff]
  %v325 = vld [vmem:[%s1 + $0x7f0] sm:$0xff]
  %v326 = vld [vmem:[%s1 + $0x7f8] sm:$0xff]
  %v327 = vld [vmem:[%s1 + $0x800] sm:$0xff]
  %v328 = vld [vmem:[%s1 + $0x808] sm:$0xff]
  %v329 = vld [vmem:[%s1 + $0x810] sm:$0xff]
  %v330 = vld [vmem:[%s1 + $0x818] sm:$0xff]
  %v331 = vld [vmem:[%s1 + $0x820] sm:$0xff]
  %v332 = vld [vmem:[%s1 + $0x828] sm:$0xff]
  %v333 = vld [vmem:[%s1 + $0x830] sm:$0xff]
  %v334 = vld [vmem:[%s1 + $0x838] sm:$0xff]
  %v335 = vld [vmem:[%s1 + $0x840] sm:$0xff]
  %v336 = vld [vmem:[%s1 + $0x848] sm:$0xff]
  %v337 = vld [vmem:[%s1 + $0x850] sm:$0xff]
  %v338 = vld [vmem:[%s1 + $0x858] sm:$0xff]
  %v339 = vld [vmem:[%s1 + $0x860] sm:$0xff]
  %v340 = vld [vmem:[%s1 + $0x868] sm:$0xff]
  %v341 = vld [vmem:[%s1 + $0x870] sm:$0xff]
  %v342 = vld [vmem:[%s1 + $0x878] sm:$0xff]
  %v343 = vld [vmem:[%s1 + $0x880] sm:$0xff]
  %v344 = vld [vmem:[%s1 + $0x888] sm:$0xff]
  %v345 = vld [vmem:[%s1 + $0x890] sm:$0xff]
  %v346 = vld [vmem:[%s1 + $0x898] sm:$0xff]
  %v347 = vld [vmem:[%s1 + $0x8a0] sm:$0xff]
  %v348 = vld [vmem:[%s1 + $0x8a8] sm:$0xff]
  %v349 = vld [vmem:[%s1 + $0x8b0] sm:$0xff]
  %v350 = vld [vmem:[%s1 + $0x8b8] sm:$0xff]
  %v351 = vld [vmem:[%s1 + $0x8c0] sm:$0xff]
  %v352 = vld [vmem:[%s1 + $0x8c8] sm:$0xff]
  %v353 = vld [vmem:[%s1 + $0x8d0] sm:$0xff]
  %v354 = vld [vmem:[%s1 + $0x8d8] sm:$0xff]
  %v355 = vld [vmem:[%s1 + $0x8e0] sm:$0xff]
  %v356 = vld [vmem:[%s1 + $0x8e8] sm:$0xff]
  %v357 = vld [vmem:[%s1 + $0x8f0] sm:$0xff]
  %v358 = vld [vmem:[%s1 + $0x8f8] sm:$0xff]
  %v359 = vld [vmem:[%s1 + $0x900] sm:$0xff]
  %v360 = vld [vmem:[%s1 + $0x908] sm:$0xff]
  %v361 = vld [vmem:[%s1 + $0x910] sm:$0xff]
  %v362 = vld [vmem:[%s1 + $0x918] sm:$0xff]
  %v363 = vld [vmem:[%s1 + $0x920] sm:$0xff]
  %v364 = vld [vmem:[%s1 + $0x928] sm:$0xff]
  %v365 = vld [vmem:[%s1 + $0x930] sm:$0xff]
  %v366 = vld [vmem:[%s1 + $0x938] sm:$0xff]
  %v367 = vld [vmem:[%s1 + $0x940] sm:$0xff]
  %v368 = vld [vmem:[%s1 + $0x948] sm:$0xff]
  %v369 = vld [vmem:[%s1 + $0x950] sm:$0xff]
  %v370 = vld [vmem:[%s1 + $0x958] sm:$0xff]
  %v371 = vld [vmem:[%s1 + $0x960] sm:$0xff]
  %v372 = vld [vmem:[%s1 + $0x968] sm:$0xff]
  %v373 = vld [vmem:[%s1 + $0x970] sm:$0xff]
  %v374 = vld [vmem:[%s1 + $0x978] sm:$0xff]
  %v375 = vld [vmem:[%s1 + $0x980] sm:$0xff]
  %v376 = vld [vmem:[%s1 + $0x988] sm:$0xff]
  %v377 = vld [vmem:[%s1 + $0x990] sm:$0xff]
  %v378 = vld [vmem:[%s1 + $0x998] sm:$0xff]
  %v379 = vld [vmem:[%s1 + $0x9a0] sm:$0xff]
  %v380 = vld [vmem:[%s1 + $0x9a8] sm:$0xff]
  %v381 = vld [vmem:[%s1 + $0x9b0] sm:$0xff]
  %v382 = vld [vmem:[%s1 + $0x9b8] sm:$0xff]
  %v383 = vld [vmem:[%s1 + $0x9c0] sm:$0xff]
  %v384 = vld [vmem:[%s1 + $0x9c8] sm:$0xff]
  %v385 = vld [vmem:[%s1 + $0x9d0] sm:$0xff]
  %v386 = vld [vmem:[%s1 + $0x9d8] sm:$0xff]
  %v387 = vld [vmem:[%s1 + $0x9e0] sm:$0xff]
  %v388 = vld [vmem:[%s1 + $0x9e8] sm:$0xff]
  %v389 = vld [vmem:[%s1 + $0x9f0] sm:$0xff]
  %v390 = vld [vmem:[%s1 + $0x9f8] sm:$0xff]
  %v391 = vld [vmem:[%s1 + $0xa00] sm:$0xff]
  %v392 = vld [vmem:[%s1 + $0xa08] sm:$0xff]
  %v393 = vld [vmem:[%s1 + $0xa10] sm:$0xff]
  %v394 = vld [vmem:[%s1 + $0xa18] sm:$0xff]
  %v395 = vld [vmem:[%s1 + $0xa20] sm:$0xff]
  %v396 = vld [vmem:[%s1 + $0xa28] sm:$0xff]
  %v397 = vld [vmem:[%s1 + $0xa30] sm:$0xff]
  %v398 = vld [vmem:[%s1 + $0xa38] sm:$0xff]
  %v399 = vld [vmem:[%s1 + $0xa40] sm:$0xff]
  %v400 = vld [vmem:[%s1 + $0xa48] sm:$0xff]
  %v401 = vld [vmem:[%s1 + $0xa50] sm:$0xff]
  %v402 = vld [vmem:[%s1 + $0xa58] sm:$0xff]
  %v403 = vld [vmem:[%s1 + $0xa60] sm:$0xff]
  %v404 = vld [vmem:[%s1 + $0xa68] sm:$0xff]
  %v405 = vld [vmem:[%s1 + $0xa70] sm:$0xff]
  %v406 = vld [vmem:[%s1 + $0xa78] sm:$0xff]
  %v407 = vld [vmem:[%s1 + $0xa80] sm:$0xff]
  %v408 = vld [vmem:[%s1 + $0xa88] sm:$0xff]
  %v409 = vld [vmem:[%s1 + $0xa90] sm:$0xff]
  %v410 = vld [vmem:[%s1 + $0xa98] sm:$0xff]
  %v411 = vld [vmem:[%s1 + $0xaa0] sm:$0xff]
  %v412 = vld [vmem:[%s1 + $0xaa8] sm:$0xff]
  %v413 = vld [vmem:[%s1 + $0xab0] sm:$0xff]
  %v414 = vld [vmem:[%s1 + $0xab8] sm:$0xff]
  %v415 = vld [vmem:[%s1 + $0xac0] sm:$0xff]
  %v416 = vld [vmem:[%s1 + $0xac8] sm:$0xff]
  %v417 = vld [vmem:[%s1 + $0xad0] sm:$0xff]
  %v418 = vld [vmem:[%s1 + $0xad8] sm:$0xff]
  %v419 = vld [vmem:[%s1 + $0xae0] sm:$0xff]
  %v420 = vld [vmem:[%s1 + $0xae8] sm:$0xff]
  %v421 = vld [vmem:[%s1 + $0xaf0] sm:$0xff]
  %v422 = vld [vmem:[%s1 + $0xaf8] sm:$0xff]
  %v423 = vld [vmem:[%s1 + $0xb00] sm:$0xff]
  %v424 = vld [vmem:[%s1 + $0xb08] sm:$0xff]
  %v425 = vld [vmem:[%s1 + $0xb10] sm:$0xff]
  %v426 = vld [vmem:[%s1 + $0xb18] sm:$0xff]
  %v427 = vld [vmem:[%s1 + $0xb20] sm:$0xff]
  %v428 = vld [vmem:[%s1 + $0xb28] sm:$0xff]
  %v429 = vld [vmem:[%s1 + $0xb30] sm:$0xff]
  %v430 = vld [vmem:[%s1 + $0xb38] sm:$0xff]
  %v431 = vld [vmem:[%s1 + $0xb40] sm:$0xff]
  %v432 = vld [vmem:[%s1 + $0xb48] sm:$0xff]
  %v433 = vld [vmem:[%s1 + $0xb50] sm:$0xff]
  %v434 = vld [vmem:[%s1 + $0xb58] sm:$0xff]
  %v435 = vld [vmem:[%s1 + $0xb60] sm:$0xff]
  %v436 = vld [vmem:[%s1 + $0xb68] sm:$0xff]
  %v437 = vld [vmem:[%s1 + $0xb70] sm:$0xff]
  %v438 = vld [vmem:[%s1 + $0xb78] sm:$0xff]
  %v439 = vld [vmem:[%s1 + $0xb80] sm:$0xff]
  %v440 = vld [vmem:[%s1 + $0xb88] sm:$0xff]
  %v441 = vld [vmem:[%s1 + $0xb90] sm:$0xff]
  %v442 = vld [vmem:[%s1 + $0xb98] sm:$0xff]
  %v443 = vld [vmem:[%s1 + $0xba0] sm:$0xff]
  %v444 = vld [vmem:[%s1 + $0xba8] sm:$0xff]
  %v445 = vld [vmem:[%s1 + $0xbb0] sm:$0xff]
  %v446 = vld [vmem:[%s1 + $0xbb8] sm:$0xff]
  %v447 = vld [vmem:[%s1 + $0xbc0] sm:$0xff]
  %v448 = vld [vmem:[%s1 + $0xbc8] sm:$0xff]
  %v449 = vld [vmem:[%s1 + $0xbd0] sm:$0xff]
  %v450 = vld [vmem:[%s1 + $0xbd8] sm:$0xff]
  %v451 = vld [vmem:[%s1 + $0xbe0] sm:$0xff]
  %v452 = vld [vmem:[%s1 + $0xbe8] sm:$0xff]
  %v453 = vld [vmem:[%s1 + $0xbf0] sm:$0xff]
  %v454 = vld [vmem:[%s1 + $0xbf8] sm:$0xff]
  %v455 = vld [vmem:[%s1 + $0xc00] sm:$0xff]
  %v456 = vld [vmem:[%s1 + $0xc08] sm:$0xff]
  %v457 = vld [vmem:[%s1 + $0xc10] sm:$0xff]
  %v458 = vld [vmem:[%s1 + $0xc18] sm:$0xff]
  %v459 = vld [vmem:[%s1 + $0xc20] sm:$0xff]
  %v460 = vld [vmem:[%s1 + $0xc28] sm:$0xff]
  %v461 = vld [vmem:[%s1 + $0xc30] sm:$0xff]
  %v462 = vld [vmem:[%s1 + $0xc38] sm:$0xff]
  %v463 = vld [vmem:[%s1 + $0xc40] sm:$0xff]
  %v464 = vld [vmem:[%s1 + $0xc48] sm:$0xff]
  %v465 = vld [vmem:[%s1 + $0xc50] sm:$0xff]
  %v466 = vld [vmem:[%s1 + $0xc58] sm:$0xff]
  %v467 = vld [vmem:[%s1 + $0xc60] sm:$0xff]
  %v468 = vld [vmem:[%s1 + $0xc68] sm:$0xff]
  %v469 = vld [vmem:[%s1 + $0xc70] sm:$0xff]
  %v470 = vld [vmem:[%s1 + $0xc78] sm:$0xff]
  %v471 = vld [vmem:[%s1 + $0xc80] sm:$0xff]
  %v472 = vld [vmem:[%s1 + $0xc88] sm:$0xff]
  %v473 = vld [vmem:[%s1 + $0xc90] sm:$0xff]
  %v474 = vld [vmem:[%s1 + $0xc98] sm:$0xff]
  %v475 = vld [vmem:[%s1 + $0xca0] sm:$0xff]
  %v476 = vld [vmem:[%s1 + $0xca8] sm:$0xff]
  %v477 = vld [vmem:[%s1 + $0xcb0] sm:$0xff]
  %v478 = vld [vmem:[%s1 + $0xcb8] sm:$0xff]
  %v479 = vld [vmem:[%s1 + $0xcc0] sm:$0xff]
  %v480 = vld [vmem:[%s1 + $0xcc8] sm:$0xff]
  %v481 = vld [vmem:[%s1 + $0xcd0] sm:$0xff]
  %v482 = vld [vmem:[%s1 + $0xcd8] sm:$0xff]
  %v483 = vld [vmem:[%s1 + $0xce0] sm:$0xff]
  %v484 = vld [vmem:[%s1 + $0xce8] sm:$0xff]
  %v485 = vld [vmem:[%s1 + $0xcf0] sm:$0xff]
  %v486 = vld [vmem:[%s1 + $0xcf8] sm:$0xff]
  %v487 = vld [vmem:[%s1 + $0xd00] sm:$0xff]
  %v488 = vld [vmem:[%s1 + $0xd08] sm:$0xff]
  %v489 = vld [vmem:[%s1 + $0xd10] sm:$0xff]
  %v490 = vld [vmem:[%s1 + $0xd18] sm:$0xff]
  %v491 = vld [vmem:[%s1 + $0xd20] sm:$0xff]
  %v492 = vld [vmem:[%s1 + $0xd28] sm:$0xff]
  %v493 = vld [vmem:[%s1 + $0xd30] sm:$0xff]
  %v494 = vld [vmem:[%s1 + $0xd38] sm:$0xff]
  %v495 = vld [vmem:[%s1 + $0xd40] sm:$0xff]
  %v496 = vld [vmem:[%s1 + $0xd48] sm:$0xff]
  %v497 = vld [vmem:[%s1 + $0xd50] sm:$0xff]
  %v498 = vld [vmem:[%s1 + $0xd58] sm:$0xff]
  %v499 = vld [vmem:[%s1 + $0xd60] sm:$0xff]
  %v500 = vld [vmem:[%s1 + $0xd68] sm:$0xff]
  %v501 = vld [vmem:[%s1 + $0xd70] sm:$0xff]
  %v502 = vld [vmem:[%s1 + $0xd78] sm:$0xff]
  %v503 = vld [vmem:[%s2] sm:$0x3]
  %v505 = vlaneseq
  %v506 = vshrl.u32 %v505, 7
  %v507 = vsub.s32 0, %v506
  %v508 = vrot.slane %v503, %v507
  %v509 = vlaneseq
  %v510 = vshrl.u32 %v509, 7
  %v511 = vsub.s32 1, %v510
  %v512 = vrot.slane %v503, %v511
  %v571 = vunpack.c.l.b16 %v15
  %v572 = vunpack.c.h.b16 %v15
  %v573 = vunpack.c.l.b16 %v16
  %v574 = vunpack.c.h.b16 %v16
  %v575 = vunpack.c.l.b16 %v17
  %v576 = vunpack.c.h.b16 %v17
  %v577 = vunpack.c.l.b16 %v18
  %v578 = vunpack.c.h.b16 %v18
  %v579 = vunpack.c.l.b16 %v19
  %v580 = vunpack.c.h.b16 %v19
  %v581 = vunpack.c.l.b16 %v20
  %v582 = vunpack.c.h.b16 %v20
  %v583 = vunpack.c.l.b16 %v21
  %v584 = vunpack.c.h.b16 %v21
  %v585 = vunpack.c.l.b16 %v22
  %v586 = vunpack.c.h.b16 %v22
  %v587 = vunpack.c.l.b16 %v23
  %v588 = vunpack.c.h.b16 %v23
  %v589 = vunpack.c.l.b16 %v24
  %v590 = vunpack.c.h.b16 %v24
  %v591 = vunpack.c.l.b16 %v25
  %v592 = vunpack.c.h.b16 %v25
  %v593 = vunpack.c.l.b16 %v26
  %v594 = vunpack.c.h.b16 %v26
  %v595 = vunpack.c.l.b16 %v27
  %v596 = vunpack.c.h.b16 %v27
  %v597 = vunpack.c.l.b16 %v28
  %v598 = vunpack.c.l.b16 %v29
  %v599 = vunpack.c.h.b16 %v29
  %v600 = vunpack.c.l.b16 %v30
  %v601 = vunpack.c.h.b16 %v30
  %v602 = vunpack.c.l.b16 %v31
  %v603 = vunpack.c.h.b16 %v31
  %v604 = vunpack.c.l.b16 %v32
  %v605 = vunpack.c.h.b16 %v32
  %v606 = vunpack.c.l.b16 %v33
  %v607 = vunpack.c.h.b16 %v33
  %v608 = vunpack.c.l.b16 %v34
  %v609 = vunpack.c.h.b16 %v34
  %v610 = vunpack.c.l.b16 %v35
  %v611 = vunpack.c.h.b16 %v35
  %v612 = vunpack.c.l.b16 %v36
  %v613 = vunpack.c.h.b16 %v36
  %v614 = vunpack.c.l.b16 %v37
  %v615 = vunpack.c.h.b16 %v37
  %v616 = vunpack.c.l.b16 %v38
  %v617 = vunpack.c.h.b16 %v38
  %v618 = vunpack.c.l.b16 %v39
  %v619 = vunpack.c.h.b16 %v39
  %v620 = vunpack.c.l.b16 %v40
  %v621 = vunpack.c.h.b16 %v40
  %v622 = vunpack.c.l.b16 %v41
  %v623 = vunpack.c.h.b16 %v41
  %v624 = vunpack.c.l.b16 %v42
  %v625 = vunpack.c.l.b16 %v43
  %v626 = vunpack.c.h.b16 %v43
  %v627 = vunpack.c.l.b16 %v44
  %v628 = vunpack.c.h.b16 %v44
  %v629 = vunpack.c.l.b16 %v45
  %v630 = vunpack.c.h.b16 %v45
  %v631 = vunpack.c.l.b16 %v46
  %v632 = vunpack.c.h.b16 %v46
  %v633 = vunpack.c.l.b16 %v47
  %v634 = vunpack.c.h.b16 %v47
  %v635 = vunpack.c.l.b16 %v48
  %v636 = vunpack.c.h.b16 %v48
  %v637 = vunpack.c.l.b16 %v49
  %v638 = vunpack.c.h.b16 %v49
  %v639 = vunpack.c.l.b16 %v50
  %v640 = vunpack.c.h.b16 %v50
  %v641 = vunpack.c.l.b16 %v51
  %v642 = vunpack.c.h.b16 %v51
  %v643 = vunpack.c.l.b16 %v52
  %v644 = vunpack.c.h.b16 %v52
  %v645 = vunpack.c.l.b16 %v53
  %v646 = vunpack.c.h.b16 %v53
  %v647 = vunpack.c.l.b16 %v54
  %v648 = vunpack.c.h.b16 %v54
  %v649 = vunpack.c.l.b16 %v55
  %v650 = vunpack.c.h.b16 %v55
  %v651 = vunpack.c.l.b16 %v56
  %v652 = vunpack.c.l.b16 %v57
  %v653 = vunpack.c.h.b16 %v57
  %v654 = vunpack.c.l.b16 %v58
  %v655 = vunpack.c.h.b16 %v58
  %v656 = vunpack.c.l.b16 %v59
  %v657 = vunpack.c.h.b16 %v59
  %v658 = vunpack.c.l.b16 %v60
  %v659 = vunpack.c.h.b16 %v60
  %v660 = vunpack.c.l.b16 %v61
  %v661 = vunpack.c.h.b16 %v61
  %v662 = vunpack.c.l.b16 %v62
  %v663 = vunpack.c.h.b16 %v62
  %v664 = vunpack.c.l.b16 %v63
  %v665 = vunpack.c.h.b16 %v63
  %v666 = vunpack.c.l.b16 %v64
  %v667 = vunpack.c.h.b16 %v64
  %v668 = vunpack.c.l.b16 %v65
  %v669 = vunpack.c.h.b16 %v65
  %v670 = vunpack.c.l.b16 %v66
  %v671 = vunpack.c.h.b16 %v66
  %v672 = vunpack.c.l.b16 %v67
  %v673 = vunpack.c.h.b16 %v67
  %v674 = vunpack.c.l.b16 %v68
  %v675 = vunpack.c.h.b16 %v68
  %v676 = vunpack.c.l.b16 %v69
  %v677 = vunpack.c.h.b16 %v69
  %v678 = vunpack.c.l.b16 %v70
  %v679 = vpack.c.b16 %v598, %v571
  %v680 = vpack.c.b16 %v599, %v572
  %v681 = vpack.c.b16 %v600, %v573
  %v682 = vpack.c.b16 %v601, %v574
  %v683 = vpack.c.b16 %v602, %v575
  %v684 = vpack.c.b16 %v603, %v576
  %v685 = vpack.c.b16 %v604, %v577
  %v686 = vpack.c.b16 %v605, %v578
  %v687 = vpack.c.b16 %v606, %v579
  %v688 = vpack.c.b16 %v607, %v580
  %v689 = vpack.c.b16 %v608, %v581
  %v690 = vpack.c.b16 %v609, %v582
  %v691 = vpack.c.b16 %v610, %v583
  %v692 = vpack.c.b16 %v611, %v584
  %v693 = vpack.c.b16 %v612, %v585
  %v694 = vpack.c.b16 %v613, %v586
  %v695 = vpack.c.b16 %v614, %v587
  %v696 = vpack.c.b16 %v615, %v588
  %v697 = vpack.c.b16 %v616, %v589
  %v698 = vpack.c.b16 %v617, %v590
  %v699 = vpack.c.b16 %v618, %v591
  %v700 = vpack.c.b16 %v619, %v592
  %v701 = vpack.c.b16 %v620, %v593
  %v702 = vpack.c.b16 %v621, %v594
  %v703 = vpack.c.b16 %v622, %v595
  %v704 = vpack.c.b16 %v623, %v596
  %v705 = vpack.c.b16 %v624, %v597
  %v706 = vpack.c.b16 %v652, %v625
  %v707 = vpack.c.b16 %v653, %v626
  %v708 = vpack.c.b16 %v654, %v627
  %v709 = vpack.c.b16 %v655, %v628
  %v710 = vpack.c.b16 %v656, %v629
  %v711 = vpack.c.b16 %v657, %v630
  %v712 = vpack.c.b16 %v658, %v631
  %v713 = vpack.c.b16 %v659, %v632
  %v714 = vpack.c.b16 %v660, %v633
  %v715 = vpack.c.b16 %v661, %v634
  %v716 = vpack.c.b16 %v662, %v635
  %v717 = vpack.c.b16 %v663, %v636
  %v718 = vpack.c.b16 %v664, %v637
  %v719 = vpack.c.b16 %v665, %v638
  %v720 = vpack.c.b16 %v666, %v639
  %v721 = vpack.c.b16 %v667, %v640
  %v722 = vpack.c.b16 %v668, %v641
  %v723 = vpack.c.b16 %v669, %v642
  %v724 = vpack.c.b16 %v670, %v643
  %v725 = vpack.c.b16 %v671, %v644
  %v726 = vpack.c.b16 %v672, %v645
  %v727 = vpack.c.b16 %v673, %v646
  %v728 = vpack.c.b16 %v674, %v647
  %v729 = vpack.c.b16 %v675, %v648
  %v730 = vpack.c.b16 %v676, %v649
  %v731 = vpack.c.b16 %v677, %v650
  %v732 = vpack.c.b16 %v678, %v651
  %v1219 = vunpack.c.l.b16 %v71
  %v1220 = vunpack.c.h.b16 %v71
  %v1221 = vunpack.c.l.b16 %v72
  %v1222 = vunpack.c.h.b16 %v72
  %v1223 = vunpack.c.l.b16 %v73
  %v1224 = vunpack.c.h.b16 %v73
  %v1225 = vunpack.c.l.b16 %v74
  %v1226 = vunpack.c.h.b16 %v74
  %v1227 = vunpack.c.l.b16 %v75
  %v1228 = vunpack.c.h.b16 %v75
  %v1229 = vunpack.c.l.b16 %v76
  %v1230 = vunpack.c.h.b16 %v76
  %v1231 = vunpack.c.l.b16 %v77
  %v1232 = vunpack.c.h.b16 %v77
  %v1233 = vunpack.c.l.b16 %v78
  %v1234 = vunpack.c.h.b16 %v78
  %v1235 = vunpack.c.l.b16 %v79
  %v1236 = vunpack.c.h.b16 %v79
  %v1237 = vunpack.c.l.b16 %v80
  %v1238 = vunpack.c.h.b16 %v80
  %v1239 = vunpack.c.l.b16 %v81
  %v1240 = vunpack.c.h.b16 %v81
  %v1241 = vunpack.c.l.b16 %v82
  %v1242 = vunpack.c.h.b16 %v82
  %v1243 = vunpack.c.l.b16 %v83
  %v1244 = vunpack.c.h.b16 %v83
  %v1245 = vunpack.c.l.b16 %v84
  %v1246 = vunpack.c.h.b16 %v84
  %v1247 = vunpack.c.l.b16 %v85
  %v1248 = vunpack.c.h.b16 %v85
  %v1249 = vunpack.c.l.b16 %v86
  %v1250 = vunpack.c.h.b16 %v86
  %v1251 = vunpack.c.l.b16 %v87
  %v1252 = vunpack.c.h.b16 %v87
  %v1253 = vunpack.c.l.b16 %v88
  %v1254 = vunpack.c.h.b16 %v88
  %v1255 = vunpack.c.l.b16 %v89
  %v1256 = vunpack.c.h.b16 %v89
  %v1257 = vunpack.c.l.b16 %v90
  %v1258 = vunpack.c.h.b16 %v90
  %v1259 = vunpack.c.l.b16 %v91
  %v1260 = vunpack.c.h.b16 %v91
  %v1261 = vunpack.c.l.b16 %v92
  %v1262 = vunpack.c.h.b16 %v92
  %v1263 = vunpack.c.l.b16 %v93
  %v1264 = vunpack.c.h.b16 %v93
  %v1265 = vunpack.c.l.b16 %v94
  %v1266 = vunpack.c.h.b16 %v94
  %v1267 = vunpack.c.l.b16 %v95
  %v1268 = vunpack.c.h.b16 %v95
  %v1269 = vunpack.c.l.b16 %v96
  %v1270 = vunpack.c.h.b16 %v96
  %v1271 = vunpack.c.l.b16 %v97
  %v1272 = vunpack.c.h.b16 %v97
  %v1273 = vunpack.c.l.b16 %v98
  %v1274 = vunpack.c.h.b16 %v98
  %v1275 = vunpack.c.l.b16 %v99
  %v1276 = vunpack.c.h.b16 %v99
  %v1277 = vunpack.c.l.b16 %v100
  %v1278 = vunpack.c.h.b16 %v100
  %v1279 = vunpack.c.l.b16 %v101
  %v1280 = vunpack.c.h.b16 %v101
  %v1281 = vunpack.c.l.b16 %v102
  %v1282 = vunpack.c.h.b16 %v102
  %v1283 = vunpack.c.l.b16 %v103
  %v1284 = vunpack.c.h.b16 %v103
  %v1285 = vunpack.c.l.b16 %v104
  %v1286 = vunpack.c.h.b16 %v104
  %v1287 = vunpack.c.l.b16 %v105
  %v1288 = vunpack.c.h.b16 %v105
  %v1289 = vunpack.c.l.b16 %v106
  %v1290 = vunpack.c.h.b16 %v106
  %v1291 = vunpack.c.l.b16 %v107
  %v1292 = vunpack.c.h.b16 %v107
  %v1293 = vunpack.c.l.b16 %v108
  %v1294 = vunpack.c.h.b16 %v108
  %v1295 = vunpack.c.l.b16 %v109
  %v1296 = vunpack.c.h.b16 %v109
  %v1297 = vunpack.c.l.b16 %v110
  %v1298 = vunpack.c.h.b16 %v110
  %v1299 = vunpack.c.l.b16 %v111
  %v1300 = vunpack.c.h.b16 %v111
  %v1301 = vunpack.c.l.b16 %v112
  %v1302 = vunpack.c.h.b16 %v112
  %v1303 = vunpack.c.l.b16 %v113
  %v1304 = vunpack.c.h.b16 %v113
  %v1305 = vunpack.c.l.b16 %v114
  %v1306 = vunpack.c.h.b16 %v114
  %v1307 = vunpack.c.l.b16 %v115
  %v1308 = vunpack.c.h.b16 %v115
  %v1309 = vunpack.c.l.b16 %v116
  %v1310 = vunpack.c.h.b16 %v116
  %v1311 = vunpack.c.l.b16 %v117
  %v1312 = vunpack.c.h.b16 %v117
  %v1313 = vunpack.c.l.b16 %v118
  %v1314 = vunpack.c.h.b16 %v118
  %v1315 = vunpack.c.l.b16 %v119
  %v1316 = vunpack.c.h.b16 %v119
  %v1317 = vunpack.c.l.b16 %v120
  %v1318 = vunpack.c.h.b16 %v120
  %v1319 = vunpack.c.l.b16 %v121
  %v1320 = vunpack.c.h.b16 %v121
  %v1321 = vunpack.c.l.b16 %v122
  %v1322 = vunpack.c.h.b16 %v122
  %v1323 = vunpack.c.l.b16 %v123
  %v1324 = vunpack.c.h.b16 %v123
  %v1325 = vunpack.c.l.b16 %v124
  %v1326 = vunpack.c.h.b16 %v124
  %v1327 = vunpack.c.l.b16 %v125
  %v1328 = vunpack.c.h.b16 %v125
  %v1329 = vunpack.c.l.b16 %v126
  %v1330 = vunpack.c.h.b16 %v126
  %v1331 = vunpack.c.l.b16 %v127
  %v1332 = vunpack.c.h.b16 %v127
  %v1333 = vunpack.c.l.b16 %v128
  %v1334 = vunpack.c.h.b16 %v128
  %v1335 = vunpack.c.l.b16 %v129
  %v1336 = vunpack.c.h.b16 %v129
  %v1337 = vunpack.c.l.b16 %v130
  %v1338 = vunpack.c.h.b16 %v130
  %v1339 = vunpack.c.l.b16 %v131
  %v1340 = vunpack.c.h.b16 %v131
  %v1341 = vunpack.c.l.b16 %v132
  %v1342 = vunpack.c.h.b16 %v132
  %v1343 = vunpack.c.l.b16 %v133
  %v1344 = vunpack.c.h.b16 %v133
  %v1345 = vunpack.c.l.b16 %v134
  %v1346 = vunpack.c.h.b16 %v134
  %v1347 = vunpack.c.l.b16 %v135
  %v1348 = vunpack.c.h.b16 %v135
  %v1349 = vunpack.c.l.b16 %v136
  %v1350 = vunpack.c.h.b16 %v136
  %v1351 = vunpack.c.l.b16 %v137
  %v1352 = vunpack.c.h.b16 %v137
  %v1353 = vunpack.c.l.b16 %v138
  %v1354 = vunpack.c.h.b16 %v138
  %v1355 = vunpack.c.l.b16 %v139
  %v1356 = vunpack.c.h.b16 %v139
  %v1357 = vunpack.c.l.b16 %v140
  %v1358 = vunpack.c.h.b16 %v140
  %v1359 = vunpack.c.l.b16 %v141
  %v1360 = vunpack.c.h.b16 %v141
  %v1361 = vunpack.c.l.b16 %v142
  %v1362 = vunpack.c.h.b16 %v142
  %v1363 = vunpack.c.l.b16 %v143
  %v1364 = vunpack.c.h.b16 %v143
  %v1365 = vunpack.c.l.b16 %v144
  %v1366 = vunpack.c.h.b16 %v144
  %v1367 = vunpack.c.l.b16 %v145
  %v1368 = vunpack.c.h.b16 %v145
  %v1369 = vunpack.c.l.b16 %v146
  %v1370 = vunpack.c.h.b16 %v146
  %v1371 = vunpack.c.l.b16 %v147
  %v1372 = vunpack.c.h.b16 %v147
  %v1373 = vunpack.c.l.b16 %v148
  %v1374 = vunpack.c.h.b16 %v148
  %v1375 = vunpack.c.l.b16 %v149
  %v1376 = vunpack.c.h.b16 %v149
  %v1377 = vunpack.c.l.b16 %v150
  %v1378 = vunpack.c.h.b16 %v150
  %v1379 = vunpack.c.l.b16 %v151
  %v1380 = vunpack.c.h.b16 %v151
  %v1381 = vunpack.c.l.b16 %v152
  %v1382 = vunpack.c.h.b16 %v152
  %v1383 = vunpack.c.l.b16 %v153
  %v1384 = vunpack.c.h.b16 %v153
  %v1385 = vunpack.c.l.b16 %v154
  %v1386 = vunpack.c.h.b16 %v154
  %v1387 = vunpack.c.l.b16 %v155
  %v1388 = vunpack.c.h.b16 %v155
  %v1389 = vunpack.c.l.b16 %v156
  %v1390 = vunpack.c.h.b16 %v156
  %v1391 = vunpack.c.l.b16 %v157
  %v1392 = vunpack.c.h.b16 %v157
  %v1393 = vunpack.c.l.b16 %v158
  %v1394 = vunpack.c.h.b16 %v158
  %v1395 = vunpack.c.l.b16 %v159
  %v1396 = vunpack.c.h.b16 %v159
  %v1397 = vunpack.c.l.b16 %v160
  %v1398 = vunpack.c.h.b16 %v160
  %v1399 = vunpack.c.l.b16 %v161
  %v1400 = vunpack.c.h.b16 %v161
  %v1401 = vunpack.c.l.b16 %v162
  %v1402 = vunpack.c.h.b16 %v162
  %v1403 = vunpack.c.l.b16 %v163
  %v1404 = vunpack.c.h.b16 %v163
  %v1405 = vunpack.c.l.b16 %v164
  %v1406 = vunpack.c.h.b16 %v164
  %v1407 = vunpack.c.l.b16 %v165
  %v1408 = vunpack.c.h.b16 %v165
  %v1409 = vunpack.c.l.b16 %v166
  %v1410 = vunpack.c.h.b16 %v166
  %v1411 = vunpack.c.l.b16 %v167
  %v1412 = vunpack.c.h.b16 %v167
  %v1413 = vunpack.c.l.b16 %v168
  %v1414 = vunpack.c.h.b16 %v168
  %v1415 = vunpack.c.l.b16 %v169
  %v1416 = vunpack.c.h.b16 %v169
  %v1417 = vunpack.c.l.b16 %v170
  %v1418 = vunpack.c.h.b16 %v170
  %v1419 = vunpack.c.l.b16 %v171
  %v1420 = vunpack.c.h.b16 %v171
  %v1421 = vunpack.c.l.b16 %v172
  %v1422 = vunpack.c.h.b16 %v172
  %v1423 = vunpack.c.l.b16 %v173
  %v1424 = vunpack.c.h.b16 %v173
  %v1425 = vunpack.c.l.b16 %v174
  %v1426 = vunpack.c.h.b16 %v174
  %v1427 = vunpack.c.l.b16 %v175
  %v1428 = vunpack.c.h.b16 %v175
  %v1429 = vunpack.c.l.b16 %v176
  %v1430 = vunpack.c.h.b16 %v176
  %v1431 = vunpack.c.l.b16 %v177
  %v1432 = vunpack.c.h.b16 %v177
  %v1433 = vunpack.c.l.b16 %v178
  %v1434 = vunpack.c.h.b16 %v178
  %v1435 = vunpack.c.l.b16 %v179
  %v1436 = vunpack.c.h.b16 %v179
  %v1437 = vunpack.c.l.b16 %v180
  %v1438 = vunpack.c.h.b16 %v180
  %v1439 = vunpack.c.l.b16 %v181
  %v1440 = vunpack.c.h.b16 %v181
  %v1441 = vunpack.c.l.b16 %v182
  %v1442 = vunpack.c.h.b16 %v182
  %v1443 = vunpack.c.l.b16 %v183
  %v1444 = vunpack.c.h.b16 %v183
  %v1445 = vunpack.c.l.b16 %v184
  %v1446 = vunpack.c.h.b16 %v184
  %v1447 = vunpack.c.l.b16 %v185
  %v1448 = vunpack.c.h.b16 %v185
  %v1449 = vunpack.c.l.b16 %v186
  %v1450 = vunpack.c.h.b16 %v186
  %v1451 = vunpack.c.l.b16 %v187
  %v1452 = vunpack.c.h.b16 %v187
  %v1453 = vunpack.c.l.b16 %v188
  %v1454 = vunpack.c.h.b16 %v188
  %v1455 = vunpack.c.l.b16 %v189
  %v1456 = vunpack.c.h.b16 %v189
  %v1457 = vunpack.c.l.b16 %v190
  %v1458 = vunpack.c.h.b16 %v190
  %v1459 = vunpack.c.l.b16 %v191
  %v1460 = vunpack.c.h.b16 %v191
  %v1461 = vunpack.c.l.b16 %v192
  %v1462 = vunpack.c.h.b16 %v192
  %v1463 = vunpack.c.l.b16 %v193
  %v1464 = vunpack.c.h.b16 %v193
  %v1465 = vunpack.c.l.b16 %v194
  %v1466 = vunpack.c.h.b16 %v194
  %v1467 = vunpack.c.l.b16 %v195
  %v1468 = vunpack.c.h.b16 %v195
  %v1469 = vunpack.c.l.b16 %v196
  %v1470 = vunpack.c.h.b16 %v196
  %v1471 = vunpack.c.l.b16 %v197
  %v1472 = vunpack.c.h.b16 %v197
  %v1473 = vunpack.c.l.b16 %v198
  %v1474 = vunpack.c.h.b16 %v198
  %v1475 = vunpack.c.l.b16 %v199
  %v1476 = vunpack.c.h.b16 %v199
  %v1477 = vunpack.c.l.b16 %v200
  %v1478 = vunpack.c.h.b16 %v200
  %v1479 = vunpack.c.l.b16 %v201
  %v1480 = vunpack.c.h.b16 %v201
  %v1481 = vunpack.c.l.b16 %v202
  %v1482 = vunpack.c.h.b16 %v202
  %v1483 = vunpack.c.l.b16 %v203
  %v1484 = vunpack.c.h.b16 %v203
  %v1485 = vunpack.c.l.b16 %v204
  %v1486 = vunpack.c.h.b16 %v204
  %v1487 = vunpack.c.l.b16 %v205
  %v1488 = vunpack.c.h.b16 %v205
  %v1489 = vunpack.c.l.b16 %v206
  %v1490 = vunpack.c.h.b16 %v206
  %v1491 = vunpack.c.l.b16 %v207
  %v1492 = vunpack.c.h.b16 %v207
  %v1493 = vunpack.c.l.b16 %v208
  %v1494 = vunpack.c.h.b16 %v208
  %v1495 = vunpack.c.l.b16 %v209
  %v1496 = vunpack.c.h.b16 %v209
  %v1497 = vunpack.c.l.b16 %v210
  %v1498 = vunpack.c.h.b16 %v210
  %v1499 = vunpack.c.l.b16 %v211
  %v1500 = vunpack.c.h.b16 %v211
  %v1501 = vunpack.c.l.b16 %v212
  %v1502 = vunpack.c.h.b16 %v212
  %v1503 = vunpack.c.l.b16 %v213
  %v1504 = vunpack.c.h.b16 %v213
  %v1505 = vunpack.c.l.b16 %v214
  %v1506 = vunpack.c.h.b16 %v214
  %v1507 = vunpack.c.l.b16 %v215
  %v1508 = vunpack.c.h.b16 %v215
  %v1509 = vunpack.c.l.b16 %v216
  %v1510 = vunpack.c.h.b16 %v216
  %v1511 = vunpack.c.l.b16 %v217
  %v1512 = vunpack.c.h.b16 %v217
  %v1513 = vunpack.c.l.b16 %v218
  %v1514 = vunpack.c.h.b16 %v218
  %v1515 = vunpack.c.l.b16 %v219
  %v1516 = vunpack.c.h.b16 %v219
  %v1517 = vunpack.c.l.b16 %v220
  %v1518 = vunpack.c.h.b16 %v220
  %v1519 = vunpack.c.l.b16 %v221
  %v1520 = vunpack.c.h.b16 %v221
  %v1521 = vunpack.c.l.b16 %v222
  %v1522 = vunpack.c.h.b16 %v222
  %v1523 = vunpack.c.l.b16 %v223
  %v1524 = vunpack.c.h.b16 %v223
  %v1525 = vunpack.c.l.b16 %v224
  %v1526 = vunpack.c.h.b16 %v224
  %v1527 = vunpack.c.l.b16 %v225
  %v1528 = vunpack.c.h.b16 %v225
  %v1529 = vunpack.c.l.b16 %v226
  %v1530 = vunpack.c.h.b16 %v226
  %v1531 = vunpack.c.l.b16 %v227
  %v1532 = vunpack.c.h.b16 %v227
  %v1533 = vunpack.c.l.b16 %v228
  %v1534 = vunpack.c.h.b16 %v228
  %v1535 = vunpack.c.l.b16 %v229
  %v1536 = vunpack.c.h.b16 %v229
  %v1537 = vunpack.c.l.b16 %v230
  %v1538 = vunpack.c.h.b16 %v230
  %v1539 = vunpack.c.l.b16 %v231
  %v1540 = vunpack.c.h.b16 %v231
  %v1541 = vunpack.c.l.b16 %v232
  %v1542 = vunpack.c.h.b16 %v232
  %v1543 = vunpack.c.l.b16 %v233
  %v1544 = vunpack.c.h.b16 %v233
  %v1545 = vunpack.c.l.b16 %v234
  %v1546 = vunpack.c.h.b16 %v234
  %v1547 = vunpack.c.l.b16 %v235
  %v1548 = vunpack.c.h.b16 %v235
  %v1549 = vunpack.c.l.b16 %v236
  %v1550 = vunpack.c.h.b16 %v236
  %v1551 = vunpack.c.l.b16 %v237
  %v1552 = vunpack.c.h.b16 %v237
  %v1553 = vunpack.c.l.b16 %v238
  %v1554 = vunpack.c.h.b16 %v238
  %v1555 = vunpack.c.l.b16 %v239
  %v1556 = vunpack.c.h.b16 %v239
  %v1557 = vunpack.c.l.b16 %v240
  %v1558 = vunpack.c.h.b16 %v240
  %v1559 = vunpack.c.l.b16 %v241
  %v1560 = vunpack.c.h.b16 %v241
  %v1561 = vunpack.c.l.b16 %v242
  %v1562 = vunpack.c.h.b16 %v242
  %v1563 = vunpack.c.l.b16 %v243
  %v1564 = vunpack.c.h.b16 %v243
  %v1565 = vunpack.c.l.b16 %v244
  %v1566 = vunpack.c.h.b16 %v244
  %v1567 = vunpack.c.l.b16 %v245
  %v1568 = vunpack.c.h.b16 %v245
  %v1569 = vunpack.c.l.b16 %v246
  %v1570 = vunpack.c.h.b16 %v246
  %v1571 = vunpack.c.l.b16 %v247
  %v1572 = vunpack.c.h.b16 %v247
  %v1573 = vunpack.c.l.b16 %v248
  %v1574 = vunpack.c.h.b16 %v248
  %v1575 = vunpack.c.l.b16 %v249
  %v1576 = vunpack.c.h.b16 %v249
  %v1577 = vunpack.c.l.b16 %v250
  %v1578 = vunpack.c.h.b16 %v250
  %v1579 = vunpack.c.l.b16 %v251
  %v1580 = vunpack.c.h.b16 %v251
  %v1581 = vunpack.c.l.b16 %v252
  %v1582 = vunpack.c.h.b16 %v252
  %v1583 = vunpack.c.l.b16 %v253
  %v1584 = vunpack.c.h.b16 %v253
  %v1585 = vunpack.c.l.b16 %v254
  %v1586 = vunpack.c.h.b16 %v254
  %v1587 = vunpack.c.l.b16 %v255
  %v1588 = vunpack.c.h.b16 %v255
  %v1589 = vunpack.c.l.b16 %v256
  %v1590 = vunpack.c.h.b16 %v256
  %v1591 = vunpack.c.l.b16 %v257
  %v1592 = vunpack.c.h.b16 %v257
  %v1593 = vunpack.c.l.b16 %v258
  %v1594 = vunpack.c.h.b16 %v258
  %v1595 = vunpack.c.l.b16 %v259
  %v1596 = vunpack.c.h.b16 %v259
  %v1597 = vunpack.c.l.b16 %v260
  %v1598 = vunpack.c.h.b16 %v260
  %v1599 = vunpack.c.l.b16 %v261
  %v1600 = vunpack.c.h.b16 %v261
  %v1601 = vunpack.c.l.b16 %v262
  %v1602 = vunpack.c.h.b16 %v262
  %v1603 = vunpack.c.l.b16 %v263
  %v1604 = vunpack.c.h.b16 %v263
  %v1605 = vunpack.c.l.b16 %v264
  %v1606 = vunpack.c.h.b16 %v264
  %v1607 = vunpack.c.l.b16 %v265
  %v1608 = vunpack.c.h.b16 %v265
  %v1609 = vunpack.c.l.b16 %v266
  %v1610 = vunpack.c.h.b16 %v266
  %v1611 = vunpack.c.l.b16 %v267
  %v1612 = vunpack.c.h.b16 %v267
  %v1613 = vunpack.c.l.b16 %v268
  %v1614 = vunpack.c.h.b16 %v268
  %v1615 = vunpack.c.l.b16 %v269
  %v1616 = vunpack.c.h.b16 %v269
  %v1617 = vunpack.c.l.b16 %v270
  %v1618 = vunpack.c.h.b16 %v270
  %v1619 = vunpack.c.l.b16 %v271
  %v1620 = vunpack.c.h.b16 %v271
  %v1621 = vunpack.c.l.b16 %v272
  %v1622 = vunpack.c.h.b16 %v272
  %v1623 = vunpack.c.l.b16 %v273
  %v1624 = vunpack.c.h.b16 %v273
  %v1625 = vunpack.c.l.b16 %v274
  %v1626 = vunpack.c.h.b16 %v274
  %v1627 = vunpack.c.l.b16 %v275
  %v1628 = vunpack.c.h.b16 %v275
  %v1629 = vunpack.c.l.b16 %v276
  %v1630 = vunpack.c.h.b16 %v276
  %v1631 = vunpack.c.l.b16 %v277
  %v1632 = vunpack.c.h.b16 %v277
  %v1633 = vunpack.c.l.b16 %v278
  %v1634 = vunpack.c.h.b16 %v278
  %v1635 = vunpack.c.l.b16 %v279
  %v1636 = vunpack.c.h.b16 %v279
  %v1637 = vunpack.c.l.b16 %v280
  %v1638 = vunpack.c.h.b16 %v280
  %v1639 = vunpack.c.l.b16 %v281
  %v1640 = vunpack.c.h.b16 %v281
  %v1641 = vunpack.c.l.b16 %v282
  %v1642 = vunpack.c.h.b16 %v282
  %v1643 = vunpack.c.l.b16 %v283
  %v1644 = vunpack.c.h.b16 %v283
  %v1645 = vunpack.c.l.b16 %v284
  %v1646 = vunpack.c.h.b16 %v284
  %v1647 = vunpack.c.l.b16 %v285
  %v1648 = vunpack.c.h.b16 %v285
  %v1649 = vunpack.c.l.b16 %v286
  %v1650 = vunpack.c.h.b16 %v286
  %v1651 = vunpack.c.l.b16 %v287
  %v1652 = vunpack.c.h.b16 %v287
  %v1653 = vunpack.c.l.b16 %v288
  %v1654 = vunpack.c.h.b16 %v288
  %v1655 = vunpack.c.l.b16 %v289
  %v1656 = vunpack.c.h.b16 %v289
  %v1657 = vunpack.c.l.b16 %v290
  %v1658 = vunpack.c.h.b16 %v290
  %v1659 = vunpack.c.l.b16 %v291
  %v1660 = vunpack.c.h.b16 %v291
  %v1661 = vunpack.c.l.b16 %v292
  %v1662 = vunpack.c.h.b16 %v292
  %v1663 = vunpack.c.l.b16 %v293
  %v1664 = vunpack.c.h.b16 %v293
  %v1665 = vunpack.c.l.b16 %v294
  %v1666 = vunpack.c.h.b16 %v294
  %v1667 = vunpack.c.l.b16 %v295
  %v1668 = vunpack.c.h.b16 %v295
  %v1669 = vunpack.c.l.b16 %v296
  %v1670 = vunpack.c.h.b16 %v296
  %v1671 = vunpack.c.l.b16 %v297
  %v1672 = vunpack.c.h.b16 %v297
  %v1673 = vunpack.c.l.b16 %v298
  %v1674 = vunpack.c.h.b16 %v298
  %v1675 = vunpack.c.l.b16 %v299
  %v1676 = vunpack.c.h.b16 %v299
  %v1677 = vunpack.c.l.b16 %v300
  %v1678 = vunpack.c.h.b16 %v300
  %v1679 = vunpack.c.l.b16 %v301
  %v1680 = vunpack.c.h.b16 %v301
  %v1681 = vunpack.c.l.b16 %v302
  %v1682 = vunpack.c.h.b16 %v302
  %v1683 = vunpack.c.l.b16 %v303
  %v1684 = vunpack.c.h.b16 %v303
  %v1685 = vunpack.c.l.b16 %v304
  %v1686 = vunpack.c.h.b16 %v304
  %v1687 = vunpack.c.l.b16 %v305
  %v1688 = vunpack.c.h.b16 %v305
  %v1689 = vunpack.c.l.b16 %v306
  %v1690 = vunpack.c.h.b16 %v306
  %v1691 = vunpack.c.l.b16 %v307
  %v1692 = vunpack.c.h.b16 %v307
  %v1693 = vunpack.c.l.b16 %v308
  %v1694 = vunpack.c.h.b16 %v308
  %v1695 = vunpack.c.l.b16 %v309
  %v1696 = vunpack.c.h.b16 %v309
  %v1697 = vunpack.c.l.b16 %v310
  %v1698 = vunpack.c.h.b16 %v310
  %v1699 = vunpack.c.l.b16 %v311
  %v1700 = vunpack.c.h.b16 %v311
  %v1701 = vunpack.c.l.b16 %v312
  %v1702 = vunpack.c.h.b16 %v312
  %v1703 = vunpack.c.l.b16 %v313
  %v1704 = vunpack.c.h.b16 %v313
  %v1705 = vunpack.c.l.b16 %v314
  %v1706 = vunpack.c.h.b16 %v314
  %v1707 = vunpack.c.l.b16 %v315
  %v1708 = vunpack.c.h.b16 %v315
  %v1709 = vunpack.c.l.b16 %v316
  %v1710 = vunpack.c.h.b16 %v316
  %v1711 = vunpack.c.l.b16 %v317
  %v1712 = vunpack.c.h.b16 %v317
  %v1713 = vunpack.c.l.b16 %v318
  %v1714 = vunpack.c.h.b16 %v318
  %v1715 = vunpack.c.l.b16 %v319
  %v1716 = vunpack.c.h.b16 %v319
  %v1717 = vunpack.c.l.b16 %v320
  %v1718 = vunpack.c.h.b16 %v320
  %v1719 = vunpack.c.l.b16 %v321
  %v1720 = vunpack.c.h.b16 %v321
  %v1721 = vunpack.c.l.b16 %v322
  %v1722 = vunpack.c.h.b16 %v322
  %v1723 = vunpack.c.l.b16 %v323
  %v1724 = vunpack.c.h.b16 %v323
  %v1725 = vunpack.c.l.b16 %v324
  %v1726 = vunpack.c.h.b16 %v324
  %v1727 = vunpack.c.l.b16 %v325
  %v1728 = vunpack.c.h.b16 %v325
  %v1729 = vunpack.c.l.b16 %v326
  %v1730 = vunpack.c.h.b16 %v326
  %v1731 = vunpack.c.l.b16 %v327
  %v1732 = vunpack.c.h.b16 %v327
  %v1733 = vunpack.c.l.b16 %v328
  %v1734 = vunpack.c.h.b16 %v328
  %v1735 = vunpack.c.l.b16 %v329
  %v1736 = vunpack.c.h.b16 %v329
  %v1737 = vunpack.c.l.b16 %v330
  %v1738 = vunpack.c.h.b16 %v330
  %v1739 = vunpack.c.l.b16 %v331
  %v1740 = vunpack.c.h.b16 %v331
  %v1741 = vunpack.c.l.b16 %v332
  %v1742 = vunpack.c.h.b16 %v332
  %v1743 = vunpack.c.l.b16 %v333
  %v1744 = vunpack.c.h.b16 %v333
  %v1745 = vunpack.c.l.b16 %v334
  %v1746 = vunpack.c.h.b16 %v334
  %v1747 = vunpack.c.l.b16 %v335
  %v1748 = vunpack.c.h.b16 %v335
  %v1749 = vunpack.c.l.b16 %v336
  %v1750 = vunpack.c.h.b16 %v336
  %v1751 = vunpack.c.l.b16 %v337
  %v1752 = vunpack.c.h.b16 %v337
  %v1753 = vunpack.c.l.b16 %v338
  %v1754 = vunpack.c.h.b16 %v338
  %v1755 = vunpack.c.l.b16 %v339
  %v1756 = vunpack.c.h.b16 %v339
  %v1757 = vunpack.c.l.b16 %v340
  %v1758 = vunpack.c.h.b16 %v340
  %v1759 = vunpack.c.l.b16 %v341
  %v1760 = vunpack.c.h.b16 %v341
  %v1761 = vunpack.c.l.b16 %v342
  %v1762 = vunpack.c.h.b16 %v342
  %v1763 = vunpack.c.l.b16 %v343
  %v1764 = vunpack.c.h.b16 %v343
  %v1765 = vunpack.c.l.b16 %v344
  %v1766 = vunpack.c.h.b16 %v344
  %v1767 = vunpack.c.l.b16 %v345
  %v1768 = vunpack.c.h.b16 %v345
  %v1769 = vunpack.c.l.b16 %v346
  %v1770 = vunpack.c.h.b16 %v346
  %v1771 = vunpack.c.l.b16 %v347
  %v1772 = vunpack.c.h.b16 %v347
  %v1773 = vunpack.c.l.b16 %v348
  %v1774 = vunpack.c.h.b16 %v348
  %v1775 = vunpack.c.l.b16 %v349
  %v1776 = vunpack.c.h.b16 %v349
  %v1777 = vunpack.c.l.b16 %v350
  %v1778 = vunpack.c.h.b16 %v350
  %v1779 = vunpack.c.l.b16 %v351
  %v1780 = vunpack.c.h.b16 %v351
  %v1781 = vunpack.c.l.b16 %v352
  %v1782 = vunpack.c.h.b16 %v352
  %v1783 = vunpack.c.l.b16 %v353
  %v1784 = vunpack.c.h.b16 %v353
  %v1785 = vunpack.c.l.b16 %v354
  %v1786 = vunpack.c.h.b16 %v354
  %v1787 = vunpack.c.l.b16 %v355
  %v1788 = vunpack.c.h.b16 %v355
  %v1789 = vunpack.c.l.b16 %v356
  %v1790 = vunpack.c.h.b16 %v356
  %v1791 = vunpack.c.l.b16 %v357
  %v1792 = vunpack.c.h.b16 %v357
  %v1793 = vunpack.c.l.b16 %v358
  %v1794 = vunpack.c.h.b16 %v358
  %v1795 = vunpack.c.l.b16 %v359
  %v1796 = vunpack.c.h.b16 %v359
  %v1797 = vunpack.c.l.b16 %v360
  %v1798 = vunpack.c.h.b16 %v360
  %v1799 = vunpack.c.l.b16 %v361
  %v1800 = vunpack.c.h.b16 %v361
  %v1801 = vunpack.c.l.b16 %v362
  %v1802 = vunpack.c.h.b16 %v362
  %v1803 = vunpack.c.l.b16 %v363
  %v1804 = vunpack.c.h.b16 %v363
  %v1805 = vunpack.c.l.b16 %v364
  %v1806 = vunpack.c.h.b16 %v364
  %v1807 = vunpack.c.l.b16 %v365
  %v1808 = vunpack.c.h.b16 %v365
  %v1809 = vunpack.c.l.b16 %v366
  %v1810 = vunpack.c.h.b16 %v366
  %v1811 = vunpack.c.l.b16 %v367
  %v1812 = vunpack.c.h.b16 %v367
  %v1813 = vunpack.c.l.b16 %v368
  %v1814 = vunpack.c.h.b16 %v368
  %v1815 = vunpack.c.l.b16 %v369
  %v1816 = vunpack.c.h.b16 %v369
  %v1817 = vunpack.c.l.b16 %v370
  %v1818 = vunpack.c.h.b16 %v370
  %v1819 = vunpack.c.l.b16 %v371
  %v1820 = vunpack.c.h.b16 %v371
  %v1821 = vunpack.c.l.b16 %v372
  %v1822 = vunpack.c.h.b16 %v372
  %v1823 = vunpack.c.l.b16 %v373
  %v1824 = vunpack.c.h.b16 %v373
  %v1825 = vunpack.c.l.b16 %v374
  %v1826 = vunpack.c.h.b16 %v374
  %v1827 = vunpack.c.l.b16 %v375
  %v1828 = vunpack.c.h.b16 %v375
  %v1829 = vunpack.c.l.b16 %v376
  %v1830 = vunpack.c.h.b16 %v376
  %v1831 = vunpack.c.l.b16 %v377
  %v1832 = vunpack.c.h.b16 %v377
  %v1833 = vunpack.c.l.b16 %v378
  %v1834 = vunpack.c.h.b16 %v378
  %v1835 = vunpack.c.l.b16 %v379
  %v1836 = vunpack.c.h.b16 %v379
  %v1837 = vunpack.c.l.b16 %v380
  %v1838 = vunpack.c.h.b16 %v380
  %v1839 = vunpack.c.l.b16 %v381
  %v1840 = vunpack.c.h.b16 %v381
  %v1841 = vunpack.c.l.b16 %v382
  %v1842 = vunpack.c.h.b16 %v382
  %v1843 = vunpack.c.l.b16 %v383
  %v1844 = vunpack.c.h.b16 %v383
  %v1845 = vunpack.c.l.b16 %v384
  %v1846 = vunpack.c.h.b16 %v384
  %v1847 = vunpack.c.l.b16 %v385
  %v1848 = vunpack.c.h.b16 %v385
  %v1849 = vunpack.c.l.b16 %v386
  %v1850 = vunpack.c.h.b16 %v386
  %v1851 = vunpack.c.l.b16 %v387
  %v1852 = vunpack.c.h.b16 %v387
  %v1853 = vunpack.c.l.b16 %v388
  %v1854 = vunpack.c.h.b16 %v388
  %v1855 = vunpack.c.l.b16 %v389
  %v1856 = vunpack.c.h.b16 %v389
  %v1857 = vunpack.c.l.b16 %v390
  %v1858 = vunpack.c.h.b16 %v390
  %v1859 = vunpack.c.l.b16 %v391
  %v1860 = vunpack.c.h.b16 %v391
  %v1861 = vunpack.c.l.b16 %v392
  %v1862 = vunpack.c.h.b16 %v392
  %v1863 = vunpack.c.l.b16 %v393
  %v1864 = vunpack.c.h.b16 %v393
  %v1865 = vunpack.c.l.b16 %v394
  %v1866 = vunpack.c.h.b16 %v394
  %v1867 = vunpack.c.l.b16 %v395
  %v1868 = vunpack.c.h.b16 %v395
  %v1869 = vunpack.c.l.b16 %v396
  %v1870 = vunpack.c.h.b16 %v396
  %v1871 = vunpack.c.l.b16 %v397
  %v1872 = vunpack.c.h.b16 %v397
  %v1873 = vunpack.c.l.b16 %v398
  %v1874 = vunpack.c.h.b16 %v398
  %v1875 = vunpack.c.l.b16 %v399
  %v1876 = vunpack.c.h.b16 %v399
  %v1877 = vunpack.c.l.b16 %v400
  %v1878 = vunpack.c.h.b16 %v400
  %v1879 = vunpack.c.l.b16 %v401
  %v1880 = vunpack.c.h.b16 %v401
  %v1881 = vunpack.c.l.b16 %v402
  %v1882 = vunpack.c.h.b16 %v402
  %v1883 = vunpack.c.l.b16 %v403
  %v1884 = vunpack.c.h.b16 %v403
  %v1885 = vunpack.c.l.b16 %v404
  %v1886 = vunpack.c.h.b16 %v404
  %v1887 = vunpack.c.l.b16 %v405
  %v1888 = vunpack.c.h.b16 %v405
  %v1889 = vunpack.c.l.b16 %v406
  %v1890 = vunpack.c.h.b16 %v406
  %v1891 = vunpack.c.l.b16 %v407
  %v1892 = vunpack.c.h.b16 %v407
  %v1893 = vunpack.c.l.b16 %v408
  %v1894 = vunpack.c.h.b16 %v408
  %v1895 = vunpack.c.l.b16 %v409
  %v1896 = vunpack.c.h.b16 %v409
  %v1897 = vunpack.c.l.b16 %v410
  %v1898 = vunpack.c.h.b16 %v410
  %v1899 = vunpack.c.l.b16 %v411
  %v1900 = vunpack.c.h.b16 %v411
  %v1901 = vunpack.c.l.b16 %v412
  %v1902 = vunpack.c.h.b16 %v412
  %v1903 = vunpack.c.l.b16 %v413
  %v1904 = vunpack.c.h.b16 %v413
  %v1905 = vunpack.c.l.b16 %v414
  %v1906 = vunpack.c.h.b16 %v414
  %v1907 = vunpack.c.l.b16 %v415
  %v1908 = vunpack.c.h.b16 %v415
  %v1909 = vunpack.c.l.b16 %v416
  %v1910 = vunpack.c.h.b16 %v416
  %v1911 = vunpack.c.l.b16 %v417
  %v1912 = vunpack.c.h.b16 %v417
  %v1913 = vunpack.c.l.b16 %v418
  %v1914 = vunpack.c.h.b16 %v418
  %v1915 = vunpack.c.l.b16 %v419
  %v1916 = vunpack.c.h.b16 %v419
  %v1917 = vunpack.c.l.b16 %v420
  %v1918 = vunpack.c.h.b16 %v420
  %v1919 = vunpack.c.l.b16 %v421
  %v1920 = vunpack.c.h.b16 %v421
  %v1921 = vunpack.c.l.b16 %v422
  %v1922 = vunpack.c.h.b16 %v422
  %v1923 = vunpack.c.l.b16 %v423
  %v1924 = vunpack.c.h.b16 %v423
  %v1925 = vunpack.c.l.b16 %v424
  %v1926 = vunpack.c.h.b16 %v424
  %v1927 = vunpack.c.l.b16 %v425
  %v1928 = vunpack.c.h.b16 %v425
  %v1929 = vunpack.c.l.b16 %v426
  %v1930 = vunpack.c.h.b16 %v426
  %v1931 = vunpack.c.l.b16 %v427
  %v1932 = vunpack.c.h.b16 %v427
  %v1933 = vunpack.c.l.b16 %v428
  %v1934 = vunpack.c.h.b16 %v428
  %v1935 = vunpack.c.l.b16 %v429
  %v1936 = vunpack.c.h.b16 %v429
  %v1937 = vunpack.c.l.b16 %v430
  %v1938 = vunpack.c.h.b16 %v430
  %v1939 = vunpack.c.l.b16 %v431
  %v1940 = vunpack.c.h.b16 %v431
  %v1941 = vunpack.c.l.b16 %v432
  %v1942 = vunpack.c.h.b16 %v432
  %v1943 = vunpack.c.l.b16 %v433
  %v1944 = vunpack.c.h.b16 %v433
  %v1945 = vunpack.c.l.b16 %v434
  %v1946 = vunpack.c.h.b16 %v434
  %v1947 = vunpack.c.l.b16 %v435
  %v1948 = vunpack.c.h.b16 %v435
  %v1949 = vunpack.c.l.b16 %v436
  %v1950 = vunpack.c.h.b16 %v436
  %v1951 = vunpack.c.l.b16 %v437
  %v1952 = vunpack.c.h.b16 %v437
  %v1953 = vunpack.c.l.b16 %v438
  %v1954 = vunpack.c.h.b16 %v438
  %v1955 = vunpack.c.l.b16 %v439
  %v1956 = vunpack.c.h.b16 %v439
  %v1957 = vunpack.c.l.b16 %v440
  %v1958 = vunpack.c.h.b16 %v440
  %v1959 = vunpack.c.l.b16 %v441
  %v1960 = vunpack.c.h.b16 %v441
  %v1961 = vunpack.c.l.b16 %v442
  %v1962 = vunpack.c.h.b16 %v442
  %v1963 = vunpack.c.l.b16 %v443
  %v1964 = vunpack.c.h.b16 %v443
  %v1965 = vunpack.c.l.b16 %v444
  %v1966 = vunpack.c.h.b16 %v444
  %v1967 = vunpack.c.l.b16 %v445
  %v1968 = vunpack.c.h.b16 %v445
  %v1969 = vunpack.c.l.b16 %v446
  %v1970 = vunpack.c.h.b16 %v446
  %v1971 = vunpack.c.l.b16 %v447
  %v1972 = vunpack.c.h.b16 %v447
  %v1973 = vunpack.c.l.b16 %v448
  %v1974 = vunpack.c.h.b16 %v448
  %v1975 = vunpack.c.l.b16 %v449
  %v1976 = vunpack.c.h.b16 %v449
  %v1977 = vunpack.c.l.b16 %v450
  %v1978 = vunpack.c.h.b16 %v450
  %v1979 = vunpack.c.l.b16 %v451
  %v1980 = vunpack.c.h.b16 %v451
  %v1981 = vunpack.c.l.b16 %v452
  %v1982 = vunpack.c.h.b16 %v452
  %v1983 = vunpack.c.l.b16 %v453
  %v1984 = vunpack.c.h.b16 %v453
  %v1985 = vunpack.c.l.b16 %v454
  %v1986 = vunpack.c.h.b16 %v454
  %v1987 = vunpack.c.l.b16 %v455
  %v1988 = vunpack.c.h.b16 %v455
  %v1989 = vunpack.c.l.b16 %v456
  %v1990 = vunpack.c.h.b16 %v456
  %v1991 = vunpack.c.l.b16 %v457
  %v1992 = vunpack.c.h.b16 %v457
  %v1993 = vunpack.c.l.b16 %v458
  %v1994 = vunpack.c.h.b16 %v458
  %v1995 = vunpack.c.l.b16 %v459
  %v1996 = vunpack.c.h.b16 %v459
  %v1997 = vunpack.c.l.b16 %v460
  %v1998 = vunpack.c.h.b16 %v460
  %v1999 = vunpack.c.l.b16 %v461
  %v2000 = vunpack.c.h.b16 %v461
  %v2001 = vunpack.c.l.b16 %v462
  %v2002 = vunpack.c.h.b16 %v462
  %v2003 = vunpack.c.l.b16 %v463
  %v2004 = vunpack.c.h.b16 %v463
  %v2005 = vunpack.c.l.b16 %v464
  %v2006 = vunpack.c.h.b16 %v464
  %v2007 = vunpack.c.l.b16 %v465
  %v2008 = vunpack.c.h.b16 %v465
  %v2009 = vunpack.c.l.b16 %v466
  %v2010 = vunpack.c.h.b16 %v466
  %v2011 = vunpack.c.l.b16 %v467
  %v2012 = vunpack.c.h.b16 %v467
  %v2013 = vunpack.c.l.b16 %v468
  %v2014 = vunpack.c.h.b16 %v468
  %v2015 = vunpack.c.l.b16 %v469
  %v2016 = vunpack.c.h.b16 %v469
  %v2017 = vunpack.c.l.b16 %v470
  %v2018 = vunpack.c.h.b16 %v470
  %v2019 = vunpack.c.l.b16 %v471
  %v2020 = vunpack.c.h.b16 %v471
  %v2021 = vunpack.c.l.b16 %v472
  %v2022 = vunpack.c.h.b16 %v472
  %v2023 = vunpack.c.l.b16 %v473
  %v2024 = vunpack.c.h.b16 %v473
  %v2025 = vunpack.c.l.b16 %v474
  %v2026 = vunpack.c.h.b16 %v474
  %v2027 = vunpack.c.l.b16 %v475
  %v2028 = vunpack.c.h.b16 %v475
  %v2029 = vunpack.c.l.b16 %v476
  %v2030 = vunpack.c.h.b16 %v476
  %v2031 = vunpack.c.l.b16 %v477
  %v2032 = vunpack.c.h.b16 %v477
  %v2033 = vunpack.c.l.b16 %v478
  %v2034 = vunpack.c.h.b16 %v478
  %v2035 = vunpack.c.l.b16 %v479
  %v2036 = vunpack.c.h.b16 %v479
  %v2037 = vunpack.c.l.b16 %v480
  %v2038 = vunpack.c.h.b16 %v480
  %v2039 = vunpack.c.l.b16 %v481
  %v2040 = vunpack.c.h.b16 %v481
  %v2041 = vunpack.c.l.b16 %v482
  %v2042 = vunpack.c.h.b16 %v482
  %v2043 = vunpack.c.l.b16 %v483
  %v2044 = vunpack.c.h.b16 %v483
  %v2045 = vunpack.c.l.b16 %v484
  %v2046 = vunpack.c.h.b16 %v484
  %v2047 = vunpack.c.l.b16 %v485
  %v2048 = vunpack.c.h.b16 %v485
  %v2049 = vunpack.c.l.b16 %v486
  %v2050 = vunpack.c.h.b16 %v486
  %v2051 = vunpack.c.l.b16 %v487
  %v2052 = vunpack.c.h.b16 %v487
  %v2053 = vunpack.c.l.b16 %v488
  %v2054 = vunpack.c.h.b16 %v488
  %v2055 = vunpack.c.l.b16 %v489
  %v2056 = vunpack.c.h.b16 %v489
  %v2057 = vunpack.c.l.b16 %v490
  %v2058 = vunpack.c.h.b16 %v490
  %v2059 = vunpack.c.l.b16 %v491
  %v2060 = vunpack.c.h.b16 %v491
  %v2061 = vunpack.c.l.b16 %v492
  %v2062 = vunpack.c.h.b16 %v492
  %v2063 = vunpack.c.l.b16 %v493
  %v2064 = vunpack.c.h.b16 %v493
  %v2065 = vunpack.c.l.b16 %v494
  %v2066 = vunpack.c.h.b16 %v494
  %v2067 = vunpack.c.l.b16 %v495
  %v2068 = vunpack.c.h.b16 %v495
  %v2069 = vunpack.c.l.b16 %v496
  %v2070 = vunpack.c.h.b16 %v496
  %v2071 = vunpack.c.l.b16 %v497
  %v2072 = vunpack.c.h.b16 %v497
  %v2073 = vunpack.c.l.b16 %v498
  %v2074 = vunpack.c.h.b16 %v498
  %v2075 = vunpack.c.l.b16 %v499
  %v2076 = vunpack.c.h.b16 %v499
  %v2077 = vunpack.c.l.b16 %v500
  %v2078 = vunpack.c.h.b16 %v500
  %v2079 = vunpack.c.l.b16 %v501
  %v2080 = vunpack.c.h.b16 %v501
  %v2081 = vunpack.c.l.b16 %v502
  %v2082 = vunpack.c.h.b16 %v502
  %v2083 = vpack.c.b16 %v1221, %v1219
  %v2084 = vpack.c.b16 %v1222, %v1220
  %v2085 = vpack.c.b16 %v1225, %v1223
  %v2086 = vpack.c.b16 %v1226, %v1224
  %v2087 = vpack.c.b16 %v1229, %v1227
  %v2088 = vpack.c.b16 %v1230, %v1228
  %v2089 = vpack.c.b16 %v1233, %v1231
  %v2090 = vpack.c.b16 %v1234, %v1232
  %v2091 = vpack.c.b16 %v1237, %v1235
  %v2092 = vpack.c.b16 %v1238, %v1236
  %v2093 = vpack.c.b16 %v1241, %v1239
  %v2094 = vpack.c.b16 %v1242, %v1240
  %v2095 = vpack.c.b16 %v1245, %v1243
  %v2096 = vpack.c.b16 %v1246, %v1244
  %v2097 = vpack.c.b16 %v1249, %v1247
  %v2098 = vpack.c.b16 %v1250, %v1248
  %v2099 = vpack.c.b16 %v1253, %v1251
  %v2100 = vpack.c.b16 %v1254, %v1252
  %v2101 = vpack.c.b16 %v1257, %v1255
  %v2102 = vpack.c.b16 %v1258, %v1256
  %v2103 = vpack.c.b16 %v1261, %v1259
  %v2104 = vpack.c.b16 %v1262, %v1260
  %v2105 = vpack.c.b16 %v1265, %v1263
  %v2106 = vpack.c.b16 %v1266, %v1264
  %v2107 = vpack.c.b16 %v1269, %v1267
  %v2108 = vpack.c.b16 %v1270, %v1268
  %v2109 = vpack.c.b16 %v1273, %v1271
  %v2110 = vpack.c.b16 %v1274, %v1272
  %v2111 = vpack.c.b16 %v1277, %v1275
  %v2112 = vpack.c.b16 %v1278, %v1276
  %v2113 = vpack.c.b16 %v1281, %v1279
  %v2114 = vpack.c.b16 %v1282, %v1280
  %v2115 = vpack.c.b16 %v1285, %v1283
  %v2116 = vpack.c.b16 %v1286, %v1284
  %v2117 = vpack.c.b16 %v1289, %v1287
  %v2118 = vpack.c.b16 %v1290, %v1288
  %v2119 = vpack.c.b16 %v1293, %v1291
  %v2120 = vpack.c.b16 %v1294, %v1292
  %v2121 = vpack.c.b16 %v1297, %v1295
  %v2122 = vpack.c.b16 %v1298, %v1296
  %v2123 = vpack.c.b16 %v1301, %v1299
  %v2124 = vpack.c.b16 %v1302, %v1300
  %v2125 = vpack.c.b16 %v1305, %v1303
  %v2126 = vpack.c.b16 %v1306, %v1304
  %v2127 = vpack.c.b16 %v1309, %v1307
  %v2128 = vpack.c.b16 %v1310, %v1308
  %v2129 = vpack.c.b16 %v1313, %v1311
  %v2130 = vpack.c.b16 %v1314, %v1312
  %v2131 = vpack.c.b16 %v1317, %v1315
  %v2132 = vpack.c.b16 %v1318, %v1316
  %v2133 = vpack.c.b16 %v1321, %v1319
  %v2134 = vpack.c.b16 %v1322, %v1320
  %v2135 = vpack.c.b16 %v1325, %v1323
  %v2136 = vpack.c.b16 %v1326, %v1324
  %v2137 = vpack.c.b16 %v1329, %v1327
  %v2138 = vpack.c.b16 %v1330, %v1328
  %v2139 = vpack.c.b16 %v1333, %v1331
  %v2140 = vpack.c.b16 %v1334, %v1332
  %v2141 = vpack.c.b16 %v1337, %v1335
  %v2142 = vpack.c.b16 %v1338, %v1336
  %v2143 = vpack.c.b16 %v1341, %v1339
  %v2144 = vpack.c.b16 %v1342, %v1340
  %v2145 = vpack.c.b16 %v1345, %v1343
  %v2146 = vpack.c.b16 %v1346, %v1344
  %v2147 = vpack.c.b16 %v1349, %v1347
  %v2148 = vpack.c.b16 %v1350, %v1348
  %v2149 = vpack.c.b16 %v1353, %v1351
  %v2150 = vpack.c.b16 %v1354, %v1352
  %v2151 = vpack.c.b16 %v1357, %v1355
  %v2152 = vpack.c.b16 %v1358, %v1356
  %v2153 = vpack.c.b16 %v1361, %v1359
  %v2154 = vpack.c.b16 %v1362, %v1360
  %v2155 = vpack.c.b16 %v1365, %v1363
  %v2156 = vpack.c.b16 %v1366, %v1364
  %v2157 = vpack.c.b16 %v1369, %v1367
  %v2158 = vpack.c.b16 %v1370, %v1368
  %v2159 = vpack.c.b16 %v1373, %v1371
  %v2160 = vpack.c.b16 %v1374, %v1372
  %v2161 = vpack.c.b16 %v1377, %v1375
  %v2162 = vpack.c.b16 %v1378, %v1376
  %v2163 = vpack.c.b16 %v1381, %v1379
  %v2164 = vpack.c.b16 %v1382, %v1380
  %v2165 = vpack.c.b16 %v1385, %v1383
  %v2166 = vpack.c.b16 %v1386, %v1384
  %v2167 = vpack.c.b16 %v1389, %v1387
  %v2168 = vpack.c.b16 %v1390, %v1388
  %v2169 = vpack.c.b16 %v1393, %v1391
  %v2170 = vpack.c.b16 %v1394, %v1392
  %v2171 = vpack.c.b16 %v1397, %v1395
  %v2172 = vpack.c.b16 %v1398, %v1396
  %v2173 = vpack.c.b16 %v1401, %v1399
  %v2174 = vpack.c.b16 %v1402, %v1400
  %v2175 = vpack.c.b16 %v1405, %v1403
  %v2176 = vpack.c.b16 %v1406, %v1404
  %v2177 = vpack.c.b16 %v1409, %v1407
  %v2178 = vpack.c.b16 %v1410, %v1408
  %v2179 = vpack.c.b16 %v1413, %v1411
  %v2180 = vpack.c.b16 %v1414, %v1412
  %v2181 = vpack.c.b16 %v1417, %v1415
  %v2182 = vpack.c.b16 %v1418, %v1416
  %v2183 = vpack.c.b16 %v1421, %v1419
  %v2184 = vpack.c.b16 %v1422, %v1420
  %v2185 = vpack.c.b16 %v1425, %v1423
  %v2186 = vpack.c.b16 %v1426, %v1424
  %v2187 = vpack.c.b16 %v1429, %v1427
  %v2188 = vpack.c.b16 %v1430, %v1428
  %v2189 = vpack.c.b16 %v1433, %v1431
  %v2190 = vpack.c.b16 %v1434, %v1432
  %v2191 = vpack.c.b16 %v1437, %v1435
  %v2192 = vpack.c.b16 %v1438, %v1436
  %v2193 = vpack.c.b16 %v1441, %v1439
  %v2194 = vpack.c.b16 %v1442, %v1440
  %v2195 = vpack.c.b16 %v1445, %v1443
  %v2196 = vpack.c.b16 %v1446, %v1444
  %v2197 = vpack.c.b16 %v1449, %v1447
  %v2198 = vpack.c.b16 %v1450, %v1448
  %v2199 = vpack.c.b16 %v1453, %v1451
  %v2200 = vpack.c.b16 %v1454, %v1452
  %v2201 = vpack.c.b16 %v1457, %v1455
  %v2202 = vpack.c.b16 %v1458, %v1456
  %v2203 = vpack.c.b16 %v1461, %v1459
  %v2204 = vpack.c.b16 %v1462, %v1460
  %v2205 = vpack.c.b16 %v1465, %v1463
  %v2206 = vpack.c.b16 %v1466, %v1464
  %v2207 = vpack.c.b16 %v1469, %v1467
  %v2208 = vpack.c.b16 %v1470, %v1468
  %v2209 = vpack.c.b16 %v1473, %v1471
  %v2210 = vpack.c.b16 %v1474, %v1472
  %v2211 = vpack.c.b16 %v1477, %v1475
  %v2212 = vpack.c.b16 %v1478, %v1476
  %v2213 = vpack.c.b16 %v1481, %v1479
  %v2214 = vpack.c.b16 %v1482, %v1480
  %v2215 = vpack.c.b16 %v1485, %v1483
  %v2216 = vpack.c.b16 %v1486, %v1484
  %v2217 = vpack.c.b16 %v1489, %v1487
  %v2218 = vpack.c.b16 %v1490, %v1488
  %v2219 = vpack.c.b16 %v1493, %v1491
  %v2220 = vpack.c.b16 %v1494, %v1492
  %v2221 = vpack.c.b16 %v1497, %v1495
  %v2222 = vpack.c.b16 %v1498, %v1496
  %v2223 = vpack.c.b16 %v1501, %v1499
  %v2224 = vpack.c.b16 %v1502, %v1500
  %v2225 = vpack.c.b16 %v1505, %v1503
  %v2226 = vpack.c.b16 %v1506, %v1504
  %v2227 = vpack.c.b16 %v1509, %v1507
  %v2228 = vpack.c.b16 %v1510, %v1508
  %v2229 = vpack.c.b16 %v1513, %v1511
  %v2230 = vpack.c.b16 %v1514, %v1512
  %v2231 = vpack.c.b16 %v1517, %v1515
  %v2232 = vpack.c.b16 %v1518, %v1516
  %v2233 = vpack.c.b16 %v1521, %v1519
  %v2234 = vpack.c.b16 %v1522, %v1520
  %v2235 = vpack.c.b16 %v1525, %v1523
  %v2236 = vpack.c.b16 %v1526, %v1524
  %v2237 = vpack.c.b16 %v1529, %v1527
  %v2238 = vpack.c.b16 %v1530, %v1528
  %v2239 = vpack.c.b16 %v1533, %v1531
  %v2240 = vpack.c.b16 %v1534, %v1532
  %v2241 = vpack.c.b16 %v1537, %v1535
  %v2242 = vpack.c.b16 %v1538, %v1536
  %v2243 = vpack.c.b16 %v1541, %v1539
  %v2244 = vpack.c.b16 %v1542, %v1540
  %v2245 = vpack.c.b16 %v1545, %v1543
  %v2246 = vpack.c.b16 %v1546, %v1544
  %v2247 = vpack.c.b16 %v1549, %v1547
  %v2248 = vpack.c.b16 %v1550, %v1548
  %v2249 = vpack.c.b16 %v1553, %v1551
  %v2250 = vpack.c.b16 %v1554, %v1552
  %v2251 = vpack.c.b16 %v1557, %v1555
  %v2252 = vpack.c.b16 %v1558, %v1556
  %v2253 = vpack.c.b16 %v1561, %v1559
  %v2254 = vpack.c.b16 %v1562, %v1560
  %v2255 = vpack.c.b16 %v1565, %v1563
  %v2256 = vpack.c.b16 %v1566, %v1564
  %v2257 = vpack.c.b16 %v1569, %v1567
  %v2258 = vpack.c.b16 %v1570, %v1568
  %v2259 = vpack.c.b16 %v1573, %v1571
  %v2260 = vpack.c.b16 %v1574, %v1572
  %v2261 = vpack.c.b16 %v1577, %v1575
  %v2262 = vpack.c.b16 %v1578, %v1576
  %v2263 = vpack.c.b16 %v1581, %v1579
  %v2264 = vpack.c.b16 %v1582, %v1580
  %v2265 = vpack.c.b16 %v1585, %v1583
  %v2266 = vpack.c.b16 %v1586, %v1584
  %v2267 = vpack.c.b16 %v1589, %v1587
  %v2268 = vpack.c.b16 %v1590, %v1588
  %v2269 = vpack.c.b16 %v1593, %v1591
  %v2270 = vpack.c.b16 %v1594, %v1592
  %v2271 = vpack.c.b16 %v1597, %v1595
  %v2272 = vpack.c.b16 %v1598, %v1596
  %v2273 = vpack.c.b16 %v1601, %v1599
  %v2274 = vpack.c.b16 %v1602, %v1600
  %v2275 = vpack.c.b16 %v1605, %v1603
  %v2276 = vpack.c.b16 %v1606, %v1604
  %v2277 = vpack.c.b16 %v1609, %v1607
  %v2278 = vpack.c.b16 %v1610, %v1608
  %v2279 = vpack.c.b16 %v1613, %v1611
  %v2280 = vpack.c.b16 %v1614, %v1612
  %v2281 = vpack.c.b16 %v1617, %v1615
  %v2282 = vpack.c.b16 %v1618, %v1616
  %v2283 = vpack.c.b16 %v1621, %v1619
  %v2284 = vpack.c.b16 %v1622, %v1620
  %v2285 = vpack.c.b16 %v1625, %v1623
  %v2286 = vpack.c.b16 %v1626, %v1624
  %v2287 = vpack.c.b16 %v1629, %v1627
  %v2288 = vpack.c.b16 %v1630, %v1628
  %v2289 = vpack.c.b16 %v1633, %v1631
  %v2290 = vpack.c.b16 %v1634, %v1632
  %v2291 = vpack.c.b16 %v1637, %v1635
  %v2292 = vpack.c.b16 %v1638, %v1636
  %v2293 = vpack.c.b16 %v1641, %v1639
  %v2294 = vpack.c.b16 %v1642, %v1640
  %v2295 = vpack.c.b16 %v1645, %v1643
  %v2296 = vpack.c.b16 %v1646, %v1644
  %v2297 = vpack.c.b16 %v1649, %v1647
  %v2298 = vpack.c.b16 %v1650, %v1648
  %v2299 = vpack.c.b16 %v1653, %v1651
  %v2300 = vpack.c.b16 %v1654, %v1652
  %v2301 = vpack.c.b16 %v1657, %v1655
  %v2302 = vpack.c.b16 %v1658, %v1656
  %v2303 = vpack.c.b16 %v1661, %v1659
  %v2304 = vpack.c.b16 %v1662, %v1660
  %v2305 = vpack.c.b16 %v1665, %v1663
  %v2306 = vpack.c.b16 %v1666, %v1664
  %v2307 = vpack.c.b16 %v1669, %v1667
  %v2308 = vpack.c.b16 %v1670, %v1668
  %v2309 = vpack.c.b16 %v1673, %v1671
  %v2310 = vpack.c.b16 %v1674, %v1672
  %v2311 = vpack.c.b16 %v1677, %v1675
  %v2312 = vpack.c.b16 %v1678, %v1676
  %v2313 = vpack.c.b16 %v1681, %v1679
  %v2314 = vpack.c.b16 %v1682, %v1680
  %v2315 = vpack.c.b16 %v1685, %v1683
  %v2316 = vpack.c.b16 %v1686, %v1684
  %v2317 = vpack.c.b16 %v1689, %v1687
  %v2318 = vpack.c.b16 %v1690, %v1688
  %v2319 = vpack.c.b16 %v1693, %v1691
  %v2320 = vpack.c.b16 %v1694, %v1692
  %v2321 = vpack.c.b16 %v1697, %v1695
  %v2322 = vpack.c.b16 %v1698, %v1696
  %v2323 = vpack.c.b16 %v1701, %v1699
  %v2324 = vpack.c.b16 %v1702, %v1700
  %v2325 = vpack.c.b16 %v1705, %v1703
  %v2326 = vpack.c.b16 %v1706, %v1704
  %v2327 = vpack.c.b16 %v1709, %v1707
  %v2328 = vpack.c.b16 %v1710, %v1708
  %v2329 = vpack.c.b16 %v1713, %v1711
  %v2330 = vpack.c.b16 %v1714, %v1712
  %v2331 = vpack.c.b16 %v1717, %v1715
  %v2332 = vpack.c.b16 %v1718, %v1716
  %v2333 = vpack.c.b16 %v1721, %v1719
  %v2334 = vpack.c.b16 %v1722, %v1720
  %v2335 = vpack.c.b16 %v1725, %v1723
  %v2336 = vpack.c.b16 %v1726, %v1724
  %v2337 = vpack.c.b16 %v1729, %v1727
  %v2338 = vpack.c.b16 %v1730, %v1728
  %v2339 = vpack.c.b16 %v1733, %v1731
  %v2340 = vpack.c.b16 %v1734, %v1732
  %v2341 = vpack.c.b16 %v1737, %v1735
  %v2342 = vpack.c.b16 %v1738, %v1736
  %v2343 = vpack.c.b16 %v1741, %v1739
  %v2344 = vpack.c.b16 %v1742, %v1740
  %v2345 = vpack.c.b16 %v1745, %v1743
  %v2346 = vpack.c.b16 %v1746, %v1744
  %v2347 = vpack.c.b16 %v1749, %v1747
  %v2348 = vpack.c.b16 %v1750, %v1748
  %v2349 = vpack.c.b16 %v1753, %v1751
  %v2350 = vpack.c.b16 %v1754, %v1752
  %v2351 = vpack.c.b16 %v1757, %v1755
  %v2352 = vpack.c.b16 %v1758, %v1756
  %v2353 = vpack.c.b16 %v1761, %v1759
  %v2354 = vpack.c.b16 %v1762, %v1760
  %v2355 = vpack.c.b16 %v1765, %v1763
  %v2356 = vpack.c.b16 %v1766, %v1764
  %v2357 = vpack.c.b16 %v1769, %v1767
  %v2358 = vpack.c.b16 %v1770, %v1768
  %v2359 = vpack.c.b16 %v1773, %v1771
  %v2360 = vpack.c.b16 %v1774, %v1772
  %v2361 = vpack.c.b16 %v1777, %v1775
  %v2362 = vpack.c.b16 %v1778, %v1776
  %v2363 = vpack.c.b16 %v1781, %v1779
  %v2364 = vpack.c.b16 %v1782, %v1780
  %v2365 = vpack.c.b16 %v1785, %v1783
  %v2366 = vpack.c.b16 %v1786, %v1784
  %v2367 = vpack.c.b16 %v1789, %v1787
  %v2368 = vpack.c.b16 %v1790, %v1788
  %v2369 = vpack.c.b16 %v1793, %v1791
  %v2370 = vpack.c.b16 %v1794, %v1792
  %v2371 = vpack.c.b16 %v1797, %v1795
  %v2372 = vpack.c.b16 %v1798, %v1796
  %v2373 = vpack.c.b16 %v1801, %v1799
  %v2374 = vpack.c.b16 %v1802, %v1800
  %v2375 = vpack.c.b16 %v1805, %v1803
  %v2376 = vpack.c.b16 %v1806, %v1804
  %v2377 = vpack.c.b16 %v1809, %v1807
  %v2378 = vpack.c.b16 %v1810, %v1808
  %v2379 = vpack.c.b16 %v1813, %v1811
  %v2380 = vpack.c.b16 %v1814, %v1812
  %v2381 = vpack.c.b16 %v1817, %v1815
  %v2382 = vpack.c.b16 %v1818, %v1816
  %v2383 = vpack.c.b16 %v1821, %v1819
  %v2384 = vpack.c.b16 %v1822, %v1820
  %v2385 = vpack.c.b16 %v1825, %v1823
  %v2386 = vpack.c.b16 %v1826, %v1824
  %v2387 = vpack.c.b16 %v1829, %v1827
  %v2388 = vpack.c.b16 %v1830, %v1828
  %v2389 = vpack.c.b16 %v1833, %v1831
  %v2390 = vpack.c.b16 %v1834, %v1832
  %v2391 = vpack.c.b16 %v1837, %v1835
  %v2392 = vpack.c.b16 %v1838, %v1836
  %v2393 = vpack.c.b16 %v1841, %v1839
  %v2394 = vpack.c.b16 %v1842, %v1840
  %v2395 = vpack.c.b16 %v1845, %v1843
  %v2396 = vpack.c.b16 %v1846, %v1844
  %v2397 = vpack.c.b16 %v1849, %v1847
  %v2398 = vpack.c.b16 %v1850, %v1848
  %v2399 = vpack.c.b16 %v1853, %v1851
  %v2400 = vpack.c.b16 %v1854, %v1852
  %v2401 = vpack.c.b16 %v1857, %v1855
  %v2402 = vpack.c.b16 %v1858, %v1856
  %v2403 = vpack.c.b16 %v1861, %v1859
  %v2404 = vpack.c.b16 %v1862, %v1860
  %v2405 = vpack.c.b16 %v1865, %v1863
  %v2406 = vpack.c.b16 %v1866, %v1864
  %v2407 = vpack.c.b16 %v1869, %v1867
  %v2408 = vpack.c.b16 %v1870, %v1868
  %v2409 = vpack.c.b16 %v1873, %v1871
  %v2410 = vpack.c.b16 %v1874, %v1872
  %v2411 = vpack.c.b16 %v1877, %v1875
  %v2412 = vpack.c.b16 %v1878, %v1876
  %v2413 = vpack.c.b16 %v1881, %v1879
  %v2414 = vpack.c.b16 %v1882, %v1880
  %v2415 = vpack.c.b16 %v1885, %v1883
  %v2416 = vpack.c.b16 %v1886, %v1884
  %v2417 = vpack.c.b16 %v1889, %v1887
  %v2418 = vpack.c.b16 %v1890, %v1888
  %v2419 = vpack.c.b16 %v1893, %v1891
  %v2420 = vpack.c.b16 %v1894, %v1892
  %v2421 = vpack.c.b16 %v1897, %v1895
  %v2422 = vpack.c.b16 %v1898, %v1896
  %v2423 = vpack.c.b16 %v1901, %v1899
  %v2424 = vpack.c.b16 %v1902, %v1900
  %v2425 = vpack.c.b16 %v1905, %v1903
  %v2426 = vpack.c.b16 %v1906, %v1904
  %v2427 = vpack.c.b16 %v1909, %v1907
  %v2428 = vpack.c.b16 %v1910, %v1908
  %v2429 = vpack.c.b16 %v1913, %v1911
  %v2430 = vpack.c.b16 %v1914, %v1912
  %v2431 = vpack.c.b16 %v1917, %v1915
  %v2432 = vpack.c.b16 %v1918, %v1916
  %v2433 = vpack.c.b16 %v1921, %v1919
  %v2434 = vpack.c.b16 %v1922, %v1920
  %v2435 = vpack.c.b16 %v1925, %v1923
  %v2436 = vpack.c.b16 %v1926, %v1924
  %v2437 = vpack.c.b16 %v1929, %v1927
  %v2438 = vpack.c.b16 %v1930, %v1928
  %v2439 = vpack.c.b16 %v1933, %v1931
  %v2440 = vpack.c.b16 %v1934, %v1932
  %v2441 = vpack.c.b16 %v1937, %v1935
  %v2442 = vpack.c.b16 %v1938, %v1936
  %v2443 = vpack.c.b16 %v1941, %v1939
  %v2444 = vpack.c.b16 %v1942, %v1940
  %v2445 = vpack.c.b16 %v1945, %v1943
  %v2446 = vpack.c.b16 %v1946, %v1944
  %v2447 = vpack.c.b16 %v1949, %v1947
  %v2448 = vpack.c.b16 %v1950, %v1948
  %v2449 = vpack.c.b16 %v1953, %v1951
  %v2450 = vpack.c.b16 %v1954, %v1952
  %v2451 = vpack.c.b16 %v1957, %v1955
  %v2452 = vpack.c.b16 %v1958, %v1956
  %v2453 = vpack.c.b16 %v1961, %v1959
  %v2454 = vpack.c.b16 %v1962, %v1960
  %v2455 = vpack.c.b16 %v1965, %v1963
  %v2456 = vpack.c.b16 %v1966, %v1964
  %v2457 = vpack.c.b16 %v1969, %v1967
  %v2458 = vpack.c.b16 %v1970, %v1968
  %v2459 = vpack.c.b16 %v1973, %v1971
  %v2460 = vpack.c.b16 %v1974, %v1972
  %v2461 = vpack.c.b16 %v1977, %v1975
  %v2462 = vpack.c.b16 %v1978, %v1976
  %v2463 = vpack.c.b16 %v1981, %v1979
  %v2464 = vpack.c.b16 %v1982, %v1980
  %v2465 = vpack.c.b16 %v1985, %v1983
  %v2466 = vpack.c.b16 %v1986, %v1984
  %v2467 = vpack.c.b16 %v1989, %v1987
  %v2468 = vpack.c.b16 %v1990, %v1988
  %v2469 = vpack.c.b16 %v1993, %v1991
  %v2470 = vpack.c.b16 %v1994, %v1992
  %v2471 = vpack.c.b16 %v1997, %v1995
  %v2472 = vpack.c.b16 %v1998, %v1996
  %v2473 = vpack.c.b16 %v2001, %v1999
  %v2474 = vpack.c.b16 %v2002, %v2000
  %v2475 = vpack.c.b16 %v2005, %v2003
  %v2476 = vpack.c.b16 %v2006, %v2004
  %v2477 = vpack.c.b16 %v2009, %v2007
  %v2478 = vpack.c.b16 %v2010, %v2008
  %v2479 = vpack.c.b16 %v2013, %v2011
  %v2480 = vpack.c.b16 %v2014, %v2012
  %v2481 = vpack.c.b16 %v2017, %v2015
  %v2482 = vpack.c.b16 %v2018, %v2016
  %v2483 = vpack.c.b16 %v2021, %v2019
  %v2484 = vpack.c.b16 %v2022, %v2020
  %v2485 = vpack.c.b16 %v2025, %v2023
  %v2486 = vpack.c.b16 %v2026, %v2024
  %v2487 = vpack.c.b16 %v2029, %v2027
  %v2488 = vpack.c.b16 %v2030, %v2028
  %v2489 = vpack.c.b16 %v2033, %v2031
  %v2490 = vpack.c.b16 %v2034, %v2032
  %v2491 = vpack.c.b16 %v2037, %v2035
  %v2492 = vpack.c.b16 %v2038, %v2036
  %v2493 = vpack.c.b16 %v2041, %v2039
  %v2494 = vpack.c.b16 %v2042, %v2040
  %v2495 = vpack.c.b16 %v2045, %v2043
  %v2496 = vpack.c.b16 %v2046, %v2044
  %v2497 = vpack.c.b16 %v2049, %v2047
  %v2498 = vpack.c.b16 %v2050, %v2048
  %v2499 = vpack.c.b16 %v2053, %v2051
  %v2500 = vpack.c.b16 %v2054, %v2052
  %v2501 = vpack.c.b16 %v2057, %v2055
  %v2502 = vpack.c.b16 %v2058, %v2056
  %v2503 = vpack.c.b16 %v2061, %v2059
  %v2504 = vpack.c.b16 %v2062, %v2060
  %v2505 = vpack.c.b16 %v2065, %v2063
  %v2506 = vpack.c.b16 %v2066, %v2064
  %v2507 = vpack.c.b16 %v2069, %v2067
  %v2508 = vpack.c.b16 %v2070, %v2068
  %v2509 = vpack.c.b16 %v2073, %v2071
  %v2510 = vpack.c.b16 %v2074, %v2072
  %v2511 = vpack.c.b16 %v2077, %v2075
  %v2512 = vpack.c.b16 %v2078, %v2076
  %v2513 = vpack.c.b16 %v2081, %v2079
  %v2514 = vpack.c.b16 %v2082, %v2080
  %2947 = vmatprep.subr.bf16.mxu0 %v2084
  %2948 = vmatpush1.bf16.msra.mxu0 %v2083
  %2949 = vmatprep.subr.bf16.mxu0 %v2086
  %2950 = vmatpush1.bf16.msra.mxu0 %v2085
  %2951 = vmatprep.subr.bf16.mxu0 %v2088
  %2952 = vmatpush1.bf16.msra.mxu0 %v2087
  %2953 = vmatprep.subr.bf16.mxu0 %v2090
  %2954 = vmatpush1.bf16.msra.mxu0 %v2089
  %2955 = vmatprep.subr.bf16.mxu0 %v2092
  %2956 = vmatpush1.bf16.msra.mxu0 %v2091
  %2957 = vmatprep.subr.bf16.mxu0 %v2094
  %2958 = vmatpush1.bf16.msra.mxu0 %v2093
  %2959 = vmatprep.subr.bf16.mxu0 %v2096
  %2960 = vmatpush1.bf16.msra.mxu0 %v2095
  %2961 = vmatprep.subr.bf16.mxu0 %v2098
  %2962 = vmatpush1.bf16.msra.mxu0 %v2097
  %2963 = vmatprep.subr.bf16.mxu0 %v2100
  %2964 = vmatpush1.bf16.msra.mxu0 %v2099
  %2965 = vmatprep.subr.bf16.mxu0 %v2102
  %2966 = vmatpush1.bf16.msra.mxu0 %v2101
  %2967 = vmatprep.subr.bf16.mxu0 %v2104
  %2968 = vmatpush1.bf16.msra.mxu0 %v2103
  %2969 = vmatprep.subr.bf16.mxu0 %v2106
  %2970 = vmatpush1.bf16.msra.mxu0 %v2105
  %2971 = vmatprep.subr.bf16.mxu0 %v2108
  %2972 = vmatpush1.bf16.msra.mxu0 %v2107
  %2973 = vmatprep.subr.bf16.mxu0 %v2110
  %2974 = vmatpush1.bf16.msra.mxu0 %v2109
  %2975 = vmatprep.subr.bf16.mxu0 %v2112
  %2976 = vmatpush1.bf16.msra.mxu0 %v2111
  %2977 = vmatprep.subr.bf16.mxu0 %v2114
  %2978 = vmatpush1.bf16.msra.mxu0 %v2113
  %2979 = vmatprep.mubr.bf16.mxu0 %v680
  %2980 = vmatmul.mubr.bf16.gmra.mrb[0].mxu0 %v679
  %v2981 = vpop.f32.mrb[0].mxu0
  %v2982 = vadd.f32 %v508, %v2981
  %v2983 = vpop.f32.mrb[0].mxu0
  %v2984 = vadd.f32 %v512, %v2983
  %v2985 = vpop.f32.mrb[0].mxu0
  %v2986 = vadd.f32 %v508, %v2985
  %v2987 = vpop.f32.mrb[0].mxu0
  %v2988 = vadd.f32 %v512, %v2987
  %2989 = vmatprep.mubr.bf16.mxu0 %v707
  %2990 = vmatmul.mubr.bf16.gmra.mrb[0].mxu0 %v706
  %v2991 = vpop.f32.mrb[0].mxu0
  %v2992 = vadd.f32 %v508, %v2991
  %v2993 = vpop.f32.mrb[0].mxu0
  %v2994 = vadd.f32 %v512, %v2993
  %v2995 = vpop.f32.mrb[0].mxu0
  %v2996 = vadd.f32 %v508, %v2995
  %v2997 = vpop.f32.mrb[0].mxu0
  %v2998 = vadd.f32 %v512, %v2997
  %2999 = vdwg.mxu0
  %3000 = vmatprep.subr.bf16.mxu0 %v2116
  %3001 = vmatpush1.bf16.msra.mxu0 %v2115
  %3002 = vmatprep.subr.bf16.mxu0 %v2118
  %3003 = vmatpush1.bf16.msra.mxu0 %v2117
  %3004 = vmatprep.subr.bf16.mxu0 %v2120
  %3005 = vmatpush1.bf16.msra.mxu0 %v2119
  %3006 = vmatprep.subr.bf16.mxu0 %v2122
  %3007 = vmatpush1.bf16.msra.mxu0 %v2121
  %3008 = vmatprep.subr.bf16.mxu0 %v2124
  %3009 = vmatpush1.bf16.msra.mxu0 %v2123
  %3010 = vmatprep.subr.bf16.mxu0 %v2126
  %3011 = vmatpush1.bf16.msra.mxu0 %v2125
  %3012 = vmatprep.subr.bf16.mxu0 %v2128
  %3013 = vmatpush1.bf16.msra.mxu0 %v2127
  %3014 = vmatprep.subr.bf16.mxu0 %v2130
  %3015 = vmatpush1.bf16.msra.mxu0 %v2129
  %3016 = vmatprep.subr.bf16.mxu0 %v2132
  %3017 = vmatpush1.bf16.msra.mxu0 %v2131
  %3018 = vmatprep.subr.bf16.mxu0 %v2134
  %3019 = vmatpush1.bf16.msra.mxu0 %v2133
  %3020 = vmatprep.subr.bf16.mxu0 %v2136
  %3021 = vmatpush1.bf16.msra.mxu0 %v2135
  %3022 = vmatprep.subr.bf16.mxu0 %v2138
  %3023 = vmatpush1.bf16.msra.mxu0 %v2137
  %3024 = vmatprep.subr.bf16.mxu0 %v2140
  %3025 = vmatpush1.bf16.msra.mxu0 %v2139
  %3026 = vmatprep.subr.bf16.mxu0 %v2142
  %3027 = vmatpush1.bf16.msra.mxu0 %v2141
  %3028 = vmatprep.subr.bf16.mxu0 %v2144
  %3029 = vmatpush1.bf16.msra.mxu0 %v2143
  %3030 = vmatprep.subr.bf16.mxu0 %v2146
  %3031 = vmatpush1.bf16.msra.mxu0 %v2145
  %3032 = vmatprep.mubr.bf16.mxu0 %v682
  %3033 = vmatmul.mubr.bf16.gmra.mrb[0].mxu0 %v681
  %v3034 = vpop.f32.mrb[0].mxu0
  %v3035 = vadd.f32 %v2982, %v3034
  %v3036 = vpop.f32.mrb[0].mxu0
  %v3037 = vadd.f32 %v2984, %v3036
  %v3038 = vpop.f32.mrb[0].mxu0
  %v3039 = vadd.f32 %v2986, %v3038
  %v3040 = vpop.f32.mrb[0].mxu0
  %v3041 = vadd.f32 %v2988, %v3040
  %3042 = vmatprep.mubr.bf16.mxu0 %v709
  %3043 = vmatmul.mubr.bf16.gmra.mrb[0].mxu0 %v708
  %v3044 = vpop.f32.mrb[0].mxu0
  %v3045 = vadd.f32 %v2992, %v3044
  %v3046 = vpop.f32.mrb[0].mxu0
  %v3047 = vadd.f32 %v2994, %v3046
  %v3048 = vpop.f32.mrb[0].mxu0
  %v3049 = vadd.f32 %v2996, %v3048
  %v3050 = vpop.f32.mrb[0].mxu0
  %v3051 = vadd.f32 %v2998, %v3050
  %3052 = vdwg.mxu0
  %3053 = vmatprep.subr.bf16.mxu0 %v2148
  %3054 = vmatpush1.bf16.msra.mxu0 %v2147
  %3055 = vmatprep.subr.bf16.mxu0 %v2150
  %3056 = vmatpush1.bf16.msra.mxu0 %v2149
  %3057 = vmatprep.subr.bf16.mxu0 %v2152
  %3058 = vmatpush1.bf16.msra.mxu0 %v2151
  %3059 = vmatprep.subr.bf16.mxu0 %v2154
  %3060 = vmatpush1.bf16.msra.mxu0 %v2153
  %3061 = vmatprep.subr.bf16.mxu0 %v2156
  %3062 = vmatpush1.bf16.msra.mxu0 %v2155
  %3063 = vmatprep.subr.bf16.mxu0 %v2158
  %3064 = vmatpush1.bf16.msra.mxu0 %v2157
  %3065 = vmatprep.subr.bf16.mxu0 %v2160
  %3066 = vmatpush1.bf16.msra.mxu0 %v2159
  %3067 = vmatprep.subr.bf16.mxu0 %v2162
  %3068 = vmatpush1.bf16.msra.mxu0 %v2161
  %3069 = vmatprep.subr.bf16.mxu0 %v2164
  %3070 = vmatpush1.bf16.msra.mxu0 %v2163
  %3071 = vmatprep.subr.bf16.mxu0 %v2166
  %3072 = vmatpush1.bf16.msra.mxu0 %v2165
  %3073 = vmatprep.subr.bf16.mxu0 %v2168
  %3074 = vmatpush1.bf16.msra.mxu0 %v2167
  %3075 = vmatprep.subr.bf16.mxu0 %v2170
  %3076 = vmatpush1.bf16.msra.mxu0 %v2169
  %3077 = vmatprep.subr.bf16.mxu0 %v2172
  %3078 = vmatpush1.bf16.msra.mxu0 %v2171
  %3079 = vmatprep.subr.bf16.mxu0 %v2174
  %3080 = vmatpush1.bf16.msra.mxu0 %v2173
  %3081 = vmatprep.subr.bf16.mxu0 %v2176
  %3082 = vmatpush1.bf16.msra.mxu0 %v2175
  %3083 = vmatprep.subr.bf16.mxu0 %v2178
  %3084 = vmatpush1.bf16.msra.mxu0 %v2177
  %3085 = vmatprep.mubr.bf16.mxu0 %v684
  %3086 = vmatmul.mubr.bf16.gmra.mrb[0].mxu0 %v683
  %v3087 = vpop.f32.mrb[0].mxu0
  %v3088 = vadd.f32 %v3035, %v3087
  %v3089 = vpop.f32.mrb[0].mxu0
  %v3090 = vadd.f32 %v3037, %v3089
  %v3091 = vpop.f32.mrb[0].mxu0
  %v3092 = vadd.f32 %v3039, %v3091
  %v3093 = vpop.f32.mrb[0].mxu0
  %v3094 = vadd.f32 %v3041, %v3093
  %3095 = vmatprep.mubr.bf16.mxu0 %v711
  %3096 = vmatmul.mubr.bf16.gmra.mrb[0].mxu0 %v710
  %v3097 = vpop.f32.mrb[0].mxu0
  %v3098 = vadd.f32 %v3045, %v3097
  %v3099 = vpop.f32.mrb[0].mxu0
  %v3100 = vadd.f32 %v3047, %v3099
  %v3101 = vpop.f32.mrb[0].mxu0
  %v3102 = vadd.f32 %v3049, %v3101
  %v3103 = vpop.f32.mrb[0].mxu0
  %v3104 = vadd.f32 %v3051, %v3103
  %3105 = vdwg.mxu0
  %3106 = vmatprep.subr.bf16.mxu0 %v2180
  %3107 = vmatpush1.bf16.msra.mxu0 %v2179
  %3108 = vmatprep.subr.bf16.mxu0 %v2182
  %3109 = vmatpush1.bf16.msra.mxu0 %v2181
  %3110 = vmatprep.subr.bf16.mxu0 %v2184
  %3111 = vmatpush1.bf16.msra.mxu0 %v2183
  %3112 = vmatprep.subr.bf16.mxu0 %v2186
  %3113 = vmatpush1.bf16.msra.mxu0 %v2185
  %3114 = vmatprep.subr.bf16.mxu0 %v2188
  %3115 = vmatpush1.bf16.msra.mxu0 %v2187
  %3116 = vmatprep.subr.bf16.mxu0 %v2190
  %3117 = vmatpush1.bf16.msra.mxu0 %v2189
  %3118 = vmatprep.subr.bf16.mxu0 %v2192
  %3119 = vmatpush1.bf16.msra.mxu0 %v2191
  %3120 = vmatprep.subr.bf16.mxu0 %v2194
  %3121 = vmatpush1.bf16.msra.mxu0 %v2193
  %3122 = vmatprep.subr.bf16.mxu0 %v2196
  %3123 = vmatpush1.bf16.msra.mxu0 %v2195
  %3124 = vmatprep.subr.bf16.mxu0 %v2198
  %3125 = vmatpush1.bf16.msra.mxu0 %v2197
  %3126 = vmatprep.subr.bf16.mxu0 %v2200
  %3127 = vmatpush1.bf16.msra.mxu0 %v2199
  %3128 = vmatprep.subr.bf16.mxu0 %v2202
  %3129 = vmatpush1.bf16.msra.mxu0 %v2201
  %3130 = vmatprep.subr.bf16.mxu0 %v2204
  %3131 = vmatpush1.bf16.msra.mxu0 %v2203
  %3132 = vmatprep.subr.bf16.mxu0 %v2206
  %3133 = vmatpush1.bf16.msra.mxu0 %v2205
  %3134 = vmatprep.subr.bf16.mxu0 %v2208
  %3135 = vmatpush1.bf16.msra.mxu0 %v2207
  %3136 = vmatprep.subr.bf16.mxu0 %v2210
  %3137 = vmatpush1.bf16.msra.mxu0 %v2209
  %3138 = vmatprep.mubr.bf16.mxu0 %v686
  %3139 = vmatmul.mubr.bf16.gmra.mrb[0].mxu0 %v685
  %v3140 = vpop.f32.mrb[0].mxu0
  %v3141 = vadd.f32 %v3088, %v3140
  %v3142 = vpop.f32.mrb[0].mxu0
  %v3143 = vadd.f32 %v3090, %v3142
  %v3144 = vpop.f32.mrb[0].mxu0
  %v3145 = vadd.f32 %v3092, %v3144
  %v3146 = vpop.f32.mrb[0].mxu0
  %v3147 = vadd.f32 %v3094, %v3146
  %3148 = vmatprep.mubr.bf16.mxu0 %v713
  %3149 = vmatmul.mubr.bf16.gmra.mrb[0].mxu0 %v712
  %v3150 = vpop.f32.mrb[0].mxu0
  %v3151 = vadd.f32 %v3098, %v3150
  %v3152 = vpop.f32.mrb[0].mxu0
  %v3153 = vadd.f32 %v3100, %v3152
  %v3154 = vpop.f32.mrb[0].mxu0
  %v3155 = vadd.f32 %v3102, %v3154
  %v3156 = vpop.f32.mrb[0].mxu0
  %v3157 = vadd.f32 %v3104, %v3156
  %3158 = vdwg.mxu0
  %3159 = vmatprep.subr.bf16.mxu0 %v2212
  %3160 = vmatpush1.bf16.msra.mxu0 %v2211
  %3161 = vmatprep.subr.bf16.mxu0 %v2214
  %3162 = vmatpush1.bf16.msra.mxu0 %v2213
  %3163 = vmatprep.subr.bf16.mxu0 %v2216
  %3164 = vmatpush1.bf16.msra.mxu0 %v2215
  %3165 = vmatprep.subr.bf16.mxu0 %v2218
  %3166 = vmatpush1.bf16.msra.mxu0 %v2217
  %3167 = vmatprep.subr.bf16.mxu0 %v2220
  %3168 = vmatpush1.bf16.msra.mxu0 %v2219
  %3169 = vmatprep.subr.bf16.mxu0 %v2222
  %3170 = vmatpush1.bf16.msra.mxu0 %v2221
  %3171 = vmatprep.subr.bf16.mxu0 %v2224
  %3172 = vmatpush1.bf16.msra.mxu0 %v2223
  %3173 = vmatprep.subr.bf16.mxu0 %v2226
  %3174 = vmatpush1.bf16.msra.mxu0 %v2225
  %3175 = vmatprep.subr.bf16.mxu0 %v2228
  %3176 = vmatpush1.bf16.msra.mxu0 %v2227
  %3177 = vmatprep.subr.bf16.mxu0 %v2230
  %3178 = vmatpush1.bf16.msra.mxu0 %v2229
  %3179 = vmatprep.subr.bf16.mxu0 %v2232
  %3180 = vmatpush1.bf16.msra.mxu0 %v2231
  %3181 = vmatprep.subr.bf16.mxu0 %v2234
  %3182 = vmatpush1.bf16.msra.mxu0 %v2233
  %3183 = vmatprep.subr.bf16.mxu0 %v2236
  %3184 = vmatpush1.bf16.msra.mxu0 %v2235
  %3185 = vmatprep.subr.bf16.mxu0 %v2238
  %3186 = vmatpush1.bf16.msra.mxu0 %v2237
  %3187 = vmatprep.subr.bf16.mxu0 %v2240
  %3188 = vmatpush1.bf16.msra.mxu0 %v2239
  %3189 = vmatprep.subr.bf16.mxu0 %v2242
  %3190 = vmatpush1.bf16.msra.mxu0 %v2241
  %3191 = vmatprep.mubr.bf16.mxu0 %v688
  %3192 = vmatmul.mubr.bf16.gmra.mrb[0].mxu0 %v687
  %v3193 = vpop.f32.mrb[0].mxu0
  %v3194 = vadd.f32 %v3141, %v3193
  %v3195 = vpop.f32.mrb[0].mxu0
  %v3196 = vadd.f32 %v3143, %v3195
  %v3197 = vpop.f32.mrb[0].mxu0
  %v3198 = vadd.f32 %v3145, %v3197
  %v3199 = vpop.f32.mrb[0].mxu0
  %v3200 = vadd.f32 %v3147, %v3199
  %3201 = vmatprep.mubr.bf16.mxu0 %v715
  %3202 = vmatmul.mubr.bf16.gmra.mrb[0].mxu0 %v714
  %v3203 = vpop.f32.mrb[0].mxu0
  %v3204 = vadd.f32 %v3151, %v3203
  %v3205 = vpop.f32.mrb[0].mxu0
  %v3206 = vadd.f32 %v3153, %v3205
  %v3207 = vpop.f32.mrb[0].mxu0
  %v3208 = vadd.f32 %v3155, %v3207
  %v3209 = vpop.f32.mrb[0].mxu0
  %v3210 = vadd.f32 %v3157, %v3209
  %3211 = vdwg.mxu0
  %3212 = vmatprep.subr.bf16.mxu0 %v2244
  %3213 = vmatpush1.bf16.msra.mxu0 %v2243
  %3214 = vmatprep.subr.bf16.mxu0 %v2246
  %3215 = vmatpush1.bf16.msra.mxu0 %v2245
  %3216 = vmatprep.subr.bf16.mxu0 %v2248
  %3217 = vmatpush1.bf16.msra.mxu0 %v2247
  %3218 = vmatprep.subr.bf16.mxu0 %v2250
  %3219 = vmatpush1.bf16.msra.mxu0 %v2249
  %3220 = vmatprep.subr.bf16.mxu0 %v2252
  %3221 = vmatpush1.bf16.msra.mxu0 %v2251
  %3222 = vmatprep.subr.bf16.mxu0 %v2254
  %3223 = vmatpush1.bf16.msra.mxu0 %v2253
  %3224 = vmatprep.subr.bf16.mxu0 %v2256
  %3225 = vmatpush1.bf16.msra.mxu0 %v2255
  %3226 = vmatprep.subr.bf16.mxu0 %v2258
  %3227 = vmatpush1.bf16.msra.mxu0 %v2257
  %3228 = vmatprep.subr.bf16.mxu0 %v2260
  %3229 = vmatpush1.bf16.msra.mxu0 %v2259
  %3230 = vmatprep.subr.bf16.mxu0 %v2262
  %3231 = vmatpush1.bf16.msra.mxu0 %v2261
  %3232 = vmatprep.subr.bf16.mxu0 %v2264
  %3233 = vmatpush1.bf16.msra.mxu0 %v2263
  %3234 = vmatprep.subr.bf16.mxu0 %v2266
  %3235 = vmatpush1.bf16.msra.mxu0 %v2265
  %3236 = vmatprep.subr.bf16.mxu0 %v2268
  %3237 = vmatpush1.bf16.msra.mxu0 %v2267
  %3238 = vmatprep.subr.bf16.mxu0 %v2270
  %3239 = vmatpush1.bf16.msra.mxu0 %v2269
  %3240 = vmatprep.subr.bf16.mxu0 %v2272
  %3241 = vmatpush1.bf16.msra.mxu0 %v2271
  %3242 = vmatprep.subr.bf16.mxu0 %v2274
  %3243 = vmatpush1.bf16.msra.mxu0 %v2273
  %3244 = vmatprep.mubr.bf16.mxu0 %v690
  %3245 = vmatmul.mubr.bf16.gmra.mrb[0].mxu0 %v689
  %v3246 = vpop.f32.mrb[0].mxu0
  %v3247 = vadd.f32 %v3194, %v3246
  %v3248 = vpop.f32.mrb[0].mxu0
  %v3249 = vadd.f32 %v3196, %v3248
  %v3250 = vpop.f32.mrb[0].mxu0
  %v3251 = vadd.f32 %v3198, %v3250
  %v3252 = vpop.f32.mrb[0].mxu0
  %v3253 = vadd.f32 %v3200, %v3252
  %3254 = vmatprep.mubr.bf16.mxu0 %v717
  %3255 = vmatmul.mubr.bf16.gmra.mrb[0].mxu0 %v716
  %v3256 = vpop.f32.mrb[0].mxu0
  %v3257 = vadd.f32 %v3204, %v3256
  %v3258 = vpop.f32.mrb[0].mxu0
  %v3259 = vadd.f32 %v3206, %v3258
  %v3260 = vpop.f32.mrb[0].mxu0
  %v3261 = vadd.f32 %v3208, %v3260
  %v3262 = vpop.f32.mrb[0].mxu0
  %v3263 = vadd.f32 %v3210, %v3262
  %3264 = vdwg.mxu0
  %3265 = vmatprep.subr.bf16.mxu0 %v2276
  %3266 = vmatpush1.bf16.msra.mxu0 %v2275
  %3267 = vmatprep.subr.bf16.mxu0 %v2278
  %3268 = vmatpush1.bf16.msra.mxu0 %v2277
  %3269 = vmatprep.subr.bf16.mxu0 %v2280
  %3270 = vmatpush1.bf16.msra.mxu0 %v2279
  %3271 = vmatprep.subr.bf16.mxu0 %v2282
  %3272 = vmatpush1.bf16.msra.mxu0 %v2281
  %3273 = vmatprep.subr.bf16.mxu0 %v2284
  %3274 = vmatpush1.bf16.msra.mxu0 %v2283
  %3275 = vmatprep.subr.bf16.mxu0 %v2286
  %3276 = vmatpush1.bf16.msra.mxu0 %v2285
  %3277 = vmatprep.subr.bf16.mxu0 %v2288
  %3278 = vmatpush1.bf16.msra.mxu0 %v2287
  %3279 = vmatprep.subr.bf16.mxu0 %v2290
  %3280 = vmatpush1.bf16.msra.mxu0 %v2289
  %3281 = vmatprep.subr.bf16.mxu0 %v2292
  %3282 = vmatpush1.bf16.msra.mxu0 %v2291
  %3283 = vmatprep.subr.bf16.mxu0 %v2294
  %3284 = vmatpush1.bf16.msra.mxu0 %v2293
  %3285 = vmatprep.subr.bf16.mxu0 %v2296
  %3286 = vmatpush1.bf16.msra.mxu0 %v2295
  %3287 = vmatprep.subr.bf16.mxu0 %v2298
  %3288 = vmatpush1.bf16.msra.mxu0 %v2297
  %3289 = vmatprep.subr.bf16.mxu0 %v2300
  %3290 = vmatpush1.bf16.msra.mxu0 %v2299
  %3291 = vmatprep.subr.bf16.mxu0 %v2302
  %3292 = vmatpush1.bf16.msra.mxu0 %v2301
  %3293 = vmatprep.subr.bf16.mxu0 %v2304
  %3294 = vmatpush1.bf16.msra.mxu0 %v2303
  %3295 = vmatprep.subr.bf16.mxu0 %v2306
  %3296 = vmatpush1.bf16.msra.mxu0 %v2305
  %3297 = vmatprep.mubr.bf16.mxu0 %v692
  %3298 = vmatmul.mubr.bf16.gmra.mrb[0].mxu0 %v691
  %v3299 = vpop.f32.mrb[0].mxu0
  %v3300 = vadd.f32 %v3247, %v3299
  %v3301 = vpop.f32.mrb[0].mxu0
  %v3302 = vadd.f32 %v3249, %v3301
  %v3303 = vpop.f32.mrb[0].mxu0
  %v3304 = vadd.f32 %v3251, %v3303
  %v3305 = vpop.f32.mrb[0].mxu0
  %v3306 = vadd.f32 %v3253, %v3305
  %3307 = vmatprep.mubr.bf16.mxu0 %v719
  %3308 = vmatmul.mubr.bf16.gmra.mrb[0].mxu0 %v718
  %v3309 = vpop.f32.mrb[0].mxu0
  %v3310 = vadd.f32 %v3257, %v3309
  %v3311 = vpop.f32.mrb[0].mxu0
  %v3312 = vadd.f32 %v3259, %v3311
  %v3313 = vpop.f32.mrb[0].mxu0
  %v3314 = vadd.f32 %v3261, %v3313
  %v3315 = vpop.f32.mrb[0].mxu0
  %v3316 = vadd.f32 %v3263, %v3315
  %3317 = vdwg.mxu0
  %3318 = vmatprep.subr.bf16.mxu0 %v2308
  %3319 = vmatpush1.bf16.msra.mxu0 %v2307
  %3320 = vmatprep.subr.bf16.mxu0 %v2310
  %3321 = vmatpush1.bf16.msra.mxu0 %v2309
  %3322 = vmatprep.subr.bf16.mxu0 %v2312
  %3323 = vmatpush1.bf16.msra.mxu0 %v2311
  %3324 = vmatprep.subr.bf16.mxu0 %v2314
  %3325 = vmatpush1.bf16.msra.mxu0 %v2313
  %3326 = vmatprep.subr.bf16.mxu0 %v2316
  %3327 = vmatpush1.bf16.msra.mxu0 %v2315
  %3328 = vmatprep.subr.bf16.mxu0 %v2318
  %3329 = vmatpush1.bf16.msra.mxu0 %v2317
  %3330 = vmatprep.subr.bf16.mxu0 %v2320
  %3331 = vmatpush1.bf16.msra.mxu0 %v2319
  %3332 = vmatprep.subr.bf16.mxu0 %v2322
  %3333 = vmatpush1.bf16.msra.mxu0 %v2321
  %3334 = vmatprep.subr.bf16.mxu0 %v2324
  %3335 = vmatpush1.bf16.msra.mxu0 %v2323
  %3336 = vmatprep.subr.bf16.mxu0 %v2326
  %3337 = vmatpush1.bf16.msra.mxu0 %v2325
  %3338 = vmatprep.subr.bf16.mxu0 %v2328
  %3339 = vmatpush1.bf16.msra.mxu0 %v2327
  %3340 = vmatprep.subr.bf16.mxu0 %v2330
  %3341 = vmatpush1.bf16.msra.mxu0 %v2329
  %3342 = vmatprep.subr.bf16.mxu0 %v2332
  %3343 = vmatpush1.bf16.msra.mxu0 %v2331
  %3344 = vmatprep.subr.bf16.mxu0 %v2334
  %3345 = vmatpush1.bf16.msra.mxu0 %v2333
  %3346 = vmatprep.subr.bf16.mxu0 %v2336
  %3347 = vmatpush1.bf16.msra.mxu0 %v2335
  %3348 = vmatprep.subr.bf16.mxu0 %v2338
  %3349 = vmatpush1.bf16.msra.mxu0 %v2337
  %3350 = vmatprep.mubr.bf16.mxu0 %v694
  %3351 = vmatmul.mubr.bf16.gmra.mrb[0].mxu0 %v693
  %v3352 = vpop.f32.mrb[0].mxu0
  %v3353 = vadd.f32 %v3300, %v3352
  %v3354 = vpop.f32.mrb[0].mxu0
  %v3355 = vadd.f32 %v3302, %v3354
  %v3356 = vpop.f32.mrb[0].mxu0
  %v3357 = vadd.f32 %v3304, %v3356
  %v3358 = vpop.f32.mrb[0].mxu0
  %v3359 = vadd.f32 %v3306, %v3358
  %3360 = vmatprep.mubr.bf16.mxu0 %v721
  %3361 = vmatmul.mubr.bf16.gmra.mrb[0].mxu0 %v720
  %v3362 = vpop.f32.mrb[0].mxu0
  %v3363 = vadd.f32 %v3310, %v3362
  %v3364 = vpop.f32.mrb[0].mxu0
  %v3365 = vadd.f32 %v3312, %v3364
  %v3366 = vpop.f32.mrb[0].mxu0
  %v3367 = vadd.f32 %v3314, %v3366
  %v3368 = vpop.f32.mrb[0].mxu0
  %v3369 = vadd.f32 %v3316, %v3368
  %3370 = vdwg.mxu0
  %3371 = vmatprep.subr.bf16.mxu0 %v2340
  %3372 = vmatpush1.bf16.msra.mxu0 %v2339
  %3373 = vmatprep.subr.bf16.mxu0 %v2342
  %3374 = vmatpush1.bf16.msra.mxu0 %v2341
  %3375 = vmatprep.subr.bf16.mxu0 %v2344
  %3376 = vmatpush1.bf16.msra.mxu0 %v2343
  %3377 = vmatprep.subr.bf16.mxu0 %v2346
  %3378 = vmatpush1.bf16.msra.mxu0 %v2345
  %3379 = vmatprep.subr.bf16.mxu0 %v2348
  %3380 = vmatpush1.bf16.msra.mxu0 %v2347
  %3381 = vmatprep.subr.bf16.mxu0 %v2350
  %3382 = vmatpush1.bf16.msra.mxu0 %v2349
  %3383 = vmatprep.subr.bf16.mxu0 %v2352
  %3384 = vmatpush1.bf16.msra.mxu0 %v2351
  %3385 = vmatprep.subr.bf16.mxu0 %v2354
  %3386 = vmatpush1.bf16.msra.mxu0 %v2353
  %3387 = vmatprep.subr.bf16.mxu0 %v2356
  %3388 = vmatpush1.bf16.msra.mxu0 %v2355
  %3389 = vmatprep.subr.bf16.mxu0 %v2358
  %3390 = vmatpush1.bf16.msra.mxu0 %v2357
  %3391 = vmatprep.subr.bf16.mxu0 %v2360
  %3392 = vmatpush1.bf16.msra.mxu0 %v2359
  %3393 = vmatprep.subr.bf16.mxu0 %v2362
  %3394 = vmatpush1.bf16.msra.mxu0 %v2361
  %3395 = vmatprep.subr.bf16.mxu0 %v2364
  %3396 = vmatpush1.bf16.msra.mxu0 %v2363
  %3397 = vmatprep.subr.bf16.mxu0 %v2366
  %3398 = vmatpush1.bf16.msra.mxu0 %v2365
  %3399 = vmatprep.subr.bf16.mxu0 %v2368
  %3400 = vmatpush1.bf16.msra.mxu0 %v2367
  %3401 = vmatprep.subr.bf16.mxu0 %v2370
  %3402 = vmatpush1.bf16.msra.mxu0 %v2369
  %3403 = vmatprep.mubr.bf16.mxu0 %v696
  %3404 = vmatmul.mubr.bf16.gmra.mrb[0].mxu0 %v695
  %v3405 = vpop.f32.mrb[0].mxu0
  %v3406 = vadd.f32 %v3353, %v3405
  %v3407 = vpop.f32.mrb[0].mxu0
  %v3408 = vadd.f32 %v3355, %v3407
  %v3409 = vpop.f32.mrb[0].mxu0
  %v3410 = vadd.f32 %v3357, %v3409
  %v3411 = vpop.f32.mrb[0].mxu0
  %v3412 = vadd.f32 %v3359, %v3411
  %3413 = vmatprep.mubr.bf16.mxu0 %v723
  %3414 = vmatmul.mubr.bf16.gmra.mrb[0].mxu0 %v722
  %v3415 = vpop.f32.mrb[0].mxu0
  %v3416 = vadd.f32 %v3363, %v3415
  %v3417 = vpop.f32.mrb[0].mxu0
  %v3418 = vadd.f32 %v3365, %v3417
  %v3419 = vpop.f32.mrb[0].mxu0
  %v3420 = vadd.f32 %v3367, %v3419
  %v3421 = vpop.f32.mrb[0].mxu0
  %v3422 = vadd.f32 %v3369, %v3421
  %3423 = vdwg.mxu0
  %3424 = vmatprep.subr.bf16.mxu0 %v2372
  %3425 = vmatpush1.bf16.msra.mxu0 %v2371
  %3426 = vmatprep.subr.bf16.mxu0 %v2374
  %3427 = vmatpush1.bf16.msra.mxu0 %v2373
  %3428 = vmatprep.subr.bf16.mxu0 %v2376
  %3429 = vmatpush1.bf16.msra.mxu0 %v2375
  %3430 = vmatprep.subr.bf16.mxu0 %v2378
  %3431 = vmatpush1.bf16.msra.mxu0 %v2377
  %3432 = vmatprep.subr.bf16.mxu0 %v2380
  %3433 = vmatpush1.bf16.msra.mxu0 %v2379
  %3434 = vmatprep.subr.bf16.mxu0 %v2382
  %3435 = vmatpush1.bf16.msra.mxu0 %v2381
  %3436 = vmatprep.subr.bf16.mxu0 %v2384
  %3437 = vmatpush1.bf16.msra.mxu0 %v2383
  %3438 = vmatprep.subr.bf16.mxu0 %v2386
  %3439 = vmatpush1.bf16.msra.mxu0 %v2385
  %3440 = vmatprep.subr.bf16.mxu0 %v2388
  %3441 = vmatpush1.bf16.msra.mxu0 %v2387
  %3442 = vmatprep.subr.bf16.mxu0 %v2390
  %3443 = vmatpush1.bf16.msra.mxu0 %v2389
  %3444 = vmatprep.subr.bf16.mxu0 %v2392
  %3445 = vmatpush1.bf16.msra.mxu0 %v2391
  %3446 = vmatprep.subr.bf16.mxu0 %v2394
  %3447 = vmatpush1.bf16.msra.mxu0 %v2393
  %3448 = vmatprep.subr.bf16.mxu0 %v2396
  %3449 = vmatpush1.bf16.msra.mxu0 %v2395
  %3450 = vmatprep.subr.bf16.mxu0 %v2398
  %3451 = vmatpush1.bf16.msra.mxu0 %v2397
  %3452 = vmatprep.subr.bf16.mxu0 %v2400
  %3453 = vmatpush1.bf16.msra.mxu0 %v2399
  %3454 = vmatprep.subr.bf16.mxu0 %v2402
  %3455 = vmatpush1.bf16.msra.mxu0 %v2401
  %3456 = vmatprep.mubr.bf16.mxu0 %v698
  %3457 = vmatmul.mubr.bf16.gmra.mrb[0].mxu0 %v697
  %v3458 = vpop.f32.mrb[0].mxu0
  %v3459 = vadd.f32 %v3406, %v3458
  %v3460 = vpop.f32.mrb[0].mxu0
  %v3461 = vadd.f32 %v3408, %v3460
  %v3462 = vpop.f32.mrb[0].mxu0
  %v3463 = vadd.f32 %v3410, %v3462
  %v3464 = vpop.f32.mrb[0].mxu0
  %v3465 = vadd.f32 %v3412, %v3464
  %3466 = vmatprep.mubr.bf16.mxu0 %v725
  %3467 = vmatmul.mubr.bf16.gmra.mrb[0].mxu0 %v724
  %v3468 = vpop.f32.mrb[0].mxu0
  %v3469 = vadd.f32 %v3416, %v3468
  %v3470 = vpop.f32.mrb[0].mxu0
  %v3471 = vadd.f32 %v3418, %v3470
  %v3472 = vpop.f32.mrb[0].mxu0
  %v3473 = vadd.f32 %v3420, %v3472
  %v3474 = vpop.f32.mrb[0].mxu0
  %v3475 = vadd.f32 %v3422, %v3474
  %3476 = vdwg.mxu0
  %3477 = vmatprep.subr.bf16.mxu0 %v2404
  %3478 = vmatpush1.bf16.msra.mxu0 %v2403
  %3479 = vmatprep.subr.bf16.mxu0 %v2406
  %3480 = vmatpush1.bf16.msra.mxu0 %v2405
  %3481 = vmatprep.subr.bf16.mxu0 %v2408
  %3482 = vmatpush1.bf16.msra.mxu0 %v2407
  %3483 = vmatprep.subr.bf16.mxu0 %v2410
  %3484 = vmatpush1.bf16.msra.mxu0 %v2409
  %3485 = vmatprep.subr.bf16.mxu0 %v2412
  %3486 = vmatpush1.bf16.msra.mxu0 %v2411
  %3487 = vmatprep.subr.bf16.mxu0 %v2414
  %3488 = vmatpush1.bf16.msra.mxu0 %v2413
  %3489 = vmatprep.subr.bf16.mxu0 %v2416
  %3490 = vmatpush1.bf16.msra.mxu0 %v2415
  %3491 = vmatprep.subr.bf16.mxu0 %v2418
  %3492 = vmatpush1.bf16.msra.mxu0 %v2417
  %3493 = vmatprep.subr.bf16.mxu0 %v2420
  %3494 = vmatpush1.bf16.msra.mxu0 %v2419
  %3495 = vmatprep.subr.bf16.mxu0 %v2422
  %3496 = vmatpush1.bf16.msra.mxu0 %v2421
  %3497 = vmatprep.subr.bf16.mxu0 %v2424
  %3498 = vmatpush1.bf16.msra.mxu0 %v2423
  %3499 = vmatprep.subr.bf16.mxu0 %v2426
  %3500 = vmatpush1.bf16.msra.mxu0 %v2425
  %3501 = vmatprep.subr.bf16.mxu0 %v2428
  %3502 = vmatpush1.bf16.msra.mxu0 %v2427
  %3503 = vmatprep.subr.bf16.mxu0 %v2430
  %3504 = vmatpush1.bf16.msra.mxu0 %v2429
  %3505 = vmatprep.subr.bf16.mxu0 %v2432
  %3506 = vmatpush1.bf16.msra.mxu0 %v2431
  %3507 = vmatprep.subr.bf16.mxu0 %v2434
  %3508 = vmatpush1.bf16.msra.mxu0 %v2433
  %3509 = vmatprep.mubr.bf16.mxu0 %v700
  %3510 = vmatmul.mubr.bf16.gmra.mrb[0].mxu0 %v699
  %v3511 = vpop.f32.mrb[0].mxu0
  %v3512 = vadd.f32 %v3459, %v3511
  %v3513 = vpop.f32.mrb[0].mxu0
  %v3514 = vadd.f32 %v3461, %v3513
  %v3515 = vpop.f32.mrb[0].mxu0
  %v3516 = vadd.f32 %v3463, %v3515
  %v3517 = vpop.f32.mrb[0].mxu0
  %v3518 = vadd.f32 %v3465, %v3517
  %3519 = vmatprep.mubr.bf16.mxu0 %v727
  %3520 = vmatmul.mubr.bf16.gmra.mrb[0].mxu0 %v726
  %v3521 = vpop.f32.mrb[0].mxu0
  %v3522 = vadd.f32 %v3469, %v3521
  %v3523 = vpop.f32.mrb[0].mxu0
  %v3524 = vadd.f32 %v3471, %v3523
  %v3525 = vpop.f32.mrb[0].mxu0
  %v3526 = vadd.f32 %v3473, %v3525
  %v3527 = vpop.f32.mrb[0].mxu0
  %v3528 = vadd.f32 %v3475, %v3527
  %3529 = vdwg.mxu0
  %3530 = vmatprep.subr.bf16.mxu0 %v2436
  %3531 = vmatpush1.bf16.msra.mxu0 %v2435
  %3532 = vmatprep.subr.bf16.mxu0 %v2438
  %3533 = vmatpush1.bf16.msra.mxu0 %v2437
  %3534 = vmatprep.subr.bf16.mxu0 %v2440
  %3535 = vmatpush1.bf16.msra.mxu0 %v2439
  %3536 = vmatprep.subr.bf16.mxu0 %v2442
  %3537 = vmatpush1.bf16.msra.mxu0 %v2441
  %3538 = vmatprep.subr.bf16.mxu0 %v2444
  %3539 = vmatpush1.bf16.msra.mxu0 %v2443
  %3540 = vmatprep.subr.bf16.mxu0 %v2446
  %3541 = vmatpush1.bf16.msra.mxu0 %v2445
  %3542 = vmatprep.subr.bf16.mxu0 %v2448
  %3543 = vmatpush1.bf16.msra.mxu0 %v2447
  %3544 = vmatprep.subr.bf16.mxu0 %v2450
  %3545 = vmatpush1.bf16.msra.mxu0 %v2449
  %3546 = vmatprep.subr.bf16.mxu0 %v2452
  %3547 = vmatpush1.bf16.msra.mxu0 %v2451
  %3548 = vmatprep.subr.bf16.mxu0 %v2454
  %3549 = vmatpush1.bf16.msra.mxu0 %v2453
  %3550 = vmatprep.subr.bf16.mxu0 %v2456
  %3551 = vmatpush1.bf16.msra.mxu0 %v2455
  %3552 = vmatprep.subr.bf16.mxu0 %v2458
  %3553 = vmatpush1.bf16.msra.mxu0 %v2457
  %3554 = vmatprep.subr.bf16.mxu0 %v2460
  %3555 = vmatpush1.bf16.msra.mxu0 %v2459
  %3556 = vmatprep.subr.bf16.mxu0 %v2462
  %3557 = vmatpush1.bf16.msra.mxu0 %v2461
  %3558 = vmatprep.subr.bf16.mxu0 %v2464
  %3559 = vmatpush1.bf16.msra.mxu0 %v2463
  %3560 = vmatprep.subr.bf16.mxu0 %v2466
  %3561 = vmatpush1.bf16.msra.mxu0 %v2465
  %3562 = vmatprep.mubr.bf16.mxu0 %v702
  %3563 = vmatmul.mubr.bf16.gmra.mrb[0].mxu0 %v701
  %v3564 = vpop.f32.mrb[0].mxu0
  %v3565 = vadd.f32 %v3512, %v3564
  %v3566 = vpop.f32.mrb[0].mxu0
  %v3567 = vadd.f32 %v3514, %v3566
  %v3568 = vpop.f32.mrb[0].mxu0
  %v3569 = vadd.f32 %v3516, %v3568
  %v3570 = vpop.f32.mrb[0].mxu0
  %v3571 = vadd.f32 %v3518, %v3570
  %3572 = vmatprep.mubr.bf16.mxu0 %v729
  %3573 = vmatmul.mubr.bf16.gmra.mrb[0].mxu0 %v728
  %v3574 = vpop.f32.mrb[0].mxu0
  %v3575 = vadd.f32 %v3522, %v3574
  %v3576 = vpop.f32.mrb[0].mxu0
  %v3577 = vadd.f32 %v3524, %v3576
  %v3578 = vpop.f32.mrb[0].mxu0
  %v3579 = vadd.f32 %v3526, %v3578
  %v3580 = vpop.f32.mrb[0].mxu0
  %v3581 = vadd.f32 %v3528, %v3580
  %3582 = vdwg.mxu0
  %3583 = vmatprep.subr.bf16.mxu0 %v2468
  %3584 = vmatpush1.bf16.msra.mxu0 %v2467
  %3585 = vmatprep.subr.bf16.mxu0 %v2470
  %3586 = vmatpush1.bf16.msra.mxu0 %v2469
  %3587 = vmatprep.subr.bf16.mxu0 %v2472
  %3588 = vmatpush1.bf16.msra.mxu0 %v2471
  %3589 = vmatprep.subr.bf16.mxu0 %v2474
  %3590 = vmatpush1.bf16.msra.mxu0 %v2473
  %3591 = vmatprep.subr.bf16.mxu0 %v2476
  %3592 = vmatpush1.bf16.msra.mxu0 %v2475
  %3593 = vmatprep.subr.bf16.mxu0 %v2478
  %3594 = vmatpush1.bf16.msra.mxu0 %v2477
  %3595 = vmatprep.subr.bf16.mxu0 %v2480
  %3596 = vmatpush1.bf16.msra.mxu0 %v2479
  %3597 = vmatprep.subr.bf16.mxu0 %v2482
  %3598 = vmatpush1.bf16.msra.mxu0 %v2481
  %3599 = vmatprep.subr.bf16.mxu0 %v2484
  %3600 = vmatpush1.bf16.msra.mxu0 %v2483
  %3601 = vmatprep.subr.bf16.mxu0 %v2486
  %3602 = vmatpush1.bf16.msra.mxu0 %v2485
  %3603 = vmatprep.subr.bf16.mxu0 %v2488
  %3604 = vmatpush1.bf16.msra.mxu0 %v2487
  %3605 = vmatprep.subr.bf16.mxu0 %v2490
  %3606 = vmatpush1.bf16.msra.mxu0 %v2489
  %3607 = vmatprep.subr.bf16.mxu0 %v2492
  %3608 = vmatpush1.bf16.msra.mxu0 %v2491
  %3609 = vmatprep.subr.bf16.mxu0 %v2494
  %3610 = vmatpush1.bf16.msra.mxu0 %v2493
  %3611 = vmatprep.subr.bf16.mxu0 %v2496
  %3612 = vmatpush1.bf16.msra.mxu0 %v2495
  %3613 = vmatprep.subr.bf16.mxu0 %v2498
  %3614 = vmatpush1.bf16.msra.mxu0 %v2497
  %3615 = vmatprep.mubr.bf16.mxu0 %v704
  %3616 = vmatmul.mubr.bf16.gmra.mrb[0].mxu0 %v703
  %v3617 = vpop.f32.mrb[0].mxu0
  %v3618 = vadd.f32 %v3565, %v3617
  %v3619 = vpop.f32.mrb[0].mxu0
  %v3620 = vadd.f32 %v3567, %v3619
  %v3621 = vpop.f32.mrb[0].mxu0
  %v3622 = vadd.f32 %v3569, %v3621
  %v3623 = vpop.f32.mrb[0].mxu0
  %v3624 = vadd.f32 %v3571, %v3623
  %3625 = vmatprep.mubr.bf16.mxu0 %v731
  %3626 = vmatmul.mubr.bf16.gmra.mrb[0].mxu0 %v730
  %v3627 = vpop.f32.mrb[0].mxu0
  %v3628 = vadd.f32 %v3575, %v3627
  %v3629 = vpop.f32.mrb[0].mxu0
  %v3630 = vadd.f32 %v3577, %v3629
  %v3631 = vpop.f32.mrb[0].mxu0
  %v3632 = vadd.f32 %v3579, %v3631
  %v3633 = vpop.f32.mrb[0].mxu0
  %v3634 = vadd.f32 %v3581, %v3633
  %3635 = vdwg.mxu0
  %3636 = vmatprep.subr.bf16.mxu0 %v2500
  %3637 = vmatpush1.bf16.msra.mxu0 %v2499
  %3638 = vmatprep.subr.bf16.mxu0 %v2502
  %3639 = vmatpush1.bf16.msra.mxu0 %v2501
  %3640 = vmatprep.subr.bf16.mxu0 %v2504
  %3641 = vmatpush1.bf16.msra.mxu0 %v2503
  %3642 = vmatprep.subr.bf16.mxu0 %v2506
  %3643 = vmatpush1.bf16.msra.mxu0 %v2505
  %3644 = vmatprep.subr.bf16.mxu0 %v2508
  %3645 = vmatpush1.bf16.msra.mxu0 %v2507
  %3646 = vmatprep.subr.bf16.mxu0 %v2510
  %3647 = vmatpush1.bf16.msra.mxu0 %v2509
  %3648 = vmatprep.subr.bf16.mxu0 %v2512
  %3649 = vmatpush1.bf16.msra.mxu0 %v2511
  %3650 = vmatprep.subr.bf16.mxu0 %v2514
  %3651 = vmatpush1.bf16.msra.mxu0 %v2513
  %3652 = vmatprep.subr.bf16.mxu0 0
  %3653 = vmatpush1.bf16.msra.mxu0 0
  %3654 = vmatprep.subr.bf16.mxu0 0
  %3655 = vmatpush1.bf16.msra.mxu0 0
  %3656 = vmatprep.subr.bf16.mxu0 0
  %3657 = vmatpush1.bf16.msra.mxu0 0
  %3658 = vmatprep.subr.bf16.mxu0 0
  %3659 = vmatpush1.bf16.msra.mxu0 0
  %3660 = vmatprep.subr.bf16.mxu0 0
  %3661 = vmatpush1.bf16.msra.mxu0 0
  %3662 = vmatprep.subr.bf16.mxu0 0
  %3663 = vmatpush1.bf16.msra.mxu0 0
  %3664 = vmatprep.subr.bf16.mxu0 0
  %3665 = vmatpush1.bf16.msra.mxu0 0
  %3666 = vmatprep.subr.bf16.mxu0 0
  %3667 = vmatpush1.bf16.msra.mxu0 0
  %3668 = vmatprep.mubr.bf16.mxu0 0
  %3669 = vmatmul.mubr.bf16.gmra.mrb[0].mxu0 %v705
  %v3670 = vpop.f32.mrb[0].mxu0
  %v3671 = vadd.f32 %v3618, %v3670
  %v3672 = vpop.f32.mrb[0].mxu0
  %v3673 = vadd.f32 %v3620, %v3672
  %v3674 = vpop.f32.mrb[0].mxu0
  %v3675 = vadd.f32 %v3622, %v3674
  %v3676 = vpop.f32.mrb[0].mxu0
  %v3677 = vadd.f32 %v3624, %v3676
  %3678 = vmatprep.mubr.bf16.mxu0 0
  %3679 = vmatmul.mubr.bf16.gmra.mrb[0].mxu0 %v732
  %v3680 = vpop.f32.mrb[0].mxu0
  %v3681 = vadd.f32 %v3628, %v3680
  %v3682 = vpop.f32.mrb[0].mxu0
  %v3683 = vadd.f32 %v3630, %v3682
  %v3684 = vpop.f32.mrb[0].mxu0
  %v3685 = vadd.f32 %v3632, %v3684
  %v3686 = vpop.f32.mrb[0].mxu0
  %v3687 = vadd.f32 %v3634, %v3686
  %3688 = vdwg.mxu0
  %v3689 = vmax.f32 %v3671, 0.0
  %v3690 = vmax.f32 %v3673, 0.0
  %v3691 = vmax.f32 %v3675, 0.0
  %v3692 = vmax.f32 %v3677, 0.0
  %v3693 = vmax.f32 %v3681, 0.0
  %v3694 = vmax.f32 %v3683, 0.0
  %v3695 = vmax.f32 %v3685, 0.0
  %v3696 = vmax.f32 %v3687, 0.0
  %v3697 = vpack.c.bf16 %v3691, %v3689
  %v3698 = vpack.c.bf16 %v3692, %v3690
  %v3699 = vpack.c.bf16 %v3695, %v3693
  %v3700 = vpack.c.bf16 %v3696, %v3694
  %v3705 = vunpack.c.l.b16 %v3697
  %v3706 = vunpack.c.l.b16 %v3698
  %v3707 = vunpack.c.h.b16 %v3697
  %v3708 = vunpack.c.h.b16 %v3698
  %v3709 = vunpack.c.l.b16 %v3699
  %v3710 = vunpack.c.l.b16 %v3700
  %v3711 = vunpack.c.h.b16 %v3699
  %v3712 = vunpack.c.h.b16 %v3700
  %v3713 = vpack.c.b16 %v3706, %v3705
  %v3714 = vpack.c.b16 %v3708, %v3707
  %v3715 = vpack.c.b16 %v3710, %v3709
  %v3716 = vpack.c.b16 %v3712, %v3711
  %3721 = vst [vmem:[%s3] sm:$0xff] %v3713
  %3722 = vst [vmem:[%s3 + $0x8] sm:$0xff] %v3714
  %3723 = vst [vmem:[%s3 + $0x10] sm:$0xff] %v3715
  %3724 = vst [vmem:[%s3 + $0x18] sm:$0xff] %v3716
  // Predicated region
  $region14: #{alexnet_forward.13} parent=0 // pred_check
    _
  $region15: #{alexnet_forward.13} parent=0 // pred_check_branch
    %3726 = sbr.rel (0) target = $region17
  $region16: #{alexnet_forward.13} parent=0 // pred_region
    _
  $region17: #{alexnet_forward.13} parent=0 // pred_fallthru
    _
  // Predicated region
  $region18: #{alexnet_forward.13} parent=0 // pred_check
    _
  $region19: #{alexnet_forward.13} parent=0 // pred_check_branch
    %3728 = sbr.rel (0) target = $region21
  $region20: #{alexnet_forward.13} parent=0 // pred_region
    _
  $region21: #{alexnet_forward.13} parent=0 // pred_fallthru
    _

// kernel: alexnet_forward.15
$region0: #{alexnet_forward.15}
  #allocation0 [shape = 'u32[]', space=smem, size = 0x4, offset = 0x4, fixed_abs, tag = 'smem constant byte address 0x4 - core index']
  #allocation1 [shape = 'u32[144,128]{1,0:T(1,128)}', space=vmem, size = 0x12000, scoped, tag = 'internal scratch']
  %s0 = inlined_call_operand.vmem [shape: bf16[9,16,128], index: 0, kind: input, shape index: {}]
  %s1 = inlined_call_operand.vmem [shape: bf16[16,128], index: 1, kind: output, shape index: {}]
  %s2 = sld [smem:[#allocation0]]
  $region14: #{alexnet_forward.15} parent=0
    _
  %s4 = ssub.s32 1, %s2
  %s5 = scalar_select 0, %s4, %s2
  // Predicated region
  $region2: #{alexnet_forward.15} parent=0 // pred_check
    _
  $region3: #{alexnet_forward.15} parent=0 // pred_check_branch
    %7 = sbr.rel (0) target = $region5
  $region4: #{alexnet_forward.15} parent=0 // pred_region
    _
  $region5: #{alexnet_forward.15} parent=0 // pred_fallthru
    _
  %v8 = vld [vmem:[%s0] sm:$0xf]
  %v9 = vld [vmem:[%s0 + $0x4] sm:$0xf]
  %v10 = vld [vmem:[%s0 + $0x8] sm:$0xf]
  %v11 = vld [vmem:[%s0 + $0xc] sm:$0xf]
  %v12 = vld [vmem:[%s0 + $0x10] sm:$0xf]
  %v13 = vld [vmem:[%s0 + $0x14] sm:$0xf]
  %v14 = vld [vmem:[%s0 + $0x18] sm:$0xf]
  %v15 = vld [vmem:[%s0 + $0x1c] sm:$0xf]
  %v16 = vld [vmem:[%s0 + $0x20] sm:$0xf]
  %v17 = vld [vmem:[%s0 + $0x24] sm:$0xf]
  %v18 = vld [vmem:[%s0 + $0x28] sm:$0xf]
  %v19 = vld [vmem:[%s0 + $0x2c] sm:$0xf]
  %v20 = vld [vmem:[%s0 + $0x30] sm:$0xf]
  %v21 = vld [vmem:[%s0 + $0x34] sm:$0xf]
  %v22 = vld [vmem:[%s0 + $0x38] sm:$0xf]
  %v23 = vld [vmem:[%s0 + $0x3c] sm:$0xf]
  %v24 = vld [vmem:[%s0 + $0x40] sm:$0xf]
  %v25 = vld [vmem:[%s0 + $0x44] sm:$0xf]
  %v26 = vmax.bf16 %v8, %v10
  %v27 = vmax.bf16 %v9, %v11
  %v28 = vmax.bf16 %v12, %v14
  %v29 = vmax.bf16 %v13, %v15
  %v30 = vmax.bf16 %v16, %v18
  %v31 = vmax.bf16 %v17, %v19
  %v32 = vmax.bf16 %v20, %v22
  %v33 = vmax.bf16 %v21, %v23
  %v34 = vmax.bf16 %v26, %v28
  %v35 = vmax.bf16 %v27, %v29
  %v36 = vmax.bf16 %v30, %v32
  %v37 = vmax.bf16 %v31, %v33
  %v38 = vmax.bf16 %v34, %v36
  %v39 = vmax.bf16 %v35, %v37
  %v40 = vmax.bf16 %v38, %v24
  %v41 = vmax.bf16 %v39, %v25
  %42 = vst [vmem:[%s1] sm:$0xf] %v40
  %43 = vst [vmem:[%s1 + $0x4] sm:$0xf] %v41
  // Predicated region
  $region6: #{alexnet_forward.15} parent=0 // pred_check
    _
  $region7: #{alexnet_forward.15} parent=0 // pred_check_branch
    %45 = sbr.rel (0) target = $region9
  $region8: #{alexnet_forward.15} parent=0 // pred_region
    _
  $region9: #{alexnet_forward.15} parent=0 // pred_fallthru
    _
  // Predicated region
  $region10: #{alexnet_forward.15} parent=0 // pred_check
    _
  $region11: #{alexnet_forward.15} parent=0 // pred_check_branch
    %47 = sbr.rel (0) target = $region13
  $region12: #{alexnet_forward.15} parent=0 // pred_region
    _
  $region13: #{alexnet_forward.15} parent=0 // pred_fallthru
    _

// kernel: alexnet_forward.14
$region0: #{alexnet_forward.14}
  #allocation0 [shape = 'u32[]', space=smem, size = 0x4, offset = 0x4, fixed_abs, tag = 'smem constant byte address 0x4 - core index']
  #allocation1 [shape = 'u32[144,128]{1,0:T(1,128)}', space=vmem, size = 0x12000, scoped, tag = 'internal scratch']
  %s0 = inlined_call_operand.vmem [shape: bf16[32,2304], index: 0, kind: input, shape index: {}]
  %s1 = inlined_call_operand.vmem [shape: bf16[2304,256], index: 1, kind: input, shape index: {}]
  %s2 = inlined_call_operand.vmem [shape: f32[1,256], index: 2, kind: input, shape index: {}]
  %s3 = inlined_call_operand.vmem [shape: bf16[32,256], index: 3, kind: output, shape index: {}]
  %s4 = sld [smem:[#allocation0]]
  $region22: #{alexnet_forward.14} parent=0
    _
  %s6 = ssub.s32 1, %s4
  %s7 = scalar_select 0, %s6, %s4
  // Predicated region
  $region2: #{alexnet_forward.14} parent=0 // pred_check
    _
  $region3: #{alexnet_forward.14} parent=0 // pred_check_branch
    %9 = sbr.rel (0) target = $region5
  $region4: #{alexnet_forward.14} parent=0 // pred_region
    _
  $region5: #{alexnet_forward.14} parent=0 // pred_fallthru
    _
  // Predicated region
  $region6: #{alexnet_forward.14} parent=0 // pred_check
    _
  $region7: #{alexnet_forward.14} parent=0 // pred_check_branch
    %11 = sbr.rel (0) target = $region9
  $region8: #{alexnet_forward.14} parent=0 // pred_region
    _
  $region9: #{alexnet_forward.14} parent=0 // pred_fallthru
    _
  // Predicated region
  $region10: #{alexnet_forward.14} parent=0 // pred_check
    _
  $region11: #{alexnet_forward.14} parent=0 // pred_check_branch
    %13 = sbr.rel (0) target = $region13
  $region12: #{alexnet_forward.14} parent=0 // pred_region
    _
  $region13: #{alexnet_forward.14} parent=0 // pred_fallthru
    _
  %v14 = vld [vmem:[%s0] sm:$0xff]
  %v15 = vld [vmem:[%s0 + $0x8] sm:$0xff]
  %v16 = vld [vmem:[%s0 + $0x10] sm:$0xff]
  %v17 = vld [vmem:[%s0 + $0x18] sm:$0xff]
  %v18 = vld [vmem:[%s0 + $0x20] sm:$0xff]
  %v19 = vld [vmem:[%s0 + $0x28] sm:$0xff]
  %v20 = vld [vmem:[%s0 + $0x30] sm:$0xff]
  %v21 = vld [vmem:[%s0 + $0x38] sm:$0xff]
  %v22 = vld [vmem:[%s0 + $0x40] sm:$0xff]
  %v23 = vld [vmem:[%s0 + $0x48] sm:$0xff]
  %v24 = vld [vmem:[%s0 + $0x50] sm:$0xff]
  %v25 = vld [vmem:[%s0 + $0x58] sm:$0xff]
  %v26 = vld [vmem:[%s0 + $0x60] sm:$0xff]
  %v27 = vld [vmem:[%s0 + $0x68] sm:$0xff]
  %v28 = vld [vmem:[%s0 + $0x70] sm:$0xff]
  %v29 = vld [vmem:[%s0 + $0x78] sm:$0xff]
  %v30 = vld [vmem:[%s0 + $0x80] sm:$0xff]
  %v31 = vld [vmem:[%s0 + $0x88] sm:$0xff]
  %v32 = vld [vmem:[%s0 + $0x90] sm:$0xff]
  %v33 = vld [vmem:[%s0 + $0x98] sm:$0xff]
  %v34 = vld [vmem:[%s0 + $0xa0] sm:$0xff]
  %v35 = vld [vmem:[%s0 + $0xa8] sm:$0xff]
  %v36 = vld [vmem:[%s0 + $0xb0] sm:$0xff]
  %v37 = vld [vmem:[%s0 + $0xb8] sm:$0xff]
  %v38 = vld [vmem:[%s0 + $0xc0] sm:$0xff]
  %v39 = vld [vmem:[%s0 + $0xc8] sm:$0xff]
  %v40 = vld [vmem:[%s0 + $0xd0] sm:$0xff]
  %v41 = vld [vmem:[%s0 + $0xd8] sm:$0xff]
  %v42 = vld [vmem:[%s0 + $0xe0] sm:$0xff]
  %v43 = vld [vmem:[%s0 + $0xe8] sm:$0xff]
  %v44 = vld [vmem:[%s0 + $0xf0] sm:$0xff]
  %v45 = vld [vmem:[%s0 + $0xf8] sm:$0xff]
  %v46 = vld [vmem:[%s0 + $0x100] sm:$0xff]
  %v47 = vld [vmem:[%s0 + $0x108] sm:$0xff]
  %v48 = vld [vmem:[%s0 + $0x110] sm:$0xff]
  %v49 = vld [vmem:[%s0 + $0x118] sm:$0xff]
  %v50 = vld [vmem:[%s1] sm:$0xff]
  %v51 = vld [vmem:[%s1 + $0x8] sm:$0xff]
  %v52 = vld [vmem:[%s1 + $0x10] sm:$0xff]
  %v53 = vld [vmem:[%s1 + $0x18] sm:$0xff]
  %v54 = vld [vmem:[%s1 + $0x20] sm:$0xff]
  %v55 = vld [vmem:[%s1 + $0x28] sm:$0xff]
  %v56 = vld [vmem:[%s1 + $0x30] sm:$0xff]
  %v57 = vld [vmem:[%s1 + $0x38] sm:$0xff]
  %v58 = vld [vmem:[%s1 + $0x40] sm:$0xff]
  %v59 = vld [vmem:[%s1 + $0x48] sm:$0xff]
  %v60 = vld [vmem:[%s1 + $0x50] sm:$0xff]
  %v61 = vld [vmem:[%s1 + $0x58] sm:$0xff]
  %v62 = vld [vmem:[%s1 + $0x60] sm:$0xff]
  %v63 = vld [vmem:[%s1 + $0x68] sm:$0xff]
  %v64 = vld [vmem:[%s1 + $0x70] sm:$0xff]
  %v65 = vld [vmem:[%s1 + $0x78] sm:$0xff]
  %v66 = vld [vmem:[%s1 + $0x80] sm:$0xff]
  %v67 = vld [vmem:[%s1 + $0x88] sm:$0xff]
  %v68 = vld [vmem:[%s1 + $0x90] sm:$0xff]
  %v69 = vld [vmem:[%s1 + $0x98] sm:$0xff]
  %v70 = vld [vmem:[%s1 + $0xa0] sm:$0xff]
  %v71 = vld [vmem:[%s1 + $0xa8] sm:$0xff]
  %v72 = vld [vmem:[%s1 + $0xb0] sm:$0xff]
  %v73 = vld [vmem:[%s1 + $0xb8] sm:$0xff]
  %v74 = vld [vmem:[%s1 + $0xc0] sm:$0xff]
  %v75 = vld [vmem:[%s1 + $0xc8] sm:$0xff]
  %v76 = vld [vmem:[%s1 + $0xd0] sm:$0xff]
  %v77 = vld [vmem:[%s1 + $0xd8] sm:$0xff]
  %v78 = vld [vmem:[%s1 + $0xe0] sm:$0xff]
  %v79 = vld [vmem:[%s1 + $0xe8] sm:$0xff]
  %v80 = vld [vmem:[%s1 + $0xf0] sm:$0xff]
  %v81 = vld [vmem:[%s1 + $0xf8] sm:$0xff]
  %v82 = vld [vmem:[%s1 + $0x100] sm:$0xff]
  %v83 = vld [vmem:[%s1 + $0x108] sm:$0xff]
  %v84 = vld [vmem:[%s1 + $0x110] sm:$0xff]
  %v85 = vld [vmem:[%s1 + $0x118] sm:$0xff]
  %v86 = vld [vmem:[%s1 + $0x120] sm:$0xff]
  %v87 = vld [vmem:[%s1 + $0x128] sm:$0xff]
  %v88 = vld [vmem:[%s1 + $0x130] sm:$0xff]
  %v89 = vld [vmem:[%s1 + $0x138] sm:$0xff]
  %v90 = vld [vmem:[%s1 + $0x140] sm:$0xff]
  %v91 = vld [vmem:[%s1 + $0x148] sm:$0xff]
  %v92 = vld [vmem:[%s1 + $0x150] sm:$0xff]
  %v93 = vld [vmem:[%s1 + $0x158] sm:$0xff]
  %v94 = vld [vmem:[%s1 + $0x160] sm:$0xff]
  %v95 = vld [vmem:[%s1 + $0x168] sm:$0xff]
  %v96 = vld [vmem:[%s1 + $0x170] sm:$0xff]
  %v97 = vld [vmem:[%s1 + $0x178] sm:$0xff]
  %v98 = vld [vmem:[%s1 + $0x180] sm:$0xff]
  %v99 = vld [vmem:[%s1 + $0x188] sm:$0xff]
  %v100 = vld [vmem:[%s1 + $0x190] sm:$0xff]
  %v101 = vld [vmem:[%s1 + $0x198] sm:$0xff]
  %v102 = vld [vmem:[%s1 + $0x1a0] sm:$0xff]
  %v103 = vld [vmem:[%s1 + $0x1a8] sm:$0xff]
  %v104 = vld [vmem:[%s1 + $0x1b0] sm:$0xff]
  %v105 = vld [vmem:[%s1 + $0x1b8] sm:$0xff]
  %v106 = vld [vmem:[%s1 + $0x1c0] sm:$0xff]
  %v107 = vld [vmem:[%s1 + $0x1c8] sm:$0xff]
  %v108 = vld [vmem:[%s1 + $0x1d0] sm:$0xff]
  %v109 = vld [vmem:[%s1 + $0x1d8] sm:$0xff]
  %v110 = vld [vmem:[%s1 + $0x1e0] sm:$0xff]
  %v111 = vld [vmem:[%s1 + $0x1e8] sm:$0xff]
  %v112 = vld [vmem:[%s1 + $0x1f0] sm:$0xff]
  %v113 = vld [vmem:[%s1 + $0x1f8] sm:$0xff]
  %v114 = vld [vmem:[%s1 + $0x200] sm:$0xff]
  %v115 = vld [vmem:[%s1 + $0x208] sm:$0xff]
  %v116 = vld [vmem:[%s1 + $0x210] sm:$0xff]
  %v117 = vld [vmem:[%s1 + $0x218] sm:$0xff]
  %v118 = vld [vmem:[%s1 + $0x220] sm:$0xff]
  %v119 = vld [vmem:[%s1 + $0x228] sm:$0xff]
  %v120 = vld [vmem:[%s1 + $0x230] sm:$0xff]
  %v121 = vld [vmem:[%s1 + $0x238] sm:$0xff]
  %v122 = vld [vmem:[%s1 + $0x240] sm:$0xff]
  %v123 = vld [vmem:[%s1 + $0x248] sm:$0xff]
  %v124 = vld [vmem:[%s1 + $0x250] sm:$0xff]
  %v125 = vld [vmem:[%s1 + $0x258] sm:$0xff]
  %v126 = vld [vmem:[%s1 + $0x260] sm:$0xff]
  %v127 = vld [vmem:[%s1 + $0x268] sm:$0xff]
  %v128 = vld [vmem:[%s1 + $0x270] sm:$0xff]
  %v129 = vld [vmem:[%s1 + $0x278] sm:$0xff]
  %v130 = vld [vmem:[%s1 + $0x280] sm:$0xff]
  %v131 = vld [vmem:[%s1 + $0x288] sm:$0xff]
  %v132 = vld [vmem:[%s1 + $0x290] sm:$0xff]
  %v133 = vld [vmem:[%s1 + $0x298] sm:$0xff]
  %v134 = vld [vmem:[%s1 + $0x2a0] sm:$0xff]
  %v135 = vld [vmem:[%s1 + $0x2a8] sm:$0xff]
  %v136 = vld [vmem:[%s1 + $0x2b0] sm:$0xff]
  %v137 = vld [vmem:[%s1 + $0x2b8] sm:$0xff]
  %v138 = vld [vmem:[%s1 + $0x2c0] sm:$0xff]
  %v139 = vld [vmem:[%s1 + $0x2c8] sm:$0xff]
  %v140 = vld [vmem:[%s1 + $0x2d0] sm:$0xff]
  %v141 = vld [vmem:[%s1 + $0x2d8] sm:$0xff]
  %v142 = vld [vmem:[%s1 + $0x2e0] sm:$0xff]
  %v143 = vld [vmem:[%s1 + $0x2e8] sm:$0xff]
  %v144 = vld [vmem:[%s1 + $0x2f0] sm:$0xff]
  %v145 = vld [vmem:[%s1 + $0x2f8] sm:$0xff]
  %v146 = vld [vmem:[%s1 + $0x300] sm:$0xff]
  %v147 = vld [vmem:[%s1 + $0x308] sm:$0xff]
  %v148 = vld [vmem:[%s1 + $0x310] sm:$0xff]
  %v149 = vld [vmem:[%s1 + $0x318] sm:$0xff]
  %v150 = vld [vmem:[%s1 + $0x320] sm:$0xff]
  %v151 = vld [vmem:[%s1 + $0x328] sm:$0xff]
  %v152 = vld [vmem:[%s1 + $0x330] sm:$0xff]
  %v153 = vld [vmem:[%s1 + $0x338] sm:$0xff]
  %v154 = vld [vmem:[%s1 + $0x340] sm:$0xff]
  %v155 = vld [vmem:[%s1 + $0x348] sm:$0xff]
  %v156 = vld [vmem:[%s1 + $0x350] sm:$0xff]
  %v157 = vld [vmem:[%s1 + $0x358] sm:$0xff]
  %v158 = vld [vmem:[%s1 + $0x360] sm:$0xff]
  %v159 = vld [vmem:[%s1 + $0x368] sm:$0xff]
  %v160 = vld [vmem:[%s1 + $0x370] sm:$0xff]
  %v161 = vld [vmem:[%s1 + $0x378] sm:$0xff]
  %v162 = vld [vmem:[%s1 + $0x380] sm:$0xff]
  %v163 = vld [vmem:[%s1 + $0x388] sm:$0xff]
  %v164 = vld [vmem:[%s1 + $0x390] sm:$0xff]
  %v165 = vld [vmem:[%s1 + $0x398] sm:$0xff]
  %v166 = vld [vmem:[%s1 + $0x3a0] sm:$0xff]
  %v167 = vld [vmem:[%s1 + $0x3a8] sm:$0xff]
  %v168 = vld [vmem:[%s1 + $0x3b0] sm:$0xff]
  %v169 = vld [vmem:[%s1 + $0x3b8] sm:$0xff]
  %v170 = vld [vmem:[%s1 + $0x3c0] sm:$0xff]
  %v171 = vld [vmem:[%s1 + $0x3c8] sm:$0xff]
  %v172 = vld [vmem:[%s1 + $0x3d0] sm:$0xff]
  %v173 = vld [vmem:[%s1 + $0x3d8] sm:$0xff]
  %v174 = vld [vmem:[%s1 + $0x3e0] sm:$0xff]
  %v175 = vld [vmem:[%s1 + $0x3e8] sm:$0xff]
  %v176 = vld [vmem:[%s1 + $0x3f0] sm:$0xff]
  %v177 = vld [vmem:[%s1 + $0x3f8] sm:$0xff]
  %v178 = vld [vmem:[%s1 + $0x400] sm:$0xff]
  %v179 = vld [vmem:[%s1 + $0x408] sm:$0xff]
  %v180 = vld [vmem:[%s1 + $0x410] sm:$0xff]
  %v181 = vld [vmem:[%s1 + $0x418] sm:$0xff]
  %v182 = vld [vmem:[%s1 + $0x420] sm:$0xff]
  %v183 = vld [vmem:[%s1 + $0x428] sm:$0xff]
  %v184 = vld [vmem:[%s1 + $0x430] sm:$0xff]
  %v185 = vld [vmem:[%s1 + $0x438] sm:$0xff]
  %v186 = vld [vmem:[%s1 + $0x440] sm:$0xff]
  %v187 = vld [vmem:[%s1 + $0x448] sm:$0xff]
  %v188 = vld [vmem:[%s1 + $0x450] sm:$0xff]
  %v189 = vld [vmem:[%s1 + $0x458] sm:$0xff]
  %v190 = vld [vmem:[%s1 + $0x460] sm:$0xff]
  %v191 = vld [vmem:[%s1 + $0x468] sm:$0xff]
  %v192 = vld [vmem:[%s1 + $0x470] sm:$0xff]
  %v193 = vld [vmem:[%s1 + $0x478] sm:$0xff]
  %v194 = vld [vmem:[%s1 + $0x480] sm:$0xff]
  %v195 = vld [vmem:[%s1 + $0x488] sm:$0xff]
  %v196 = vld [vmem:[%s1 + $0x490] sm:$0xff]
  %v197 = vld [vmem:[%s1 + $0x498] sm:$0xff]
  %v198 = vld [vmem:[%s1 + $0x4a0] sm:$0xff]
  %v199 = vld [vmem:[%s1 + $0x4a8] sm:$0xff]
  %v200 = vld [vmem:[%s1 + $0x4b0] sm:$0xff]
  %v201 = vld [vmem:[%s1 + $0x4b8] sm:$0xff]
  %v202 = vld [vmem:[%s1 + $0x4c0] sm:$0xff]
  %v203 = vld [vmem:[%s1 + $0x4c8] sm:$0xff]
  %v204 = vld [vmem:[%s1 + $0x4d0] sm:$0xff]
  %v205 = vld [vmem:[%s1 + $0x4d8] sm:$0xff]
  %v206 = vld [vmem:[%s1 + $0x4e0] sm:$0xff]
  %v207 = vld [vmem:[%s1 + $0x4e8] sm:$0xff]
  %v208 = vld [vmem:[%s1 + $0x4f0] sm:$0xff]
  %v209 = vld [vmem:[%s1 + $0x4f8] sm:$0xff]
  %v210 = vld [vmem:[%s1 + $0x500] sm:$0xff]
  %v211 = vld [vmem:[%s1 + $0x508] sm:$0xff]
  %v212 = vld [vmem:[%s1 + $0x510] sm:$0xff]
  %v213 = vld [vmem:[%s1 + $0x518] sm:$0xff]
  %v214 = vld [vmem:[%s1 + $0x520] sm:$0xff]
  %v215 = vld [vmem:[%s1 + $0x528] sm:$0xff]
  %v216 = vld [vmem:[%s1 + $0x530] sm:$0xff]
  %v217 = vld [vmem:[%s1 + $0x538] sm:$0xff]
  %v218 = vld [vmem:[%s1 + $0x540] sm:$0xff]
  %v219 = vld [vmem:[%s1 + $0x548] sm:$0xff]
  %v220 = vld [vmem:[%s1 + $0x550] sm:$0xff]
  %v221 = vld [vmem:[%s1 + $0x558] sm:$0xff]
  %v222 = vld [vmem:[%s1 + $0x560] sm:$0xff]
  %v223 = vld [vmem:[%s1 + $0x568] sm:$0xff]
  %v224 = vld [vmem:[%s1 + $0x570] sm:$0xff]
  %v225 = vld [vmem:[%s1 + $0x578] sm:$0xff]
  %v226 = vld [vmem:[%s1 + $0x580] sm:$0xff]
  %v227 = vld [vmem:[%s1 + $0x588] sm:$0xff]
  %v228 = vld [vmem:[%s1 + $0x590] sm:$0xff]
  %v229 = vld [vmem:[%s1 + $0x598] sm:$0xff]
  %v230 = vld [vmem:[%s1 + $0x5a0] sm:$0xff]
  %v231 = vld [vmem:[%s1 + $0x5a8] sm:$0xff]
  %v232 = vld [vmem:[%s1 + $0x5b0] sm:$0xff]
  %v233 = vld [vmem:[%s1 + $0x5b8] sm:$0xff]
  %v234 = vld [vmem:[%s1 + $0x5c0] sm:$0xff]
  %v235 = vld [vmem:[%s1 + $0x5c8] sm:$0xff]
  %v236 = vld [vmem:[%s1 + $0x5d0] sm:$0xff]
  %v237 = vld [vmem:[%s1 + $0x5d8] sm:$0xff]
  %v238 = vld [vmem:[%s1 + $0x5e0] sm:$0xff]
  %v239 = vld [vmem:[%s1 + $0x5e8] sm:$0xff]
  %v240 = vld [vmem:[%s1 + $0x5f0] sm:$0xff]
  %v241 = vld [vmem:[%s1 + $0x5f8] sm:$0xff]
  %v242 = vld [vmem:[%s1 + $0x600] sm:$0xff]
  %v243 = vld [vmem:[%s1 + $0x608] sm:$0xff]
  %v244 = vld [vmem:[%s1 + $0x610] sm:$0xff]
  %v245 = vld [vmem:[%s1 + $0x618] sm:$0xff]
  %v246 = vld [vmem:[%s1 + $0x620] sm:$0xff]
  %v247 = vld [vmem:[%s1 + $0x628] sm:$0xff]
  %v248 = vld [vmem:[%s1 + $0x630] sm:$0xff]
  %v249 = vld [vmem:[%s1 + $0x638] sm:$0xff]
  %v250 = vld [vmem:[%s1 + $0x640] sm:$0xff]
  %v251 = vld [vmem:[%s1 + $0x648] sm:$0xff]
  %v252 = vld [vmem:[%s1 + $0x650] sm:$0xff]
  %v253 = vld [vmem:[%s1 + $0x658] sm:$0xff]
  %v254 = vld [vmem:[%s1 + $0x660] sm:$0xff]
  %v255 = vld [vmem:[%s1 + $0x668] sm:$0xff]
  %v256 = vld [vmem:[%s1 + $0x670] sm:$0xff]
  %v257 = vld [vmem:[%s1 + $0x678] sm:$0xff]
  %v258 = vld [vmem:[%s1 + $0x680] sm:$0xff]
  %v259 = vld [vmem:[%s1 + $0x688] sm:$0xff]
  %v260 = vld [vmem:[%s1 + $0x690] sm:$0xff]
  %v261 = vld [vmem:[%s1 + $0x698] sm:$0xff]
  %v262 = vld [vmem:[%s1 + $0x6a0] sm:$0xff]
  %v263 = vld [vmem:[%s1 + $0x6a8] sm:$0xff]
  %v264 = vld [vmem:[%s1 + $0x6b0] sm:$0xff]
  %v265 = vld [vmem:[%s1 + $0x6b8] sm:$0xff]
  %v266 = vld [vmem:[%s1 + $0x6c0] sm:$0xff]
  %v267 = vld [vmem:[%s1 + $0x6c8] sm:$0xff]
  %v268 = vld [vmem:[%s1 + $0x6d0] sm:$0xff]
  %v269 = vld [vmem:[%s1 + $0x6d8] sm:$0xff]
  %v270 = vld [vmem:[%s1 + $0x6e0] sm:$0xff]
  %v271 = vld [vmem:[%s1 + $0x6e8] sm:$0xff]
  %v272 = vld [vmem:[%s1 + $0x6f0] sm:$0xff]
  %v273 = vld [vmem:[%s1 + $0x6f8] sm:$0xff]
  %v274 = vld [vmem:[%s1 + $0x700] sm:$0xff]
  %v275 = vld [vmem:[%s1 + $0x708] sm:$0xff]
  %v276 = vld [vmem:[%s1 + $0x710] sm:$0xff]
  %v277 = vld [vmem:[%s1 + $0x718] sm:$0xff]
  %v278 = vld [vmem:[%s1 + $0x720] sm:$0xff]
  %v279 = vld [vmem:[%s1 + $0x728] sm:$0xff]
  %v280 = vld [vmem:[%s1 + $0x730] sm:$0xff]
  %v281 = vld [vmem:[%s1 + $0x738] sm:$0xff]
  %v282 = vld [vmem:[%s1 + $0x740] sm:$0xff]
  %v283 = vld [vmem:[%s1 + $0x748] sm:$0xff]
  %v284 = vld [vmem:[%s1 + $0x750] sm:$0xff]
  %v285 = vld [vmem:[%s1 + $0x758] sm:$0xff]
  %v286 = vld [vmem:[%s1 + $0x760] sm:$0xff]
  %v287 = vld [vmem:[%s1 + $0x768] sm:$0xff]
  %v288 = vld [vmem:[%s1 + $0x770] sm:$0xff]
  %v289 = vld [vmem:[%s1 + $0x778] sm:$0xff]
  %v290 = vld [vmem:[%s1 + $0x780] sm:$0xff]
  %v291 = vld [vmem:[%s1 + $0x788] sm:$0xff]
  %v292 = vld [vmem:[%s1 + $0x790] sm:$0xff]
  %v293 = vld [vmem:[%s1 + $0x798] sm:$0xff]
  %v294 = vld [vmem:[%s1 + $0x7a0] sm:$0xff]
  %v295 = vld [vmem:[%s1 + $0x7a8] sm:$0xff]
  %v296 = vld [vmem:[%s1 + $0x7b0] sm:$0xff]
  %v297 = vld [vmem:[%s1 + $0x7b8] sm:$0xff]
  %v298 = vld [vmem:[%s1 + $0x7c0] sm:$0xff]
  %v299 = vld [vmem:[%s1 + $0x7c8] sm:$0xff]
  %v300 = vld [vmem:[%s1 + $0x7d0] sm:$0xff]
  %v301 = vld [vmem:[%s1 + $0x7d8] sm:$0xff]
  %v302 = vld [vmem:[%s1 + $0x7e0] sm:$0xff]
  %v303 = vld [vmem:[%s1 + $0x7e8] sm:$0xff]
  %v304 = vld [vmem:[%s1 + $0x7f0] sm:$0xff]
  %v305 = vld [vmem:[%s1 + $0x7f8] sm:$0xff]
  %v306 = vld [vmem:[%s1 + $0x800] sm:$0xff]
  %v307 = vld [vmem:[%s1 + $0x808] sm:$0xff]
  %v308 = vld [vmem:[%s1 + $0x810] sm:$0xff]
  %v309 = vld [vmem:[%s1 + $0x818] sm:$0xff]
  %v310 = vld [vmem:[%s1 + $0x820] sm:$0xff]
  %v311 = vld [vmem:[%s1 + $0x828] sm:$0xff]
  %v312 = vld [vmem:[%s1 + $0x830] sm:$0xff]
  %v313 = vld [vmem:[%s1 + $0x838] sm:$0xff]
  %v314 = vld [vmem:[%s1 + $0x840] sm:$0xff]
  %v315 = vld [vmem:[%s1 + $0x848] sm:$0xff]
  %v316 = vld [vmem:[%s1 + $0x850] sm:$0xff]
  %v317 = vld [vmem:[%s1 + $0x858] sm:$0xff]
  %v318 = vld [vmem:[%s1 + $0x860] sm:$0xff]
  %v319 = vld [vmem:[%s1 + $0x868] sm:$0xff]
  %v320 = vld [vmem:[%s1 + $0x870] sm:$0xff]
  %v321 = vld [vmem:[%s1 + $0x878] sm:$0xff]
  %v322 = vld [vmem:[%s1 + $0x880] sm:$0xff]
  %v323 = vld [vmem:[%s1 + $0x888] sm:$0xff]
  %v324 = vld [vmem:[%s1 + $0x890] sm:$0xff]
  %v325 = vld [vmem:[%s1 + $0x898] sm:$0xff]
  %v326 = vld [vmem:[%s1 + $0x8a0] sm:$0xff]
  %v327 = vld [vmem:[%s1 + $0x8a8] sm:$0xff]
  %v328 = vld [vmem:[%s1 + $0x8b0] sm:$0xff]
  %v329 = vld [vmem:[%s1 + $0x8b8] sm:$0xff]
  %v330 = vld [vmem:[%s1 + $0x8c0] sm:$0xff]
  %v331 = vld [vmem:[%s1 + $0x8c8] sm:$0xff]
  %v332 = vld [vmem:[%s1 + $0x8d0] sm:$0xff]
  %v333 = vld [vmem:[%s1 + $0x8d8] sm:$0xff]
  %v334 = vld [vmem:[%s1 + $0x8e0] sm:$0xff]
  %v335 = vld [vmem:[%s1 + $0x8e8] sm:$0xff]
  %v336 = vld [vmem:[%s1 + $0x8f0] sm:$0xff]
  %v337 = vld [vmem:[%s1 + $0x8f8] sm:$0xff]
  %v338 = vld [vmem:[%s2] sm:$0x3]
  %v340 = vlaneseq
  %v341 = vshrl.u32 %v340, 7
  %v342 = vsub.s32 0, %v341
  %v343 = vrot.slane %v338, %v342
  %v344 = vlaneseq
  %v345 = vshrl.u32 %v344, 7
  %v346 = vsub.s32 1, %v345
  %v347 = vrot.slane %v338, %v346
  %v386 = vunpack.c.l.b16 %v14
  %v387 = vunpack.c.h.b16 %v14
  %v388 = vunpack.c.l.b16 %v15
  %v389 = vunpack.c.h.b16 %v15
  %v390 = vunpack.c.l.b16 %v16
  %v391 = vunpack.c.h.b16 %v16
  %v392 = vunpack.c.l.b16 %v17
  %v393 = vunpack.c.h.b16 %v17
  %v394 = vunpack.c.l.b16 %v18
  %v395 = vunpack.c.h.b16 %v18
  %v396 = vunpack.c.l.b16 %v19
  %v397 = vunpack.c.h.b16 %v19
  %v398 = vunpack.c.l.b16 %v20
  %v399 = vunpack.c.h.b16 %v20
  %v400 = vunpack.c.l.b16 %v21
  %v401 = vunpack.c.h.b16 %v21
  %v402 = vunpack.c.l.b16 %v22
  %v403 = vunpack.c.h.b16 %v22
  %v404 = vunpack.c.l.b16 %v23
  %v405 = vunpack.c.h.b16 %v23
  %v406 = vunpack.c.l.b16 %v24
  %v407 = vunpack.c.h.b16 %v24
  %v408 = vunpack.c.l.b16 %v25
  %v409 = vunpack.c.h.b16 %v25
  %v410 = vunpack.c.l.b16 %v26
  %v411 = vunpack.c.h.b16 %v26
  %v412 = vunpack.c.l.b16 %v27
  %v413 = vunpack.c.h.b16 %v27
  %v414 = vunpack.c.l.b16 %v28
  %v415 = vunpack.c.h.b16 %v28
  %v416 = vunpack.c.l.b16 %v29
  %v417 = vunpack.c.h.b16 %v29
  %v418 = vunpack.c.l.b16 %v30
  %v419 = vunpack.c.h.b16 %v30
  %v420 = vunpack.c.l.b16 %v31
  %v421 = vunpack.c.h.b16 %v31
  %v422 = vunpack.c.l.b16 %v32
  %v423 = vunpack.c.h.b16 %v32
  %v424 = vunpack.c.l.b16 %v33
  %v425 = vunpack.c.h.b16 %v33
  %v426 = vunpack.c.l.b16 %v34
  %v427 = vunpack.c.h.b16 %v34
  %v428 = vunpack.c.l.b16 %v35
  %v429 = vunpack.c.h.b16 %v35
  %v430 = vunpack.c.l.b16 %v36
  %v431 = vunpack.c.h.b16 %v36
  %v432 = vunpack.c.l.b16 %v37
  %v433 = vunpack.c.h.b16 %v37
  %v434 = vunpack.c.l.b16 %v38
  %v435 = vunpack.c.h.b16 %v38
  %v436 = vunpack.c.l.b16 %v39
  %v437 = vunpack.c.h.b16 %v39
  %v438 = vunpack.c.l.b16 %v40
  %v439 = vunpack.c.h.b16 %v40
  %v440 = vunpack.c.l.b16 %v41
  %v441 = vunpack.c.h.b16 %v41
  %v442 = vunpack.c.l.b16 %v42
  %v443 = vunpack.c.h.b16 %v42
  %v444 = vunpack.c.l.b16 %v43
  %v445 = vunpack.c.h.b16 %v43
  %v446 = vunpack.c.l.b16 %v44
  %v447 = vunpack.c.h.b16 %v44
  %v448 = vunpack.c.l.b16 %v45
  %v449 = vunpack.c.h.b16 %v45
  %v450 = vunpack.c.l.b16 %v46
  %v451 = vunpack.c.h.b16 %v46
  %v452 = vunpack.c.l.b16 %v47
  %v453 = vunpack.c.h.b16 %v47
  %v454 = vunpack.c.l.b16 %v48
  %v455 = vunpack.c.h.b16 %v48
  %v456 = vunpack.c.l.b16 %v49
  %v457 = vunpack.c.h.b16 %v49
  %v458 = vpack.c.b16 %v404, %v386
  %v459 = vpack.c.b16 %v405, %v387
  %v460 = vpack.c.b16 %v406, %v388
  %v461 = vpack.c.b16 %v407, %v389
  %v462 = vpack.c.b16 %v408, %v390
  %v463 = vpack.c.b16 %v409, %v391
  %v464 = vpack.c.b16 %v410, %v392
  %v465 = vpack.c.b16 %v411, %v393
  %v466 = vpack.c.b16 %v412, %v394
  %v467 = vpack.c.b16 %v413, %v395
  %v468 = vpack.c.b16 %v414, %v396
  %v469 = vpack.c.b16 %v415, %v397
  %v470 = vpack.c.b16 %v416, %v398
  %v471 = vpack.c.b16 %v417, %v399
  %v472 = vpack.c.b16 %v418, %v400
  %v473 = vpack.c.b16 %v419, %v401
  %v474 = vpack.c.b16 %v420, %v402
  %v475 = vpack.c.b16 %v421, %v403
  %v476 = vpack.c.b16 %v440, %v422
  %v477 = vpack.c.b16 %v441, %v423
  %v478 = vpack.c.b16 %v442, %v424
  %v479 = vpack.c.b16 %v443, %v425
  %v480 = vpack.c.b16 %v444, %v426
  %v481 = vpack.c.b16 %v445, %v427
  %v482 = vpack.c.b16 %v446, %v428
  %v483 = vpack.c.b16 %v447, %v429
  %v484 = vpack.c.b16 %v448, %v430
  %v485 = vpack.c.b16 %v449, %v431
  %v486 = vpack.c.b16 %v450, %v432
  %v487 = vpack.c.b16 %v451, %v433
  %v488 = vpack.c.b16 %v452, %v434
  %v489 = vpack.c.b16 %v453, %v435
  %v490 = vpack.c.b16 %v454, %v436
  %v491 = vpack.c.b16 %v455, %v437
  %v492 = vpack.c.b16 %v456, %v438
  %v493 = vpack.c.b16 %v457, %v439
  %v818 = vunpack.c.l.b16 %v50
  %v819 = vunpack.c.h.b16 %v50
  %v820 = vunpack.c.l.b16 %v51
  %v821 = vunpack.c.h.b16 %v51
  %v822 = vunpack.c.l.b16 %v52
  %v823 = vunpack.c.h.b16 %v52
  %v824 = vunpack.c.l.b16 %v53
  %v825 = vunpack.c.h.b16 %v53
  %v826 = vunpack.c.l.b16 %v54
  %v827 = vunpack.c.h.b16 %v54
  %v828 = vunpack.c.l.b16 %v55
  %v829 = vunpack.c.h.b16 %v55
  %v830 = vunpack.c.l.b16 %v56
  %v831 = vunpack.c.h.b16 %v56
  %v832 = vunpack.c.l.b16 %v57
  %v833 = vunpack.c.h.b16 %v57
  %v834 = vunpack.c.l.b16 %v58
  %v835 = vunpack.c.h.b16 %v58
  %v836 = vunpack.c.l.b16 %v59
  %v837 = vunpack.c.h.b16 %v59
  %v838 = vunpack.c.l.b16 %v60
  %v839 = vunpack.c.h.b16 %v60
  %v840 = vunpack.c.l.b16 %v61
  %v841 = vunpack.c.h.b16 %v61
  %v842 = vunpack.c.l.b16 %v62
  %v843 = vunpack.c.h.b16 %v62
  %v844 = vunpack.c.l.b16 %v63
  %v845 = vunpack.c.h.b16 %v63
  %v846 = vunpack.c.l.b16 %v64
  %v847 = vunpack.c.h.b16 %v64
  %v848 = vunpack.c.l.b16 %v65
  %v849 = vunpack.c.h.b16 %v65
  %v850 = vunpack.c.l.b16 %v66
  %v851 = vunpack.c.h.b16 %v66
  %v852 = vunpack.c.l.b16 %v67
  %v853 = vunpack.c.h.b16 %v67
  %v854 = vunpack.c.l.b16 %v68
  %v855 = vunpack.c.h.b16 %v68
  %v856 = vunpack.c.l.b16 %v69
  %v857 = vunpack.c.h.b16 %v69
  %v858 = vunpack.c.l.b16 %v70
  %v859 = vunpack.c.h.b16 %v70
  %v860 = vunpack.c.l.b16 %v71
  %v861 = vunpack.c.h.b16 %v71
  %v862 = vunpack.c.l.b16 %v72
  %v863 = vunpack.c.h.b16 %v72
  %v864 = vunpack.c.l.b16 %v73
  %v865 = vunpack.c.h.b16 %v73
  %v866 = vunpack.c.l.b16 %v74
  %v867 = vunpack.c.h.b16 %v74
  %v868 = vunpack.c.l.b16 %v75
  %v869 = vunpack.c.h.b16 %v75
  %v870 = vunpack.c.l.b16 %v76
  %v871 = vunpack.c.h.b16 %v76
  %v872 = vunpack.c.l.b16 %v77
  %v873 = vunpack.c.h.b16 %v77
  %v874 = vunpack.c.l.b16 %v78
  %v875 = vunpack.c.h.b16 %v78
  %v876 = vunpack.c.l.b16 %v79
  %v877 = vunpack.c.h.b16 %v79
  %v878 = vunpack.c.l.b16 %v80
  %v879 = vunpack.c.h.b16 %v80
  %v880 = vunpack.c.l.b16 %v81
  %v881 = vunpack.c.h.b16 %v81
  %v882 = vunpack.c.l.b16 %v82
  %v883 = vunpack.c.h.b16 %v82
  %v884 = vunpack.c.l.b16 %v83
  %v885 = vunpack.c.h.b16 %v83
  %v886 = vunpack.c.l.b16 %v84
  %v887 = vunpack.c.h.b16 %v84
  %v888 = vunpack.c.l.b16 %v85
  %v889 = vunpack.c.h.b16 %v85
  %v890 = vunpack.c.l.b16 %v86
  %v891 = vunpack.c.h.b16 %v86
  %v892 = vunpack.c.l.b16 %v87
  %v893 = vunpack.c.h.b16 %v87
  %v894 = vunpack.c.l.b16 %v88
  %v895 = vunpack.c.h.b16 %v88
  %v896 = vunpack.c.l.b16 %v89
  %v897 = vunpack.c.h.b16 %v89
  %v898 = vunpack.c.l.b16 %v90
  %v899 = vunpack.c.h.b16 %v90
  %v900 = vunpack.c.l.b16 %v91
  %v901 = vunpack.c.h.b16 %v91
  %v902 = vunpack.c.l.b16 %v92
  %v903 = vunpack.c.h.b16 %v92
  %v904 = vunpack.c.l.b16 %v93
  %v905 = vunpack.c.h.b16 %v93
  %v906 = vunpack.c.l.b16 %v94
  %v907 = vunpack.c.h.b16 %v94
  %v908 = vunpack.c.l.b16 %v95
  %v909 = vunpack.c.h.b16 %v95
  %v910 = vunpack.c.l.b16 %v96
  %v911 = vunpack.c.h.b16 %v96
  %v912 = vunpack.c.l.b16 %v97
  %v913 = vunpack.c.h.b16 %v97
  %v914 = vunpack.c.l.b16 %v98
  %v915 = vunpack.c.h.b16 %v98
  %v916 = vunpack.c.l.b16 %v99
  %v917 = vunpack.c.h.b16 %v99
  %v918 = vunpack.c.l.b16 %v100
  %v919 = vunpack.c.h.b16 %v100
  %v920 = vunpack.c.l.b16 %v101
  %v921 = vunpack.c.h.b16 %v101
  %v922 = vunpack.c.l.b16 %v102
  %v923 = vunpack.c.h.b16 %v102
  %v924 = vunpack.c.l.b16 %v103
  %v925 = vunpack.c.h.b16 %v103
  %v926 = vunpack.c.l.b16 %v104
  %v927 = vunpack.c.h.b16 %v104
  %v928 = vunpack.c.l.b16 %v105
  %v929 = vunpack.c.h.b16 %v105
  %v930 = vunpack.c.l.b16 %v106
  %v931 = vunpack.c.h.b16 %v106
  %v932 = vunpack.c.l.b16 %v107
  %v933 = vunpack.c.h.b16 %v107
  %v934 = vunpack.c.l.b16 %v108
  %v935 = vunpack.c.h.b16 %v108
  %v936 = vunpack.c.l.b16 %v109
  %v937 = vunpack.c.h.b16 %v109
  %v938 = vunpack.c.l.b16 %v110
  %v939 = vunpack.c.h.b16 %v110
  %v940 = vunpack.c.l.b16 %v111
  %v941 = vunpack.c.h.b16 %v111
  %v942 = vunpack.c.l.b16 %v112
  %v943 = vunpack.c.h.b16 %v112
  %v944 = vunpack.c.l.b16 %v113
  %v945 = vunpack.c.h.b16 %v113
  %v946 = vunpack.c.l.b16 %v114
  %v947 = vunpack.c.h.b16 %v114
  %v948 = vunpack.c.l.b16 %v115
  %v949 = vunpack.c.h.b16 %v115
  %v950 = vunpack.c.l.b16 %v116
  %v951 = vunpack.c.h.b16 %v116
  %v952 = vunpack.c.l.b16 %v117
  %v953 = vunpack.c.h.b16 %v117
  %v954 = vunpack.c.l.b16 %v118
  %v955 = vunpack.c.h.b16 %v118
  %v956 = vunpack.c.l.b16 %v119
  %v957 = vunpack.c.h.b16 %v119
  %v958 = vunpack.c.l.b16 %v120
  %v959 = vunpack.c.h.b16 %v120
  %v960 = vunpack.c.l.b16 %v121
  %v961 = vunpack.c.h.b16 %v121
  %v962 = vunpack.c.l.b16 %v122
  %v963 = vunpack.c.h.b16 %v122
  %v964 = vunpack.c.l.b16 %v123
  %v965 = vunpack.c.h.b16 %v123
  %v966 = vunpack.c.l.b16 %v124
  %v967 = vunpack.c.h.b16 %v124
  %v968 = vunpack.c.l.b16 %v125
  %v969 = vunpack.c.h.b16 %v125
  %v970 = vunpack.c.l.b16 %v126
  %v971 = vunpack.c.h.b16 %v126
  %v972 = vunpack.c.l.b16 %v127
  %v973 = vunpack.c.h.b16 %v127
  %v974 = vunpack.c.l.b16 %v128
  %v975 = vunpack.c.h.b16 %v128
  %v976 = vunpack.c.l.b16 %v129
  %v977 = vunpack.c.h.b16 %v129
  %v978 = vunpack.c.l.b16 %v130
  %v979 = vunpack.c.h.b16 %v130
  %v980 = vunpack.c.l.b16 %v131
  %v981 = vunpack.c.h.b16 %v131
  %v982 = vunpack.c.l.b16 %v132
  %v983 = vunpack.c.h.b16 %v132
  %v984 = vunpack.c.l.b16 %v133
  %v985 = vunpack.c.h.b16 %v133
  %v986 = vunpack.c.l.b16 %v134
  %v987 = vunpack.c.h.b16 %v134
  %v988 = vunpack.c.l.b16 %v135
  %v989 = vunpack.c.h.b16 %v135
  %v990 = vunpack.c.l.b16 %v136
  %v991 = vunpack.c.h.b16 %v136
  %v992 = vunpack.c.l.b16 %v137
  %v993 = vunpack.c.h.b16 %v137
  %v994 = vunpack.c.l.b16 %v138
  %v995 = vunpack.c.h.b16 %v138
  %v996 = vunpack.c.l.b16 %v139
  %v997 = vunpack.c.h.b16 %v139
  %v998 = vunpack.c.l.b16 %v140
  %v999 = vunpack.c.h.b16 %v140
  %v1000 = vunpack.c.l.b16 %v141
  %v1001 = vunpack.c.h.b16 %v141
  %v1002 = vunpack.c.l.b16 %v142
  %v1003 = vunpack.c.h.b16 %v142
  %v1004 = vunpack.c.l.b16 %v143
  %v1005 = vunpack.c.h.b16 %v143
  %v1006 = vunpack.c.l.b16 %v144
  %v1007 = vunpack.c.h.b16 %v144
  %v1008 = vunpack.c.l.b16 %v145
  %v1009 = vunpack.c.h.b16 %v145
  %v1010 = vunpack.c.l.b16 %v146
  %v1011 = vunpack.c.h.b16 %v146
  %v1012 = vunpack.c.l.b16 %v147
  %v1013 = vunpack.c.h.b16 %v147
  %v1014 = vunpack.c.l.b16 %v148
  %v1015 = vunpack.c.h.b16 %v148
  %v1016 = vunpack.c.l.b16 %v149
  %v1017 = vunpack.c.h.b16 %v149
  %v1018 = vunpack.c.l.b16 %v150
  %v1019 = vunpack.c.h.b16 %v150
  %v1020 = vunpack.c.l.b16 %v151
  %v1021 = vunpack.c.h.b16 %v151
  %v1022 = vunpack.c.l.b16 %v152
  %v1023 = vunpack.c.h.b16 %v152
  %v1024 = vunpack.c.l.b16 %v153
  %v1025 = vunpack.c.h.b16 %v153
  %v1026 = vunpack.c.l.b16 %v154
  %v1027 = vunpack.c.h.b16 %v154
  %v1028 = vunpack.c.l.b16 %v155
  %v1029 = vunpack.c.h.b16 %v155
  %v1030 = vunpack.c.l.b16 %v156
  %v1031 = vunpack.c.h.b16 %v156
  %v1032 = vunpack.c.l.b16 %v157
  %v1033 = vunpack.c.h.b16 %v157
  %v1034 = vunpack.c.l.b16 %v158
  %v1035 = vunpack.c.h.b16 %v158
  %v1036 = vunpack.c.l.b16 %v159
  %v1037 = vunpack.c.h.b16 %v159
  %v1038 = vunpack.c.l.b16 %v160
  %v1039 = vunpack.c.h.b16 %v160
  %v1040 = vunpack.c.l.b16 %v161
  %v1041 = vunpack.c.h.b16 %v161
  %v1042 = vunpack.c.l.b16 %v162
  %v1043 = vunpack.c.h.b16 %v162
  %v1044 = vunpack.c.l.b16 %v163
  %v1045 = vunpack.c.h.b16 %v163
  %v1046 = vunpack.c.l.b16 %v164
  %v1047 = vunpack.c.h.b16 %v164
  %v1048 = vunpack.c.l.b16 %v165
  %v1049 = vunpack.c.h.b16 %v165
  %v1050 = vunpack.c.l.b16 %v166
  %v1051 = vunpack.c.h.b16 %v166
  %v1052 = vunpack.c.l.b16 %v167
  %v1053 = vunpack.c.h.b16 %v167
  %v1054 = vunpack.c.l.b16 %v168
  %v1055 = vunpack.c.h.b16 %v168
  %v1056 = vunpack.c.l.b16 %v169
  %v1057 = vunpack.c.h.b16 %v169
  %v1058 = vunpack.c.l.b16 %v170
  %v1059 = vunpack.c.h.b16 %v170
  %v1060 = vunpack.c.l.b16 %v171
  %v1061 = vunpack.c.h.b16 %v171
  %v1062 = vunpack.c.l.b16 %v172
  %v1063 = vunpack.c.h.b16 %v172
  %v1064 = vunpack.c.l.b16 %v173
  %v1065 = vunpack.c.h.b16 %v173
  %v1066 = vunpack.c.l.b16 %v174
  %v1067 = vunpack.c.h.b16 %v174
  %v1068 = vunpack.c.l.b16 %v175
  %v1069 = vunpack.c.h.b16 %v175
  %v1070 = vunpack.c.l.b16 %v176
  %v1071 = vunpack.c.h.b16 %v176
  %v1072 = vunpack.c.l.b16 %v177
  %v1073 = vunpack.c.h.b16 %v177
  %v1074 = vunpack.c.l.b16 %v178
  %v1075 = vunpack.c.h.b16 %v178
  %v1076 = vunpack.c.l.b16 %v179
  %v1077 = vunpack.c.h.b16 %v179
  %v1078 = vunpack.c.l.b16 %v180
  %v1079 = vunpack.c.h.b16 %v180
  %v1080 = vunpack.c.l.b16 %v181
  %v1081 = vunpack.c.h.b16 %v181
  %v1082 = vunpack.c.l.b16 %v182
  %v1083 = vunpack.c.h.b16 %v182
  %v1084 = vunpack.c.l.b16 %v183
  %v1085 = vunpack.c.h.b16 %v183
  %v1086 = vunpack.c.l.b16 %v184
  %v1087 = vunpack.c.h.b16 %v184
  %v1088 = vunpack.c.l.b16 %v185
  %v1089 = vunpack.c.h.b16 %v185
  %v1090 = vunpack.c.l.b16 %v186
  %v1091 = vunpack.c.h.b16 %v186
  %v1092 = vunpack.c.l.b16 %v187
  %v1093 = vunpack.c.h.b16 %v187
  %v1094 = vunpack.c.l.b16 %v188
  %v1095 = vunpack.c.h.b16 %v188
  %v1096 = vunpack.c.l.b16 %v189
  %v1097 = vunpack.c.h.b16 %v189
  %v1098 = vunpack.c.l.b16 %v190
  %v1099 = vunpack.c.h.b16 %v190
  %v1100 = vunpack.c.l.b16 %v191
  %v1101 = vunpack.c.h.b16 %v191
  %v1102 = vunpack.c.l.b16 %v192
  %v1103 = vunpack.c.h.b16 %v192
  %v1104 = vunpack.c.l.b16 %v193
  %v1105 = vunpack.c.h.b16 %v193
  %v1106 = vunpack.c.l.b16 %v194
  %v1107 = vunpack.c.h.b16 %v194
  %v1108 = vunpack.c.l.b16 %v195
  %v1109 = vunpack.c.h.b16 %v195
  %v1110 = vunpack.c.l.b16 %v196
  %v1111 = vunpack.c.h.b16 %v196
  %v1112 = vunpack.c.l.b16 %v197
  %v1113 = vunpack.c.h.b16 %v197
  %v1114 = vunpack.c.l.b16 %v198
  %v1115 = vunpack.c.h.b16 %v198
  %v1116 = vunpack.c.l.b16 %v199
  %v1117 = vunpack.c.h.b16 %v199
  %v1118 = vunpack.c.l.b16 %v200
  %v1119 = vunpack.c.h.b16 %v200
  %v1120 = vunpack.c.l.b16 %v201
  %v1121 = vunpack.c.h.b16 %v201
  %v1122 = vunpack.c.l.b16 %v202
  %v1123 = vunpack.c.h.b16 %v202
  %v1124 = vunpack.c.l.b16 %v203
  %v1125 = vunpack.c.h.b16 %v203
  %v1126 = vunpack.c.l.b16 %v204
  %v1127 = vunpack.c.h.b16 %v204
  %v1128 = vunpack.c.l.b16 %v205
  %v1129 = vunpack.c.h.b16 %v205
  %v1130 = vunpack.c.l.b16 %v206
  %v1131 = vunpack.c.h.b16 %v206
  %v1132 = vunpack.c.l.b16 %v207
  %v1133 = vunpack.c.h.b16 %v207
  %v1134 = vunpack.c.l.b16 %v208
  %v1135 = vunpack.c.h.b16 %v208
  %v1136 = vunpack.c.l.b16 %v209
  %v1137 = vunpack.c.h.b16 %v209
  %v1138 = vunpack.c.l.b16 %v210
  %v1139 = vunpack.c.h.b16 %v210
  %v1140 = vunpack.c.l.b16 %v211
  %v1141 = vunpack.c.h.b16 %v211
  %v1142 = vunpack.c.l.b16 %v212
  %v1143 = vunpack.c.h.b16 %v212
  %v1144 = vunpack.c.l.b16 %v213
  %v1145 = vunpack.c.h.b16 %v213
  %v1146 = vunpack.c.l.b16 %v214
  %v1147 = vunpack.c.h.b16 %v214
  %v1148 = vunpack.c.l.b16 %v215
  %v1149 = vunpack.c.h.b16 %v215
  %v1150 = vunpack.c.l.b16 %v216
  %v1151 = vunpack.c.h.b16 %v216
  %v1152 = vunpack.c.l.b16 %v217
  %v1153 = vunpack.c.h.b16 %v217
  %v1154 = vunpack.c.l.b16 %v218
  %v1155 = vunpack.c.h.b16 %v218
  %v1156 = vunpack.c.l.b16 %v219
  %v1157 = vunpack.c.h.b16 %v219
  %v1158 = vunpack.c.l.b16 %v220
  %v1159 = vunpack.c.h.b16 %v220
  %v1160 = vunpack.c.l.b16 %v221
  %v1161 = vunpack.c.h.b16 %v221
  %v1162 = vunpack.c.l.b16 %v222
  %v1163 = vunpack.c.h.b16 %v222
  %v1164 = vunpack.c.l.b16 %v223
  %v1165 = vunpack.c.h.b16 %v223
  %v1166 = vunpack.c.l.b16 %v224
  %v1167 = vunpack.c.h.b16 %v224
  %v1168 = vunpack.c.l.b16 %v225
  %v1169 = vunpack.c.h.b16 %v225
  %v1170 = vunpack.c.l.b16 %v226
  %v1171 = vunpack.c.h.b16 %v226
  %v1172 = vunpack.c.l.b16 %v227
  %v1173 = vunpack.c.h.b16 %v227
  %v1174 = vunpack.c.l.b16 %v228
  %v1175 = vunpack.c.h.b16 %v228
  %v1176 = vunpack.c.l.b16 %v229
  %v1177 = vunpack.c.h.b16 %v229
  %v1178 = vunpack.c.l.b16 %v230
  %v1179 = vunpack.c.h.b16 %v230
  %v1180 = vunpack.c.l.b16 %v231
  %v1181 = vunpack.c.h.b16 %v231
  %v1182 = vunpack.c.l.b16 %v232
  %v1183 = vunpack.c.h.b16 %v232
  %v1184 = vunpack.c.l.b16 %v233
  %v1185 = vunpack.c.h.b16 %v233
  %v1186 = vunpack.c.l.b16 %v234
  %v1187 = vunpack.c.h.b16 %v234
  %v1188 = vunpack.c.l.b16 %v235
  %v1189 = vunpack.c.h.b16 %v235
  %v1190 = vunpack.c.l.b16 %v236
  %v1191 = vunpack.c.h.b16 %v236
  %v1192 = vunpack.c.l.b16 %v237
  %v1193 = vunpack.c.h.b16 %v237
  %v1194 = vunpack.c.l.b16 %v238
  %v1195 = vunpack.c.h.b16 %v238
  %v1196 = vunpack.c.l.b16 %v239
  %v1197 = vunpack.c.h.b16 %v239
  %v1198 = vunpack.c.l.b16 %v240
  %v1199 = vunpack.c.h.b16 %v240
  %v1200 = vunpack.c.l.b16 %v241
  %v1201 = vunpack.c.h.b16 %v241
  %v1202 = vunpack.c.l.b16 %v242
  %v1203 = vunpack.c.h.b16 %v242
  %v1204 = vunpack.c.l.b16 %v243
  %v1205 = vunpack.c.h.b16 %v243
  %v1206 = vunpack.c.l.b16 %v244
  %v1207 = vunpack.c.h.b16 %v244
  %v1208 = vunpack.c.l.b16 %v245
  %v1209 = vunpack.c.h.b16 %v245
  %v1210 = vunpack.c.l.b16 %v246
  %v1211 = vunpack.c.h.b16 %v246
  %v1212 = vunpack.c.l.b16 %v247
  %v1213 = vunpack.c.h.b16 %v247
  %v1214 = vunpack.c.l.b16 %v248
  %v1215 = vunpack.c.h.b16 %v248
  %v1216 = vunpack.c.l.b16 %v249
  %v1217 = vunpack.c.h.b16 %v249
  %v1218 = vunpack.c.l.b16 %v250
  %v1219 = vunpack.c.h.b16 %v250
  %v1220 = vunpack.c.l.b16 %v251
  %v1221 = vunpack.c.h.b16 %v251
  %v1222 = vunpack.c.l.b16 %v252
  %v1223 = vunpack.c.h.b16 %v252
  %v1224 = vunpack.c.l.b16 %v253
  %v1225 = vunpack.c.h.b16 %v253
  %v1226 = vunpack.c.l.b16 %v254
  %v1227 = vunpack.c.h.b16 %v254
  %v1228 = vunpack.c.l.b16 %v255
  %v1229 = vunpack.c.h.b16 %v255
  %v1230 = vunpack.c.l.b16 %v256
  %v1231 = vunpack.c.h.b16 %v256
  %v1232 = vunpack.c.l.b16 %v257
  %v1233 = vunpack.c.h.b16 %v257
  %v1234 = vunpack.c.l.b16 %v258
  %v1235 = vunpack.c.h.b16 %v258
  %v1236 = vunpack.c.l.b16 %v259
  %v1237 = vunpack.c.h.b16 %v259
  %v1238 = vunpack.c.l.b16 %v260
  %v1239 = vunpack.c.h.b16 %v260
  %v1240 = vunpack.c.l.b16 %v261
  %v1241 = vunpack.c.h.b16 %v261
  %v1242 = vunpack.c.l.b16 %v262
  %v1243 = vunpack.c.h.b16 %v262
  %v1244 = vunpack.c.l.b16 %v263
  %v1245 = vunpack.c.h.b16 %v263
  %v1246 = vunpack.c.l.b16 %v264
  %v1247 = vunpack.c.h.b16 %v264
  %v1248 = vunpack.c.l.b16 %v265
  %v1249 = vunpack.c.h.b16 %v265
  %v1250 = vunpack.c.l.b16 %v266
  %v1251 = vunpack.c.h.b16 %v266
  %v1252 = vunpack.c.l.b16 %v267
  %v1253 = vunpack.c.h.b16 %v267
  %v1254 = vunpack.c.l.b16 %v268
  %v1255 = vunpack.c.h.b16 %v268
  %v1256 = vunpack.c.l.b16 %v269
  %v1257 = vunpack.c.h.b16 %v269
  %v1258 = vunpack.c.l.b16 %v270
  %v1259 = vunpack.c.h.b16 %v270
  %v1260 = vunpack.c.l.b16 %v271
  %v1261 = vunpack.c.h.b16 %v271
  %v1262 = vunpack.c.l.b16 %v272
  %v1263 = vunpack.c.h.b16 %v272
  %v1264 = vunpack.c.l.b16 %v273
  %v1265 = vunpack.c.h.b16 %v273
  %v1266 = vunpack.c.l.b16 %v274
  %v1267 = vunpack.c.h.b16 %v274
  %v1268 = vunpack.c.l.b16 %v275
  %v1269 = vunpack.c.h.b16 %v275
  %v1270 = vunpack.c.l.b16 %v276
  %v1271 = vunpack.c.h.b16 %v276
  %v1272 = vunpack.c.l.b16 %v277
  %v1273 = vunpack.c.h.b16 %v277
  %v1274 = vunpack.c.l.b16 %v278
  %v1275 = vunpack.c.h.b16 %v278
  %v1276 = vunpack.c.l.b16 %v279
  %v1277 = vunpack.c.h.b16 %v279
  %v1278 = vunpack.c.l.b16 %v280
  %v1279 = vunpack.c.h.b16 %v280
  %v1280 = vunpack.c.l.b16 %v281
  %v1281 = vunpack.c.h.b16 %v281
  %v1282 = vunpack.c.l.b16 %v282
  %v1283 = vunpack.c.h.b16 %v282
  %v1284 = vunpack.c.l.b16 %v283
  %v1285 = vunpack.c.h.b16 %v283
  %v1286 = vunpack.c.l.b16 %v284
  %v1287 = vunpack.c.h.b16 %v284
  %v1288 = vunpack.c.l.b16 %v285
  %v1289 = vunpack.c.h.b16 %v285
  %v1290 = vunpack.c.l.b16 %v286
  %v1291 = vunpack.c.h.b16 %v286
  %v1292 = vunpack.c.l.b16 %v287
  %v1293 = vunpack.c.h.b16 %v287
  %v1294 = vunpack.c.l.b16 %v288
  %v1295 = vunpack.c.h.b16 %v288
  %v1296 = vunpack.c.l.b16 %v289
  %v1297 = vunpack.c.h.b16 %v289
  %v1298 = vunpack.c.l.b16 %v290
  %v1299 = vunpack.c.h.b16 %v290
  %v1300 = vunpack.c.l.b16 %v291
  %v1301 = vunpack.c.h.b16 %v291
  %v1302 = vunpack.c.l.b16 %v292
  %v1303 = vunpack.c.h.b16 %v292
  %v1304 = vunpack.c.l.b16 %v293
  %v1305 = vunpack.c.h.b16 %v293
  %v1306 = vunpack.c.l.b16 %v294
  %v1307 = vunpack.c.h.b16 %v294
  %v1308 = vunpack.c.l.b16 %v295
  %v1309 = vunpack.c.h.b16 %v295
  %v1310 = vunpack.c.l.b16 %v296
  %v1311 = vunpack.c.h.b16 %v296
  %v1312 = vunpack.c.l.b16 %v297
  %v1313 = vunpack.c.h.b16 %v297
  %v1314 = vunpack.c.l.b16 %v298
  %v1315 = vunpack.c.h.b16 %v298
  %v1316 = vunpack.c.l.b16 %v299
  %v1317 = vunpack.c.h.b16 %v299
  %v1318 = vunpack.c.l.b16 %v300
  %v1319 = vunpack.c.h.b16 %v300
  %v1320 = vunpack.c.l.b16 %v301
  %v1321 = vunpack.c.h.b16 %v301
  %v1322 = vunpack.c.l.b16 %v302
  %v1323 = vunpack.c.h.b16 %v302
  %v1324 = vunpack.c.l.b16 %v303
  %v1325 = vunpack.c.h.b16 %v303
  %v1326 = vunpack.c.l.b16 %v304
  %v1327 = vunpack.c.h.b16 %v304
  %v1328 = vunpack.c.l.b16 %v305
  %v1329 = vunpack.c.h.b16 %v305
  %v1330 = vunpack.c.l.b16 %v306
  %v1331 = vunpack.c.h.b16 %v306
  %v1332 = vunpack.c.l.b16 %v307
  %v1333 = vunpack.c.h.b16 %v307
  %v1334 = vunpack.c.l.b16 %v308
  %v1335 = vunpack.c.h.b16 %v308
  %v1336 = vunpack.c.l.b16 %v309
  %v1337 = vunpack.c.h.b16 %v309
  %v1338 = vunpack.c.l.b16 %v310
  %v1339 = vunpack.c.h.b16 %v310
  %v1340 = vunpack.c.l.b16 %v311
  %v1341 = vunpack.c.h.b16 %v311
  %v1342 = vunpack.c.l.b16 %v312
  %v1343 = vunpack.c.h.b16 %v312
  %v1344 = vunpack.c.l.b16 %v313
  %v1345 = vunpack.c.h.b16 %v313
  %v1346 = vunpack.c.l.b16 %v314
  %v1347 = vunpack.c.h.b16 %v314
  %v1348 = vunpack.c.l.b16 %v315
  %v1349 = vunpack.c.h.b16 %v315
  %v1350 = vunpack.c.l.b16 %v316
  %v1351 = vunpack.c.h.b16 %v316
  %v1352 = vunpack.c.l.b16 %v317
  %v1353 = vunpack.c.h.b16 %v317
  %v1354 = vunpack.c.l.b16 %v318
  %v1355 = vunpack.c.h.b16 %v318
  %v1356 = vunpack.c.l.b16 %v319
  %v1357 = vunpack.c.h.b16 %v319
  %v1358 = vunpack.c.l.b16 %v320
  %v1359 = vunpack.c.h.b16 %v320
  %v1360 = vunpack.c.l.b16 %v321
  %v1361 = vunpack.c.h.b16 %v321
  %v1362 = vunpack.c.l.b16 %v322
  %v1363 = vunpack.c.h.b16 %v322
  %v1364 = vunpack.c.l.b16 %v323
  %v1365 = vunpack.c.h.b16 %v323
  %v1366 = vunpack.c.l.b16 %v324
  %v1367 = vunpack.c.h.b16 %v324
  %v1368 = vunpack.c.l.b16 %v325
  %v1369 = vunpack.c.h.b16 %v325
  %v1370 = vunpack.c.l.b16 %v326
  %v1371 = vunpack.c.h.b16 %v326
  %v1372 = vunpack.c.l.b16 %v327
  %v1373 = vunpack.c.h.b16 %v327
  %v1374 = vunpack.c.l.b16 %v328
  %v1375 = vunpack.c.h.b16 %v328
  %v1376 = vunpack.c.l.b16 %v329
  %v1377 = vunpack.c.h.b16 %v329
  %v1378 = vunpack.c.l.b16 %v330
  %v1379 = vunpack.c.h.b16 %v330
  %v1380 = vunpack.c.l.b16 %v331
  %v1381 = vunpack.c.h.b16 %v331
  %v1382 = vunpack.c.l.b16 %v332
  %v1383 = vunpack.c.h.b16 %v332
  %v1384 = vunpack.c.l.b16 %v333
  %v1385 = vunpack.c.h.b16 %v333
  %v1386 = vunpack.c.l.b16 %v334
  %v1387 = vunpack.c.h.b16 %v334
  %v1388 = vunpack.c.l.b16 %v335
  %v1389 = vunpack.c.h.b16 %v335
  %v1390 = vunpack.c.l.b16 %v336
  %v1391 = vunpack.c.h.b16 %v336
  %v1392 = vunpack.c.l.b16 %v337
  %v1393 = vunpack.c.h.b16 %v337
  %v1394 = vpack.c.b16 %v820, %v818
  %v1395 = vpack.c.b16 %v821, %v819
  %v1396 = vpack.c.b16 %v824, %v822
  %v1397 = vpack.c.b16 %v825, %v823
  %v1398 = vpack.c.b16 %v828, %v826
  %v1399 = vpack.c.b16 %v829, %v827
  %v1400 = vpack.c.b16 %v832, %v830
  %v1401 = vpack.c.b16 %v833, %v831
  %v1402 = vpack.c.b16 %v836, %v834
  %v1403 = vpack.c.b16 %v837, %v835
  %v1404 = vpack.c.b16 %v840, %v838
  %v1405 = vpack.c.b16 %v841, %v839
  %v1406 = vpack.c.b16 %v844, %v842
  %v1407 = vpack.c.b16 %v845, %v843
  %v1408 = vpack.c.b16 %v848, %v846
  %v1409 = vpack.c.b16 %v849, %v847
  %v1410 = vpack.c.b16 %v852, %v850
  %v1411 = vpack.c.b16 %v853, %v851
  %v1412 = vpack.c.b16 %v856, %v854
  %v1413 = vpack.c.b16 %v857, %v855
  %v1414 = vpack.c.b16 %v860, %v858
  %v1415 = vpack.c.b16 %v861, %v859
  %v1416 = vpack.c.b16 %v864, %v862
  %v1417 = vpack.c.b16 %v865, %v863
  %v1418 = vpack.c.b16 %v868, %v866
  %v1419 = vpack.c.b16 %v869, %v867
  %v1420 = vpack.c.b16 %v872, %v870
  %v1421 = vpack.c.b16 %v873, %v871
  %v1422 = vpack.c.b16 %v876, %v874
  %v1423 = vpack.c.b16 %v877, %v875
  %v1424 = vpack.c.b16 %v880, %v878
  %v1425 = vpack.c.b16 %v881, %v879
  %v1426 = vpack.c.b16 %v884, %v882
  %v1427 = vpack.c.b16 %v885, %v883
  %v1428 = vpack.c.b16 %v888, %v886
  %v1429 = vpack.c.b16 %v889, %v887
  %v1430 = vpack.c.b16 %v892, %v890
  %v1431 = vpack.c.b16 %v893, %v891
  %v1432 = vpack.c.b16 %v896, %v894
  %v1433 = vpack.c.b16 %v897, %v895
  %v1434 = vpack.c.b16 %v900, %v898
  %v1435 = vpack.c.b16 %v901, %v899
  %v1436 = vpack.c.b16 %v904, %v902
  %v1437 = vpack.c.b16 %v905, %v903
  %v1438 = vpack.c.b16 %v908, %v906
  %v1439 = vpack.c.b16 %v909, %v907
  %v1440 = vpack.c.b16 %v912, %v910
  %v1441 = vpack.c.b16 %v913, %v911
  %v1442 = vpack.c.b16 %v916, %v914
  %v1443 = vpack.c.b16 %v917, %v915
  %v1444 = vpack.c.b16 %v920, %v918
  %v1445 = vpack.c.b16 %v921, %v919
  %v1446 = vpack.c.b16 %v924, %v922
  %v1447 = vpack.c.b16 %v925, %v923
  %v1448 = vpack.c.b16 %v928, %v926
  %v1449 = vpack.c.b16 %v929, %v927
  %v1450 = vpack.c.b16 %v932, %v930
  %v1451 = vpack.c.b16 %v933, %v931
  %v1452 = vpack.c.b16 %v936, %v934
  %v1453 = vpack.c.b16 %v937, %v935
  %v1454 = vpack.c.b16 %v940, %v938
  %v1455 = vpack.c.b16 %v941, %v939
  %v1456 = vpack.c.b16 %v944, %v942
  %v1457 = vpack.c.b16 %v945, %v943
  %v1458 = vpack.c.b16 %v948, %v946
  %v1459 = vpack.c.b16 %v949, %v947
  %v1460 = vpack.c.b16 %v952, %v950
  %v1461 = vpack.c.b16 %v953, %v951
  %v1462 = vpack.c.b16 %v956, %v954
  %v1463 = vpack.c.b16 %v957, %v955
  %v1464 = vpack.c.b16 %v960, %v958
  %v1465 = vpack.c.b16 %v961, %v959
  %v1466 = vpack.c.b16 %v964, %v962
  %v1467 = vpack.c.b16 %v965, %v963
  %v1468 = vpack.c.b16 %v968, %v966
  %v1469 = vpack.c.b16 %v969, %v967
  %v1470 = vpack.c.b16 %v972, %v970
  %v1471 = vpack.c.b16 %v973, %v971
  %v1472 = vpack.c.b16 %v976, %v974
  %v1473 = vpack.c.b16 %v977, %v975
  %v1474 = vpack.c.b16 %v980, %v978
  %v1475 = vpack.c.b16 %v981, %v979
  %v1476 = vpack.c.b16 %v984, %v982
  %v1477 = vpack.c.b16 %v985, %v983
  %v1478 = vpack.c.b16 %v988, %v986
  %v1479 = vpack.c.b16 %v989, %v987
  %v1480 = vpack.c.b16 %v992, %v990
  %v1481 = vpack.c.b16 %v993, %v991
  %v1482 = vpack.c.b16 %v996, %v994
  %v1483 = vpack.c.b16 %v997, %v995
  %v1484 = vpack.c.b16 %v1000, %v998
  %v1485 = vpack.c.b16 %v1001, %v999
  %v1486 = vpack.c.b16 %v1004, %v1002
  %v1487 = vpack.c.b16 %v1005, %v1003
  %v1488 = vpack.c.b16 %v1008, %v1006
  %v1489 = vpack.c.b16 %v1009, %v1007
  %v1490 = vpack.c.b16 %v1012, %v1010
  %v1491 = vpack.c.b16 %v1013, %v1011
  %v1492 = vpack.c.b16 %v1016, %v1014
  %v1493 = vpack.c.b16 %v1017, %v1015
  %v1494 = vpack.c.b16 %v1020, %v1018
  %v1495 = vpack.c.b16 %v1021, %v1019
  %v1496 = vpack.c.b16 %v1024, %v1022
  %v1497 = vpack.c.b16 %v1025, %v1023
  %v1498 = vpack.c.b16 %v1028, %v1026
  %v1499 = vpack.c.b16 %v1029, %v1027
  %v1500 = vpack.c.b16 %v1032, %v1030
  %v1501 = vpack.c.b16 %v1033, %v1031
  %v1502 = vpack.c.b16 %v1036, %v1034
  %v1503 = vpack.c.b16 %v1037, %v1035
  %v1504 = vpack.c.b16 %v1040, %v1038
  %v1505 = vpack.c.b16 %v1041, %v1039
  %v1506 = vpack.c.b16 %v1044, %v1042
  %v1507 = vpack.c.b16 %v1045, %v1043
  %v1508 = vpack.c.b16 %v1048, %v1046
  %v1509 = vpack.c.b16 %v1049, %v1047
  %v1510 = vpack.c.b16 %v1052, %v1050
  %v1511 = vpack.c.b16 %v1053, %v1051
  %v1512 = vpack.c.b16 %v1056, %v1054
  %v1513 = vpack.c.b16 %v1057, %v1055
  %v1514 = vpack.c.b16 %v1060, %v1058
  %v1515 = vpack.c.b16 %v1061, %v1059
  %v1516 = vpack.c.b16 %v1064, %v1062
  %v1517 = vpack.c.b16 %v1065, %v1063
  %v1518 = vpack.c.b16 %v1068, %v1066
  %v1519 = vpack.c.b16 %v1069, %v1067
  %v1520 = vpack.c.b16 %v1072, %v1070
  %v1521 = vpack.c.b16 %v1073, %v1071
  %v1522 = vpack.c.b16 %v1076, %v1074
  %v1523 = vpack.c.b16 %v1077, %v1075
  %v1524 = vpack.c.b16 %v1080, %v1078
  %v1525 = vpack.c.b16 %v1081, %v1079
  %v1526 = vpack.c.b16 %v1084, %v1082
  %v1527 = vpack.c.b16 %v1085, %v1083
  %v1528 = vpack.c.b16 %v1088, %v1086
  %v1529 = vpack.c.b16 %v1089, %v1087
  %v1530 = vpack.c.b16 %v1092, %v1090
  %v1531 = vpack.c.b16 %v1093, %v1091
  %v1532 = vpack.c.b16 %v1096, %v1094
  %v1533 = vpack.c.b16 %v1097, %v1095
  %v1534 = vpack.c.b16 %v1100, %v1098
  %v1535 = vpack.c.b16 %v1101, %v1099
  %v1536 = vpack.c.b16 %v1104, %v1102
  %v1537 = vpack.c.b16 %v1105, %v1103
  %v1538 = vpack.c.b16 %v1108, %v1106
  %v1539 = vpack.c.b16 %v1109, %v1107
  %v1540 = vpack.c.b16 %v1112, %v1110
  %v1541 = vpack.c.b16 %v1113, %v1111
  %v1542 = vpack.c.b16 %v1116, %v1114
  %v1543 = vpack.c.b16 %v1117, %v1115
  %v1544 = vpack.c.b16 %v1120, %v1118
  %v1545 = vpack.c.b16 %v1121, %v1119
  %v1546 = vpack.c.b16 %v1124, %v1122
  %v1547 = vpack.c.b16 %v1125, %v1123
  %v1548 = vpack.c.b16 %v1128, %v1126
  %v1549 = vpack.c.b16 %v1129, %v1127
  %v1550 = vpack.c.b16 %v1132, %v1130
  %v1551 = vpack.c.b16 %v1133, %v1131
  %v1552 = vpack.c.b16 %v1136, %v1134
  %v1553 = vpack.c.b16 %v1137, %v1135
  %v1554 = vpack.c.b16 %v1140, %v1138
  %v1555 = vpack.c.b16 %v1141, %v1139
  %v1556 = vpack.c.b16 %v1144, %v1142
  %v1557 = vpack.c.b16 %v1145, %v1143
  %v1558 = vpack.c.b16 %v1148, %v1146
  %v1559 = vpack.c.b16 %v1149, %v1147
  %v1560 = vpack.c.b16 %v1152, %v1150
  %v1561 = vpack.c.b16 %v1153, %v1151
  %v1562 = vpack.c.b16 %v1156, %v1154
  %v1563 = vpack.c.b16 %v1157, %v1155
  %v1564 = vpack.c.b16 %v1160, %v1158
  %v1565 = vpack.c.b16 %v1161, %v1159
  %v1566 = vpack.c.b16 %v1164, %v1162
  %v1567 = vpack.c.b16 %v1165, %v1163
  %v1568 = vpack.c.b16 %v1168, %v1166
  %v1569 = vpack.c.b16 %v1169, %v1167
  %v1570 = vpack.c.b16 %v1172, %v1170
  %v1571 = vpack.c.b16 %v1173, %v1171
  %v1572 = vpack.c.b16 %v1176, %v1174
  %v1573 = vpack.c.b16 %v1177, %v1175
  %v1574 = vpack.c.b16 %v1180, %v1178
  %v1575 = vpack.c.b16 %v1181, %v1179
  %v1576 = vpack.c.b16 %v1184, %v1182
  %v1577 = vpack.c.b16 %v1185, %v1183
  %v1578 = vpack.c.b16 %v1188, %v1186
  %v1579 = vpack.c.b16 %v1189, %v1187
  %v1580 = vpack.c.b16 %v1192, %v1190
  %v1581 = vpack.c.b16 %v1193, %v1191
  %v1582 = vpack.c.b16 %v1196, %v1194
  %v1583 = vpack.c.b16 %v1197, %v1195
  %v1584 = vpack.c.b16 %v1200, %v1198
  %v1585 = vpack.c.b16 %v1201, %v1199
  %v1586 = vpack.c.b16 %v1204, %v1202
  %v1587 = vpack.c.b16 %v1205, %v1203
  %v1588 = vpack.c.b16 %v1208, %v1206
  %v1589 = vpack.c.b16 %v1209, %v1207
  %v1590 = vpack.c.b16 %v1212, %v1210
  %v1591 = vpack.c.b16 %v1213, %v1211
  %v1592 = vpack.c.b16 %v1216, %v1214
  %v1593 = vpack.c.b16 %v1217, %v1215
  %v1594 = vpack.c.b16 %v1220, %v1218
  %v1595 = vpack.c.b16 %v1221, %v1219
  %v1596 = vpack.c.b16 %v1224, %v1222
  %v1597 = vpack.c.b16 %v1225, %v1223
  %v1598 = vpack.c.b16 %v1228, %v1226
  %v1599 = vpack.c.b16 %v1229, %v1227
  %v1600 = vpack.c.b16 %v1232, %v1230
  %v1601 = vpack.c.b16 %v1233, %v1231
  %v1602 = vpack.c.b16 %v1236, %v1234
  %v1603 = vpack.c.b16 %v1237, %v1235
  %v1604 = vpack.c.b16 %v1240, %v1238
  %v1605 = vpack.c.b16 %v1241, %v1239
  %v1606 = vpack.c.b16 %v1244, %v1242
  %v1607 = vpack.c.b16 %v1245, %v1243
  %v1608 = vpack.c.b16 %v1248, %v1246
  %v1609 = vpack.c.b16 %v1249, %v1247
  %v1610 = vpack.c.b16 %v1252, %v1250
  %v1611 = vpack.c.b16 %v1253, %v1251
  %v1612 = vpack.c.b16 %v1256, %v1254
  %v1613 = vpack.c.b16 %v1257, %v1255
  %v1614 = vpack.c.b16 %v1260, %v1258
  %v1615 = vpack.c.b16 %v1261, %v1259
  %v1616 = vpack.c.b16 %v1264, %v1262
  %v1617 = vpack.c.b16 %v1265, %v1263
  %v1618 = vpack.c.b16 %v1268, %v1266
  %v1619 = vpack.c.b16 %v1269, %v1267
  %v1620 = vpack.c.b16 %v1272, %v1270
  %v1621 = vpack.c.b16 %v1273, %v1271
  %v1622 = vpack.c.b16 %v1276, %v1274
  %v1623 = vpack.c.b16 %v1277, %v1275
  %v1624 = vpack.c.b16 %v1280, %v1278
  %v1625 = vpack.c.b16 %v1281, %v1279
  %v1626 = vpack.c.b16 %v1284, %v1282
  %v1627 = vpack.c.b16 %v1285, %v1283
  %v1628 = vpack.c.b16 %v1288, %v1286
  %v1629 = vpack.c.b16 %v1289, %v1287
  %v1630 = vpack.c.b16 %v1292, %v1290
  %v1631 = vpack.c.b16 %v1293, %v1291
  %v1632 = vpack.c.b16 %v1296, %v1294
  %v1633 = vpack.c.b16 %v1297, %v1295
  %v1634 = vpack.c.b16 %v1300, %v1298
  %v1635 = vpack.c.b16 %v1301, %v1299
  %v1636 = vpack.c.b16 %v1304, %v1302
  %v1637 = vpack.c.b16 %v1305, %v1303
  %v1638 = vpack.c.b16 %v1308, %v1306
  %v1639 = vpack.c.b16 %v1309, %v1307
  %v1640 = vpack.c.b16 %v1312, %v1310
  %v1641 = vpack.c.b16 %v1313, %v1311
  %v1642 = vpack.c.b16 %v1316, %v1314
  %v1643 = vpack.c.b16 %v1317, %v1315
  %v1644 = vpack.c.b16 %v1320, %v1318
  %v1645 = vpack.c.b16 %v1321, %v1319
  %v1646 = vpack.c.b16 %v1324, %v1322
  %v1647 = vpack.c.b16 %v1325, %v1323
  %v1648 = vpack.c.b16 %v1328, %v1326
  %v1649 = vpack.c.b16 %v1329, %v1327
  %v1650 = vpack.c.b16 %v1332, %v1330
  %v1651 = vpack.c.b16 %v1333, %v1331
  %v1652 = vpack.c.b16 %v1336, %v1334
  %v1653 = vpack.c.b16 %v1337, %v1335
  %v1654 = vpack.c.b16 %v1340, %v1338
  %v1655 = vpack.c.b16 %v1341, %v1339
  %v1656 = vpack.c.b16 %v1344, %v1342
  %v1657 = vpack.c.b16 %v1345, %v1343
  %v1658 = vpack.c.b16 %v1348, %v1346
  %v1659 = vpack.c.b16 %v1349, %v1347
  %v1660 = vpack.c.b16 %v1352, %v1350
  %v1661 = vpack.c.b16 %v1353, %v1351
  %v1662 = vpack.c.b16 %v1356, %v1354
  %v1663 = vpack.c.b16 %v1357, %v1355
  %v1664 = vpack.c.b16 %v1360, %v1358
  %v1665 = vpack.c.b16 %v1361, %v1359
  %v1666 = vpack.c.b16 %v1364, %v1362
  %v1667 = vpack.c.b16 %v1365, %v1363
  %v1668 = vpack.c.b16 %v1368, %v1366
  %v1669 = vpack.c.b16 %v1369, %v1367
  %v1670 = vpack.c.b16 %v1372, %v1370
  %v1671 = vpack.c.b16 %v1373, %v1371
  %v1672 = vpack.c.b16 %v1376, %v1374
  %v1673 = vpack.c.b16 %v1377, %v1375
  %v1674 = vpack.c.b16 %v1380, %v1378
  %v1675 = vpack.c.b16 %v1381, %v1379
  %v1676 = vpack.c.b16 %v1384, %v1382
  %v1677 = vpack.c.b16 %v1385, %v1383
  %v1678 = vpack.c.b16 %v1388, %v1386
  %v1679 = vpack.c.b16 %v1389, %v1387
  %v1680 = vpack.c.b16 %v1392, %v1390
  %v1681 = vpack.c.b16 %v1393, %v1391
  %1970 = vmatprep.subr.bf16.mxu0 %v1395
  %1971 = vmatpush1.bf16.msra.mxu0 %v1394
  %1972 = vmatprep.subr.bf16.mxu0 %v1397
  %1973 = vmatpush1.bf16.msra.mxu0 %v1396
  %1974 = vmatprep.subr.bf16.mxu0 %v1399
  %1975 = vmatpush1.bf16.msra.mxu0 %v1398
  %1976 = vmatprep.subr.bf16.mxu0 %v1401
  %1977 = vmatpush1.bf16.msra.mxu0 %v1400
  %1978 = vmatprep.subr.bf16.mxu0 %v1403
  %1979 = vmatpush1.bf16.msra.mxu0 %v1402
  %1980 = vmatprep.subr.bf16.mxu0 %v1405
  %1981 = vmatpush1.bf16.msra.mxu0 %v1404
  %1982 = vmatprep.subr.bf16.mxu0 %v1407
  %1983 = vmatpush1.bf16.msra.mxu0 %v1406
  %1984 = vmatprep.subr.bf16.mxu0 %v1409
  %1985 = vmatpush1.bf16.msra.mxu0 %v1408
  %1986 = vmatprep.subr.bf16.mxu0 %v1411
  %1987 = vmatpush1.bf16.msra.mxu0 %v1410
  %1988 = vmatprep.subr.bf16.mxu0 %v1413
  %1989 = vmatpush1.bf16.msra.mxu0 %v1412
  %1990 = vmatprep.subr.bf16.mxu0 %v1415
  %1991 = vmatpush1.bf16.msra.mxu0 %v1414
  %1992 = vmatprep.subr.bf16.mxu0 %v1417
  %1993 = vmatpush1.bf16.msra.mxu0 %v1416
  %1994 = vmatprep.subr.bf16.mxu0 %v1419
  %1995 = vmatpush1.bf16.msra.mxu0 %v1418
  %1996 = vmatprep.subr.bf16.mxu0 %v1421
  %1997 = vmatpush1.bf16.msra.mxu0 %v1420
  %1998 = vmatprep.subr.bf16.mxu0 %v1423
  %1999 = vmatpush1.bf16.msra.mxu0 %v1422
  %2000 = vmatprep.subr.bf16.mxu0 %v1425
  %2001 = vmatpush1.bf16.msra.mxu0 %v1424
  %2002 = vmatprep.mubr.bf16.mxu0 %v459
  %2003 = vmatmul.mubr.bf16.gmra.mrb[0].mxu0 %v458
  %v2004 = vpop.f32.mrb[0].mxu0
  %v2005 = vadd.f32 %v343, %v2004
  %v2006 = vpop.f32.mrb[0].mxu0
  %v2007 = vadd.f32 %v347, %v2006
  %v2008 = vpop.f32.mrb[0].mxu0
  %v2009 = vadd.f32 %v343, %v2008
  %v2010 = vpop.f32.mrb[0].mxu0
  %v2011 = vadd.f32 %v347, %v2010
  %2012 = vmatprep.mubr.bf16.mxu0 %v477
  %2013 = vmatmul.mubr.bf16.gmra.mrb[0].mxu0 %v476
  %v2014 = vpop.f32.mrb[0].mxu0
  %v2015 = vadd.f32 %v343, %v2014
  %v2016 = vpop.f32.mrb[0].mxu0
  %v2017 = vadd.f32 %v347, %v2016
  %v2018 = vpop.f32.mrb[0].mxu0
  %v2019 = vadd.f32 %v343, %v2018
  %v2020 = vpop.f32.mrb[0].mxu0
  %v2021 = vadd.f32 %v347, %v2020
  %2022 = vdwg.mxu0
  %2023 = vmatprep.subr.bf16.mxu0 %v1427
  %2024 = vmatpush1.bf16.msra.mxu0 %v1426
  %2025 = vmatprep.subr.bf16.mxu0 %v1429
  %2026 = vmatpush1.bf16.msra.mxu0 %v1428
  %2027 = vmatprep.subr.bf16.mxu0 %v1431
  %2028 = vmatpush1.bf16.msra.mxu0 %v1430
  %2029 = vmatprep.subr.bf16.mxu0 %v1433
  %2030 = vmatpush1.bf16.msra.mxu0 %v1432
  %2031 = vmatprep.subr.bf16.mxu0 %v1435
  %2032 = vmatpush1.bf16.msra.mxu0 %v1434
  %2033 = vmatprep.subr.bf16.mxu0 %v1437
  %2034 = vmatpush1.bf16.msra.mxu0 %v1436
  %2035 = vmatprep.subr.bf16.mxu0 %v1439
  %2036 = vmatpush1.bf16.msra.mxu0 %v1438
  %2037 = vmatprep.subr.bf16.mxu0 %v1441
  %2038 = vmatpush1.bf16.msra.mxu0 %v1440
  %2039 = vmatprep.subr.bf16.mxu0 %v1443
  %2040 = vmatpush1.bf16.msra.mxu0 %v1442
  %2041 = vmatprep.subr.bf16.mxu0 %v1445
  %2042 = vmatpush1.bf16.msra.mxu0 %v1444
  %2043 = vmatprep.subr.bf16.mxu0 %v1447
  %2044 = vmatpush1.bf16.msra.mxu0 %v1446
  %2045 = vmatprep.subr.bf16.mxu0 %v1449
  %2046 = vmatpush1.bf16.msra.mxu0 %v1448
  %2047 = vmatprep.subr.bf16.mxu0 %v1451
  %2048 = vmatpush1.bf16.msra.mxu0 %v1450
  %2049 = vmatprep.subr.bf16.mxu0 %v1453
  %2050 = vmatpush1.bf16.msra.mxu0 %v1452
  %2051 = vmatprep.subr.bf16.mxu0 %v1455
  %2052 = vmatpush1.bf16.msra.mxu0 %v1454
  %2053 = vmatprep.subr.bf16.mxu0 %v1457
  %2054 = vmatpush1.bf16.msra.mxu0 %v1456
  %2055 = vmatprep.mubr.bf16.mxu0 %v461
  %2056 = vmatmul.mubr.bf16.gmra.mrb[0].mxu0 %v460
  %v2057 = vpop.f32.mrb[0].mxu0
  %v2058 = vadd.f32 %v2005, %v2057
  %v2059 = vpop.f32.mrb[0].mxu0
  %v2060 = vadd.f32 %v2007, %v2059
  %v2061 = vpop.f32.mrb[0].mxu0
  %v2062 = vadd.f32 %v2009, %v2061
  %v2063 = vpop.f32.mrb[0].mxu0
  %v2064 = vadd.f32 %v2011, %v2063
  %2065 = vmatprep.mubr.bf16.mxu0 %v479
  %2066 = vmatmul.mubr.bf16.gmra.mrb[0].mxu0 %v478
  %v2067 = vpop.f32.mrb[0].mxu0
  %v2068 = vadd.f32 %v2015, %v2067
  %v2069 = vpop.f32.mrb[0].mxu0
  %v2070 = vadd.f32 %v2017, %v2069
  %v2071 = vpop.f32.mrb[0].mxu0
  %v2072 = vadd.f32 %v2019, %v2071
  %v2073 = vpop.f32.mrb[0].mxu0
  %v2074 = vadd.f32 %v2021, %v2073
  %2075 = vdwg.mxu0
  %2076 = vmatprep.subr.bf16.mxu0 %v1459
  %2077 = vmatpush1.bf16.msra.mxu0 %v1458
  %2078 = vmatprep.subr.bf16.mxu0 %v1461
  %2079 = vmatpush1.bf16.msra.mxu0 %v1460
  %2080 = vmatprep.subr.bf16.mxu0 %v1463
  %2081 = vmatpush1.bf16.msra.mxu0 %v1462
  %2082 = vmatprep.subr.bf16.mxu0 %v1465
  %2083 = vmatpush1.bf16.msra.mxu0 %v1464
  %2084 = vmatprep.subr.bf16.mxu0 %v1467
  %2085 = vmatpush1.bf16.msra.mxu0 %v1466
  %2086 = vmatprep.subr.bf16.mxu0 %v1469
  %2087 = vmatpush1.bf16.msra.mxu0 %v1468
  %2088 = vmatprep.subr.bf16.mxu0 %v1471
  %2089 = vmatpush1.bf16.msra.mxu0 %v1470
  %2090 = vmatprep.subr.bf16.mxu0 %v1473
  %2091 = vmatpush1.bf16.msra.mxu0 %v1472
  %2092 = vmatprep.subr.bf16.mxu0 %v1475
  %2093 = vmatpush1.bf16.msra.mxu0 %v1474
  %2094 = vmatprep.subr.bf16.mxu0 %v1477
  %2095 = vmatpush1.bf16.msra.mxu0 %v1476
  %2096 = vmatprep.subr.bf16.mxu0 %v1479
  %2097 = vmatpush1.bf16.msra.mxu0 %v1478
  %2098 = vmatprep.subr.bf16.mxu0 %v1481
  %2099 = vmatpush1.bf16.msra.mxu0 %v1480
  %2100 = vmatprep.subr.bf16.mxu0 %v1483
  %2101 = vmatpush1.bf16.msra.mxu0 %v1482
  %2102 = vmatprep.subr.bf16.mxu0 %v1485
  %2103 = vmatpush1.bf16.msra.mxu0 %v1484
  %2104 = vmatprep.subr.bf16.mxu0 %v1487
  %2105 = vmatpush1.bf16.msra.mxu0 %v1486
  %2106 = vmatprep.subr.bf16.mxu0 %v1489
  %2107 = vmatpush1.bf16.msra.mxu0 %v1488
  %2108 = vmatprep.mubr.bf16.mxu0 %v463
  %2109 = vmatmul.mubr.bf16.gmra.mrb[0].mxu0 %v462
  %v2110 = vpop.f32.mrb[0].mxu0
  %v2111 = vadd.f32 %v2058, %v2110
  %v2112 = vpop.f32.mrb[0].mxu0
  %v2113 = vadd.f32 %v2060, %v2112
  %v2114 = vpop.f32.mrb[0].mxu0
  %v2115 = vadd.f32 %v2062, %v2114
  %v2116 = vpop.f32.mrb[0].mxu0
  %v2117 = vadd.f32 %v2064, %v2116
  %2118 = vmatprep.mubr.bf16.mxu0 %v481
  %2119 = vmatmul.mubr.bf16.gmra.mrb[0].mxu0 %v480
  %v2120 = vpop.f32.mrb[0].mxu0
  %v2121 = vadd.f32 %v2068, %v2120
  %v2122 = vpop.f32.mrb[0].mxu0
  %v2123 = vadd.f32 %v2070, %v2122
  %v2124 = vpop.f32.mrb[0].mxu0
  %v2125 = vadd.f32 %v2072, %v2124
  %v2126 = vpop.f32.mrb[0].mxu0
  %v2127 = vadd.f32 %v2074, %v2126
  %2128 = vdwg.mxu0
  %2129 = vmatprep.subr.bf16.mxu0 %v1491
  %2130 = vmatpush1.bf16.msra.mxu0 %v1490
  %2131 = vmatprep.subr.bf16.mxu0 %v1493
  %2132 = vmatpush1.bf16.msra.mxu0 %v1492
  %2133 = vmatprep.subr.bf16.mxu0 %v1495
  %2134 = vmatpush1.bf16.msra.mxu0 %v1494
  %2135 = vmatprep.subr.bf16.mxu0 %v1497
  %2136 = vmatpush1.bf16.msra.mxu0 %v1496
  %2137 = vmatprep.subr.bf16.mxu0 %v1499
  %2138 = vmatpush1.bf16.msra.mxu0 %v1498
  %2139 = vmatprep.subr.bf16.mxu0 %v1501
  %2140 = vmatpush1.bf16.msra.mxu0 %v1500
  %2141 = vmatprep.subr.bf16.mxu0 %v1503
  %2142 = vmatpush1.bf16.msra.mxu0 %v1502
  %2143 = vmatprep.subr.bf16.mxu0 %v1505
  %2144 = vmatpush1.bf16.msra.mxu0 %v1504
  %2145 = vmatprep.subr.bf16.mxu0 %v1507
  %2146 = vmatpush1.bf16.msra.mxu0 %v1506
  %2147 = vmatprep.subr.bf16.mxu0 %v1509
  %2148 = vmatpush1.bf16.msra.mxu0 %v1508
  %2149 = vmatprep.subr.bf16.mxu0 %v1511
  %2150 = vmatpush1.bf16.msra.mxu0 %v1510
  %2151 = vmatprep.subr.bf16.mxu0 %v1513
  %2152 = vmatpush1.bf16.msra.mxu0 %v1512
  %2153 = vmatprep.subr.bf16.mxu0 %v1515
  %2154 = vmatpush1.bf16.msra.mxu0 %v1514
  %2155 = vmatprep.subr.bf16.mxu0 %v1517
  %2156 = vmatpush1.bf16.msra.mxu0 %v1516
  %2157 = vmatprep.subr.bf16.mxu0 %v1519
  %2158 = vmatpush1.bf16.msra.mxu0 %v1518
  %2159 = vmatprep.subr.bf16.mxu0 %v1521
  %2160 = vmatpush1.bf16.msra.mxu0 %v1520
  %2161 = vmatprep.mubr.bf16.mxu0 %v465
  %2162 = vmatmul.mubr.bf16.gmra.mrb[0].mxu0 %v464
  %v2163 = vpop.f32.mrb[0].mxu0
  %v2164 = vadd.f32 %v2111, %v2163
  %v2165 = vpop.f32.mrb[0].mxu0
  %v2166 = vadd.f32 %v2113, %v2165
  %v2167 = vpop.f32.mrb[0].mxu0
  %v2168 = vadd.f32 %v2115, %v2167
  %v2169 = vpop.f32.mrb[0].mxu0
  %v2170 = vadd.f32 %v2117, %v2169
  %2171 = vmatprep.mubr.bf16.mxu0 %v483
  %2172 = vmatmul.mubr.bf16.gmra.mrb[0].mxu0 %v482
  %v2173 = vpop.f32.mrb[0].mxu0
  %v2174 = vadd.f32 %v2121, %v2173
  %v2175 = vpop.f32.mrb[0].mxu0
  %v2176 = vadd.f32 %v2123, %v2175
  %v2177 = vpop.f32.mrb[0].mxu0
  %v2178 = vadd.f32 %v2125, %v2177
  %v2179 = vpop.f32.mrb[0].mxu0
  %v2180 = vadd.f32 %v2127, %v2179
  %2181 = vdwg.mxu0
  %2182 = vmatprep.subr.bf16.mxu0 %v1523
  %2183 = vmatpush1.bf16.msra.mxu0 %v1522
  %2184 = vmatprep.subr.bf16.mxu0 %v1525
  %2185 = vmatpush1.bf16.msra.mxu0 %v1524
  %2186 = vmatprep.subr.bf16.mxu0 %v1527
  %2187 = vmatpush1.bf16.msra.mxu0 %v1526
  %2188 = vmatprep.subr.bf16.mxu0 %v1529
  %2189 = vmatpush1.bf16.msra.mxu0 %v1528
  %2190 = vmatprep.subr.bf16.mxu0 %v1531
  %2191 = vmatpush1.bf16.msra.mxu0 %v1530
  %2192 = vmatprep.subr.bf16.mxu0 %v1533
  %2193 = vmatpush1.bf16.msra.mxu0 %v1532
  %2194 = vmatprep.subr.bf16.mxu0 %v1535
  %2195 = vmatpush1.bf16.msra.mxu0 %v1534
  %2196 = vmatprep.subr.bf16.mxu0 %v1537
  %2197 = vmatpush1.bf16.msra.mxu0 %v1536
  %2198 = vmatprep.subr.bf16.mxu0 %v1539
  %2199 = vmatpush1.bf16.msra.mxu0 %v1538
  %2200 = vmatprep.subr.bf16.mxu0 %v1541
  %2201 = vmatpush1.bf16.msra.mxu0 %v1540
  %2202 = vmatprep.subr.bf16.mxu0 %v1543
  %2203 = vmatpush1.bf16.msra.mxu0 %v1542
  %2204 = vmatprep.subr.bf16.mxu0 %v1545
  %2205 = vmatpush1.bf16.msra.mxu0 %v1544
  %2206 = vmatprep.subr.bf16.mxu0 %v1547
  %2207 = vmatpush1.bf16.msra.mxu0 %v1546
  %2208 = vmatprep.subr.bf16.mxu0 %v1549
  %2209 = vmatpush1.bf16.msra.mxu0 %v1548
  %2210 = vmatprep.subr.bf16.mxu0 %v1551
  %2211 = vmatpush1.bf16.msra.mxu0 %v1550
  %2212 = vmatprep.subr.bf16.mxu0 %v1553
  %2213 = vmatpush1.bf16.msra.mxu0 %v1552
  %2214 = vmatprep.mubr.bf16.mxu0 %v467
  %2215 = vmatmul.mubr.bf16.gmra.mrb[0].mxu0 %v466
  %v2216 = vpop.f32.mrb[0].mxu0
  %v2217 = vadd.f32 %v2164, %v2216
  %v2218 = vpop.f32.mrb[0].mxu0
  %v2219 = vadd.f32 %v2166, %v2218
  %v2220 = vpop.f32.mrb[0].mxu0
  %v2221 = vadd.f32 %v2168, %v2220
  %v2222 = vpop.f32.mrb[0].mxu0
  %v2223 = vadd.f32 %v2170, %v2222
  %2224 = vmatprep.mubr.bf16.mxu0 %v485
  %2225 = vmatmul.mubr.bf16.gmra.mrb[0].mxu0 %v484
  %v2226 = vpop.f32.mrb[0].mxu0
  %v2227 = vadd.f32 %v2174, %v2226
  %v2228 = vpop.f32.mrb[0].mxu0
  %v2229 = vadd.f32 %v2176, %v2228
  %v2230 = vpop.f32.mrb[0].mxu0
  %v2231 = vadd.f32 %v2178, %v2230
  %v2232 = vpop.f32.mrb[0].mxu0
  %v2233 = vadd.f32 %v2180, %v2232
  %2234 = vdwg.mxu0
  %2235 = vmatprep.subr.bf16.mxu0 %v1555
  %2236 = vmatpush1.bf16.msra.mxu0 %v1554
  %2237 = vmatprep.subr.bf16.mxu0 %v1557
  %2238 = vmatpush1.bf16.msra.mxu0 %v1556
  %2239 = vmatprep.subr.bf16.mxu0 %v1559
  %2240 = vmatpush1.bf16.msra.mxu0 %v1558
  %2241 = vmatprep.subr.bf16.mxu0 %v1561
  %2242 = vmatpush1.bf16.msra.mxu0 %v1560
  %2243 = vmatprep.subr.bf16.mxu0 %v1563
  %2244 = vmatpush1.bf16.msra.mxu0 %v1562
  %2245 = vmatprep.subr.bf16.mxu0 %v1565
  %2246 = vmatpush1.bf16.msra.mxu0 %v1564
  %2247 = vmatprep.subr.bf16.mxu0 %v1567
  %2248 = vmatpush1.bf16.msra.mxu0 %v1566
  %2249 = vmatprep.subr.bf16.mxu0 %v1569
  %2250 = vmatpush1.bf16.msra.mxu0 %v1568
  %2251 = vmatprep.subr.bf16.mxu0 %v1571
  %2252 = vmatpush1.bf16.msra.mxu0 %v1570
  %2253 = vmatprep.subr.bf16.mxu0 %v1573
  %2254 = vmatpush1.bf16.msra.mxu0 %v1572
  %2255 = vmatprep.subr.bf16.mxu0 %v1575
  %2256 = vmatpush1.bf16.msra.mxu0 %v1574
  %2257 = vmatprep.subr.bf16.mxu0 %v1577
  %2258 = vmatpush1.bf16.msra.mxu0 %v1576
  %2259 = vmatprep.subr.bf16.mxu0 %v1579
  %2260 = vmatpush1.bf16.msra.mxu0 %v1578
  %2261 = vmatprep.subr.bf16.mxu0 %v1581
  %2262 = vmatpush1.bf16.msra.mxu0 %v1580
  %2263 = vmatprep.subr.bf16.mxu0 %v1583
  %2264 = vmatpush1.bf16.msra.mxu0 %v1582
  %2265 = vmatprep.subr.bf16.mxu0 %v1585
  %2266 = vmatpush1.bf16.msra.mxu0 %v1584
  %2267 = vmatprep.mubr.bf16.mxu0 %v469
  %2268 = vmatmul.mubr.bf16.gmra.mrb[0].mxu0 %v468
  %v2269 = vpop.f32.mrb[0].mxu0
  %v2270 = vadd.f32 %v2217, %v2269
  %v2271 = vpop.f32.mrb[0].mxu0
  %v2272 = vadd.f32 %v2219, %v2271
  %v2273 = vpop.f32.mrb[0].mxu0
  %v2274 = vadd.f32 %v2221, %v2273
  %v2275 = vpop.f32.mrb[0].mxu0
  %v2276 = vadd.f32 %v2223, %v2275
  %2277 = vmatprep.mubr.bf16.mxu0 %v487
  %2278 = vmatmul.mubr.bf16.gmra.mrb[0].mxu0 %v486
  %v2279 = vpop.f32.mrb[0].mxu0
  %v2280 = vadd.f32 %v2227, %v2279
  %v2281 = vpop.f32.mrb[0].mxu0
  %v2282 = vadd.f32 %v2229, %v2281
  %v2283 = vpop.f32.mrb[0].mxu0
  %v2284 = vadd.f32 %v2231, %v2283
  %v2285 = vpop.f32.mrb[0].mxu0
  %v2286 = vadd.f32 %v2233, %v2285
  %2287 = vdwg.mxu0
  %2288 = vmatprep.subr.bf16.mxu0 %v1587
  %2289 = vmatpush1.bf16.msra.mxu0 %v1586
  %2290 = vmatprep.subr.bf16.mxu0 %v1589
  %2291 = vmatpush1.bf16.msra.mxu0 %v1588
  %2292 = vmatprep.subr.bf16.mxu0 %v1591
  %2293 = vmatpush1.bf16.msra.mxu0 %v1590
  %2294 = vmatprep.subr.bf16.mxu0 %v1593
  %2295 = vmatpush1.bf16.msra.mxu0 %v1592
  %2296 = vmatprep.subr.bf16.mxu0 %v1595
  %2297 = vmatpush1.bf16.msra.mxu0 %v1594
  %2298 = vmatprep.subr.bf16.mxu0 %v1597
  %2299 = vmatpush1.bf16.msra.mxu0 %v1596
  %2300 = vmatprep.subr.bf16.mxu0 %v1599
  %2301 = vmatpush1.bf16.msra.mxu0 %v1598
  %2302 = vmatprep.subr.bf16.mxu0 %v1601
  %2303 = vmatpush1.bf16.msra.mxu0 %v1600
  %2304 = vmatprep.subr.bf16.mxu0 %v1603
  %2305 = vmatpush1.bf16.msra.mxu0 %v1602
  %2306 = vmatprep.subr.bf16.mxu0 %v1605
  %2307 = vmatpush1.bf16.msra.mxu0 %v1604
  %2308 = vmatprep.subr.bf16.mxu0 %v1607
  %2309 = vmatpush1.bf16.msra.mxu0 %v1606
  %2310 = vmatprep.subr.bf16.mxu0 %v1609
  %2311 = vmatpush1.bf16.msra.mxu0 %v1608
  %2312 = vmatprep.subr.bf16.mxu0 %v1611
  %2313 = vmatpush1.bf16.msra.mxu0 %v1610
  %2314 = vmatprep.subr.bf16.mxu0 %v1613
  %2315 = vmatpush1.bf16.msra.mxu0 %v1612
  %2316 = vmatprep.subr.bf16.mxu0 %v1615
  %2317 = vmatpush1.bf16.msra.mxu0 %v1614
  %2318 = vmatprep.subr.bf16.mxu0 %v1617
  %2319 = vmatpush1.bf16.msra.mxu0 %v1616
  %2320 = vmatprep.mubr.bf16.mxu0 %v471
  %2321 = vmatmul.mubr.bf16.gmra.mrb[0].mxu0 %v470
  %v2322 = vpop.f32.mrb[0].mxu0
  %v2323 = vadd.f32 %v2270, %v2322
  %v2324 = vpop.f32.mrb[0].mxu0
  %v2325 = vadd.f32 %v2272, %v2324
  %v2326 = vpop.f32.mrb[0].mxu0
  %v2327 = vadd.f32 %v2274, %v2326
  %v2328 = vpop.f32.mrb[0].mxu0
  %v2329 = vadd.f32 %v2276, %v2328
  %2330 = vmatprep.mubr.bf16.mxu0 %v489
  %2331 = vmatmul.mubr.bf16.gmra.mrb[0].mxu0 %v488
  %v2332 = vpop.f32.mrb[0].mxu0
  %v2333 = vadd.f32 %v2280, %v2332
  %v2334 = vpop.f32.mrb[0].mxu0
  %v2335 = vadd.f32 %v2282, %v2334
  %v2336 = vpop.f32.mrb[0].mxu0
  %v2337 = vadd.f32 %v2284, %v2336
  %v2338 = vpop.f32.mrb[0].mxu0
  %v2339 = vadd.f32 %v2286, %v2338
  %2340 = vdwg.mxu0
  %2341 = vmatprep.subr.bf16.mxu0 %v1619
  %2342 = vmatpush1.bf16.msra.mxu0 %v1618
  %2343 = vmatprep.subr.bf16.mxu0 %v1621
  %2344 = vmatpush1.bf16.msra.mxu0 %v1620
  %2345 = vmatprep.subr.bf16.mxu0 %v1623
  %2346 = vmatpush1.bf16.msra.mxu0 %v1622
  %2347 = vmatprep.subr.bf16.mxu0 %v1625
  %2348 = vmatpush1.bf16.msra.mxu0 %v1624
  %2349 = vmatprep.subr.bf16.mxu0 %v1627
  %2350 = vmatpush1.bf16.msra.mxu0 %v1626
  %2351 = vmatprep.subr.bf16.mxu0 %v1629
  %2352 = vmatpush1.bf16.msra.mxu0 %v1628
  %2353 = vmatprep.subr.bf16.mxu0 %v1631
  %2354 = vmatpush1.bf16.msra.mxu0 %v1630
  %2355 = vmatprep.subr.bf16.mxu0 %v1633
  %2356 = vmatpush1.bf16.msra.mxu0 %v1632
  %2357 = vmatprep.subr.bf16.mxu0 %v1635
  %2358 = vmatpush1.bf16.msra.mxu0 %v1634
  %2359 = vmatprep.subr.bf16.mxu0 %v1637
  %2360 = vmatpush1.bf16.msra.mxu0 %v1636
  %2361 = vmatprep.subr.bf16.mxu0 %v1639
  %2362 = vmatpush1.bf16.msra.mxu0 %v1638
  %2363 = vmatprep.subr.bf16.mxu0 %v1641
  %2364 = vmatpush1.bf16.msra.mxu0 %v1640
  %2365 = vmatprep.subr.bf16.mxu0 %v1643
  %2366 = vmatpush1.bf16.msra.mxu0 %v1642
  %2367 = vmatprep.subr.bf16.mxu0 %v1645
  %2368 = vmatpush1.bf16.msra.mxu0 %v1644
  %2369 = vmatprep.subr.bf16.mxu0 %v1647
  %2370 = vmatpush1.bf16.msra.mxu0 %v1646
  %2371 = vmatprep.subr.bf16.mxu0 %v1649
  %2372 = vmatpush1.bf16.msra.mxu0 %v1648
  %2373 = vmatprep.mubr.bf16.mxu0 %v473
  %2374 = vmatmul.mubr.bf16.gmra.mrb[0].mxu0 %v472
  %v2375 = vpop.f32.mrb[0].mxu0
  %v2376 = vadd.f32 %v2323, %v2375
  %v2377 = vpop.f32.mrb[0].mxu0
  %v2378 = vadd.f32 %v2325, %v2377
  %v2379 = vpop.f32.mrb[0].mxu0
  %v2380 = vadd.f32 %v2327, %v2379
  %v2381 = vpop.f32.mrb[0].mxu0
  %v2382 = vadd.f32 %v2329, %v2381
  %2383 = vmatprep.mubr.bf16.mxu0 %v491
  %2384 = vmatmul.mubr.bf16.gmra.mrb[0].mxu0 %v490
  %v2385 = vpop.f32.mrb[0].mxu0
  %v2386 = vadd.f32 %v2333, %v2385
  %v2387 = vpop.f32.mrb[0].mxu0
  %v2388 = vadd.f32 %v2335, %v2387
  %v2389 = vpop.f32.mrb[0].mxu0
  %v2390 = vadd.f32 %v2337, %v2389
  %v2391 = vpop.f32.mrb[0].mxu0
  %v2392 = vadd.f32 %v2339, %v2391
  %2393 = vdwg.mxu0
  %2394 = vmatprep.subr.bf16.mxu0 %v1651
  %2395 = vmatpush1.bf16.msra.mxu0 %v1650
  %2396 = vmatprep.subr.bf16.mxu0 %v1653
  %2397 = vmatpush1.bf16.msra.mxu0 %v1652
  %2398 = vmatprep.subr.bf16.mxu0 %v1655
  %2399 = vmatpush1.bf16.msra.mxu0 %v1654
  %2400 = vmatprep.subr.bf16.mxu0 %v1657
  %2401 = vmatpush1.bf16.msra.mxu0 %v1656
  %2402 = vmatprep.subr.bf16.mxu0 %v1659
  %2403 = vmatpush1.bf16.msra.mxu0 %v1658
  %2404 = vmatprep.subr.bf16.mxu0 %v1661
  %2405 = vmatpush1.bf16.msra.mxu0 %v1660
  %2406 = vmatprep.subr.bf16.mxu0 %v1663
  %2407 = vmatpush1.bf16.msra.mxu0 %v1662
  %2408 = vmatprep.subr.bf16.mxu0 %v1665
  %2409 = vmatpush1.bf16.msra.mxu0 %v1664
  %2410 = vmatprep.subr.bf16.mxu0 %v1667
  %2411 = vmatpush1.bf16.msra.mxu0 %v1666
  %2412 = vmatprep.subr.bf16.mxu0 %v1669
  %2413 = vmatpush1.bf16.msra.mxu0 %v1668
  %2414 = vmatprep.subr.bf16.mxu0 %v1671
  %2415 = vmatpush1.bf16.msra.mxu0 %v1670
  %2416 = vmatprep.subr.bf16.mxu0 %v1673
  %2417 = vmatpush1.bf16.msra.mxu0 %v1672
  %2418 = vmatprep.subr.bf16.mxu0 %v1675
  %2419 = vmatpush1.bf16.msra.mxu0 %v1674
  %2420 = vmatprep.subr.bf16.mxu0 %v1677
  %2421 = vmatpush1.bf16.msra.mxu0 %v1676
  %2422 = vmatprep.subr.bf16.mxu0 %v1679
  %2423 = vmatpush1.bf16.msra.mxu0 %v1678
  %2424 = vmatprep.subr.bf16.mxu0 %v1681
  %2425 = vmatpush1.bf16.msra.mxu0 %v1680
  %2426 = vmatprep.mubr.bf16.mxu0 %v475
  %2427 = vmatmul.mubr.bf16.gmra.mrb[0].mxu0 %v474
  %v2428 = vpop.f32.mrb[0].mxu0
  %v2429 = vadd.f32 %v2376, %v2428
  %v2430 = vpop.f32.mrb[0].mxu0
  %v2431 = vadd.f32 %v2378, %v2430
  %v2432 = vpop.f32.mrb[0].mxu0
  %v2433 = vadd.f32 %v2380, %v2432
  %v2434 = vpop.f32.mrb[0].mxu0
  %v2435 = vadd.f32 %v2382, %v2434
  %2436 = vmatprep.mubr.bf16.mxu0 %v493
  %2437 = vmatmul.mubr.bf16.gmra.mrb[0].mxu0 %v492
  %v2438 = vpop.f32.mrb[0].mxu0
  %v2439 = vadd.f32 %v2386, %v2438
  %v2440 = vpop.f32.mrb[0].mxu0
  %v2441 = vadd.f32 %v2388, %v2440
  %v2442 = vpop.f32.mrb[0].mxu0
  %v2443 = vadd.f32 %v2390, %v2442
  %v2444 = vpop.f32.mrb[0].mxu0
  %v2445 = vadd.f32 %v2392, %v2444
  %2446 = vdwg.mxu0
  %v2447 = vmax.f32 %v2429, 0.0
  %v2448 = vmax.f32 %v2431, 0.0
  %v2449 = vmax.f32 %v2433, 0.0
  %v2450 = vmax.f32 %v2435, 0.0
  %v2451 = vmax.f32 %v2439, 0.0
  %v2452 = vmax.f32 %v2441, 0.0
  %v2453 = vmax.f32 %v2443, 0.0
  %v2454 = vmax.f32 %v2445, 0.0
  %v2455 = vpack.c.bf16 %v2449, %v2447
  %v2456 = vpack.c.bf16 %v2450, %v2448
  %v2457 = vpack.c.bf16 %v2453, %v2451
  %v2458 = vpack.c.bf16 %v2454, %v2452
  %v2463 = vunpack.c.l.b16 %v2455
  %v2464 = vunpack.c.l.b16 %v2456
  %v2465 = vunpack.c.h.b16 %v2455
  %v2466 = vunpack.c.h.b16 %v2456
  %v2467 = vunpack.c.l.b16 %v2457
  %v2468 = vunpack.c.l.b16 %v2458
  %v2469 = vunpack.c.h.b16 %v2457
  %v2470 = vunpack.c.h.b16 %v2458
  %v2471 = vpack.c.b16 %v2464, %v2463
  %v2472 = vpack.c.b16 %v2466, %v2465
  %v2473 = vpack.c.b16 %v2468, %v2467
  %v2474 = vpack.c.b16 %v2470, %v2469
  %2479 = vst [vmem:[%s3] sm:$0xff] %v2471
  %2480 = vst [vmem:[%s3 + $0x8] sm:$0xff] %v2472
  %2481 = vst [vmem:[%s3 + $0x10] sm:$0xff] %v2473
  %2482 = vst [vmem:[%s3 + $0x18] sm:$0xff] %v2474
  // Predicated region
  $region14: #{alexnet_forward.14} parent=0 // pred_check
    _
  $region15: #{alexnet_forward.14} parent=0 // pred_check_branch
    %2484 = sbr.rel (0) target = $region17
  $region16: #{alexnet_forward.14} parent=0 // pred_region
    _
  $region17: #{alexnet_forward.14} parent=0 // pred_fallthru
    _
  // Predicated region
  $region18: #{alexnet_forward.14} parent=0 // pred_check
    _
  $region19: #{alexnet_forward.14} parent=0 // pred_check_branch
    %2486 = sbr.rel (0) target = $region21
  $region20: #{alexnet_forward.14} parent=0 // pred_region
    _
  $region21: #{alexnet_forward.14} parent=0 // pred_fallthru
    _

</llo_original>
